<compile_context>
chip_gen: v7x
topology: tpu7x:2x2x1
jax: 0.10.0
libtpu: 0.0.40
codegen_flags: <defaults>
</compile_context>

<pallas_src>
import functools
import math

import numpy as np
import jax
import jax.numpy as jnp
from jax.experimental import pallas as pl
from jax.experimental.pallas import tpu as pltpu

# ---- hyperparameters: TransformerNet defaults ----
ACTION_SIZE = 214
DISCARD_SIZE = 18
NOBLE_SIZE = 10
INPUT_SIZE = 401
MEMORY_SIZE = 4
D_MODEL = 64            # transformer_input_size
SEQ_LEN = 64            # transformer_length
N_HEADS = 8
HEAD_DIM = D_MODEL // N_HEADS
FFN_DIM = 512
MATRIX_SIZE = D_MODEL * SEQ_LEN
LN_EPS = 1e-5

PRE_IN = INPUT_SIZE + MEMORY_SIZE                                   # 405
PRE_IN_PAD = 512                                                    # aligned K
HEADS_TOTAL = ACTION_SIZE + DISCARD_SIZE + NOBLE_SIZE + MEMORY_SIZE  # 246
HEADS_PAD = 256                                                     # lane-dense N
MEM_COL = ACTION_SIZE + DISCARD_SIZE + NOBLE_SIZE                    # 242


# ----------------------------------------------------------------------------
# Kernel 1: generic tiled linear  y = act(x @ W + b), grid = (N_tiles, K_tiles).
# Activation is y + mask*(tanh(y)-y): mask==1 -> tanh, mask==0 -> identity, so
# one kernel serves the tanh'd pre_transform and the fused output heads
# (tanh only on the memory columns).
# ----------------------------------------------------------------------------
def _linear_kernel(x_ref, w_ref, b_ref, m_ref, o_ref, acc_ref):
    kk = pl.program_id(1)

    @pl.when(kk == 0)
    def _():
        acc_ref[...] = jnp.zeros_like(acc_ref)

    acc_ref[...] += jnp.dot(x_ref[...], w_ref[...].astype(jnp.float32),
                            preferred_element_type=jnp.float32)

    @pl.when(kk == pl.num_programs(1) - 1)
    def _():
        y = acc_ref[...] + b_ref[...]
        y = y + m_ref[...] * (jnp.tanh(y) - y)
        o_ref[...] = y.astype(o_ref.dtype)


def pallas_linear(x, w_t, b, tanh_mask, *, tn, tk):
    """x:(M,K) f32, w_t:(K,N) (bf16 or f32), b/mask:(N,) f32 -> (M,N) f32."""
    M, K = x.shape
    K2, N = w_t.shape
    assert K == K2 and N % tn == 0 and K % tk == 0
    grid = (N // tn, K // tk)
    return pl.pallas_call(
        _linear_kernel,
        out_shape=jax.ShapeDtypeStruct((M, N), jnp.float32),
        grid=grid,
        in_specs=[
            pl.BlockSpec((M, tk), lambda j, kk: (0, kk)),
            pl.BlockSpec((tk, tn), lambda j, kk: (kk, j)),
            pl.BlockSpec((1, tn), lambda j, kk: (0, j)),
            pl.BlockSpec((1, tn), lambda j, kk: (0, j)),
        ],
        out_specs=pl.BlockSpec((M, tn), lambda j, kk: (0, j)),
        scratch_shapes=[pltpu.VMEM((M, tn), jnp.float32)],
        compiler_params=pltpu.CompilerParams(
            dimension_semantics=("parallel", "arbitrary")),
    )(x, w_t, b.reshape(1, N), tanh_mask.reshape(1, N))


# ----------------------------------------------------------------------------
# Kernel 2: one full nn.TransformerEncoderLayer (post-norm, relu, dropout=0).
# Input x is the (seq*npos, d_model) flattening of the (S=B, N=64, E=64) tensor
# (rows s-major).  Attention is over the first axis (size seq=B).
# ----------------------------------------------------------------------------
def _layer_norm(x, gamma, beta):
    mean = jnp.mean(x, axis=-1, keepdims=True)
    c = x - mean
    var = jnp.mean(c * c, axis=-1, keepdims=True)
    return c * jax.lax.rsqrt(var + LN_EPS) * gamma + beta


def _encoder_layer_kernel(x_ref, wqkv_ref, bqkv_ref, wo_ref, bo_ref,
                          ln1g_ref, ln1b_ref, w1_ref, b1_ref, w2_ref, b2_ref,
                          ln2g_ref, ln2b_ref, p_ref, pt_ref, o_ref,
                          *, seq, npos, emb, heads):
    hd = emb // heads
    scale = 1.0 / math.sqrt(hd)

    x = x_ref[...].astype(jnp.float32)                       # (seq*npos, emb)

    # Fused QKV projection: one lane-dense (., 3*emb) matmul instead of three.
    qkv = jnp.dot(x, wqkv_ref[...], preferred_element_type=jnp.float32)
    qkv = qkv + bqkv_ref[...]
    q = qkv[:, :emb]
    k = qkv[:, emb:2 * emb]
    v = qkv[:, 2 * emb:]

    # P (emb, heads): per-head sum pooling; PT (heads, emb): per-head broadcast.
    # Both are precomputed constants passed in (hoisted out of the kernel).
    def tile_rows(block):                                    # (npos,emb)->(seq*npos,emb)
        if seq == 1:
            return block
        return jnp.concatenate([block] * seq, axis=0)

    # Scores: loop over the key index t only (O(B) unroll); all (s, n) query
    # rows are processed at once, so every matmul / VPU op has M = seq*npos.
    scores = []                                              # each (seq*npos, heads)
    for t in range(seq):
        k_rep = tile_rows(k[t * npos:(t + 1) * npos, :])
        scores.append(jnp.dot(q * k_rep, p_ref[...],
                              preferred_element_type=jnp.float32) * scale)

    m = scores[0]
    for t in range(1, seq):
        m = jnp.maximum(m, scores[t])
    exps = [jnp.exp(s_t - m) for s_t in scores]
    denom = exps[0]
    for t in range(1, seq):
        denom = denom + exps[t]
    inv = pl.reciprocal(denom, approx=True)                  # EUP slot, ~free

    ctx = jnp.zeros((seq * npos, emb), jnp.float32)
    for t in range(seq):
        w_t = exps[t] * inv                                  # (seq*npos, heads)
        w_full = jnp.dot(w_t, pt_ref[...], preferred_element_type=jnp.float32)
        v_rep = tile_rows(v[t * npos:(t + 1) * npos, :])
        ctx = ctx + w_full * v_rep

    attn_out = jnp.dot(ctx, wo_ref[...], preferred_element_type=jnp.float32)
    attn_out = attn_out + bo_ref[...]
    h1 = _layer_norm(x + attn_out, ln1g_ref[...], ln1b_ref[...])

    ff = jnp.dot(h1, w1_ref[...].astype(jnp.float32),
                 preferred_element_type=jnp.float32) + b1_ref[...]
    ff = jnp.maximum(ff, 0.0)
    ff = jnp.dot(ff, w2_ref[...].astype(jnp.float32),
                 preferred_element_type=jnp.float32) + b2_ref[...]
    out = _layer_norm(h1 + ff, ln2g_ref[...], ln2b_ref[...])
    o_ref[...] = out.astype(o_ref.dtype)


def pallas_encoder_layer(x2, p, seq):
    M, emb = x2.shape
    npos = M // seq
    args = [
        x2,
        p["wqkv_t"], p["bqkv"].reshape(1, -1),
        p["wo_t"], p["bo"].reshape(1, -1),
        p["ln1_g"].reshape(1, -1), p["ln1_b"].reshape(1, -1),
        p["w1_t"], p["b1"].reshape(1, -1),
        p["w2_t"], p["b2"].reshape(1, -1),
        p["ln2_g"].reshape(1, -1), p["ln2_b"].reshape(1, -1),
        p["head_P"], p["head_PT"],
    ]
    in_specs = [pl.BlockSpec(a.shape, lambda i: (0, 0)) for a in args]
    return pl.pallas_call(
        functools.partial(_encoder_layer_kernel, seq=seq, npos=npos,
                          emb=emb, heads=N_HEADS),
        out_shape=jax.ShapeDtypeStruct((M, emb), jnp.float32),
        grid=(1,),
        in_specs=in_specs,
        out_specs=pl.BlockSpec((M, emb), lambda i: (0, 0)),
    )(*args)


# ----------------------------------------------------------------------------
# Parameter init (deterministic, torch-Linear-style uniform init).
# ----------------------------------------------------------------------------
def init_params(key):
    keys = jax.random.split(key, 16)

    def lin(k, fan_in, fan_out):
        k1, k2 = jax.random.split(k)
        bound = 1.0 / math.sqrt(fan_in)
        w = jax.random.uniform(k1, (fan_out, fan_in), jnp.float32, -bound, bound)
        b = jax.random.uniform(k2, (fan_out,), jnp.float32, -bound, bound)
        return w, b

    p = {}

    # pre_transform (405 -> 4096): contraction zero-padded to 512, bf16 weight.
    w, b = lin(keys[0], PRE_IN, MATRIX_SIZE)
    w_t = jnp.pad(w.T, ((0, PRE_IN_PAD - PRE_IN), (0, 0)))
    p["pre_w_t"] = w_t.astype(jnp.bfloat16)
    p["pre_b"] = b
    p["pre_mask"] = jnp.ones((MATRIX_SIZE,), jnp.float32)     # tanh everywhere

    # encoder: fused in_proj (E -> 3E), exactly torch MultiheadAttention layout.
    w_in, b_in = lin(keys[1], D_MODEL, 3 * D_MODEL)
    p["wqkv_t"] = w_in.T                                      # (E, 3E) f32 (small)
    p["bqkv"] = b_in
    w, b = lin(keys[2], D_MODEL, D_MODEL)
    p["wo_t"], p["bo"] = w.T, b
    p["ln1_g"] = jnp.ones((D_MODEL,), jnp.float32)
    p["ln1_b"] = jnp.zeros((D_MODEL,), jnp.float32)
    w, b = lin(keys[3], D_MODEL, FFN_DIM)
    p["w1_t"], p["b1"] = w.T.astype(jnp.bfloat16), b
    w, b = lin(keys[4], FFN_DIM, D_MODEL)
    p["w2_t"], p["b2"] = w.T.astype(jnp.bfloat16), b
    p["ln2_g"] = jnp.ones((D_MODEL,), jnp.float32)
    p["ln2_b"] = jnp.zeros((D_MODEL,), jnp.float32)

    # per-head one-hot pooling / broadcast matrices (hoisted out of the kernel).
    e_idx = np.arange(D_MODEL) // HEAD_DIM
    P = (e_idx[:, None] == np.arange(N_HEADS)[None, :]).astype(np.float32)
    p["head_P"] = jnp.asarray(P)                              # (E, H)
    p["head_PT"] = jnp.asarray(P.T)                           # (H, E)

    # Four output heads fused into one lane-dense (4096, 256) bf16 matmul:
    # cols [0:214) action, [214:232) discard, [232:242) noble, [242:246) memory.
    w0, b0 = lin(keys[5], MATRIX_SIZE, ACTION_SIZE)
    w1, b1 = lin(keys[6], MATRIX_SIZE, DISCARD_SIZE)
    w2, b2 = lin(keys[7], MATRIX_SIZE, NOBLE_SIZE)
    wm, bm = lin(keys[8], MATRIX_SIZE, MEMORY_SIZE)
    w_heads = jnp.concatenate([w0.T, w1.T, w2.T, wm.T], axis=1)        # (4096, 246)
    w_heads = jnp.pad(w_heads, ((0, 0), (0, HEADS_PAD - HEADS_TOTAL)))
    p["heads_w_t"] = w_heads.astype(jnp.bfloat16)
    p["heads_b"] = jnp.pad(jnp.concatenate([b0, b1, b2, bm]),
                           (0, HEADS_PAD - HEADS_TOTAL))
    p["heads_mask"] = jnp.zeros((HEADS_PAD,), jnp.float32).at[
        MEM_COL:MEM_COL + MEMORY_SIZE].set(1.0)               # tanh on memory cols only
    return p


# ----------------------------------------------------------------------------
# TransformerNet.forward (aux is accepted but unused, exactly as in the module).
# ----------------------------------------------------------------------------
def transformer_net_forward(params, inp, aux=None, memory=None):
    del aux  # TransformerNet.forward never uses `aux`
    B = inp.shape[0]
    if memory is None:
        memory = jnp.zeros((B, MEMORY_SIZE), jnp.float32)
    aug = jnp.concatenate([inp.astype(jnp.float32), memory.astype(jnp.float32)], axis=1)
    aug = jnp.pad(aug, ((0, 0), (0, PRE_IN_PAD - PRE_IN)))    # aligned K = 512

    # pre_transform + tanh, tiled over the 4096-wide output for weight pipelining
    # (and megacore on the "parallel" N axis).
    feat = pallas_linear(aug, params["pre_w_t"], params["pre_b"],
                         params["pre_mask"], tn=1024, tk=PRE_IN_PAD)

    # (B, 64, 64) seen by torch as (S=B, N=64, E=64); flatten to 2-D (s-major rows).
    x2 = feat.reshape(B * SEQ_LEN, D_MODEL)
    y2 = pallas_encoder_layer(x2, params, seq=B)
    flat = y2.reshape(B, MATRIX_SIZE)

    # fused output heads: one (B,4096)@(4096,256) matmul, K-tiled for pipelining;
    # tanh applied in-kernel to the memory columns only.  Split in the wrapper.
    fused = pallas_linear(flat, params["heads_w_t"], params["heads_b"],
                          params["heads_mask"], tn=HEADS_PAD, tk=1024)
    action = fused[:, :ACTION_SIZE]
    discard = fused[:, ACTION_SIZE:ACTION_SIZE + DISCARD_SIZE]
    noble = fused[:, ACTION_SIZE + DISCARD_SIZE:MEM_COL]
    mem = fused[:, MEM_COL:MEM_COL + MEMORY_SIZE]
    return action, discard, noble, mem


# ----------------------------------------------------------------------------
# Pure-JAX reference (independent einsum formulation, same params).
# ----------------------------------------------------------------------------
def reference_forward(params, inp, memory):
    f32 = lambda a: a.astype(jnp.float32)
    aug = jnp.concatenate([inp, memory], axis=1)
    aug = jnp.pad(aug, ((0, 0), (0, PRE_IN_PAD - PRE_IN)))
    feat = jnp.tanh(aug @ f32(params["pre_w_t"]) + params["pre_b"])

    B = inp.shape[0]
    h = feat.reshape(B, SEQ_LEN, D_MODEL)                     # (S, N, E)
    qkv = jnp.einsum("sne,ef->snf", h, f32(params["wqkv_t"])) + params["bqkv"]
    q = qkv[..., :D_MODEL].reshape(B, SEQ_LEN, N_HEADS, HEAD_DIM)
    k = qkv[..., D_MODEL:2 * D_MODEL].reshape(B, SEQ_LEN, N_HEADS, HEAD_DIM)
    v = qkv[..., 2 * D_MODEL:].reshape(B, SEQ_LEN, N_HEADS, HEAD_DIM)
    scores = jnp.einsum("snhd,tnhd->nhst", q, k) / math.sqrt(HEAD_DIM)
    attn = jax.nn.softmax(scores, axis=-1)
    ctx = jnp.einsum("nhst,tnhd->snhd", attn, v).reshape(B, SEQ_LEN, D_MODEL)
    out = jnp.einsum("sne,ef->snf", ctx, params["wo_t"]) + params["bo"]

    def ln(x, g, b):
        m = jnp.mean(x, -1, keepdims=True)
        c = x - m
        var = jnp.mean(c * c, -1, keepdims=True)
        return c * jax.lax.rsqrt(var + LN_EPS) * g + b

    h1 = ln(h + out, params["ln1_g"], params["ln1_b"])
    ff = jax.nn.relu(jnp.einsum("sne,ef->snf", h1, f32(params["w1_t"])) + params["b1"])
    ff = jnp.einsum("snf,fe->sne", ff, f32(params["w2_t"])) + params["b2"]
    h2 = ln(h1 + ff, params["ln2_g"], params["ln2_b"])

    flat = h2.reshape(B, MATRIX_SIZE)
    fused = flat @ f32(params["heads_w_t"]) + params["heads_b"]
    action = fused[:, :ACTION_SIZE]
    discard = fused[:, ACTION_SIZE:ACTION_SIZE + DISCARD_SIZE]
    noble = fused[:, ACTION_SIZE + DISCARD_SIZE:MEM_COL]
    mem = jnp.tanh(fused[:, MEM_COL:MEM_COL + MEMORY_SIZE])
    return action, discard, noble, mem


if __name__ == "__main__":
    key = jax.random.PRNGKey(0)
    pkey, xkey = jax.random.split(key)
    params = init_params(pkey)

    B = 2
    inp = jax.random.normal(xkey, (B, INPUT_SIZE), jnp.float32)
    memory = jnp.zeros((B, MEMORY_SIZE), jnp.float32)   # forward() with memory=None

    fwd = jax.jit(transformer_net_forward)
    action, discard, noble, mem = fwd(params, inp, None, memory)
    jax.block_until_ready((action, discard, noble, mem))

    assert action.shape == (B, ACTION_SIZE)
    assert discard.shape == (B, DISCARD_SIZE)
    assert noble.shape == (B, NOBLE_SIZE)
    assert mem.shape == (B, MEMORY_SIZE)

    # numerical sanity check against the pure-JAX reference
    ra, rd, rn, rm = jax.jit(reference_forward)(params, inp, memory)
    for got, ref in ((action, ra), (discard, rd), (noble, rn), (mem, rm)):
        np.testing.assert_allclose(np.asarray(got), np.asarray(ref),
                                   rtol=2e-2, atol=2e-2)

    print("KERNEL_OK")
</pallas_src>

<mosaic_0001>
module attributes {stable_mosaic.version = 11 : i64} {
  func.func @_linear_kernel(%arg0: i32, %arg1: i32, %arg2: memref<2x512xf32, #tpu.memory_space<vmem>>, %arg3: memref<512x1024xbf16, #tpu.memory_space<vmem>>, %arg4: memref<1x1024xf32, #tpu.memory_space<vmem>>, %arg5: memref<1x1024xf32, #tpu.memory_space<vmem>>, %arg6: memref<2x1024xf32, #tpu.memory_space<vmem>>, %arg7: memref<2x1024xf32, #tpu.memory_space<vmem>>) attributes {dimension_semantics = [#tpu.dimension_semantics<parallel>, #tpu.dimension_semantics<arbitrary>], iteration_bounds = array<i64: 4, 1>, scalar_prefetch = 0 : i64, scratch_operands = 1 : i64, tpu.core_type = #tpu.core_type<tc>, window_params = [{transform_indices = @transform_0, window_bounds = array<i64: 2, 512>}, {transform_indices = @transform_1, window_bounds = array<i64: 512, 1024>}, {transform_indices = @transform_2, window_bounds = array<i64: 1, 1024>}, {transform_indices = @transform_3, window_bounds = array<i64: 1, 1024>}, {transform_indices = @transform_4, window_bounds = array<i64: 2, 1024>}]} {
    %c0_i32 = arith.constant 0 : i32
    %0 = arith.cmpi eq, %arg1, %c0_i32 : i32
    %1 = arith.extui %0 : i1 to i32
    %c0_i32_0 = arith.constant 0 : i32
    %2 = arith.cmpi ne, %1, %c0_i32_0 : i32
    scf.if %2 {
      %cst_10 = arith.constant 0.000000e+00 : f32
      %13 = vector.broadcast %cst_10 : f32 to vector<2x1024xf32>
      %c0_11 = arith.constant 0 : index
      %c0_12 = arith.constant 0 : index
      %14 = vector.load %arg7[%c0_11, %c0_12] : memref<2x1024xf32, #tpu.memory_space<vmem>>, vector<2x1024xf32>
      tpu.vector_store %arg7[%c0_11, %c0_12], %13 {strides = array<i32>} : memref<2x1024xf32, #tpu.memory_space<vmem>>, vector<2x1024xf32>,
    } else {
    }
    %c0 = arith.constant 0 : index
    %c0_1 = arith.constant 0 : index
    %3 = vector.load %arg7[%c0, %c0_1] : memref<2x1024xf32, #tpu.memory_space<vmem>>, vector<2x1024xf32>
    %c0_2 = arith.constant 0 : index
    %c0_3 = arith.constant 0 : index
    %4 = vector.load %arg2[%c0_2, %c0_3] : memref<2x512xf32, #tpu.memory_space<vmem>>, vector<2x512xf32>
    %c0_4 = arith.constant 0 : index
    %c0_5 = arith.constant 0 : index
    %5 = vector.load %arg3[%c0_4, %c0_5] : memref<512x1024xbf16, #tpu.memory_space<vmem>>, vector<512x1024xbf16>
    %6 = arith.extf %5 : vector<512x1024xbf16> to vector<512x1024xf32>
    %cst = arith.constant dense<0.000000e+00> : vector<2x1024xf32>
    %7 = tpu.matmul %4, %6, %cst {dimension_numbers = #tpu.dot_dimension_numbers<[1], [0], [0], [1], [0, 0, 1, 1], [], []>} : vector<2x512xf32>, vector<512x1024xf32>, vector<2x1024xf32> -> vector<2x1024xf32>
    %8 = arith.addf %3, %7 : vector<2x1024xf32>
    %c0_6 = arith.constant 0 : index
    %c0_7 = arith.constant 0 : index
    %9 = vector.load %arg7[%c0_6, %c0_7] : memref<2x1024xf32, #tpu.memory_space<vmem>>, vector<2x1024xf32>
    tpu.vector_store %arg7[%c0_6, %c0_7], %8 {strides = array<i32>} : memref<2x1024xf32, #tpu.memory_space<vmem>>, vector<2x1024xf32>,
    %c0_i32_8 = arith.constant 0 : i32
    %10 = arith.cmpi eq, %arg1, %c0_i32_8 : i32
    %11 = arith.extui %10 : i1 to i32
    %c0_i32_9 = arith.constant 0 : i32
    %12 = arith.cmpi ne, %11, %c0_i32_9 : i32
    scf.if %12 {
      %c0_10 = arith.constant 0 : index
      %c0_11 = arith.constant 0 : index
      %13 = vector.load %arg7[%c0_10, %c0_11] : memref<2x1024xf32, #tpu.memory_space<vmem>>, vector<2x1024xf32>
      %c0_12 = arith.constant 0 : index
      %c0_13 = arith.constant 0 : index
      %14 = vector.load %arg4[%c0_12, %c0_13] : memref<1x1024xf32, #tpu.memory_space<vmem>>, vector<1x1024xf32>
      %15 = vector.broadcast %14 : vector<1x1024xf32> to vector<2x1024xf32>
      %16 = arith.addf %13, %15 : vector<2x1024xf32>
      %c0_14 = arith.constant 0 : index
      %c0_15 = arith.constant 0 : index
      %17 = vector.load %arg5[%c0_14, %c0_15] : memref<1x1024xf32, #tpu.memory_space<vmem>>, vector<1x1024xf32>
      %18 = math.tanh %16 : vector<2x1024xf32>
      %19 = arith.subf %18, %16 : vector<2x1024xf32>
      %20 = vector.broadcast %17 : vector<1x1024xf32> to vector<2x1024xf32>
      %21 = arith.mulf %20, %19 : vector<2x1024xf32>
      %22 = arith.addf %16, %21 : vector<2x1024xf32>
      %c0_16 = arith.constant 0 : index
      %c0_17 = arith.constant 0 : index
      %23 = vector.load %arg6[%c0_16, %c0_17] : memref<2x1024xf32, #tpu.memory_space<vmem>>, vector<2x1024xf32>
      tpu.vector_store %arg6[%c0_16, %c0_17], %22 {strides = array<i32>} : memref<2x1024xf32, #tpu.memory_space<vmem>>, vector<2x1024xf32>,
    } else {
    }
    return
  }
  func.func @transform_0(%arg0: i32, %arg1: i32) -> (i32, i32) {
    %c0_i32 = arith.constant 0 : i32
    %c0_i32_0 = arith.constant 0 : i32
    return %c0_i32, %arg1 : i32, i32
  }
  func.func @transform_1(%arg0: i32, %arg1: i32) -> (i32, i32) {
    %c0_i32 = arith.constant 0 : i32
    return %arg1, %arg0 : i32, i32
  }
  func.func @transform_2(%arg0: i32, %arg1: i32) -> (i32, i32) {
    %c0_i32 = arith.constant 0 : i32
    %c0_i32_0 = arith.constant 0 : i32
    return %c0_i32, %arg0 : i32, i32
  }
  func.func @transform_3(%arg0: i32, %arg1: i32) -> (i32, i32) {
    %c0_i32 = arith.constant 0 : i32
    %c0_i32_0 = arith.constant 0 : i32
    return %c0_i32, %arg0 : i32, i32
  }
  func.func @transform_4(%arg0: i32, %arg1: i32) -> (i32, i32) {
    %c0_i32 = arith.constant 0 : i32
    %c0_i32_0 = arith.constant 0 : i32
    return %c0_i32, %arg0 : i32, i32
  }
}

module attributes {stable_mosaic.version = 11 : i64} {
  func.func @_encoder_layer_kernel(%arg0: i32, %arg1: memref<128x64xf32, #tpu.memory_space<vmem>>, %arg2: memref<64x192xf32, #tpu.memory_space<vmem>>, %arg3: memref<1x192xf32, #tpu.memory_space<vmem>>, %arg4: memref<64x64xf32, #tpu.memory_space<vmem>>, %arg5: memref<1x64xf32, #tpu.memory_space<vmem>>, %arg6: memref<1x64xf32, #tpu.memory_space<vmem>>, %arg7: memref<1x64xf32, #tpu.memory_space<vmem>>, %arg8: memref<64x512xbf16, #tpu.memory_space<vmem>>, %arg9: memref<1x512xf32, #tpu.memory_space<vmem>>, %arg10: memref<512x64xbf16, #tpu.memory_space<vmem>>, %arg11: memref<1x64xf32, #tpu.memory_space<vmem>>, %arg12: memref<1x64xf32, #tpu.memory_space<vmem>>, %arg13: memref<1x64xf32, #tpu.memory_space<vmem>>, %arg14: memref<64x8xf32, #tpu.memory_space<vmem>>, %arg15: memref<8x64xf32, #tpu.memory_space<vmem>>, %arg16: memref<128x64xf32, #tpu.memory_space<vmem>>) attributes {dimension_semantics = [#tpu.dimension_semantics<arbitrary>], iteration_bounds = array<i64: 1>, scalar_prefetch = 0 : i64, scratch_operands = 0 : i64, tpu.core_type = #tpu.core_type<tc>, window_params = [{pipeline_mode = #tpu.pipeline_mode<synchronous>, transform_indices = @transform_0, window_bounds = array<i64: 128, 64>}, {pipeline_mode = #tpu.pipeline_mode<synchronous>, transform_indices = @transform_1, window_bounds = array<i64: 64, 192>}, {pipeline_mode = #tpu.pipeline_mode<synchronous>, transform_indices = @transform_2, window_bounds = array<i64: 1, 192>}, {pipeline_mode = #tpu.pipeline_mode<synchronous>, transform_indices = @transform_3, window_bounds = array<i64: 64, 64>}, {pipeline_mode = #tpu.pipeline_mode<synchronous>, transform_indices = @transform_4, window_bounds = array<i64: 1, 64>}, {pipeline_mode = #tpu.pipeline_mode<synchronous>, transform_indices = @transform_5, window_bounds = array<i64: 1, 64>}, {pipeline_mode = #tpu.pipeline_mode<synchronous>, transform_indices = @transform_6, window_bounds = array<i64: 1, 64>}, {pipeline_mode = #tpu.pipeline_mode<synchronous>, transform_indices = @transform_7, window_bounds = array<i64: 64, 512>}, {pipeline_mode = #tpu.pipeline_mode<synchronous>, transform_indices = @transform_8, window_bounds = array<i64: 1, 512>}, {pipeline_mode = #tpu.pipeline_mode<synchronous>, transform_indices = @transform_9, window_bounds = array<i64: 512, 64>}, {pipeline_mode = #tpu.pipeline_mode<synchronous>, transform_indices = @transform_10, window_bounds = array<i64: 1, 64>}, {pipeline_mode = #tpu.pipeline_mode<synchronous>, transform_indices = @transform_11, window_bounds = array<i64: 1, 64>}, {pipeline_mode = #tpu.pipeline_mode<synchronous>, transform_indices = @transform_12, window_bounds = array<i64: 1, 64>}, {pipeline_mode = #tpu.pipeline_mode<synchronous>, transform_indices = @transform_13, window_bounds = array<i64: 64, 8>}, {pipeline_mode = #tpu.pipeline_mode<synchronous>, transform_indices = @transform_14, window_bounds = array<i64: 8, 64>}, {pipeline_mode = #tpu.pipeline_mode<synchronous>, transform_indices = @transform_15, window_bounds = array<i64: 128, 64>}]} {
    %c0 = arith.constant 0 : index
    %c0_0 = arith.constant 0 : index
    %0 = vector.load %arg1[%c0, %c0_0] : memref<128x64xf32, #tpu.memory_space<vmem>>, vector<128x64xf32>
    %c0_1 = arith.constant 0 : index
    %c0_2 = arith.constant 0 : index
    %1 = vector.load %arg2[%c0_1, %c0_2] : memref<64x192xf32, #tpu.memory_space<vmem>>, vector<64x192xf32>
    %cst = arith.constant dense<0.000000e+00> : vector<128x192xf32>
    %2 = tpu.matmul %0, %1, %cst {dimension_numbers = #tpu.dot_dimension_numbers<[1], [0], [0], [1], [0, 0, 1, 1], [], []>} : vector<128x64xf32>, vector<64x192xf32>, vector<128x192xf32> -> vector<128x192xf32>
    %c0_3 = arith.constant 0 : index
    %c0_4 = arith.constant 0 : index
    %3 = vector.load %arg3[%c0_3, %c0_4] : memref<1x192xf32, #tpu.memory_space<vmem>>, vector<1x192xf32>
    %4 = vector.broadcast %3 : vector<1x192xf32> to vector<128x192xf32>
    %5 = arith.addf %2, %4 : vector<128x192xf32>
    %6 = vector.extract_strided_slice %5 {offsets = [0, 0], sizes = [128, 64], strides = [1, 1]} : vector<128x192xf32> to vector<128x64xf32>
    %7 = vector.extract_strided_slice %5 {offsets = [0, 64], sizes = [128, 64], strides = [1, 1]} : vector<128x192xf32> to vector<128x64xf32>
    %8 = vector.extract_strided_slice %5 {offsets = [0, 128], sizes = [128, 64], strides = [1, 1]} : vector<128x192xf32> to vector<128x64xf32>
    %9 = vector.extract_strided_slice %7 {offsets = [0, 0], sizes = [64, 64], strides = [1, 1]} : vector<128x64xf32> to vector<64x64xf32>
    %10 = tpu.concatenate %9, %9 in 0 : vector<64x64xf32>, vector<64x64xf32> -> vector<128x64xf32>
    %11 = arith.mulf %6, %10 : vector<128x64xf32>
    %c0_5 = arith.constant 0 : index
    %c0_6 = arith.constant 0 : index
    %12 = vector.load %arg14[%c0_5, %c0_6] : memref<64x8xf32, #tpu.memory_space<vmem>>, vector<64x8xf32>
    %cst_7 = arith.constant dense<0.000000e+00> : vector<128x8xf32>
    %13 = tpu.matmul %11, %12, %cst_7 {dimension_numbers = #tpu.dot_dimension_numbers<[1], [0], [0], [1], [0, 0, 1, 1], [], []>} : vector<128x64xf32>, vector<64x8xf32>, vector<128x8xf32> -> vector<128x8xf32>
    %cst_8 = arith.constant 0.353553385 : f32
    %14 = vector.broadcast %cst_8 : f32 to vector<128x8xf32>
    %15 = arith.mulf %13, %14 : vector<128x8xf32>
    %16 = vector.extract_strided_slice %7 {offsets = [64, 0], sizes = [64, 64], strides = [1, 1]} : vector<128x64xf32> to vector<64x64xf32>
    %17 = tpu.concatenate %16, %16 in 0 : vector<64x64xf32>, vector<64x64xf32> -> vector<128x64xf32>
    %18 = arith.mulf %6, %17 : vector<128x64xf32>
    %c0_9 = arith.constant 0 : index
    %c0_10 = arith.constant 0 : index
    %19 = vector.load %arg14[%c0_9, %c0_10] : memref<64x8xf32, #tpu.memory_space<vmem>>, vector<64x8xf32>
    %cst_11 = arith.constant dense<0.000000e+00> : vector<128x8xf32>
    %20 = tpu.matmul %18, %19, %cst_11 {dimension_numbers = #tpu.dot_dimension_numbers<[1], [0], [0], [1], [0, 0, 1, 1], [], []>} : vector<128x64xf32>, vector<64x8xf32>, vector<128x8xf32> -> vector<128x8xf32>
    %cst_12 = arith.constant 0.353553385 : f32
    %21 = vector.broadcast %cst_12 : f32 to vector<128x8xf32>
    %22 = arith.mulf %20, %21 : vector<128x8xf32>
    %23 = arith.maximumf %15, %22 : vector<128x8xf32>
    %24 = arith.subf %15, %23 : vector<128x8xf32>
    %25 = math.exp %24 : vector<128x8xf32>
    %26 = arith.subf %22, %23 : vector<128x8xf32>
    %27 = math.exp %26 : vector<128x8xf32>
    %28 = arith.addf %25, %27 : vector<128x8xf32>
    %29 = tpu.reciprocal %28 {approx = true} : vector<128x8xf32> -> vector<128x8xf32>
    %cst_13 = arith.constant 0.000000e+00 : f32
    %30 = vector.broadcast %cst_13 : f32 to vector<128x64xf32>
    %31 = arith.mulf %25, %29 : vector<128x8xf32>
    %c0_14 = arith.constant 0 : index
    %c0_15 = arith.constant 0 : index
    %32 = vector.load %arg15[%c0_14, %c0_15] : memref<8x64xf32, #tpu.memory_space<vmem>>, vector<8x64xf32>
    %cst_16 = arith.constant dense<0.000000e+00> : vector<128x64xf32>
    %33 = tpu.matmul %31, %32, %cst_16 {dimension_numbers = #tpu.dot_dimension_numbers<[1], [0], [0], [1], [0, 0, 1, 1], [], []>} : vector<128x8xf32>, vector<8x64xf32>, vector<128x64xf32> -> vector<128x64xf32>
    %34 = vector.extract_strided_slice %8 {offsets = [0, 0], sizes = [64, 64], strides = [1, 1]} : vector<128x64xf32> to vector<64x64xf32>
    %35 = tpu.concatenate %34, %34 in 0 : vector<64x64xf32>, vector<64x64xf32> -> vector<128x64xf32>
    %36 = arith.mulf %33, %35 : vector<128x64xf32>
    %37 = arith.addf %30, %36 : vector<128x64xf32>
    %38 = arith.mulf %27, %29 : vector<128x8xf32>
    %c0_17 = arith.constant 0 : index
    %c0_18 = arith.constant 0 : index
    %39 = vector.load %arg15[%c0_17, %c0_18] : memref<8x64xf32, #tpu.memory_space<vmem>>, vector<8x64xf32>
    %cst_19 = arith.constant dense<0.000000e+00> : vector<128x64xf32>
    %40 = tpu.matmul %38, %39, %cst_19 {dimension_numbers = #tpu.dot_dimension_numbers<[1], [0], [0], [1], [0, 0, 1, 1], [], []>} : vector<128x8xf32>, vector<8x64xf32>, vector<128x64xf32> -> vector<128x64xf32>
    %41 = vector.extract_strided_slice %8 {offsets = [64, 0], sizes = [64, 64], strides = [1, 1]} : vector<128x64xf32> to vector<64x64xf32>
    %42 = tpu.concatenate %41, %41 in 0 : vector<64x64xf32>, vector<64x64xf32> -> vector<128x64xf32>
    %43 = arith.mulf %40, %42 : vector<128x64xf32>
    %44 = arith.addf %37, %43 : vector<128x64xf32>
    %c0_20 = arith.constant 0 : index
    %c0_21 = arith.constant 0 : index
    %45 = vector.load %arg4[%c0_20, %c0_21] : memref<64x64xf32, #tpu.memory_space<vmem>>, vector<64x64xf32>
    %cst_22 = arith.constant dense<0.000000e+00> : vector<128x64xf32>
    %46 = tpu.matmul %44, %45, %cst_22 {dimension_numbers = #tpu.dot_dimension_numbers<[1], [0], [0], [1], [0, 0, 1, 1], [], []>} : vector<128x64xf32>, vector<64x64xf32>, vector<128x64xf32> -> vector<128x64xf32>
    %c0_23 = arith.constant 0 : index
    %c0_24 = arith.constant 0 : index
    %47 = vector.load %arg5[%c0_23, %c0_24] : memref<1x64xf32, #tpu.memory_space<vmem>>, vector<1x64xf32>
    %48 = vector.broadcast %47 : vector<1x64xf32> to vector<128x64xf32>
    %49 = arith.addf %46, %48 : vector<128x64xf32>
    %50 = arith.addf %0, %49 : vector<128x64xf32>
    %c0_25 = arith.constant 0 : index
    %c0_26 = arith.constant 0 : index
    %51 = vector.load %arg6[%c0_25, %c0_26] : memref<1x64xf32, #tpu.memory_space<vmem>>, vector<1x64xf32>
    %c0_27 = arith.constant 0 : index
    %c0_28 = arith.constant 0 : index
    %52 = vector.load %arg7[%c0_27, %c0_28] : memref<1x64xf32, #tpu.memory_space<vmem>>, vector<1x64xf32>
    %cst_29 = arith.constant dense<0.000000e+00> : vector<128xf32>
    %53 = vector.multi_reduction <add>, %50, %cst_29 [1] : vector<128x64xf32> to vector<128xf32>
    %54 = vector.shape_cast %53 : vector<128xf32> to vector<128x1xf32>
    %cst_30 = arith.constant 6.400000e+01 : f32
    %55 = vector.broadcast %cst_30 : f32 to vector<128x1xf32>
    %56 = arith.divf %54, %55 : vector<128x1xf32>
    %57 = vector.broadcast %56 : vector<128x1xf32> to vector<128x64xf32>
    %58 = arith.subf %50, %57 : vector<128x64xf32>
    %59 = arith.mulf %58, %58 : vector<128x64xf32>
    %cst_31 = arith.constant dense<0.000000e+00> : vector<128xf32>
    %60 = vector.multi_reduction <add>, %59, %cst_31 [1] : vector<128x64xf32> to vector<128xf32>
    %61 = vector.shape_cast %60 : vector<128xf32> to vector<128x1xf32>
    %cst_32 = arith.constant 6.400000e+01 : f32
    %62 = vector.broadcast %cst_32 : f32 to vector<128x1xf32>
    %63 = arith.divf %61, %62 : vector<128x1xf32>
    %cst_33 = arith.constant 9.99999974E-6 : f32
    %64 = vector.broadcast %cst_33 : f32 to vector<128x1xf32>
    %65 = arith.addf %63, %64 : vector<128x1xf32>
    %66 = math.rsqrt %65 : vector<128x1xf32>
    %67 = vector.broadcast %66 : vector<128x1xf32> to vector<128x64xf32>
    %68 = arith.mulf %58, %67 : vector<128x64xf32>
    %69 = vector.broadcast %51 : vector<1x64xf32> to vector<128x64xf32>
    %70 = arith.mulf %68, %69 : vector<128x64xf32>
    %71 = vector.broadcast %52 : vector<1x64xf32> to vector<128x64xf32>
    %72 = arith.addf %70, %71 : vector<128x64xf32>
    %c0_34 = arith.constant 0 : index
    %c0_35 = arith.constant 0 : index
    %73 = vector.load %arg8[%c0_34, %c0_35] : memref<64x512xbf16, #tpu.memory_space<vmem>>, vector<64x512xbf16>
    %74 = arith.extf %73 : vector<64x512xbf16> to vector<64x512xf32>
    %cst_36 = arith.constant dense<0.000000e+00> : vector<128x512xf32>
    %75 = tpu.matmul %72, %74, %cst_36 {dimension_numbers = #tpu.dot_dimension_numbers<[1], [0], [0], [1], [0, 0, 1, 1], [], []>} : vector<128x64xf32>, vector<64x512xf32>, vector<128x512xf32> -> vector<128x512xf32>
    %c0_37 = arith.constant 0 : index
    %c0_38 = arith.constant 0 : index
    %76 = vector.load %arg9[%c0_37, %c0_38] : memref<1x512xf32, #tpu.memory_space<vmem>>, vector<1x512xf32>
    %77 = vector.broadcast %76 : vector<1x512xf32> to vector<128x512xf32>
    %78 = arith.addf %75, %77 : vector<128x512xf32>
    %cst_39 = arith.constant 0.000000e+00 : f32
    %79 = vector.broadcast %cst_39 : f32 to vector<128x512xf32>
    %80 = arith.maximumf %78, %79 : vector<128x512xf32>
    %c0_40 = arith.constant 0 : index
    %c0_41 = arith.constant 0 : index
    %81 = vector.load %arg10[%c0_40, %c0_41] : memref<512x64xbf16, #tpu.memory_space<vmem>>, vector<512x64xbf16>
    %82 = arith.extf %81 : vector<512x64xbf16> to vector<512x64xf32>
    %cst_42 = arith.constant dense<0.000000e+00> : vector<128x64xf32>
    %83 = tpu.matmul %80, %82, %cst_42 {dimension_numbers = #tpu.dot_dimension_numbers<[1], [0], [0], [1], [0, 0, 1, 1], [], []>} : vector<128x512xf32>, vector<512x64xf32>, vector<128x64xf32> -> vector<128x64xf32>
    %c0_43 = arith.constant 0 : index
    %c0_44 = arith.constant 0 : index
    %84 = vector.load %arg11[%c0_43, %c0_44] : memref<1x64xf32, #tpu.memory_space<vmem>>, vector<1x64xf32>
    %85 = vector.broadcast %84 : vector<1x64xf32> to vector<128x64xf32>
    %86 = arith.addf %83, %85 : vector<128x64xf32>
    %87 = arith.addf %72, %86 : vector<128x64xf32>
    %c0_45 = arith.constant 0 : index
    %c0_46 = arith.constant 0 : index
    %88 = vector.load %arg12[%c0_45, %c0_46] : memref<1x64xf32, #tpu.memory_space<vmem>>, vector<1x64xf32>
    %c0_47 = arith.constant 0 : index
    %c0_48 = arith.constant 0 : index
    %89 = vector.load %arg13[%c0_47, %c0_48] : memref<1x64xf32, #tpu.memory_space<vmem>>, vector<1x64xf32>
    %cst_49 = arith.constant dense<0.000000e+00> : vector<128xf32>
    %90 = vector.multi_reduction <add>, %87, %cst_49 [1] : vector<128x64xf32> to vector<128xf32>
    %91 = vector.shape_cast %90 : vector<128xf32> to vector<128x1xf32>
    %cst_50 = arith.constant 6.400000e+01 : f32
    %92 = vector.broadcast %cst_50 : f32 to vector<128x1xf32>
    %93 = arith.divf %91, %92 : vector<128x1xf32>
    %94 = vector.broadcast %93 : vector<128x1xf32> to vector<128x64xf32>
    %95 = arith.subf %87, %94 : vector<128x64xf32>
    %96 = arith.mulf %95, %95 : vector<128x64xf32>
    %cst_51 = arith.constant dense<0.000000e+00> : vector<128xf32>
    %97 = vector.multi_reduction <add>, %96, %cst_51 [1] : vector<128x64xf32> to vector<128xf32>
    %98 = vector.shape_cast %97 : vector<128xf32> to vector<128x1xf32>
    %cst_52 = arith.constant 6.400000e+01 : f32
    %99 = vector.broadcast %cst_52 : f32 to vector<128x1xf32>
    %100 = arith.divf %98, %99 : vector<128x1xf32>
    %cst_53 = arith.constant 9.99999974E-6 : f32
    %101 = vector.broadcast %cst_53 : f32 to vector<128x1xf32>
    %102 = arith.addf %100, %101 : vector<128x1xf32>
    %103 = math.rsqrt %102 : vector<128x1xf32>
    %104 = vector.broadcast %103 : vector<128x1xf32> to vector<128x64xf32>
    %105 = arith.mulf %95, %104 : vector<128x64xf32>
    %106 = vector.broadcast %88 : vector<1x64xf32> to vector<128x64xf32>
    %107 = arith.mulf %105, %106 : vector<128x64xf32>
    %108 = vector.broadcast %89 : vector<1x64xf32> to vector<128x64xf32>
    %109 = arith.addf %107, %108 : vector<128x64xf32>
    %c0_54 = arith.constant 0 : index
    %c0_55 = arith.constant 0 : index
    %110 = vector.load %arg16[%c0_54, %c0_55] : memref<128x64xf32, #tpu.memory_space<vmem>>, vector<128x64xf32>
    tpu.vector_store %arg16[%c0_54, %c0_55], %109 {strides = array<i32>} : memref<128x64xf32, #tpu.memory_space<vmem>>, vector<128x64xf32>,
    return
  }
  func.func @transform_0(%arg0: i32) -> (i32, i32) {
    %c0_i32 = arith.constant 0 : i32
    %c0_i32_0 = arith.constant 0 : i32
    %c0_i32_1 = arith.constant 0 : i32
    return %c0_i32, %c0_i32_0 : i32, i32
  }
  func.func @transform_1(%arg0: i32) -> (i32, i32) {
    %c0_i32 = arith.constant 0 : i32
    %c0_i32_0 = arith.constant 0 : i32
    %c0_i32_1 = arith.constant 0 : i32
    return %c0_i32, %c0_i32_0 : i32, i32
  }
  func.func @transform_2(%arg0: i32) -> (i32, i32) {
    %c0_i32 = arith.constant 0 : i32
    %c0_i32_0 = arith.constant 0 : i32
    %c0_i32_1 = arith.constant 0 : i32
    return %c0_i32, %c0_i32_0 : i32, i32
  }
  func.func @transform_3(%arg0: i32) -> (i32, i32) {
    %c0_i32 = arith.constant 0 : i32
    %c0_i32_0 = arith.constant 0 : i32
    %c0_i32_1 = arith.constant 0 : i32
    return %c0_i32, %c0_i32_0 : i32, i32
  }
  func.func @transform_4(%arg0: i32) -> (i32, i32) {
    %c0_i32 = arith.constant 0 : i32
    %c0_i32_0 = arith.constant 0 : i32
    %c0_i32_1 = arith.constant 0 : i32
    return %c0_i32, %c0_i32_0 : i32, i32
  }
  func.func @transform_5(%arg0: i32) -> (i32, i32) {
    %c0_i32 = arith.constant 0 : i32
    %c0_i32_0 = arith.constant 0 : i32
    %c0_i32_1 = arith.constant 0 : i32
    return %c0_i32, %c0_i32_0 : i32, i32
  }
  func.func @transform_6(%arg0: i32) -> (i32, i32) {
    %c0_i32 = arith.constant 0 : i32
    %c0_i32_0 = arith.constant 0 : i32
    %c0_i32_1 = arith.constant 0 : i32
    return %c0_i32, %c0_i32_0 : i32, i32
  }
  func.func @transform_7(%arg0: i32) -> (i32, i32) {
    %c0_i32 = arith.constant 0 : i32
    %c0_i32_0 = arith.constant 0 : i32
    %c0_i32_1 = arith.constant 0 : i32
    return %c0_i32, %c0_i32_0 : i32, i32
  }
  func.func @transform_8(%arg0: i32) -> (i32, i32) {
    %c0_i32 = arith.constant 0 : i32
    %c0_i32_0 = arith.constant 0 : i32
    %c0_i32_1 = arith.constant 0 : i32
    return %c0_i32, %c0_i32_0 : i32, i32
  }
  func.func @transform_9(%arg0: i32) -> (i32, i32) {
    %c0_i32 = arith.constant 0 : i32
    %c0_i32_0 = arith.constant 0 : i32
    %c0_i32_1 = arith.constant 0 : i32
    return %c0_i32, %c0_i32_0 : i32, i32
  }
  func.func @transform_10(%arg0: i32) -> (i32, i32) {
    %c0_i32 = arith.constant 0 : i32
    %c0_i32_0 = arith.constant 0 : i32
    %c0_i32_1 = arith.constant 0 : i32
    return %c0_i32, %c0_i32_0 : i32, i32
  }
  func.func @transform_11(%arg0: i32) -> (i32, i32) {
    %c0_i32 = arith.constant 0 : i32
    %c0_i32_0 = arith.constant 0 : i32
    %c0_i32_1 = arith.constant 0 : i32
    return %c0_i32, %c0_i32_0 : i32, i32
  }
  func.func @transform_12(%arg0: i32) -> (i32, i32) {
    %c0_i32 = arith.constant 0 : i32
    %c0_i32_0 = arith.constant 0 : i32
    %c0_i32_1 = arith.constant 0 : i32
    return %c0_i32, %c0_i32_0 : i32, i32
  }
  func.func @transform_13(%arg0: i32) -> (i32, i32) {
    %c0_i32 = arith.constant 0 : i32
    %c0_i32_0 = arith.constant 0 : i32
    %c0_i32_1 = arith.constant 0 : i32
    return %c0_i32, %c0_i32_0 : i32, i32
  }
  func.func @transform_14(%arg0: i32) -> (i32, i32) {
    %c0_i32 = arith.constant 0 : i32
    %c0_i32_0 = arith.constant 0 : i32
    %c0_i32_1 = arith.constant 0 : i32
    return %c0_i32, %c0_i32_0 : i32, i32
  }
  func.func @transform_15(%arg0: i32) -> (i32, i32) {
    %c0_i32 = arith.constant 0 : i32
    %c0_i32_0 = arith.constant 0 : i32
    %c0_i32_1 = arith.constant 0 : i32
    return %c0_i32, %c0_i32_0 : i32, i32
  }
}

module attributes {stable_mosaic.version = 11 : i64} {
  func.func @_linear_kernel(%arg0: i32, %arg1: i32, %arg2: memref<2x1024xf32, #tpu.memory_space<vmem>>, %arg3: memref<1024x256xbf16, #tpu.memory_space<vmem>>, %arg4: memref<1x256xf32, #tpu.memory_space<vmem>>, %arg5: memref<1x256xf32, #tpu.memory_space<vmem>>, %arg6: memref<2x256xf32, #tpu.memory_space<vmem>>, %arg7: memref<2x256xf32, #tpu.memory_space<vmem>>) attributes {dimension_semantics = [#tpu.dimension_semantics<parallel>, #tpu.dimension_semantics<arbitrary>], iteration_bounds = array<i64: 1, 4>, scalar_prefetch = 0 : i64, scratch_operands = 1 : i64, tpu.core_type = #tpu.core_type<tc>, window_params = [{transform_indices = @transform_0, window_bounds = array<i64: 2, 1024>}, {transform_indices = @transform_1, window_bounds = array<i64: 1024, 256>}, {transform_indices = @transform_2, window_bounds = array<i64: 1, 256>}, {transform_indices = @transform_3, window_bounds = array<i64: 1, 256>}, {transform_indices = @transform_4, window_bounds = array<i64: 2, 256>}]} {
    %c0_i32 = arith.constant 0 : i32
    %0 = arith.cmpi eq, %arg1, %c0_i32 : i32
    %1 = arith.extui %0 : i1 to i32
    %c0_i32_0 = arith.constant 0 : i32
    %2 = arith.cmpi ne, %1, %c0_i32_0 : i32
    scf.if %2 {
      %cst_9 = arith.constant 0.000000e+00 : f32
      %13 = vector.broadcast %cst_9 : f32 to vector<2x256xf32>
      %c0_10 = arith.constant 0 : index
      %c0_11 = arith.constant 0 : index
      %14 = vector.load %arg7[%c0_10, %c0_11] : memref<2x256xf32, #tpu.memory_space<vmem>>, vector<2x256xf32>
      tpu.vector_store %arg7[%c0_10, %c0_11], %13 {strides = array<i32>} : memref<2x256xf32, #tpu.memory_space<vmem>>, vector<2x256xf32>,
    } else {
    }
    %c0 = arith.constant 0 : index
    %c0_1 = arith.constant 0 : index
    %3 = vector.load %arg7[%c0, %c0_1] : memref<2x256xf32, #tpu.memory_space<vmem>>, vector<2x256xf32>
    %c0_2 = arith.constant 0 : index
    %c0_3 = arith.constant 0 : index
    %4 = vector.load %arg2[%c0_2, %c0_3] : memref<2x1024xf32, #tpu.memory_space<vmem>>, vector<2x1024xf32>
    %c0_4 = arith.constant 0 : index
    %c0_5 = arith.constant 0 : index
    %5 = vector.load %arg3[%c0_4, %c0_5] : memref<1024x256xbf16, #tpu.memory_space<vmem>>, vector<1024x256xbf16>
    %6 = arith.extf %5 : vector<1024x256xbf16> to vector<1024x256xf32>
    %cst = arith.constant dense<0.000000e+00> : vector<2x256xf32>
    %7 = tpu.matmul %4, %6, %cst {dimension_numbers = #tpu.dot_dimension_numbers<[1], [0], [0], [1], [0, 0, 1, 1], [], []>} : vector<2x1024xf32>, vector<1024x256xf32>, vector<2x256xf32> -> vector<2x256xf32>
    %8 = arith.addf %3, %7 : vector<2x256xf32>
    %c0_6 = arith.constant 0 : index
    %c0_7 = arith.constant 0 : index
    %9 = vector.load %arg7[%c0_6, %c0_7] : memref<2x256xf32, #tpu.memory_space<vmem>>, vector<2x256xf32>
    tpu.vector_store %arg7[%c0_6, %c0_7], %8 {strides = array<i32>} : memref<2x256xf32, #tpu.memory_space<vmem>>, vector<2x256xf32>,
    %c3_i32 = arith.constant 3 : i32
    %10 = arith.cmpi eq, %arg1, %c3_i32 : i32
    %11 = arith.extui %10 : i1 to i32
    %c0_i32_8 = arith.constant 0 : i32
    %12 = arith.cmpi ne, %11, %c0_i32_8 : i32
    scf.if %12 {
      %c0_9 = arith.constant 0 : index
      %c0_10 = arith.constant 0 : index
      %13 = vector.load %arg7[%c0_9, %c0_10] : memref<2x256xf32, #tpu.memory_space<vmem>>, vector<2x256xf32>
      %c0_11 = arith.constant 0 : index
      %c0_12 = arith.constant 0 : index
      %14 = vector.load %arg4[%c0_11, %c0_12] : memref<1x256xf32, #tpu.memory_space<vmem>>, vector<1x256xf32>
      %15 = vector.broadcast %14 : vector<1x256xf32> to vector<2x256xf32>
      %16 = arith.addf %13, %15 : vector<2x256xf32>
      %c0_13 = arith.constant 0 : index
      %c0_14 = arith.constant 0 : index
      %17 = vector.load %arg5[%c0_13, %c0_14] : memref<1x256xf32, #tpu.memory_space<vmem>>, vector<1x256xf32>
      %18 = math.tanh %16 : vector<2x256xf32>
      %19 = arith.subf %18, %16 : vector<2x256xf32>
      %20 = vector.broadcast %17 : vector<1x256xf32> to vector<2x256xf32>
      %21 = arith.mulf %20, %19 : vector<2x256xf32>
      %22 = arith.addf %16, %21 : vector<2x256xf32>
      %c0_15 = arith.constant 0 : index
      %c0_16 = arith.constant 0 : index
      %23 = vector.load %arg6[%c0_15, %c0_16] : memref<2x256xf32, #tpu.memory_space<vmem>>, vector<2x256xf32>
      tpu.vector_store %arg6[%c0_15, %c0_16], %22 {strides = array<i32>} : memref<2x256xf32, #tpu.memory_space<vmem>>, vector<2x256xf32>,
    } else {
    }
    return
  }
  func.func @transform_0(%arg0: i32, %arg1: i32) -> (i32, i32) {
    %c0_i32 = arith.constant 0 : i32
    %c0_i32_0 = arith.constant 0 : i32
    return %c0_i32, %arg1 : i32, i32
  }
  func.func @transform_1(%arg0: i32, %arg1: i32) -> (i32, i32) {
    %c0_i32 = arith.constant 0 : i32
    return %arg1, %arg0 : i32, i32
  }
  func.func @transform_2(%arg0: i32, %arg1: i32) -> (i32, i32) {
    %c0_i32 = arith.constant 0 : i32
    %c0_i32_0 = arith.constant 0 : i32
    return %c0_i32, %arg0 : i32, i32
  }
  func.func @transform_3(%arg0: i32, %arg1: i32) -> (i32, i32) {
    %c0_i32 = arith.constant 0 : i32
    %c0_i32_0 = arith.constant 0 : i32
    return %c0_i32, %arg0 : i32, i32
  }
  func.func @transform_4(%arg0: i32, %arg1: i32) -> (i32, i32) {
    %c0_i32 = arith.constant 0 : i32
    %c0_i32_0 = arith.constant 0 : i32
    return %c0_i32, %arg0 : i32, i32
  }
}

</mosaic_0001>

<llo_original>
// kernel: transformer_net_forward.3
$region0: #{transformer_net_forward.3}
  #allocation0 [shape = 'u32[]', space=smem, size = 0x4, offset = 0x4, fixed_abs, tag = 'smem constant byte address 0x4 - core index']
  #allocation1 [shape = 'u32[144,128]{1,0:T(1,128)}', space=vmem, size = 0x12000, scoped, tag = 'internal scratch']
  #allocation2 [shape = 'f32[2,1024]{1,0:T(2,128)}', space=vmem, size = 0x2000, scoped, tag = 'scratch operand']
  %s0 = inlined_call_operand.vmem [shape: f32[2,512], index: 0, kind: input, shape index: {}]
  %s1 = inlined_call_operand.hbm [shape: bf16[512,4096], index: 1, kind: input, shape index: {}]
  %s2 = inlined_call_operand.hbm [shape: f32[1,4096], index: 2, kind: input, shape index: {}]
  %s3 = inlined_call_operand.hbm [shape: f32[1,4096], index: 3, kind: input, shape index: {}]
  %s4 = inlined_call_operand.vmem [shape: f32[2,4096], index: 4, kind: output, shape index: {}]
  %s5 = sld [smem:[#allocation0]]
  $region69: #{transformer_net_forward.3} parent=0
    _
  %s7 = ssub.s32 1, %s5
  %s8 = scalar_select 0, %s7, %s5
  $region1: #{transformer_net_forward.3} parent=0
    #allocation3 [shape = 'u8[2097152]{0}', space=vmem, size = 0x200000, scoped, tag = 'input window, operand 1']
    #allocation4 [shape = 's32[2]{0}', space=sflag, size = 0x8, scoped, tag = 'scoped memory for transformer_net_forward.3']
    #allocation5 [shape = 'u8[8192]{0}', space=vmem, size = 0x2000, scoped, tag = 'input window, operand 2']
    #allocation6 [shape = 's32[2]{0}', space=sflag, size = 0x8, scoped, tag = 'scoped memory for transformer_net_forward.3']
    #allocation7 [shape = 'u8[8192]{0}', space=vmem, size = 0x2000, scoped, tag = 'input window, operand 3']
    %9 = vsyncpa [#allocation4], 0
    %s10 = scalar_lea.sflag [#allocation4], 1
    %11 = vsyncpa %s10, 0
    %12 = vsyncpa [#allocation6], 0
    %s13 = scalar_lea.sflag [#allocation6], 1
    %14 = vsyncpa %s13, 0
    loop: start=0, step=1, limit=6
    $region2: #{transformer_net_forward.3} parent=1 // loop_pre_header
      _
    $region3: #{transformer_net_forward.3} parent=1 // loop_header
      %s16 = sphi 0, %s20
      %p17 = scmp.ge.s32.totalorder %s16, 6
      %s23 = sphi 0, %s35
      %s24 = sphi 0, %s31
      %s25 = sphi 0, %s23
      %s26 = sphi 0, %s24
      %s27 = sphi 0, %s25
      %s28 = sphi 0, %s26
      %s38 = sphi 0, %s40
      %s41 = sphi 0, %s38
      %s42 = sphi 0, %s41
      %s58 = sphi 0, %s42
      %s66 = sphi 0, %s68
      %s69 = sphi 0, %s66
      %s70 = sphi 0, %s69
      %s86 = sphi 0, %s70
      %s92 = sphi 0, %s94
      %s95 = sphi 0, %s92
      %s96 = sphi 0, %s95
      %s112 = sphi 0, %s96
      %s118 = sphi 0, %s120
      %s121 = sphi 0, %s118
      %s122 = sphi 0, %s121
      %s138 = sphi 0, %s122
      %s144 = sphi 0, %s146
      %s147 = sphi 0, %s144
      %s148 = sphi 0, %s147
      %s164 = sphi 0, %s148
    $region4: #{transformer_net_forward.3} parent=1 // loop_header_branch
      %19 = sbr.rel (%p17) target = $region8
    $region5: #{transformer_net_forward.3} parent=1 // loop_body
      %s21 = ssub.s32 %s16, 1
      %s22 = ssub.s32 %s16, 2
      %s29 = sadd.s32 1, %s24
      %p30 = scmp.ge.s32.totalorder %s29, 1
      %s31 = scalar_select %p30, 0, %s29
      %s32 = sadd.s32 1, %s23
      %s33 = scalar_select %p30, %s32, %s23
      %p34 = scmp.ge.s32.totalorder %s33, 4
      %s35 = scalar_select %p34, 0, %s33
      %s36 = ssub.s32 %s24, %s31
      %p37 = scmp.eq.s32.totalorder %s36, 0
      %s39 = sadd.s32 %s38, 1
      %s40 = scalar_select %p37, %s38, %s39
      %p43 = pneg %p37
      %p44 = scmp.eq.s32.totalorder %s16, 3
      %p45 = por %p43, %p44
      %p46 = scmp.ne.s32.totalorder %s38, %s41
      %p47 = scmp.eq.s32.totalorder %s16, 0
      %p48 = por %p46, %p47
      %p49 = scmp.ne.s32.totalorder %s38, %s41
      %p50 = scmp.eq.s32.totalorder %s21, 3
      %p51 = por %p49, %p50
      %p52 = scmp.ne.s32.totalorder %s41, %s42
      %p53 = scmp.eq.s32.totalorder %s21, 0
      %p54 = por %p52, %p53
      %p55 = scmp.ne.s32.totalorder %s41, %s42
      %p56 = scmp.eq.s32.totalorder %s22, 3
      %p57 = por %p55, %p56
      %p59 = scmp.ne.s32.totalorder %s42, %s58
      %p60 = scmp.eq.s32.totalorder %s22, 0
      %p61 = por %p59, %p60
      %s62 = ssub.s32 %s24, %s31
      %s63 = ssub.s32 %s23, %s35
      %s64 = sor.u32 %s62, %s63
      %p65 = scmp.eq.s32.totalorder %s64, 0
      %s67 = sadd.s32 %s66, 1
      %s68 = scalar_select %p65, %s66, %s67
      %p71 = pneg %p65
      %p72 = scmp.eq.s32.totalorder %s16, 3
      %p73 = por %p71, %p72
      %p74 = scmp.ne.s32.totalorder %s66, %s69
      %p75 = scmp.eq.s32.totalorder %s16, 0
      %p76 = por %p74, %p75
      %p77 = scmp.ne.s32.totalorder %s66, %s69
      %p78 = scmp.eq.s32.totalorder %s21, 3
      %p79 = por %p77, %p78
      %p80 = scmp.ne.s32.totalorder %s69, %s70
      %p81 = scmp.eq.s32.totalorder %s21, 0
      %p82 = por %p80, %p81
      %p83 = scmp.ne.s32.totalorder %s69, %s70
      %p84 = scmp.eq.s32.totalorder %s22, 3
      %p85 = por %p83, %p84
      %p87 = scmp.ne.s32.totalorder %s70, %s86
      %p88 = scmp.eq.s32.totalorder %s22, 0
      %p89 = por %p87, %p88
      %s90 = ssub.s32 %s23, %s35
      %p91 = scmp.eq.s32.totalorder %s90, 0
      %s93 = sadd.s32 %s92, 1
      %s94 = scalar_select %p91, %s92, %s93
      %p97 = pneg %p91
      %p98 = scmp.eq.s32.totalorder %s16, 3
      %p99 = por %p97, %p98
      %p100 = scmp.ne.s32.totalorder %s92, %s95
      %p101 = scmp.eq.s32.totalorder %s16, 0
      %p102 = por %p100, %p101
      %p103 = scmp.ne.s32.totalorder %s92, %s95
      %p104 = scmp.eq.s32.totalorder %s21, 3
      %p105 = por %p103, %p104
      %p106 = scmp.ne.s32.totalorder %s95, %s96
      %p107 = scmp.eq.s32.totalorder %s21, 0
      %p108 = por %p106, %p107
      %p109 = scmp.ne.s32.totalorder %s95, %s96
      %p110 = scmp.eq.s32.totalorder %s22, 3
      %p111 = por %p109, %p110
      %p113 = scmp.ne.s32.totalorder %s96, %s112
      %p114 = scmp.eq.s32.totalorder %s22, 0
      %p115 = por %p113, %p114
      %s116 = ssub.s32 %s23, %s35
      %p117 = scmp.eq.s32.totalorder %s116, 0
      %s119 = sadd.s32 %s118, 1
      %s120 = scalar_select %p117, %s118, %s119
      %p123 = pneg %p117
      %p124 = scmp.eq.s32.totalorder %s16, 3
      %p125 = por %p123, %p124
      %p126 = scmp.ne.s32.totalorder %s118, %s121
      %p127 = scmp.eq.s32.totalorder %s16, 0
      %p128 = por %p126, %p127
      %p129 = scmp.ne.s32.totalorder %s118, %s121
      %p130 = scmp.eq.s32.totalorder %s21, 3
      %p131 = por %p129, %p130
      %p132 = scmp.ne.s32.totalorder %s121, %s122
      %p133 = scmp.eq.s32.totalorder %s21, 0
      %p134 = por %p132, %p133
      %p135 = scmp.ne.s32.totalorder %s121, %s122
      %p136 = scmp.eq.s32.totalorder %s22, 3
      %p137 = por %p135, %p136
      %p139 = scmp.ne.s32.totalorder %s122, %s138
      %p140 = scmp.eq.s32.totalorder %s22, 0
      %p141 = por %p139, %p140
      %s142 = ssub.s32 %s23, %s35
      %p143 = scmp.eq.s32.totalorder %s142, 0
      %s145 = sadd.s32 %s144, 1
      %s146 = scalar_select %p143, %s144, %s145
      %p149 = pneg %p143
      %p150 = scmp.eq.s32.totalorder %s16, 3
      %p151 = por %p149, %p150
      %p152 = scmp.ne.s32.totalorder %s144, %s147
      %p153 = scmp.eq.s32.totalorder %s16, 0
      %p154 = por %p152, %p153
      %p155 = scmp.ne.s32.totalorder %s144, %s147
      %p156 = scmp.eq.s32.totalorder %s21, 3
      %p157 = por %p155, %p156
      %p158 = scmp.ne.s32.totalorder %s147, %s148
      %p159 = scmp.eq.s32.totalorder %s21, 0
      %p160 = por %p158, %p159
      %p161 = scmp.ne.s32.totalorder %s147, %s148
      %p162 = scmp.eq.s32.totalorder %s22, 3
      %p163 = por %p161, %p162
      %p165 = scmp.ne.s32.totalorder %s148, %s164
      %p166 = scmp.eq.s32.totalorder %s22, 0
      %p167 = por %p165, %p166
      %p168 = scmp.le.s32.totalorder 1, %s16
      %p169 = scmp.lt.s32.totalorder %s16, 5
      %p170 = pnand %p168, %p169
      %p171 = pneg %p170
      // Predicated region
      $region9: #{transformer_net_forward.3} parent=5 // pred_check
        _
      $region10: #{transformer_net_forward.3} parent=5 // pred_check_branch
        %173 = sbr.rel (%p170) target = $region12
      $region11: #{transformer_net_forward.3} parent=5 // pred_region
        %s174 = ssub.s32 %s16, 1
        // Predicated region
        $region13: #{transformer_net_forward.3} parent=11 // pred_check
          %p175 = pneg %p54
        $region14: #{transformer_net_forward.3} parent=11 // pred_check_branch
          %177 = sbr.rel (%p175) target = $region16
        $region15: #{transformer_net_forward.3} parent=11 // pred_region
          %s178 = smul.u32 4, %s26
          %p179 = scmp.lt.s32.totalorder %s178, 3
          %s180 = scalar_select %p179, %s178, 3
          %s181 = smul.addr %s180, 2
          %s182 = scalar_lea.vmem %s0, %s181
          %s183 = smul.u32 4, %s26
        $region16: #{transformer_net_forward.3} parent=11 // pred_fallthru
          _
      $region12: #{transformer_net_forward.3} parent=5 // pred_fallthru
        _
      %p184 = scmp.lt.s32.totalorder %s16, 4
      // Predicated region
      $region17: #{transformer_net_forward.3} parent=5 // pred_check
        %p185 = pneg %p184
      $region18: #{transformer_net_forward.3} parent=5 // pred_check_branch
        %187 = sbr.rel (%p185) target = $region20
      $region19: #{transformer_net_forward.3} parent=5 // pred_region
        // Predicated region
        $region21: #{transformer_net_forward.3} parent=19 // pred_check
          %p188 = pneg %p76
        $region22: #{transformer_net_forward.3} parent=19 // pred_check_branch
          %190 = sbr.rel (%p188) target = $region24
        $region23: #{transformer_net_forward.3} parent=19 // pred_region
          %s191 = sand.u32 %s66, 1
          %s192 = scalar_lea.sflag [#allocation4], %s191
          %s193 = sand.u32 %s66, 1
          %s194 = smul.addr %s193, 2048
          %s195 = scalar_lea.vmem [#allocation3], %s194
          %s196 = smul.u32 64, %s24
          %s197 = smul.u32 8, %s23
          %s199 = ssub.s32 32768, 32768
          %200 = vsyncadd %s192, %s199
          %s201 = smul.addr %s196, 32
          %s202 = sadd.s32 %s197, %s201
          %s203 = smul.addr %s202, 64
          %s204 = scalar_lea.hbm %s1, %s203
          %s205 = sshll.u32 %s195, 4
          %s206 = int_to_ptr.vmem [resolvable:$true] %s205
          %211 = dma.hbm_to_vmem [thread:$0]  %s204, 32768, %s206, %s192, 2048, 512, 32
        $region24: #{transformer_net_forward.3} parent=19 // pred_fallthru
          _
        // Predicated region
        $region25: #{transformer_net_forward.3} parent=19 // pred_check
          %p212 = pneg %p102
        $region26: #{transformer_net_forward.3} parent=19 // pred_check_branch
          %214 = sbr.rel (%p212) target = $region28
        $region27: #{transformer_net_forward.3} parent=19 // pred_region
          %s215 = sand.u32 %s16, 1
          %s216 = scalar_lea.sflag [#allocation6], %s215
          %s217 = sand.u32 %s92, 1
          %s218 = smul.addr %s217, 8
          %s219 = scalar_lea.vmem [#allocation5], %s218
          %s220 = smul.u32 8, %s23
          %s222 = ssub.s32 128, 128
          %223 = vsyncadd %s216, %s222
          %s224 = smul.addr %s220, 16
          %s225 = scalar_lea.hbm %s2, %s224
          %s227 = sshll.u32 %s219, 4
          %s228 = int_to_ptr.vmem [resolvable:$true] %s227
          %230 = dma.hbm_to_vmem [thread:$0]  %s225, 128, %s228, %s216
        $region28: #{transformer_net_forward.3} parent=19 // pred_fallthru
          _
        // Predicated region
        $region29: #{transformer_net_forward.3} parent=19 // pred_check
          %p231 = pneg %p128
        $region30: #{transformer_net_forward.3} parent=19 // pred_check_branch
          %233 = sbr.rel (%p231) target = $region32
        $region31: #{transformer_net_forward.3} parent=19 // pred_region
          %s234 = sand.u32 %s16, 1
          %s235 = scalar_lea.sflag [#allocation6], %s234
          %s236 = sand.u32 %s118, 1
          %s237 = smul.addr %s236, 8
          %s238 = scalar_lea.vmem [#allocation7], %s237
          %s239 = smul.u32 8, %s23
          %s241 = ssub.s32 128, 128
          %242 = vsyncadd %s235, %s241
          %s243 = smul.addr %s239, 16
          %s244 = scalar_lea.hbm %s3, %s243
          %s246 = sshll.u32 %s238, 4
          %s247 = int_to_ptr.vmem [resolvable:$true] %s246
          %249 = dma.hbm_to_vmem [thread:$0]  %s244, 128, %s247, %s235
        $region32: #{transformer_net_forward.3} parent=19 // pred_fallthru
          _
      $region20: #{transformer_net_forward.3} parent=5 // pred_fallthru
        _
      %p250 = scmp.le.s32.totalorder 1, %s16
      %p251 = scmp.lt.s32.totalorder %s16, 5
      %p252 = pnand %p250, %p251
      %p253 = pneg %p252
      // Predicated region
      $region33: #{transformer_net_forward.3} parent=5 // pred_check
        _
      $region34: #{transformer_net_forward.3} parent=5 // pred_check_branch
        %255 = sbr.rel (%p252) target = $region36
      $region35: #{transformer_net_forward.3} parent=5 // pred_region
        %s256 = ssub.s32 %s16, 1
        %s257 = sand.u32 %s69, 1
        %s258 = scalar_lea.sflag [#allocation4], %s257
        %s259 = sand.u32 %s69, 1
        %s260 = smul.addr %s259, 2048
        %s261 = scalar_lea.vmem [#allocation3], %s260
        // Predicated region
        $region37: #{transformer_net_forward.3} parent=35 // pred_check
          %p262 = pneg %p82
        $region38: #{transformer_net_forward.3} parent=35 // pred_check_branch
          %264 = sbr.rel (%p262) target = $region40
        $region39: #{transformer_net_forward.3} parent=35 // pred_region
          %265 = dma.done %s258, 32768
        $region40: #{transformer_net_forward.3} parent=35 // pred_fallthru
          _
        %s266 = sand.u32 %s21, 1
        %s267 = scalar_lea.sflag [#allocation6], %s266
        %s268 = sand.u32 %s95, 1
        %s269 = smul.addr %s268, 8
        %s270 = scalar_lea.vmem [#allocation5], %s269
        // Predicated region
        $region41: #{transformer_net_forward.3} parent=35 // pred_check
          %p271 = pneg %p108
        $region42: #{transformer_net_forward.3} parent=35 // pred_check_branch
          %273 = sbr.rel (%p271) target = $region44
        $region43: #{transformer_net_forward.3} parent=35 // pred_region
          %274 = dma.done %s267, 128
        $region44: #{transformer_net_forward.3} parent=35 // pred_fallthru
          _
        %s275 = sand.u32 %s21, 1
        %s276 = scalar_lea.sflag [#allocation6], %s275
        %s277 = sand.u32 %s121, 1
        %s278 = smul.addr %s277, 8
        %s279 = scalar_lea.vmem [#allocation7], %s278
        // Predicated region
        $region45: #{transformer_net_forward.3} parent=35 // pred_check
          %p280 = pneg %p134
        $region46: #{transformer_net_forward.3} parent=35 // pred_check_branch
          %282 = sbr.rel (%p280) target = $region48
        $region47: #{transformer_net_forward.3} parent=35 // pred_region
          %283 = dma.done %s276, 128
        $region48: #{transformer_net_forward.3} parent=35 // pred_fallthru
          _
        %s284 = smul.u32 4, %s26
        %p285 = scmp.lt.s32.totalorder %s284, 3
        %s286 = scalar_select %p285, %s284, 3
        %s287 = smul.addr %s286, 2
        %s288 = scalar_lea.vmem %s0, %s287
        %p289 = pneg %p54
        %p290 = pneg %p51
        %s291 = sand.u32 %s69, 1
        %s292 = scalar_lea.sflag [#allocation4], %s291
        %s293 = sand.u32 %s69, 1
        %s294 = smul.addr %s293, 2048
        %s295 = scalar_lea.vmem [#allocation3], %s294
        %p296 = pneg %p82
        %p297 = pneg %p79
        %s298 = sand.u32 %s21, 1
        %s299 = scalar_lea.sflag [#allocation6], %s298
        %s300 = sand.u32 %s95, 1
        %s301 = smul.addr %s300, 8
        %s302 = scalar_lea.vmem [#allocation5], %s301
        %p303 = pneg %p108
        %p304 = pneg %p105
        %s305 = sand.u32 %s21, 1
        %s306 = scalar_lea.sflag [#allocation6], %s305
        %s307 = sand.u32 %s121, 1
        %s308 = smul.addr %s307, 8
        %s309 = scalar_lea.vmem [#allocation7], %s308
        %p310 = pneg %p134
        %p311 = pneg %p131
        %p312 = pneg %p160
        %p313 = pneg %p157
        %s314 = smul.u32 8, %s25
        %p315 = scmp.lt.s32.totalorder %s314, 31
        %s316 = scalar_select %p315, %s314, 31
        %s317 = smul.addr %s316, 2
        %s318 = scalar_lea.vmem %s4, %s317
        %s319 = smul.u32 4, %s26
        %p320 = scmp.lt.s32.totalorder %s319, 3
        %s321 = scalar_select %p320, %s319, 3
        %s322 = smul.addr %s321, 2
        %s323 = scalar_lea.vmem %s0, %s322
        %s324 = smul.u32 4, %s26
        %s325 = smul.u32 64, %s26
        %s326 = smul.u32 8, %s25
        %s327 = smul.u32 8, %s25
        %s328 = smul.u32 8, %s25
        %s329 = smul.u32 8, %s25
        %p330 = scmp.lt.s32.totalorder %s329, 31
        %s331 = scalar_select %p330, %s329, 31
        %s332 = smul.addr %s331, 2
        %s333 = scalar_lea.vmem %s4, %s332
        %s334 = smul.u32 8, %s25
        %p335 = scmp.eq.s32.totalorder %s26, 0
        // Predicated region
        $region49: #{transformer_net_forward.3} parent=35 // pred_check
          %p336 = pneg %p335
        $region50: #{transformer_net_forward.3} parent=35 // pred_check_branch
          %338 = sbr.rel (%p336) target = $region52
        $region51: #{transformer_net_forward.3} parent=35 // pred_region
          %339 = vst [vmem:[#allocation2] sm:$0xff] 0.0
          %340 = vst [vmem:[#allocation2 + $0x8] sm:$0xff] 0.0
        $region52: #{transformer_net_forward.3} parent=35 // pred_fallthru
          _
        %v341 = vld [vmem:[#allocation2] sm:$0xff]
        %v342 = vld [vmem:[#allocation2 + $0x8] sm:$0xff]
        %v343 = vld [vmem:[%s323] sm:$0xff]
        %v344 = vld [vmem:[%s261] sm:$0xff]
        %v345 = vld [vmem:[%s261 + $0x8] sm:$0xff]
        %v346 = vld [vmem:[%s261 + $0x10] sm:$0xff]
        %v347 = vld [vmem:[%s261 + $0x18] sm:$0xff]
        %v348 = vld [vmem:[%s261 + $0x20] sm:$0xff]
        %v349 = vld [vmem:[%s261 + $0x28] sm:$0xff]
        %v350 = vld [vmem:[%s261 + $0x30] sm:$0xff]
        %v351 = vld [vmem:[%s261 + $0x38] sm:$0xff]
        %v352 = vld [vmem:[%s261 + $0x40] sm:$0xff]
        %v353 = vld [vmem:[%s261 + $0x48] sm:$0xff]
        %v354 = vld [vmem:[%s261 + $0x50] sm:$0xff]
        %v355 = vld [vmem:[%s261 + $0x58] sm:$0xff]
        %v356 = vld [vmem:[%s261 + $0x60] sm:$0xff]
        %v357 = vld [vmem:[%s261 + $0x68] sm:$0xff]
        %v358 = vld [vmem:[%s261 + $0x70] sm:$0xff]
        %v359 = vld [vmem:[%s261 + $0x78] sm:$0xff]
        %v360 = vld [vmem:[%s261 + $0x80] sm:$0xff]
        %v361 = vld [vmem:[%s261 + $0x88] sm:$0xff]
        %v362 = vld [vmem:[%s261 + $0x90] sm:$0xff]
        %v363 = vld [vmem:[%s261 + $0x98] sm:$0xff]
        %v364 = vld [vmem:[%s261 + $0xa0] sm:$0xff]
        %v365 = vld [vmem:[%s261 + $0xa8] sm:$0xff]
        %v366 = vld [vmem:[%s261 + $0xb0] sm:$0xff]
        %v367 = vld [vmem:[%s261 + $0xb8] sm:$0xff]
        %v368 = vld [vmem:[%s261 + $0xc0] sm:$0xff]
        %v369 = vld [vmem:[%s261 + $0xc8] sm:$0xff]
        %v370 = vld [vmem:[%s261 + $0xd0] sm:$0xff]
        %v371 = vld [vmem:[%s261 + $0xd8] sm:$0xff]
        %v372 = vld [vmem:[%s261 + $0xe0] sm:$0xff]
        %v373 = vld [vmem:[%s261 + $0xe8] sm:$0xff]
        %v374 = vld [vmem:[%s261 + $0xf0] sm:$0xff]
        %v375 = vld [vmem:[%s261 + $0xf8] sm:$0xff]
        %v376 = vld [vmem:[%s261 + $0x100] sm:$0xff]
        %v377 = vld [vmem:[%s261 + $0x108] sm:$0xff]
        %v378 = vld [vmem:[%s261 + $0x110] sm:$0xff]
        %v379 = vld [vmem:[%s261 + $0x118] sm:$0xff]
        %v380 = vld [vmem:[%s261 + $0x120] sm:$0xff]
        %v381 = vld [vmem:[%s261 + $0x128] sm:$0xff]
        %v382 = vld [vmem:[%s261 + $0x130] sm:$0xff]
        %v383 = vld [vmem:[%s261 + $0x138] sm:$0xff]
        %v384 = vld [vmem:[%s261 + $0x140] sm:$0xff]
        %v385 = vld [vmem:[%s261 + $0x148] sm:$0xff]
        %v386 = vld [vmem:[%s261 + $0x150] sm:$0xff]
        %v387 = vld [vmem:[%s261 + $0x158] sm:$0xff]
        %v388 = vld [vmem:[%s261 + $0x160] sm:$0xff]
        %v389 = vld [vmem:[%s261 + $0x168] sm:$0xff]
        %v390 = vld [vmem:[%s261 + $0x170] sm:$0xff]
        %v391 = vld [vmem:[%s261 + $0x178] sm:$0xff]
        %v392 = vld [vmem:[%s261 + $0x180] sm:$0xff]
        %v393 = vld [vmem:[%s261 + $0x188] sm:$0xff]
        %v394 = vld [vmem:[%s261 + $0x190] sm:$0xff]
        %v395 = vld [vmem:[%s261 + $0x198] sm:$0xff]
        %v396 = vld [vmem:[%s261 + $0x1a0] sm:$0xff]
        %v397 = vld [vmem:[%s261 + $0x1a8] sm:$0xff]
        %v398 = vld [vmem:[%s261 + $0x1b0] sm:$0xff]
        %v399 = vld [vmem:[%s261 + $0x1b8] sm:$0xff]
        %v400 = vld [vmem:[%s261 + $0x1c0] sm:$0xff]
        %v401 = vld [vmem:[%s261 + $0x1c8] sm:$0xff]
        %v402 = vld [vmem:[%s261 + $0x1d0] sm:$0xff]
        %v403 = vld [vmem:[%s261 + $0x1d8] sm:$0xff]
        %v404 = vld [vmem:[%s261 + $0x1e0] sm:$0xff]
        %v405 = vld [vmem:[%s261 + $0x1e8] sm:$0xff]
        %v406 = vld [vmem:[%s261 + $0x1f0] sm:$0xff]
        %v407 = vld [vmem:[%s261 + $0x1f8] sm:$0xff]
        %v408 = vld [vmem:[%s261 + $0x200] sm:$0xff]
        %v409 = vld [vmem:[%s261 + $0x208] sm:$0xff]
        %v410 = vld [vmem:[%s261 + $0x210] sm:$0xff]
        %v411 = vld [vmem:[%s261 + $0x218] sm:$0xff]
        %v412 = vld [vmem:[%s261 + $0x220] sm:$0xff]
        %v413 = vld [vmem:[%s261 + $0x228] sm:$0xff]
        %v414 = vld [vmem:[%s261 + $0x230] sm:$0xff]
        %v415 = vld [vmem:[%s261 + $0x238] sm:$0xff]
        %v416 = vld [vmem:[%s261 + $0x240] sm:$0xff]
        %v417 = vld [vmem:[%s261 + $0x248] sm:$0xff]
        %v418 = vld [vmem:[%s261 + $0x250] sm:$0xff]
        %v419 = vld [vmem:[%s261 + $0x258] sm:$0xff]
        %v420 = vld [vmem:[%s261 + $0x260] sm:$0xff]
        %v421 = vld [vmem:[%s261 + $0x268] sm:$0xff]
        %v422 = vld [vmem:[%s261 + $0x270] sm:$0xff]
        %v423 = vld [vmem:[%s261 + $0x278] sm:$0xff]
        %v424 = vld [vmem:[%s261 + $0x280] sm:$0xff]
        %v425 = vld [vmem:[%s261 + $0x288] sm:$0xff]
        %v426 = vld [vmem:[%s261 + $0x290] sm:$0xff]
        %v427 = vld [vmem:[%s261 + $0x298] sm:$0xff]
        %v428 = vld [vmem:[%s261 + $0x2a0] sm:$0xff]
        %v429 = vld [vmem:[%s261 + $0x2a8] sm:$0xff]
        %v430 = vld [vmem:[%s261 + $0x2b0] sm:$0xff]
        %v431 = vld [vmem:[%s261 + $0x2b8] sm:$0xff]
        %v432 = vld [vmem:[%s261 + $0x2c0] sm:$0xff]
        %v433 = vld [vmem:[%s261 + $0x2c8] sm:$0xff]
        %v434 = vld [vmem:[%s261 + $0x2d0] sm:$0xff]
        %v435 = vld [vmem:[%s261 + $0x2d8] sm:$0xff]
        %v436 = vld [vmem:[%s261 + $0x2e0] sm:$0xff]
        %v437 = vld [vmem:[%s261 + $0x2e8] sm:$0xff]
        %v438 = vld [vmem:[%s261 + $0x2f0] sm:$0xff]
        %v439 = vld [vmem:[%s261 + $0x2f8] sm:$0xff]
        %v440 = vld [vmem:[%s261 + $0x300] sm:$0xff]
        %v441 = vld [vmem:[%s261 + $0x308] sm:$0xff]
        %v442 = vld [vmem:[%s261 + $0x310] sm:$0xff]
        %v443 = vld [vmem:[%s261 + $0x318] sm:$0xff]
        %v444 = vld [vmem:[%s261 + $0x320] sm:$0xff]
        %v445 = vld [vmem:[%s261 + $0x328] sm:$0xff]
        %v446 = vld [vmem:[%s261 + $0x330] sm:$0xff]
        %v447 = vld [vmem:[%s261 + $0x338] sm:$0xff]
        %v448 = vld [vmem:[%s261 + $0x340] sm:$0xff]
        %v449 = vld [vmem:[%s261 + $0x348] sm:$0xff]
        %v450 = vld [vmem:[%s261 + $0x350] sm:$0xff]
        %v451 = vld [vmem:[%s261 + $0x358] sm:$0xff]
        %v452 = vld [vmem:[%s261 + $0x360] sm:$0xff]
        %v453 = vld [vmem:[%s261 + $0x368] sm:$0xff]
        %v454 = vld [vmem:[%s261 + $0x370] sm:$0xff]
        %v455 = vld [vmem:[%s261 + $0x378] sm:$0xff]
        %v456 = vld [vmem:[%s261 + $0x380] sm:$0xff]
        %v457 = vld [vmem:[%s261 + $0x388] sm:$0xff]
        %v458 = vld [vmem:[%s261 + $0x390] sm:$0xff]
        %v459 = vld [vmem:[%s261 + $0x398] sm:$0xff]
        %v460 = vld [vmem:[%s261 + $0x3a0] sm:$0xff]
        %v461 = vld [vmem:[%s261 + $0x3a8] sm:$0xff]
        %v462 = vld [vmem:[%s261 + $0x3b0] sm:$0xff]
        %v463 = vld [vmem:[%s261 + $0x3b8] sm:$0xff]
        %v464 = vld [vmem:[%s261 + $0x3c0] sm:$0xff]
        %v465 = vld [vmem:[%s261 + $0x3c8] sm:$0xff]
        %v466 = vld [vmem:[%s261 + $0x3d0] sm:$0xff]
        %v467 = vld [vmem:[%s261 + $0x3d8] sm:$0xff]
        %v468 = vld [vmem:[%s261 + $0x3e0] sm:$0xff]
        %v469 = vld [vmem:[%s261 + $0x3e8] sm:$0xff]
        %v470 = vld [vmem:[%s261 + $0x3f0] sm:$0xff]
        %v471 = vld [vmem:[%s261 + $0x3f8] sm:$0xff]
        %v472 = vld [vmem:[%s261 + $0x400] sm:$0xff]
        %v473 = vld [vmem:[%s261 + $0x408] sm:$0xff]
        %v474 = vld [vmem:[%s261 + $0x410] sm:$0xff]
        %v475 = vld [vmem:[%s261 + $0x418] sm:$0xff]
        %v476 = vld [vmem:[%s261 + $0x420] sm:$0xff]
        %v477 = vld [vmem:[%s261 + $0x428] sm:$0xff]
        %v478 = vld [vmem:[%s261 + $0x430] sm:$0xff]
        %v479 = vld [vmem:[%s261 + $0x438] sm:$0xff]
        %v480 = vld [vmem:[%s261 + $0x440] sm:$0xff]
        %v481 = vld [vmem:[%s261 + $0x448] sm:$0xff]
        %v482 = vld [vmem:[%s261 + $0x450] sm:$0xff]
        %v483 = vld [vmem:[%s261 + $0x458] sm:$0xff]
        %v484 = vld [vmem:[%s261 + $0x460] sm:$0xff]
        %v485 = vld [vmem:[%s261 + $0x468] sm:$0xff]
        %v486 = vld [vmem:[%s261 + $0x470] sm:$0xff]
        %v487 = vld [vmem:[%s261 + $0x478] sm:$0xff]
        %v488 = vld [vmem:[%s261 + $0x480] sm:$0xff]
        %v489 = vld [vmem:[%s261 + $0x488] sm:$0xff]
        %v490 = vld [vmem:[%s261 + $0x490] sm:$0xff]
        %v491 = vld [vmem:[%s261 + $0x498] sm:$0xff]
        %v492 = vld [vmem:[%s261 + $0x4a0] sm:$0xff]
        %v493 = vld [vmem:[%s261 + $0x4a8] sm:$0xff]
        %v494 = vld [vmem:[%s261 + $0x4b0] sm:$0xff]
        %v495 = vld [vmem:[%s261 + $0x4b8] sm:$0xff]
        %v496 = vld [vmem:[%s261 + $0x4c0] sm:$0xff]
        %v497 = vld [vmem:[%s261 + $0x4c8] sm:$0xff]
        %v498 = vld [vmem:[%s261 + $0x4d0] sm:$0xff]
        %v499 = vld [vmem:[%s261 + $0x4d8] sm:$0xff]
        %v500 = vld [vmem:[%s261 + $0x4e0] sm:$0xff]
        %v501 = vld [vmem:[%s261 + $0x4e8] sm:$0xff]
        %v502 = vld [vmem:[%s261 + $0x4f0] sm:$0xff]
        %v503 = vld [vmem:[%s261 + $0x4f8] sm:$0xff]
        %v504 = vld [vmem:[%s261 + $0x500] sm:$0xff]
        %v505 = vld [vmem:[%s261 + $0x508] sm:$0xff]
        %v506 = vld [vmem:[%s261 + $0x510] sm:$0xff]
        %v507 = vld [vmem:[%s261 + $0x518] sm:$0xff]
        %v508 = vld [vmem:[%s261 + $0x520] sm:$0xff]
        %v509 = vld [vmem:[%s261 + $0x528] sm:$0xff]
        %v510 = vld [vmem:[%s261 + $0x530] sm:$0xff]
        %v511 = vld [vmem:[%s261 + $0x538] sm:$0xff]
        %v512 = vld [vmem:[%s261 + $0x540] sm:$0xff]
        %v513 = vld [vmem:[%s261 + $0x548] sm:$0xff]
        %v514 = vld [vmem:[%s261 + $0x550] sm:$0xff]
        %v515 = vld [vmem:[%s261 + $0x558] sm:$0xff]
        %v516 = vld [vmem:[%s261 + $0x560] sm:$0xff]
        %v517 = vld [vmem:[%s261 + $0x568] sm:$0xff]
        %v518 = vld [vmem:[%s261 + $0x570] sm:$0xff]
        %v519 = vld [vmem:[%s261 + $0x578] sm:$0xff]
        %v520 = vld [vmem:[%s261 + $0x580] sm:$0xff]
        %v521 = vld [vmem:[%s261 + $0x588] sm:$0xff]
        %v522 = vld [vmem:[%s261 + $0x590] sm:$0xff]
        %v523 = vld [vmem:[%s261 + $0x598] sm:$0xff]
        %v524 = vld [vmem:[%s261 + $0x5a0] sm:$0xff]
        %v525 = vld [vmem:[%s261 + $0x5a8] sm:$0xff]
        %v526 = vld [vmem:[%s261 + $0x5b0] sm:$0xff]
        %v527 = vld [vmem:[%s261 + $0x5b8] sm:$0xff]
        %v528 = vld [vmem:[%s261 + $0x5c0] sm:$0xff]
        %v529 = vld [vmem:[%s261 + $0x5c8] sm:$0xff]
        %v530 = vld [vmem:[%s261 + $0x5d0] sm:$0xff]
        %v531 = vld [vmem:[%s261 + $0x5d8] sm:$0xff]
        %v532 = vld [vmem:[%s261 + $0x5e0] sm:$0xff]
        %v533 = vld [vmem:[%s261 + $0x5e8] sm:$0xff]
        %v534 = vld [vmem:[%s261 + $0x5f0] sm:$0xff]
        %v535 = vld [vmem:[%s261 + $0x5f8] sm:$0xff]
        %v536 = vld [vmem:[%s261 + $0x600] sm:$0xff]
        %v537 = vld [vmem:[%s261 + $0x608] sm:$0xff]
        %v538 = vld [vmem:[%s261 + $0x610] sm:$0xff]
        %v539 = vld [vmem:[%s261 + $0x618] sm:$0xff]
        %v540 = vld [vmem:[%s261 + $0x620] sm:$0xff]
        %v541 = vld [vmem:[%s261 + $0x628] sm:$0xff]
        %v542 = vld [vmem:[%s261 + $0x630] sm:$0xff]
        %v543 = vld [vmem:[%s261 + $0x638] sm:$0xff]
        %v544 = vld [vmem:[%s261 + $0x640] sm:$0xff]
        %v545 = vld [vmem:[%s261 + $0x648] sm:$0xff]
        %v546 = vld [vmem:[%s261 + $0x650] sm:$0xff]
        %v547 = vld [vmem:[%s261 + $0x658] sm:$0xff]
        %v548 = vld [vmem:[%s261 + $0x660] sm:$0xff]
        %v549 = vld [vmem:[%s261 + $0x668] sm:$0xff]
        %v550 = vld [vmem:[%s261 + $0x670] sm:$0xff]
        %v551 = vld [vmem:[%s261 + $0x678] sm:$0xff]
        %v552 = vld [vmem:[%s261 + $0x680] sm:$0xff]
        %v553 = vld [vmem:[%s261 + $0x688] sm:$0xff]
        %v554 = vld [vmem:[%s261 + $0x690] sm:$0xff]
        %v555 = vld [vmem:[%s261 + $0x698] sm:$0xff]
        %v556 = vld [vmem:[%s261 + $0x6a0] sm:$0xff]
        %v557 = vld [vmem:[%s261 + $0x6a8] sm:$0xff]
        %v558 = vld [vmem:[%s261 + $0x6b0] sm:$0xff]
        %v559 = vld [vmem:[%s261 + $0x6b8] sm:$0xff]
        %v560 = vld [vmem:[%s261 + $0x6c0] sm:$0xff]
        %v561 = vld [vmem:[%s261 + $0x6c8] sm:$0xff]
        %v562 = vld [vmem:[%s261 + $0x6d0] sm:$0xff]
        %v563 = vld [vmem:[%s261 + $0x6d8] sm:$0xff]
        %v564 = vld [vmem:[%s261 + $0x6e0] sm:$0xff]
        %v565 = vld [vmem:[%s261 + $0x6e8] sm:$0xff]
        %v566 = vld [vmem:[%s261 + $0x6f0] sm:$0xff]
        %v567 = vld [vmem:[%s261 + $0x6f8] sm:$0xff]
        %v568 = vld [vmem:[%s261 + $0x700] sm:$0xff]
        %v569 = vld [vmem:[%s261 + $0x708] sm:$0xff]
        %v570 = vld [vmem:[%s261 + $0x710] sm:$0xff]
        %v571 = vld [vmem:[%s261 + $0x718] sm:$0xff]
        %v572 = vld [vmem:[%s261 + $0x720] sm:$0xff]
        %v573 = vld [vmem:[%s261 + $0x728] sm:$0xff]
        %v574 = vld [vmem:[%s261 + $0x730] sm:$0xff]
        %v575 = vld [vmem:[%s261 + $0x738] sm:$0xff]
        %v576 = vld [vmem:[%s261 + $0x740] sm:$0xff]
        %v577 = vld [vmem:[%s261 + $0x748] sm:$0xff]
        %v578 = vld [vmem:[%s261 + $0x750] sm:$0xff]
        %v579 = vld [vmem:[%s261 + $0x758] sm:$0xff]
        %v580 = vld [vmem:[%s261 + $0x760] sm:$0xff]
        %v581 = vld [vmem:[%s261 + $0x768] sm:$0xff]
        %v582 = vld [vmem:[%s261 + $0x770] sm:$0xff]
        %v583 = vld [vmem:[%s261 + $0x778] sm:$0xff]
        %v584 = vld [vmem:[%s261 + $0x780] sm:$0xff]
        %v585 = vld [vmem:[%s261 + $0x788] sm:$0xff]
        %v586 = vld [vmem:[%s261 + $0x790] sm:$0xff]
        %v587 = vld [vmem:[%s261 + $0x798] sm:$0xff]
        %v588 = vld [vmem:[%s261 + $0x7a0] sm:$0xff]
        %v589 = vld [vmem:[%s261 + $0x7a8] sm:$0xff]
        %v590 = vld [vmem:[%s261 + $0x7b0] sm:$0xff]
        %v591 = vld [vmem:[%s261 + $0x7b8] sm:$0xff]
        %v592 = vld [vmem:[%s261 + $0x7c0] sm:$0xff]
        %v593 = vld [vmem:[%s261 + $0x7c8] sm:$0xff]
        %v594 = vld [vmem:[%s261 + $0x7d0] sm:$0xff]
        %v595 = vld [vmem:[%s261 + $0x7d8] sm:$0xff]
        %v596 = vld [vmem:[%s261 + $0x7e0] sm:$0xff]
        %v597 = vld [vmem:[%s261 + $0x7e8] sm:$0xff]
        %v598 = vld [vmem:[%s261 + $0x7f0] sm:$0xff]
        %v599 = vld [vmem:[%s261 + $0x7f8] sm:$0xff]
        %v600 = vunpack.c.l.bf16 %v344
        %v601 = vunpack.c.h.bf16 %v344
        %v602 = vunpack.c.l.bf16 %v345
        %v603 = vunpack.c.h.bf16 %v345
        %v604 = vunpack.c.l.bf16 %v346
        %v605 = vunpack.c.h.bf16 %v346
        %v606 = vunpack.c.l.bf16 %v347
        %v607 = vunpack.c.h.bf16 %v347
        %v608 = vunpack.c.l.bf16 %v348
        %v609 = vunpack.c.h.bf16 %v348
        %v610 = vunpack.c.l.bf16 %v349
        %v611 = vunpack.c.h.bf16 %v349
        %v612 = vunpack.c.l.bf16 %v350
        %v613 = vunpack.c.h.bf16 %v350
        %v614 = vunpack.c.l.bf16 %v351
        %v615 = vunpack.c.h.bf16 %v351
        %v616 = vunpack.c.l.bf16 %v352
        %v617 = vunpack.c.h.bf16 %v352
        %v618 = vunpack.c.l.bf16 %v353
        %v619 = vunpack.c.h.bf16 %v353
        %v620 = vunpack.c.l.bf16 %v354
        %v621 = vunpack.c.h.bf16 %v354
        %v622 = vunpack.c.l.bf16 %v355
        %v623 = vunpack.c.h.bf16 %v355
        %v624 = vunpack.c.l.bf16 %v356
        %v625 = vunpack.c.h.bf16 %v356
        %v626 = vunpack.c.l.bf16 %v357
        %v627 = vunpack.c.h.bf16 %v357
        %v628 = vunpack.c.l.bf16 %v358
        %v629 = vunpack.c.h.bf16 %v358
        %v630 = vunpack.c.l.bf16 %v359
        %v631 = vunpack.c.h.bf16 %v359
        %v632 = vunpack.c.l.bf16 %v360
        %v633 = vunpack.c.h.bf16 %v360
        %v634 = vunpack.c.l.bf16 %v361
        %v635 = vunpack.c.h.bf16 %v361
        %v636 = vunpack.c.l.bf16 %v362
        %v637 = vunpack.c.h.bf16 %v362
        %v638 = vunpack.c.l.bf16 %v363
        %v639 = vunpack.c.h.bf16 %v363
        %v640 = vunpack.c.l.bf16 %v364
        %v641 = vunpack.c.h.bf16 %v364
        %v642 = vunpack.c.l.bf16 %v365
        %v643 = vunpack.c.h.bf16 %v365
        %v644 = vunpack.c.l.bf16 %v366
        %v645 = vunpack.c.h.bf16 %v366
        %v646 = vunpack.c.l.bf16 %v367
        %v647 = vunpack.c.h.bf16 %v367
        %v648 = vunpack.c.l.bf16 %v368
        %v649 = vunpack.c.h.bf16 %v368
        %v650 = vunpack.c.l.bf16 %v369
        %v651 = vunpack.c.h.bf16 %v369
        %v652 = vunpack.c.l.bf16 %v370
        %v653 = vunpack.c.h.bf16 %v370
        %v654 = vunpack.c.l.bf16 %v371
        %v655 = vunpack.c.h.bf16 %v371
        %v656 = vunpack.c.l.bf16 %v372
        %v657 = vunpack.c.h.bf16 %v372
        %v658 = vunpack.c.l.bf16 %v373
        %v659 = vunpack.c.h.bf16 %v373
        %v660 = vunpack.c.l.bf16 %v374
        %v661 = vunpack.c.h.bf16 %v374
        %v662 = vunpack.c.l.bf16 %v375
        %v663 = vunpack.c.h.bf16 %v375
        %v664 = vunpack.c.l.bf16 %v376
        %v665 = vunpack.c.h.bf16 %v376
        %v666 = vunpack.c.l.bf16 %v377
        %v667 = vunpack.c.h.bf16 %v377
        %v668 = vunpack.c.l.bf16 %v378
        %v669 = vunpack.c.h.bf16 %v378
        %v670 = vunpack.c.l.bf16 %v379
        %v671 = vunpack.c.h.bf16 %v379
        %v672 = vunpack.c.l.bf16 %v380
        %v673 = vunpack.c.h.bf16 %v380
        %v674 = vunpack.c.l.bf16 %v381
        %v675 = vunpack.c.h.bf16 %v381
        %v676 = vunpack.c.l.bf16 %v382
        %v677 = vunpack.c.h.bf16 %v382
        %v678 = vunpack.c.l.bf16 %v383
        %v679 = vunpack.c.h.bf16 %v383
        %v680 = vunpack.c.l.bf16 %v384
        %v681 = vunpack.c.h.bf16 %v384
        %v682 = vunpack.c.l.bf16 %v385
        %v683 = vunpack.c.h.bf16 %v385
        %v684 = vunpack.c.l.bf16 %v386
        %v685 = vunpack.c.h.bf16 %v386
        %v686 = vunpack.c.l.bf16 %v387
        %v687 = vunpack.c.h.bf16 %v387
        %v688 = vunpack.c.l.bf16 %v388
        %v689 = vunpack.c.h.bf16 %v388
        %v690 = vunpack.c.l.bf16 %v389
        %v691 = vunpack.c.h.bf16 %v389
        %v692 = vunpack.c.l.bf16 %v390
        %v693 = vunpack.c.h.bf16 %v390
        %v694 = vunpack.c.l.bf16 %v391
        %v695 = vunpack.c.h.bf16 %v391
        %v696 = vunpack.c.l.bf16 %v392
        %v697 = vunpack.c.h.bf16 %v392
        %v698 = vunpack.c.l.bf16 %v393
        %v699 = vunpack.c.h.bf16 %v393
        %v700 = vunpack.c.l.bf16 %v394
        %v701 = vunpack.c.h.bf16 %v394
        %v702 = vunpack.c.l.bf16 %v395
        %v703 = vunpack.c.h.bf16 %v395
        %v704 = vunpack.c.l.bf16 %v396
        %v705 = vunpack.c.h.bf16 %v396
        %v706 = vunpack.c.l.bf16 %v397
        %v707 = vunpack.c.h.bf16 %v397
        %v708 = vunpack.c.l.bf16 %v398
        %v709 = vunpack.c.h.bf16 %v398
        %v710 = vunpack.c.l.bf16 %v399
        %v711 = vunpack.c.h.bf16 %v399
        %v712 = vunpack.c.l.bf16 %v400
        %v713 = vunpack.c.h.bf16 %v400
        %v714 = vunpack.c.l.bf16 %v401
        %v715 = vunpack.c.h.bf16 %v401
        %v716 = vunpack.c.l.bf16 %v402
        %v717 = vunpack.c.h.bf16 %v402
        %v718 = vunpack.c.l.bf16 %v403
        %v719 = vunpack.c.h.bf16 %v403
        %v720 = vunpack.c.l.bf16 %v404
        %v721 = vunpack.c.h.bf16 %v404
        %v722 = vunpack.c.l.bf16 %v405
        %v723 = vunpack.c.h.bf16 %v405
        %v724 = vunpack.c.l.bf16 %v406
        %v725 = vunpack.c.h.bf16 %v406
        %v726 = vunpack.c.l.bf16 %v407
        %v727 = vunpack.c.h.bf16 %v407
        %v728 = vunpack.c.l.bf16 %v408
        %v729 = vunpack.c.h.bf16 %v408
        %v730 = vunpack.c.l.bf16 %v409
        %v731 = vunpack.c.h.bf16 %v409
        %v732 = vunpack.c.l.bf16 %v410
        %v733 = vunpack.c.h.bf16 %v410
        %v734 = vunpack.c.l.bf16 %v411
        %v735 = vunpack.c.h.bf16 %v411
        %v736 = vunpack.c.l.bf16 %v412
        %v737 = vunpack.c.h.bf16 %v412
        %v738 = vunpack.c.l.bf16 %v413
        %v739 = vunpack.c.h.bf16 %v413
        %v740 = vunpack.c.l.bf16 %v414
        %v741 = vunpack.c.h.bf16 %v414
        %v742 = vunpack.c.l.bf16 %v415
        %v743 = vunpack.c.h.bf16 %v415
        %v744 = vunpack.c.l.bf16 %v416
        %v745 = vunpack.c.h.bf16 %v416
        %v746 = vunpack.c.l.bf16 %v417
        %v747 = vunpack.c.h.bf16 %v417
        %v748 = vunpack.c.l.bf16 %v418
        %v749 = vunpack.c.h.bf16 %v418
        %v750 = vunpack.c.l.bf16 %v419
        %v751 = vunpack.c.h.bf16 %v419
        %v752 = vunpack.c.l.bf16 %v420
        %v753 = vunpack.c.h.bf16 %v420
        %v754 = vunpack.c.l.bf16 %v421
        %v755 = vunpack.c.h.bf16 %v421
        %v756 = vunpack.c.l.bf16 %v422
        %v757 = vunpack.c.h.bf16 %v422
        %v758 = vunpack.c.l.bf16 %v423
        %v759 = vunpack.c.h.bf16 %v423
        %v760 = vunpack.c.l.bf16 %v424
        %v761 = vunpack.c.h.bf16 %v424
        %v762 = vunpack.c.l.bf16 %v425
        %v763 = vunpack.c.h.bf16 %v425
        %v764 = vunpack.c.l.bf16 %v426
        %v765 = vunpack.c.h.bf16 %v426
        %v766 = vunpack.c.l.bf16 %v427
        %v767 = vunpack.c.h.bf16 %v427
        %v768 = vunpack.c.l.bf16 %v428
        %v769 = vunpack.c.h.bf16 %v428
        %v770 = vunpack.c.l.bf16 %v429
        %v771 = vunpack.c.h.bf16 %v429
        %v772 = vunpack.c.l.bf16 %v430
        %v773 = vunpack.c.h.bf16 %v430
        %v774 = vunpack.c.l.bf16 %v431
        %v775 = vunpack.c.h.bf16 %v431
        %v776 = vunpack.c.l.bf16 %v432
        %v777 = vunpack.c.h.bf16 %v432
        %v778 = vunpack.c.l.bf16 %v433
        %v779 = vunpack.c.h.bf16 %v433
        %v780 = vunpack.c.l.bf16 %v434
        %v781 = vunpack.c.h.bf16 %v434
        %v782 = vunpack.c.l.bf16 %v435
        %v783 = vunpack.c.h.bf16 %v435
        %v784 = vunpack.c.l.bf16 %v436
        %v785 = vunpack.c.h.bf16 %v436
        %v786 = vunpack.c.l.bf16 %v437
        %v787 = vunpack.c.h.bf16 %v437
        %v788 = vunpack.c.l.bf16 %v438
        %v789 = vunpack.c.h.bf16 %v438
        %v790 = vunpack.c.l.bf16 %v439
        %v791 = vunpack.c.h.bf16 %v439
        %v792 = vunpack.c.l.bf16 %v440
        %v793 = vunpack.c.h.bf16 %v440
        %v794 = vunpack.c.l.bf16 %v441
        %v795 = vunpack.c.h.bf16 %v441
        %v796 = vunpack.c.l.bf16 %v442
        %v797 = vunpack.c.h.bf16 %v442
        %v798 = vunpack.c.l.bf16 %v443
        %v799 = vunpack.c.h.bf16 %v443
        %v800 = vunpack.c.l.bf16 %v444
        %v801 = vunpack.c.h.bf16 %v444
        %v802 = vunpack.c.l.bf16 %v445
        %v803 = vunpack.c.h.bf16 %v445
        %v804 = vunpack.c.l.bf16 %v446
        %v805 = vunpack.c.h.bf16 %v446
        %v806 = vunpack.c.l.bf16 %v447
        %v807 = vunpack.c.h.bf16 %v447
        %v808 = vunpack.c.l.bf16 %v448
        %v809 = vunpack.c.h.bf16 %v448
        %v810 = vunpack.c.l.bf16 %v449
        %v811 = vunpack.c.h.bf16 %v449
        %v812 = vunpack.c.l.bf16 %v450
        %v813 = vunpack.c.h.bf16 %v450
        %v814 = vunpack.c.l.bf16 %v451
        %v815 = vunpack.c.h.bf16 %v451
        %v816 = vunpack.c.l.bf16 %v452
        %v817 = vunpack.c.h.bf16 %v452
        %v818 = vunpack.c.l.bf16 %v453
        %v819 = vunpack.c.h.bf16 %v453
        %v820 = vunpack.c.l.bf16 %v454
        %v821 = vunpack.c.h.bf16 %v454
        %v822 = vunpack.c.l.bf16 %v455
        %v823 = vunpack.c.h.bf16 %v455
        %v824 = vunpack.c.l.bf16 %v456
        %v825 = vunpack.c.h.bf16 %v456
        %v826 = vunpack.c.l.bf16 %v457
        %v827 = vunpack.c.h.bf16 %v457
        %v828 = vunpack.c.l.bf16 %v458
        %v829 = vunpack.c.h.bf16 %v458
        %v830 = vunpack.c.l.bf16 %v459
        %v831 = vunpack.c.h.bf16 %v459
        %v832 = vunpack.c.l.bf16 %v460
        %v833 = vunpack.c.h.bf16 %v460
        %v834 = vunpack.c.l.bf16 %v461
        %v835 = vunpack.c.h.bf16 %v461
        %v836 = vunpack.c.l.bf16 %v462
        %v837 = vunpack.c.h.bf16 %v462
        %v838 = vunpack.c.l.bf16 %v463
        %v839 = vunpack.c.h.bf16 %v463
        %v840 = vunpack.c.l.bf16 %v464
        %v841 = vunpack.c.h.bf16 %v464
        %v842 = vunpack.c.l.bf16 %v465
        %v843 = vunpack.c.h.bf16 %v465
        %v844 = vunpack.c.l.bf16 %v466
        %v845 = vunpack.c.h.bf16 %v466
        %v846 = vunpack.c.l.bf16 %v467
        %v847 = vunpack.c.h.bf16 %v467
        %v848 = vunpack.c.l.bf16 %v468
        %v849 = vunpack.c.h.bf16 %v468
        %v850 = vunpack.c.l.bf16 %v469
        %v851 = vunpack.c.h.bf16 %v469
        %v852 = vunpack.c.l.bf16 %v470
        %v853 = vunpack.c.h.bf16 %v470
        %v854 = vunpack.c.l.bf16 %v471
        %v855 = vunpack.c.h.bf16 %v471
        %v856 = vunpack.c.l.bf16 %v472
        %v857 = vunpack.c.h.bf16 %v472
        %v858 = vunpack.c.l.bf16 %v473
        %v859 = vunpack.c.h.bf16 %v473
        %v860 = vunpack.c.l.bf16 %v474
        %v861 = vunpack.c.h.bf16 %v474
        %v862 = vunpack.c.l.bf16 %v475
        %v863 = vunpack.c.h.bf16 %v475
        %v864 = vunpack.c.l.bf16 %v476
        %v865 = vunpack.c.h.bf16 %v476
        %v866 = vunpack.c.l.bf16 %v477
        %v867 = vunpack.c.h.bf16 %v477
        %v868 = vunpack.c.l.bf16 %v478
        %v869 = vunpack.c.h.bf16 %v478
        %v870 = vunpack.c.l.bf16 %v479
        %v871 = vunpack.c.h.bf16 %v479
        %v872 = vunpack.c.l.bf16 %v480
        %v873 = vunpack.c.h.bf16 %v480
        %v874 = vunpack.c.l.bf16 %v481
        %v875 = vunpack.c.h.bf16 %v481
        %v876 = vunpack.c.l.bf16 %v482
        %v877 = vunpack.c.h.bf16 %v482
        %v878 = vunpack.c.l.bf16 %v483
        %v879 = vunpack.c.h.bf16 %v483
        %v880 = vunpack.c.l.bf16 %v484
        %v881 = vunpack.c.h.bf16 %v484
        %v882 = vunpack.c.l.bf16 %v485
        %v883 = vunpack.c.h.bf16 %v485
        %v884 = vunpack.c.l.bf16 %v486
        %v885 = vunpack.c.h.bf16 %v486
        %v886 = vunpack.c.l.bf16 %v487
        %v887 = vunpack.c.h.bf16 %v487
        %v888 = vunpack.c.l.bf16 %v488
        %v889 = vunpack.c.h.bf16 %v488
        %v890 = vunpack.c.l.bf16 %v489
        %v891 = vunpack.c.h.bf16 %v489
        %v892 = vunpack.c.l.bf16 %v490
        %v893 = vunpack.c.h.bf16 %v490
        %v894 = vunpack.c.l.bf16 %v491
        %v895 = vunpack.c.h.bf16 %v491
        %v896 = vunpack.c.l.bf16 %v492
        %v897 = vunpack.c.h.bf16 %v492
        %v898 = vunpack.c.l.bf16 %v493
        %v899 = vunpack.c.h.bf16 %v493
        %v900 = vunpack.c.l.bf16 %v494
        %v901 = vunpack.c.h.bf16 %v494
        %v902 = vunpack.c.l.bf16 %v495
        %v903 = vunpack.c.h.bf16 %v495
        %v904 = vunpack.c.l.bf16 %v496
        %v905 = vunpack.c.h.bf16 %v496
        %v906 = vunpack.c.l.bf16 %v497
        %v907 = vunpack.c.h.bf16 %v497
        %v908 = vunpack.c.l.bf16 %v498
        %v909 = vunpack.c.h.bf16 %v498
        %v910 = vunpack.c.l.bf16 %v499
        %v911 = vunpack.c.h.bf16 %v499
        %v912 = vunpack.c.l.bf16 %v500
        %v913 = vunpack.c.h.bf16 %v500
        %v914 = vunpack.c.l.bf16 %v501
        %v915 = vunpack.c.h.bf16 %v501
        %v916 = vunpack.c.l.bf16 %v502
        %v917 = vunpack.c.h.bf16 %v502
        %v918 = vunpack.c.l.bf16 %v503
        %v919 = vunpack.c.h.bf16 %v503
        %v920 = vunpack.c.l.bf16 %v504
        %v921 = vunpack.c.h.bf16 %v504
        %v922 = vunpack.c.l.bf16 %v505
        %v923 = vunpack.c.h.bf16 %v505
        %v924 = vunpack.c.l.bf16 %v506
        %v925 = vunpack.c.h.bf16 %v506
        %v926 = vunpack.c.l.bf16 %v507
        %v927 = vunpack.c.h.bf16 %v507
        %v928 = vunpack.c.l.bf16 %v508
        %v929 = vunpack.c.h.bf16 %v508
        %v930 = vunpack.c.l.bf16 %v509
        %v931 = vunpack.c.h.bf16 %v509
        %v932 = vunpack.c.l.bf16 %v510
        %v933 = vunpack.c.h.bf16 %v510
        %v934 = vunpack.c.l.bf16 %v511
        %v935 = vunpack.c.h.bf16 %v511
        %v936 = vunpack.c.l.bf16 %v512
        %v937 = vunpack.c.h.bf16 %v512
        %v938 = vunpack.c.l.bf16 %v513
        %v939 = vunpack.c.h.bf16 %v513
        %v940 = vunpack.c.l.bf16 %v514
        %v941 = vunpack.c.h.bf16 %v514
        %v942 = vunpack.c.l.bf16 %v515
        %v943 = vunpack.c.h.bf16 %v515
        %v944 = vunpack.c.l.bf16 %v516
        %v945 = vunpack.c.h.bf16 %v516
        %v946 = vunpack.c.l.bf16 %v517
        %v947 = vunpack.c.h.bf16 %v517
        %v948 = vunpack.c.l.bf16 %v518
        %v949 = vunpack.c.h.bf16 %v518
        %v950 = vunpack.c.l.bf16 %v519
        %v951 = vunpack.c.h.bf16 %v519
        %v952 = vunpack.c.l.bf16 %v520
        %v953 = vunpack.c.h.bf16 %v520
        %v954 = vunpack.c.l.bf16 %v521
        %v955 = vunpack.c.h.bf16 %v521
        %v956 = vunpack.c.l.bf16 %v522
        %v957 = vunpack.c.h.bf16 %v522
        %v958 = vunpack.c.l.bf16 %v523
        %v959 = vunpack.c.h.bf16 %v523
        %v960 = vunpack.c.l.bf16 %v524
        %v961 = vunpack.c.h.bf16 %v524
        %v962 = vunpack.c.l.bf16 %v525
        %v963 = vunpack.c.h.bf16 %v525
        %v964 = vunpack.c.l.bf16 %v526
        %v965 = vunpack.c.h.bf16 %v526
        %v966 = vunpack.c.l.bf16 %v527
        %v967 = vunpack.c.h.bf16 %v527
        %v968 = vunpack.c.l.bf16 %v528
        %v969 = vunpack.c.h.bf16 %v528
        %v970 = vunpack.c.l.bf16 %v529
        %v971 = vunpack.c.h.bf16 %v529
        %v972 = vunpack.c.l.bf16 %v530
        %v973 = vunpack.c.h.bf16 %v530
        %v974 = vunpack.c.l.bf16 %v531
        %v975 = vunpack.c.h.bf16 %v531
        %v976 = vunpack.c.l.bf16 %v532
        %v977 = vunpack.c.h.bf16 %v532
        %v978 = vunpack.c.l.bf16 %v533
        %v979 = vunpack.c.h.bf16 %v533
        %v980 = vunpack.c.l.bf16 %v534
        %v981 = vunpack.c.h.bf16 %v534
        %v982 = vunpack.c.l.bf16 %v535
        %v983 = vunpack.c.h.bf16 %v535
        %v984 = vunpack.c.l.bf16 %v536
        %v985 = vunpack.c.h.bf16 %v536
        %v986 = vunpack.c.l.bf16 %v537
        %v987 = vunpack.c.h.bf16 %v537
        %v988 = vunpack.c.l.bf16 %v538
        %v989 = vunpack.c.h.bf16 %v538
        %v990 = vunpack.c.l.bf16 %v539
        %v991 = vunpack.c.h.bf16 %v539
        %v992 = vunpack.c.l.bf16 %v540
        %v993 = vunpack.c.h.bf16 %v540
        %v994 = vunpack.c.l.bf16 %v541
        %v995 = vunpack.c.h.bf16 %v541
        %v996 = vunpack.c.l.bf16 %v542
        %v997 = vunpack.c.h.bf16 %v542
        %v998 = vunpack.c.l.bf16 %v543
        %v999 = vunpack.c.h.bf16 %v543
        %v1000 = vunpack.c.l.bf16 %v544
        %v1001 = vunpack.c.h.bf16 %v544
        %v1002 = vunpack.c.l.bf16 %v545
        %v1003 = vunpack.c.h.bf16 %v545
        %v1004 = vunpack.c.l.bf16 %v546
        %v1005 = vunpack.c.h.bf16 %v546
        %v1006 = vunpack.c.l.bf16 %v547
        %v1007 = vunpack.c.h.bf16 %v547
        %v1008 = vunpack.c.l.bf16 %v548
        %v1009 = vunpack.c.h.bf16 %v548
        %v1010 = vunpack.c.l.bf16 %v549
        %v1011 = vunpack.c.h.bf16 %v549
        %v1012 = vunpack.c.l.bf16 %v550
        %v1013 = vunpack.c.h.bf16 %v550
        %v1014 = vunpack.c.l.bf16 %v551
        %v1015 = vunpack.c.h.bf16 %v551
        %v1016 = vunpack.c.l.bf16 %v552
        %v1017 = vunpack.c.h.bf16 %v552
        %v1018 = vunpack.c.l.bf16 %v553
        %v1019 = vunpack.c.h.bf16 %v553
        %v1020 = vunpack.c.l.bf16 %v554
        %v1021 = vunpack.c.h.bf16 %v554
        %v1022 = vunpack.c.l.bf16 %v555
        %v1023 = vunpack.c.h.bf16 %v555
        %v1024 = vunpack.c.l.bf16 %v556
        %v1025 = vunpack.c.h.bf16 %v556
        %v1026 = vunpack.c.l.bf16 %v557
        %v1027 = vunpack.c.h.bf16 %v557
        %v1028 = vunpack.c.l.bf16 %v558
        %v1029 = vunpack.c.h.bf16 %v558
        %v1030 = vunpack.c.l.bf16 %v559
        %v1031 = vunpack.c.h.bf16 %v559
        %v1032 = vunpack.c.l.bf16 %v560
        %v1033 = vunpack.c.h.bf16 %v560
        %v1034 = vunpack.c.l.bf16 %v561
        %v1035 = vunpack.c.h.bf16 %v561
        %v1036 = vunpack.c.l.bf16 %v562
        %v1037 = vunpack.c.h.bf16 %v562
        %v1038 = vunpack.c.l.bf16 %v563
        %v1039 = vunpack.c.h.bf16 %v563
        %v1040 = vunpack.c.l.bf16 %v564
        %v1041 = vunpack.c.h.bf16 %v564
        %v1042 = vunpack.c.l.bf16 %v565
        %v1043 = vunpack.c.h.bf16 %v565
        %v1044 = vunpack.c.l.bf16 %v566
        %v1045 = vunpack.c.h.bf16 %v566
        %v1046 = vunpack.c.l.bf16 %v567
        %v1047 = vunpack.c.h.bf16 %v567
        %v1048 = vunpack.c.l.bf16 %v568
        %v1049 = vunpack.c.h.bf16 %v568
        %v1050 = vunpack.c.l.bf16 %v569
        %v1051 = vunpack.c.h.bf16 %v569
        %v1052 = vunpack.c.l.bf16 %v570
        %v1053 = vunpack.c.h.bf16 %v570
        %v1054 = vunpack.c.l.bf16 %v571
        %v1055 = vunpack.c.h.bf16 %v571
        %v1056 = vunpack.c.l.bf16 %v572
        %v1057 = vunpack.c.h.bf16 %v572
        %v1058 = vunpack.c.l.bf16 %v573
        %v1059 = vunpack.c.h.bf16 %v573
        %v1060 = vunpack.c.l.bf16 %v574
        %v1061 = vunpack.c.h.bf16 %v574
        %v1062 = vunpack.c.l.bf16 %v575
        %v1063 = vunpack.c.h.bf16 %v575
        %v1064 = vunpack.c.l.bf16 %v576
        %v1065 = vunpack.c.h.bf16 %v576
        %v1066 = vunpack.c.l.bf16 %v577
        %v1067 = vunpack.c.h.bf16 %v577
        %v1068 = vunpack.c.l.bf16 %v578
        %v1069 = vunpack.c.h.bf16 %v578
        %v1070 = vunpack.c.l.bf16 %v579
        %v1071 = vunpack.c.h.bf16 %v579
        %v1072 = vunpack.c.l.bf16 %v580
        %v1073 = vunpack.c.h.bf16 %v580
        %v1074 = vunpack.c.l.bf16 %v581
        %v1075 = vunpack.c.h.bf16 %v581
        %v1076 = vunpack.c.l.bf16 %v582
        %v1077 = vunpack.c.h.bf16 %v582
        %v1078 = vunpack.c.l.bf16 %v583
        %v1079 = vunpack.c.h.bf16 %v583
        %v1080 = vunpack.c.l.bf16 %v584
        %v1081 = vunpack.c.h.bf16 %v584
        %v1082 = vunpack.c.l.bf16 %v585
        %v1083 = vunpack.c.h.bf16 %v585
        %v1084 = vunpack.c.l.bf16 %v586
        %v1085 = vunpack.c.h.bf16 %v586
        %v1086 = vunpack.c.l.bf16 %v587
        %v1087 = vunpack.c.h.bf16 %v587
        %v1088 = vunpack.c.l.bf16 %v588
        %v1089 = vunpack.c.h.bf16 %v588
        %v1090 = vunpack.c.l.bf16 %v589
        %v1091 = vunpack.c.h.bf16 %v589
        %v1092 = vunpack.c.l.bf16 %v590
        %v1093 = vunpack.c.h.bf16 %v590
        %v1094 = vunpack.c.l.bf16 %v591
        %v1095 = vunpack.c.h.bf16 %v591
        %v1096 = vunpack.c.l.bf16 %v592
        %v1097 = vunpack.c.h.bf16 %v592
        %v1098 = vunpack.c.l.bf16 %v593
        %v1099 = vunpack.c.h.bf16 %v593
        %v1100 = vunpack.c.l.bf16 %v594
        %v1101 = vunpack.c.h.bf16 %v594
        %v1102 = vunpack.c.l.bf16 %v595
        %v1103 = vunpack.c.h.bf16 %v595
        %v1104 = vunpack.c.l.bf16 %v596
        %v1105 = vunpack.c.h.bf16 %v596
        %v1106 = vunpack.c.l.bf16 %v597
        %v1107 = vunpack.c.h.bf16 %v597
        %v1108 = vunpack.c.l.bf16 %v598
        %v1109 = vunpack.c.h.bf16 %v598
        %v1110 = vunpack.c.l.bf16 %v599
        %v1111 = vunpack.c.h.bf16 %v599
        %v1113 = vcombine.high %v343, %v343
        %v1115 = vunpack.c.l.s4 1983009808
        %v1116 = vunpack.c.0.s8 %v1115
        %v1117 = vlaneseq
        %v1118 = vshrl.u32 %v1117, 7
        %v1119 = vsub.s32 %v1116, %v1118
        %v1120 = vrot.slane %v343, %v1119
        %v1122 = vunpack.c.l.s4 1983009808
        %v1123 = vunpack.c.0.s8 %v1122
        %v1124 = vlaneseq
        %v1125 = vshrl.u32 %v1124, 7
        %v1126 = vsub.s32 %v1123, %v1125
        %v1127 = vrot.slane %v1113, %v1126
        %v1128 = vcombine.high %v1120, %v1120
        %v1129 = vcombine.high %v1127, %v1127
        %1134 = vmatprep.subr.mxu0 %v601
        %1135 = vmatpush1.msra.mxu0 %v600
        %1136 = vmatprep.subr.mxu0 %v609
        %1137 = vmatpush1.msra.mxu0 %v608
        %1138 = vmatprep.subr.mxu0 %v617
        %1139 = vmatpush1.msra.mxu0 %v616
        %1140 = vmatprep.subr.mxu0 %v625
        %1141 = vmatpush1.msra.mxu0 %v624
        %1142 = vmatprep.subr.mxu0 %v633
        %1143 = vmatpush1.msra.mxu0 %v632
        %1144 = vmatprep.subr.mxu0 %v641
        %1145 = vmatpush1.msra.mxu0 %v640
        %1146 = vmatprep.subr.mxu0 %v649
        %1147 = vmatpush1.msra.mxu0 %v648
        %1148 = vmatprep.subr.mxu0 %v657
        %1149 = vmatpush1.msra.mxu0 %v656
        %1150 = vmatprep.subr.mxu0 %v665
        %1151 = vmatpush1.msra.mxu0 %v664
        %1152 = vmatprep.subr.mxu0 %v673
        %1153 = vmatpush1.msra.mxu0 %v672
        %1154 = vmatprep.subr.mxu0 %v681
        %1155 = vmatpush1.msra.mxu0 %v680
        %1156 = vmatprep.subr.mxu0 %v689
        %1157 = vmatpush1.msra.mxu0 %v688
        %1158 = vmatprep.subr.mxu0 %v697
        %1159 = vmatpush1.msra.mxu0 %v696
        %1160 = vmatprep.subr.mxu0 %v705
        %1161 = vmatpush1.msra.mxu0 %v704
        %1162 = vmatprep.subr.mxu0 %v713
        %1163 = vmatpush1.msra.mxu0 %v712
        %1164 = vmatprep.subr.mxu0 %v721
        %1165 = vmatpush1.msra.mxu0 %v720
        %1166 = vmatprep.subr.mxu0 %v729
        %1167 = vmatpush1.msra.mxu0 %v728
        %1168 = vmatprep.subr.mxu0 %v737
        %1169 = vmatpush1.msra.mxu0 %v736
        %1170 = vmatprep.subr.mxu0 %v745
        %1171 = vmatpush1.msra.mxu0 %v744
        %1172 = vmatprep.subr.mxu0 %v753
        %1173 = vmatpush1.msra.mxu0 %v752
        %1174 = vmatprep.subr.mxu0 %v761
        %1175 = vmatpush1.msra.mxu0 %v760
        %1176 = vmatprep.subr.mxu0 %v769
        %1177 = vmatpush1.msra.mxu0 %v768
        %1178 = vmatprep.subr.mxu0 %v777
        %1179 = vmatpush1.msra.mxu0 %v776
        %1180 = vmatprep.subr.mxu0 %v785
        %1181 = vmatpush1.msra.mxu0 %v784
        %1182 = vmatprep.subr.mxu0 %v793
        %1183 = vmatpush1.msra.mxu0 %v792
        %1184 = vmatprep.subr.mxu0 %v801
        %1185 = vmatpush1.msra.mxu0 %v800
        %1186 = vmatprep.subr.mxu0 %v809
        %1187 = vmatpush1.msra.mxu0 %v808
        %1188 = vmatprep.subr.mxu0 %v817
        %1189 = vmatpush1.msra.mxu0 %v816
        %1190 = vmatprep.subr.mxu0 %v825
        %1191 = vmatpush1.msra.mxu0 %v824
        %1192 = vmatprep.subr.mxu0 %v833
        %1193 = vmatpush1.msra.mxu0 %v832
        %1194 = vmatprep.subr.mxu0 %v841
        %1195 = vmatpush1.msra.mxu0 %v840
        %1196 = vmatprep.subr.mxu0 %v849
        %1197 = vmatpush1.msra.mxu0 %v848
        %1198 = vmatprep.mubr.f32.mxu0 %v1128
        %1199 = vmatmul.mubr.f32.gmra.mrb[0].mxu0 %v1120
        %v1200 = vpop.f32.mrb[0].mxu0
        %v1201 = vadd.f32 0.0, %v1200
        %v1202 = vpop.f32.mrb[0].mxu0
        %v1203 = vadd.f32 0.0, %v1202
        %1204 = vdwg.mxu0
        %1205 = vmatprep.subr.mxu0 %v857
        %1206 = vmatpush1.msra.mxu0 %v856
        %1207 = vmatprep.subr.mxu0 %v865
        %1208 = vmatpush1.msra.mxu0 %v864
        %1209 = vmatprep.subr.mxu0 %v873
        %1210 = vmatpush1.msra.mxu0 %v872
        %1211 = vmatprep.subr.mxu0 %v881
        %1212 = vmatpush1.msra.mxu0 %v880
        %1213 = vmatprep.subr.mxu0 %v889
        %1214 = vmatpush1.msra.mxu0 %v888
        %1215 = vmatprep.subr.mxu0 %v897
        %1216 = vmatpush1.msra.mxu0 %v896
        %1217 = vmatprep.subr.mxu0 %v905
        %1218 = vmatpush1.msra.mxu0 %v904
        %1219 = vmatprep.subr.mxu0 %v913
        %1220 = vmatpush1.msra.mxu0 %v912
        %1221 = vmatprep.subr.mxu0 %v921
        %1222 = vmatpush1.msra.mxu0 %v920
        %1223 = vmatprep.subr.mxu0 %v929
        %1224 = vmatpush1.msra.mxu0 %v928
        %1225 = vmatprep.subr.mxu0 %v937
        %1226 = vmatpush1.msra.mxu0 %v936
        %1227 = vmatprep.subr.mxu0 %v945
        %1228 = vmatpush1.msra.mxu0 %v944
        %1229 = vmatprep.subr.mxu0 %v953
        %1230 = vmatpush1.msra.mxu0 %v952
        %1231 = vmatprep.subr.mxu0 %v961
        %1232 = vmatpush1.msra.mxu0 %v960
        %1233 = vmatprep.subr.mxu0 %v969
        %1234 = vmatpush1.msra.mxu0 %v968
        %1235 = vmatprep.subr.mxu0 %v977
        %1236 = vmatpush1.msra.mxu0 %v976
        %1237 = vmatprep.subr.mxu0 %v985
        %1238 = vmatpush1.msra.mxu0 %v984
        %1239 = vmatprep.subr.mxu0 %v993
        %1240 = vmatpush1.msra.mxu0 %v992
        %1241 = vmatprep.subr.mxu0 %v1001
        %1242 = vmatpush1.msra.mxu0 %v1000
        %1243 = vmatprep.subr.mxu0 %v1009
        %1244 = vmatpush1.msra.mxu0 %v1008
        %1245 = vmatprep.subr.mxu0 %v1017
        %1246 = vmatpush1.msra.mxu0 %v1016
        %1247 = vmatprep.subr.mxu0 %v1025
        %1248 = vmatpush1.msra.mxu0 %v1024
        %1249 = vmatprep.subr.mxu0 %v1033
        %1250 = vmatpush1.msra.mxu0 %v1032
        %1251 = vmatprep.subr.mxu0 %v1041
        %1252 = vmatpush1.msra.mxu0 %v1040
        %1253 = vmatprep.subr.mxu0 %v1049
        %1254 = vmatpush1.msra.mxu0 %v1048
        %1255 = vmatprep.subr.mxu0 %v1057
        %1256 = vmatpush1.msra.mxu0 %v1056
        %1257 = vmatprep.subr.mxu0 %v1065
        %1258 = vmatpush1.msra.mxu0 %v1064
        %1259 = vmatprep.subr.mxu0 %v1073
        %1260 = vmatpush1.msra.mxu0 %v1072
        %1261 = vmatprep.subr.mxu0 %v1081
        %1262 = vmatpush1.msra.mxu0 %v1080
        %1263 = vmatprep.subr.mxu0 %v1089
        %1264 = vmatpush1.msra.mxu0 %v1088
        %1265 = vmatprep.subr.mxu0 %v1097
        %1266 = vmatpush1.msra.mxu0 %v1096
        %1267 = vmatprep.subr.mxu0 %v1105
        %1268 = vmatpush1.msra.mxu0 %v1104
        %1269 = vmatprep.mubr.f32.mxu0 %v1129
        %1270 = vmatmul.mubr.f32.gmra.mrb[0].mxu0 %v1127
        %v1271 = vpop.f32.mrb[0].mxu0
        %v1272 = vadd.f32 %v1201, %v1271
        %v1273 = vpop.f32.mrb[0].mxu0
        %v1274 = vadd.f32 %v1203, %v1273
        %1275 = vdwg.mxu0
        %1276 = vmatprep.subr.mxu0 %v603
        %1277 = vmatpush1.msra.mxu0 %v602
        %1278 = vmatprep.subr.mxu0 %v611
        %1279 = vmatpush1.msra.mxu0 %v610
        %1280 = vmatprep.subr.mxu0 %v619
        %1281 = vmatpush1.msra.mxu0 %v618
        %1282 = vmatprep.subr.mxu0 %v627
        %1283 = vmatpush1.msra.mxu0 %v626
        %1284 = vmatprep.subr.mxu0 %v635
        %1285 = vmatpush1.msra.mxu0 %v634
        %1286 = vmatprep.subr.mxu0 %v643
        %1287 = vmatpush1.msra.mxu0 %v642
        %1288 = vmatprep.subr.mxu0 %v651
        %1289 = vmatpush1.msra.mxu0 %v650
        %1290 = vmatprep.subr.mxu0 %v659
        %1291 = vmatpush1.msra.mxu0 %v658
        %1292 = vmatprep.subr.mxu0 %v667
        %1293 = vmatpush1.msra.mxu0 %v666
        %1294 = vmatprep.subr.mxu0 %v675
        %1295 = vmatpush1.msra.mxu0 %v674
        %1296 = vmatprep.subr.mxu0 %v683
        %1297 = vmatpush1.msra.mxu0 %v682
        %1298 = vmatprep.subr.mxu0 %v691
        %1299 = vmatpush1.msra.mxu0 %v690
        %1300 = vmatprep.subr.mxu0 %v699
        %1301 = vmatpush1.msra.mxu0 %v698
        %1302 = vmatprep.subr.mxu0 %v707
        %1303 = vmatpush1.msra.mxu0 %v706
        %1304 = vmatprep.subr.mxu0 %v715
        %1305 = vmatpush1.msra.mxu0 %v714
        %1306 = vmatprep.subr.mxu0 %v723
        %1307 = vmatpush1.msra.mxu0 %v722
        %1308 = vmatprep.subr.mxu0 %v731
        %1309 = vmatpush1.msra.mxu0 %v730
        %1310 = vmatprep.subr.mxu0 %v739
        %1311 = vmatpush1.msra.mxu0 %v738
        %1312 = vmatprep.subr.mxu0 %v747
        %1313 = vmatpush1.msra.mxu0 %v746
        %1314 = vmatprep.subr.mxu0 %v755
        %1315 = vmatpush1.msra.mxu0 %v754
        %1316 = vmatprep.subr.mxu0 %v763
        %1317 = vmatpush1.msra.mxu0 %v762
        %1318 = vmatprep.subr.mxu0 %v771
        %1319 = vmatpush1.msra.mxu0 %v770
        %1320 = vmatprep.subr.mxu0 %v779
        %1321 = vmatpush1.msra.mxu0 %v778
        %1322 = vmatprep.subr.mxu0 %v787
        %1323 = vmatpush1.msra.mxu0 %v786
        %1324 = vmatprep.subr.mxu0 %v795
        %1325 = vmatpush1.msra.mxu0 %v794
        %1326 = vmatprep.subr.mxu0 %v803
        %1327 = vmatpush1.msra.mxu0 %v802
        %1328 = vmatprep.subr.mxu0 %v811
        %1329 = vmatpush1.msra.mxu0 %v810
        %1330 = vmatprep.subr.mxu0 %v819
        %1331 = vmatpush1.msra.mxu0 %v818
        %1332 = vmatprep.subr.mxu0 %v827
        %1333 = vmatpush1.msra.mxu0 %v826
        %1334 = vmatprep.subr.mxu0 %v835
        %1335 = vmatpush1.msra.mxu0 %v834
        %1336 = vmatprep.subr.mxu0 %v843
        %1337 = vmatpush1.msra.mxu0 %v842
        %1338 = vmatprep.subr.mxu0 %v851
        %1339 = vmatpush1.msra.mxu0 %v850
        %1340 = vmatprep.mubr.f32.mxu0 %v1128
        %1341 = vmatmul.mubr.f32.gmra.mrb[0].mxu0 %v1120
        %v1342 = vpop.f32.mrb[0].mxu0
        %v1343 = vadd.f32 0.0, %v1342
        %v1344 = vpop.f32.mrb[0].mxu0
        %v1345 = vadd.f32 0.0, %v1344
        %1346 = vdwg.mxu0
        %1347 = vmatprep.subr.mxu0 %v859
        %1348 = vmatpush1.msra.mxu0 %v858
        %1349 = vmatprep.subr.mxu0 %v867
        %1350 = vmatpush1.msra.mxu0 %v866
        %1351 = vmatprep.subr.mxu0 %v875
        %1352 = vmatpush1.msra.mxu0 %v874
        %1353 = vmatprep.subr.mxu0 %v883
        %1354 = vmatpush1.msra.mxu0 %v882
        %1355 = vmatprep.subr.mxu0 %v891
        %1356 = vmatpush1.msra.mxu0 %v890
        %1357 = vmatprep.subr.mxu0 %v899
        %1358 = vmatpush1.msra.mxu0 %v898
        %1359 = vmatprep.subr.mxu0 %v907
        %1360 = vmatpush1.msra.mxu0 %v906
        %1361 = vmatprep.subr.mxu0 %v915
        %1362 = vmatpush1.msra.mxu0 %v914
        %1363 = vmatprep.subr.mxu0 %v923
        %1364 = vmatpush1.msra.mxu0 %v922
        %1365 = vmatprep.subr.mxu0 %v931
        %1366 = vmatpush1.msra.mxu0 %v930
        %1367 = vmatprep.subr.mxu0 %v939
        %1368 = vmatpush1.msra.mxu0 %v938
        %1369 = vmatprep.subr.mxu0 %v947
        %1370 = vmatpush1.msra.mxu0 %v946
        %1371 = vmatprep.subr.mxu0 %v955
        %1372 = vmatpush1.msra.mxu0 %v954
        %1373 = vmatprep.subr.mxu0 %v963
        %1374 = vmatpush1.msra.mxu0 %v962
        %1375 = vmatprep.subr.mxu0 %v971
        %1376 = vmatpush1.msra.mxu0 %v970
        %1377 = vmatprep.subr.mxu0 %v979
        %1378 = vmatpush1.msra.mxu0 %v978
        %1379 = vmatprep.subr.mxu0 %v987
        %1380 = vmatpush1.msra.mxu0 %v986
        %1381 = vmatprep.subr.mxu0 %v995
        %1382 = vmatpush1.msra.mxu0 %v994
        %1383 = vmatprep.subr.mxu0 %v1003
        %1384 = vmatpush1.msra.mxu0 %v1002
        %1385 = vmatprep.subr.mxu0 %v1011
        %1386 = vmatpush1.msra.mxu0 %v1010
        %1387 = vmatprep.subr.mxu0 %v1019
        %1388 = vmatpush1.msra.mxu0 %v1018
        %1389 = vmatprep.subr.mxu0 %v1027
        %1390 = vmatpush1.msra.mxu0 %v1026
        %1391 = vmatprep.subr.mxu0 %v1035
        %1392 = vmatpush1.msra.mxu0 %v1034
        %1393 = vmatprep.subr.mxu0 %v1043
        %1394 = vmatpush1.msra.mxu0 %v1042
        %1395 = vmatprep.subr.mxu0 %v1051
        %1396 = vmatpush1.msra.mxu0 %v1050
        %1397 = vmatprep.subr.mxu0 %v1059
        %1398 = vmatpush1.msra.mxu0 %v1058
        %1399 = vmatprep.subr.mxu0 %v1067
        %1400 = vmatpush1.msra.mxu0 %v1066
        %1401 = vmatprep.subr.mxu0 %v1075
        %1402 = vmatpush1.msra.mxu0 %v1074
        %1403 = vmatprep.subr.mxu0 %v1083
        %1404 = vmatpush1.msra.mxu0 %v1082
        %1405 = vmatprep.subr.mxu0 %v1091
        %1406 = vmatpush1.msra.mxu0 %v1090
        %1407 = vmatprep.subr.mxu0 %v1099
        %1408 = vmatpush1.msra.mxu0 %v1098
        %1409 = vmatprep.subr.mxu0 %v1107
        %1410 = vmatpush1.msra.mxu0 %v1106
        %1411 = vmatprep.mubr.f32.mxu0 %v1129
        %1412 = vmatmul.mubr.f32.gmra.mrb[0].mxu0 %v1127
        %v1413 = vpop.f32.mrb[0].mxu0
        %v1414 = vadd.f32 %v1343, %v1413
        %v1415 = vpop.f32.mrb[0].mxu0
        %v1416 = vadd.f32 %v1345, %v1415
        %1417 = vdwg.mxu0
        %1418 = vmatprep.subr.mxu0 %v605
        %1419 = vmatpush1.msra.mxu0 %v604
        %1420 = vmatprep.subr.mxu0 %v613
        %1421 = vmatpush1.msra.mxu0 %v612
        %1422 = vmatprep.subr.mxu0 %v621
        %1423 = vmatpush1.msra.mxu0 %v620
        %1424 = vmatprep.subr.mxu0 %v629
        %1425 = vmatpush1.msra.mxu0 %v628
        %1426 = vmatprep.subr.mxu0 %v637
        %1427 = vmatpush1.msra.mxu0 %v636
        %1428 = vmatprep.subr.mxu0 %v645
        %1429 = vmatpush1.msra.mxu0 %v644
        %1430 = vmatprep.subr.mxu0 %v653
        %1431 = vmatpush1.msra.mxu0 %v652
        %1432 = vmatprep.subr.mxu0 %v661
        %1433 = vmatpush1.msra.mxu0 %v660
        %1434 = vmatprep.subr.mxu0 %v669
        %1435 = vmatpush1.msra.mxu0 %v668
        %1436 = vmatprep.subr.mxu0 %v677
        %1437 = vmatpush1.msra.mxu0 %v676
        %1438 = vmatprep.subr.mxu0 %v685
        %1439 = vmatpush1.msra.mxu0 %v684
        %1440 = vmatprep.subr.mxu0 %v693
        %1441 = vmatpush1.msra.mxu0 %v692
        %1442 = vmatprep.subr.mxu0 %v701
        %1443 = vmatpush1.msra.mxu0 %v700
        %1444 = vmatprep.subr.mxu0 %v709
        %1445 = vmatpush1.msra.mxu0 %v708
        %1446 = vmatprep.subr.mxu0 %v717
        %1447 = vmatpush1.msra.mxu0 %v716
        %1448 = vmatprep.subr.mxu0 %v725
        %1449 = vmatpush1.msra.mxu0 %v724
        %1450 = vmatprep.subr.mxu0 %v733
        %1451 = vmatpush1.msra.mxu0 %v732
        %1452 = vmatprep.subr.mxu0 %v741
        %1453 = vmatpush1.msra.mxu0 %v740
        %1454 = vmatprep.subr.mxu0 %v749
        %1455 = vmatpush1.msra.mxu0 %v748
        %1456 = vmatprep.subr.mxu0 %v757
        %1457 = vmatpush1.msra.mxu0 %v756
        %1458 = vmatprep.subr.mxu0 %v765
        %1459 = vmatpush1.msra.mxu0 %v764
        %1460 = vmatprep.subr.mxu0 %v773
        %1461 = vmatpush1.msra.mxu0 %v772
        %1462 = vmatprep.subr.mxu0 %v781
        %1463 = vmatpush1.msra.mxu0 %v780
        %1464 = vmatprep.subr.mxu0 %v789
        %1465 = vmatpush1.msra.mxu0 %v788
        %1466 = vmatprep.subr.mxu0 %v797
        %1467 = vmatpush1.msra.mxu0 %v796
        %1468 = vmatprep.subr.mxu0 %v805
        %1469 = vmatpush1.msra.mxu0 %v804
        %1470 = vmatprep.subr.mxu0 %v813
        %1471 = vmatpush1.msra.mxu0 %v812
        %1472 = vmatprep.subr.mxu0 %v821
        %1473 = vmatpush1.msra.mxu0 %v820
        %1474 = vmatprep.subr.mxu0 %v829
        %1475 = vmatpush1.msra.mxu0 %v828
        %1476 = vmatprep.subr.mxu0 %v837
        %1477 = vmatpush1.msra.mxu0 %v836
        %1478 = vmatprep.subr.mxu0 %v845
        %1479 = vmatpush1.msra.mxu0 %v844
        %1480 = vmatprep.subr.mxu0 %v853
        %1481 = vmatpush1.msra.mxu0 %v852
        %1482 = vmatprep.mubr.f32.mxu0 %v1128
        %1483 = vmatmul.mubr.f32.gmra.mrb[0].mxu0 %v1120
        %v1484 = vpop.f32.mrb[0].mxu0
        %v1485 = vadd.f32 0.0, %v1484
        %v1486 = vpop.f32.mrb[0].mxu0
        %v1487 = vadd.f32 0.0, %v1486
        %1488 = vdwg.mxu0
        %1489 = vmatprep.subr.mxu0 %v861
        %1490 = vmatpush1.msra.mxu0 %v860
        %1491 = vmatprep.subr.mxu0 %v869
        %1492 = vmatpush1.msra.mxu0 %v868
        %1493 = vmatprep.subr.mxu0 %v877
        %1494 = vmatpush1.msra.mxu0 %v876
        %1495 = vmatprep.subr.mxu0 %v885
        %1496 = vmatpush1.msra.mxu0 %v884
        %1497 = vmatprep.subr.mxu0 %v893
        %1498 = vmatpush1.msra.mxu0 %v892
        %1499 = vmatprep.subr.mxu0 %v901
        %1500 = vmatpush1.msra.mxu0 %v900
        %1501 = vmatprep.subr.mxu0 %v909
        %1502 = vmatpush1.msra.mxu0 %v908
        %1503 = vmatprep.subr.mxu0 %v917
        %1504 = vmatpush1.msra.mxu0 %v916
        %1505 = vmatprep.subr.mxu0 %v925
        %1506 = vmatpush1.msra.mxu0 %v924
        %1507 = vmatprep.subr.mxu0 %v933
        %1508 = vmatpush1.msra.mxu0 %v932
        %1509 = vmatprep.subr.mxu0 %v941
        %1510 = vmatpush1.msra.mxu0 %v940
        %1511 = vmatprep.subr.mxu0 %v949
        %1512 = vmatpush1.msra.mxu0 %v948
        %1513 = vmatprep.subr.mxu0 %v957
        %1514 = vmatpush1.msra.mxu0 %v956
        %1515 = vmatprep.subr.mxu0 %v965
        %1516 = vmatpush1.msra.mxu0 %v964
        %1517 = vmatprep.subr.mxu0 %v973
        %1518 = vmatpush1.msra.mxu0 %v972
        %1519 = vmatprep.subr.mxu0 %v981
        %1520 = vmatpush1.msra.mxu0 %v980
        %1521 = vmatprep.subr.mxu0 %v989
        %1522 = vmatpush1.msra.mxu0 %v988
        %1523 = vmatprep.subr.mxu0 %v997
        %1524 = vmatpush1.msra.mxu0 %v996
        %1525 = vmatprep.subr.mxu0 %v1005
        %1526 = vmatpush1.msra.mxu0 %v1004
        %1527 = vmatprep.subr.mxu0 %v1013
        %1528 = vmatpush1.msra.mxu0 %v1012
        %1529 = vmatprep.subr.mxu0 %v1021
        %1530 = vmatpush1.msra.mxu0 %v1020
        %1531 = vmatprep.subr.mxu0 %v1029
        %1532 = vmatpush1.msra.mxu0 %v1028
        %1533 = vmatprep.subr.mxu0 %v1037
        %1534 = vmatpush1.msra.mxu0 %v1036
        %1535 = vmatprep.subr.mxu0 %v1045
        %1536 = vmatpush1.msra.mxu0 %v1044
        %1537 = vmatprep.subr.mxu0 %v1053
        %1538 = vmatpush1.msra.mxu0 %v1052
        %1539 = vmatprep.subr.mxu0 %v1061
        %1540 = vmatpush1.msra.mxu0 %v1060
        %1541 = vmatprep.subr.mxu0 %v1069
        %1542 = vmatpush1.msra.mxu0 %v1068
        %1543 = vmatprep.subr.mxu0 %v1077
        %1544 = vmatpush1.msra.mxu0 %v1076
        %1545 = vmatprep.subr.mxu0 %v1085
        %1546 = vmatpush1.msra.mxu0 %v1084
        %1547 = vmatprep.subr.mxu0 %v1093
        %1548 = vmatpush1.msra.mxu0 %v1092
        %1549 = vmatprep.subr.mxu0 %v1101
        %1550 = vmatpush1.msra.mxu0 %v1100
        %1551 = vmatprep.subr.mxu0 %v1109
        %1552 = vmatpush1.msra.mxu0 %v1108
        %1553 = vmatprep.mubr.f32.mxu0 %v1129
        %1554 = vmatmul.mubr.f32.gmra.mrb[0].mxu0 %v1127
        %v1555 = vpop.f32.mrb[0].mxu0
        %v1556 = vadd.f32 %v1485, %v1555
        %v1557 = vpop.f32.mrb[0].mxu0
        %v1558 = vadd.f32 %v1487, %v1557
        %1559 = vdwg.mxu0
        %1560 = vmatprep.subr.mxu0 %v607
        %1561 = vmatpush1.msra.mxu0 %v606
        %1562 = vmatprep.subr.mxu0 %v615
        %1563 = vmatpush1.msra.mxu0 %v614
        %1564 = vmatprep.subr.mxu0 %v623
        %1565 = vmatpush1.msra.mxu0 %v622
        %1566 = vmatprep.subr.mxu0 %v631
        %1567 = vmatpush1.msra.mxu0 %v630
        %1568 = vmatprep.subr.mxu0 %v639
        %1569 = vmatpush1.msra.mxu0 %v638
        %1570 = vmatprep.subr.mxu0 %v647
        %1571 = vmatpush1.msra.mxu0 %v646
        %1572 = vmatprep.subr.mxu0 %v655
        %1573 = vmatpush1.msra.mxu0 %v654
        %1574 = vmatprep.subr.mxu0 %v663
        %1575 = vmatpush1.msra.mxu0 %v662
        %1576 = vmatprep.subr.mxu0 %v671
        %1577 = vmatpush1.msra.mxu0 %v670
        %1578 = vmatprep.subr.mxu0 %v679
        %1579 = vmatpush1.msra.mxu0 %v678
        %1580 = vmatprep.subr.mxu0 %v687
        %1581 = vmatpush1.msra.mxu0 %v686
        %1582 = vmatprep.subr.mxu0 %v695
        %1583 = vmatpush1.msra.mxu0 %v694
        %1584 = vmatprep.subr.mxu0 %v703
        %1585 = vmatpush1.msra.mxu0 %v702
        %1586 = vmatprep.subr.mxu0 %v711
        %1587 = vmatpush1.msra.mxu0 %v710
        %1588 = vmatprep.subr.mxu0 %v719
        %1589 = vmatpush1.msra.mxu0 %v718
        %1590 = vmatprep.subr.mxu0 %v727
        %1591 = vmatpush1.msra.mxu0 %v726
        %1592 = vmatprep.subr.mxu0 %v735
        %1593 = vmatpush1.msra.mxu0 %v734
        %1594 = vmatprep.subr.mxu0 %v743
        %1595 = vmatpush1.msra.mxu0 %v742
        %1596 = vmatprep.subr.mxu0 %v751
        %1597 = vmatpush1.msra.mxu0 %v750
        %1598 = vmatprep.subr.mxu0 %v759
        %1599 = vmatpush1.msra.mxu0 %v758
        %1600 = vmatprep.subr.mxu0 %v767
        %1601 = vmatpush1.msra.mxu0 %v766
        %1602 = vmatprep.subr.mxu0 %v775
        %1603 = vmatpush1.msra.mxu0 %v774
        %1604 = vmatprep.subr.mxu0 %v783
        %1605 = vmatpush1.msra.mxu0 %v782
        %1606 = vmatprep.subr.mxu0 %v791
        %1607 = vmatpush1.msra.mxu0 %v790
        %1608 = vmatprep.subr.mxu0 %v799
        %1609 = vmatpush1.msra.mxu0 %v798
        %1610 = vmatprep.subr.mxu0 %v807
        %1611 = vmatpush1.msra.mxu0 %v806
        %1612 = vmatprep.subr.mxu0 %v815
        %1613 = vmatpush1.msra.mxu0 %v814
        %1614 = vmatprep.subr.mxu0 %v823
        %1615 = vmatpush1.msra.mxu0 %v822
        %1616 = vmatprep.subr.mxu0 %v831
        %1617 = vmatpush1.msra.mxu0 %v830
        %1618 = vmatprep.subr.mxu0 %v839
        %1619 = vmatpush1.msra.mxu0 %v838
        %1620 = vmatprep.subr.mxu0 %v847
        %1621 = vmatpush1.msra.mxu0 %v846
        %1622 = vmatprep.subr.mxu0 %v855
        %1623 = vmatpush1.msra.mxu0 %v854
        %1624 = vmatprep.mubr.f32.mxu0 %v1128
        %1625 = vmatmul.mubr.f32.gmra.mrb[0].mxu0 %v1120
        %v1626 = vpop.f32.mrb[0].mxu0
        %v1627 = vadd.f32 0.0, %v1626
        %v1628 = vpop.f32.mrb[0].mxu0
        %v1629 = vadd.f32 0.0, %v1628
        %1630 = vdwg.mxu0
        %1631 = vmatprep.subr.mxu0 %v863
        %1632 = vmatpush1.msra.mxu0 %v862
        %1633 = vmatprep.subr.mxu0 %v871
        %1634 = vmatpush1.msra.mxu0 %v870
        %1635 = vmatprep.subr.mxu0 %v879
        %1636 = vmatpush1.msra.mxu0 %v878
        %1637 = vmatprep.subr.mxu0 %v887
        %1638 = vmatpush1.msra.mxu0 %v886
        %1639 = vmatprep.subr.mxu0 %v895
        %1640 = vmatpush1.msra.mxu0 %v894
        %1641 = vmatprep.subr.mxu0 %v903
        %1642 = vmatpush1.msra.mxu0 %v902
        %1643 = vmatprep.subr.mxu0 %v911
        %1644 = vmatpush1.msra.mxu0 %v910
        %1645 = vmatprep.subr.mxu0 %v919
        %1646 = vmatpush1.msra.mxu0 %v918
        %1647 = vmatprep.subr.mxu0 %v927
        %1648 = vmatpush1.msra.mxu0 %v926
        %1649 = vmatprep.subr.mxu0 %v935
        %1650 = vmatpush1.msra.mxu0 %v934
        %1651 = vmatprep.subr.mxu0 %v943
        %1652 = vmatpush1.msra.mxu0 %v942
        %1653 = vmatprep.subr.mxu0 %v951
        %1654 = vmatpush1.msra.mxu0 %v950
        %1655 = vmatprep.subr.mxu0 %v959
        %1656 = vmatpush1.msra.mxu0 %v958
        %1657 = vmatprep.subr.mxu0 %v967
        %1658 = vmatpush1.msra.mxu0 %v966
        %1659 = vmatprep.subr.mxu0 %v975
        %1660 = vmatpush1.msra.mxu0 %v974
        %1661 = vmatprep.subr.mxu0 %v983
        %1662 = vmatpush1.msra.mxu0 %v982
        %1663 = vmatprep.subr.mxu0 %v991
        %1664 = vmatpush1.msra.mxu0 %v990
        %1665 = vmatprep.subr.mxu0 %v999
        %1666 = vmatpush1.msra.mxu0 %v998
        %1667 = vmatprep.subr.mxu0 %v1007
        %1668 = vmatpush1.msra.mxu0 %v1006
        %1669 = vmatprep.subr.mxu0 %v1015
        %1670 = vmatpush1.msra.mxu0 %v1014
        %1671 = vmatprep.subr.mxu0 %v1023
        %1672 = vmatpush1.msra.mxu0 %v1022
        %1673 = vmatprep.subr.mxu0 %v1031
        %1674 = vmatpush1.msra.mxu0 %v1030
        %1675 = vmatprep.subr.mxu0 %v1039
        %1676 = vmatpush1.msra.mxu0 %v1038
        %1677 = vmatprep.subr.mxu0 %v1047
        %1678 = vmatpush1.msra.mxu0 %v1046
        %1679 = vmatprep.subr.mxu0 %v1055
        %1680 = vmatpush1.msra.mxu0 %v1054
        %1681 = vmatprep.subr.mxu0 %v1063
        %1682 = vmatpush1.msra.mxu0 %v1062
        %1683 = vmatprep.subr.mxu0 %v1071
        %1684 = vmatpush1.msra.mxu0 %v1070
        %1685 = vmatprep.subr.mxu0 %v1079
        %1686 = vmatpush1.msra.mxu0 %v1078
        %1687 = vmatprep.subr.mxu0 %v1087
        %1688 = vmatpush1.msra.mxu0 %v1086
        %1689 = vmatprep.subr.mxu0 %v1095
        %1690 = vmatpush1.msra.mxu0 %v1094
        %1691 = vmatprep.subr.mxu0 %v1103
        %1692 = vmatpush1.msra.mxu0 %v1102
        %1693 = vmatprep.subr.mxu0 %v1111
        %1694 = vmatpush1.msra.mxu0 %v1110
        %1695 = vmatprep.mubr.f32.mxu0 %v1129
        %1696 = vmatmul.mubr.f32.gmra.mrb[0].mxu0 %v1127
        %v1697 = vpop.f32.mrb[0].mxu0
        %v1698 = vadd.f32 %v1627, %v1697
        %v1699 = vpop.f32.mrb[0].mxu0
        %v1700 = vadd.f32 %v1629, %v1699
        %1701 = vdwg.mxu0
        %v1710 = vcombine.low %v1272, %v1274
        %v1711 = vcombine.low %v1414, %v1416
        %v1713 = vunpack.c.l.s4 1983009808
        %v1714 = vunpack.c.0.s8 %v1713
        %v1715 = vlaneseq
        %v1716 = vshrl.u32 %v1715, 7
        %v1717 = vsub.s32 %v1714, %v1716
        %v1718 = vrot.slane %v1710, %v1717
        %v1720 = vunpack.c.l.s4 1983009808
        %v1721 = vunpack.c.0.s8 %v1720
        %v1722 = vlaneseq
        %v1723 = vshrl.u32 %v1722, 7
        %v1724 = vsub.s32 %v1721, %v1723
        %v1725 = vrot.slane %v1711, %v1724
        %v1726 = vcombine.low %v1718, %v1725
        %v1727 = vcombine.low %v1556, %v1558
        %v1728 = vcombine.low %v1698, %v1700
        %v1730 = vunpack.c.l.s4 1983009808
        %v1731 = vunpack.c.0.s8 %v1730
        %v1732 = vlaneseq
        %v1733 = vshrl.u32 %v1732, 7
        %v1734 = vsub.s32 %v1731, %v1733
        %v1735 = vrot.slane %v1727, %v1734
        %v1737 = vunpack.c.l.s4 1983009808
        %v1738 = vunpack.c.0.s8 %v1737
        %v1739 = vlaneseq
        %v1740 = vshrl.u32 %v1739, 7
        %v1741 = vsub.s32 %v1738, %v1740
        %v1742 = vrot.slane %v1728, %v1741
        %v1743 = vcombine.low %v1735, %v1742
        %v1746 = vadd.f32 %v341, %v1726
        %v1747 = vadd.f32 %v342, %v1743
        %1748 = vst [vmem:[#allocation2] sm:$0xff] %v1746
        %1749 = vst [vmem:[#allocation2 + $0x8] sm:$0xff] %v1747
        // Predicated region
        $region53: #{transformer_net_forward.3} parent=35 // pred_check
          %p1750 = pneg %p335
        $region54: #{transformer_net_forward.3} parent=35 // pred_check_branch
          %1752 = sbr.rel (%p1750) target = $region56
        $region55: #{transformer_net_forward.3} parent=35 // pred_region
          %v1753 = vld [vmem:[#allocation2] sm:$0xff]
          %v1754 = vld [vmem:[#allocation2 + $0x8] sm:$0xff]
          %v1755 = vld [vmem:[%s270] sm:$0xff]
          %v1757 = vlaneseq
          %v1758 = vshrl.u32 %v1757, 7
          %v1759 = vsub.s32 0, %v1758
          %v1760 = vrot.slane %v1755, %v1759
          %v1761 = vlaneseq
          %v1762 = vshrl.u32 %v1761, 7
          %v1763 = vsub.s32 1, %v1762
          %v1764 = vrot.slane %v1755, %v1763
          %v1765 = vlaneseq
          %v1766 = vshrl.u32 %v1765, 7
          %v1767 = vsub.s32 2, %v1766
          %v1768 = vrot.slane %v1755, %v1767
          %v1769 = vlaneseq
          %v1770 = vshrl.u32 %v1769, 7
          %v1771 = vsub.s32 3, %v1770
          %v1772 = vrot.slane %v1755, %v1771
          %v1773 = vlaneseq
          %v1774 = vshrl.u32 %v1773, 7
          %v1775 = vsub.s32 4, %v1774
          %v1776 = vrot.slane %v1755, %v1775
          %v1777 = vlaneseq
          %v1778 = vshrl.u32 %v1777, 7
          %v1779 = vsub.s32 5, %v1778
          %v1780 = vrot.slane %v1755, %v1779
          %v1781 = vlaneseq
          %v1782 = vshrl.u32 %v1781, 7
          %v1783 = vsub.s32 6, %v1782
          %v1784 = vrot.slane %v1755, %v1783
          %v1785 = vlaneseq
          %v1786 = vshrl.u32 %v1785, 7
          %v1787 = vsub.s32 7, %v1786
          %v1788 = vrot.slane %v1755, %v1787
          %v1789 = vcombine.low %v1760, %v1764
          %v1790 = vcombine.low %v1768, %v1772
          %v1792 = vunpack.c.l.s4 1983009808
          %v1793 = vunpack.c.0.s8 %v1792
          %v1794 = vlaneseq
          %v1795 = vshrl.u32 %v1794, 7
          %v1796 = vsub.s32 %v1793, %v1795
          %v1797 = vrot.slane %v1789, %v1796
          %v1799 = vunpack.c.l.s4 1983009808
          %v1800 = vunpack.c.0.s8 %v1799
          %v1801 = vlaneseq
          %v1802 = vshrl.u32 %v1801, 7
          %v1803 = vsub.s32 %v1800, %v1802
          %v1804 = vrot.slane %v1790, %v1803
          %v1805 = vcombine.low %v1797, %v1804
          %v1806 = vcombine.low %v1776, %v1780
          %v1807 = vcombine.low %v1784, %v1788
          %v1809 = vunpack.c.l.s4 1983009808
          %v1810 = vunpack.c.0.s8 %v1809
          %v1811 = vlaneseq
          %v1812 = vshrl.u32 %v1811, 7
          %v1813 = vsub.s32 %v1810, %v1812
          %v1814 = vrot.slane %v1806, %v1813
          %v1816 = vunpack.c.l.s4 1983009808
          %v1817 = vunpack.c.0.s8 %v1816
          %v1818 = vlaneseq
          %v1819 = vshrl.u32 %v1818, 7
          %v1820 = vsub.s32 %v1817, %v1819
          %v1821 = vrot.slane %v1807, %v1820
          %v1822 = vcombine.low %v1814, %v1821
          %v1825 = vadd.f32 %v1753, %v1805
          %v1826 = vadd.f32 %v1754, %v1822
          %v1827 = vld [vmem:[%s279] sm:$0xff]
          %v1828 = vtanh.pop %v1825
          %v1829 = vtanh.pop %v1826
          %v1830 = vsub.f32 %v1828, %v1825
          %v1831 = vsub.f32 %v1829, %v1826
          %v1833 = vlaneseq
          %v1834 = vshrl.u32 %v1833, 7
          %v1835 = vsub.s32 0, %v1834
          %v1836 = vrot.slane %v1827, %v1835
          %v1837 = vlaneseq
          %v1838 = vshrl.u32 %v1837, 7
          %v1839 = vsub.s32 1, %v1838
          %v1840 = vrot.slane %v1827, %v1839
          %v1841 = vlaneseq
          %v1842 = vshrl.u32 %v1841, 7
          %v1843 = vsub.s32 2, %v1842
          %v1844 = vrot.slane %v1827, %v1843
          %v1845 = vlaneseq
          %v1846 = vshrl.u32 %v1845, 7
          %v1847 = vsub.s32 3, %v1846
          %v1848 = vrot.slane %v1827, %v1847
          %v1849 = vlaneseq
          %v1850 = vshrl.u32 %v1849, 7
          %v1851 = vsub.s32 4, %v1850
          %v1852 = vrot.slane %v1827, %v1851
          %v1853 = vlaneseq
          %v1854 = vshrl.u32 %v1853, 7
          %v1855 = vsub.s32 5, %v1854
          %v1856 = vrot.slane %v1827, %v1855
          %v1857 = vlaneseq
          %v1858 = vshrl.u32 %v1857, 7
          %v1859 = vsub.s32 6, %v1858
          %v1860 = vrot.slane %v1827, %v1859
          %v1861 = vlaneseq
          %v1862 = vshrl.u32 %v1861, 7
          %v1863 = vsub.s32 7, %v1862
          %v1864 = vrot.slane %v1827, %v1863
          %v1875 = vcombine.high %v1830, %v1830
          %v1877 = vunpack.c.l.s4 1983009808
          %v1878 = vunpack.c.0.s8 %v1877
          %v1879 = vlaneseq
          %v1880 = vshrl.u32 %v1879, 7
          %v1881 = vsub.s32 %v1878, %v1880
          %v1882 = vrot.slane %v1830, %v1881
          %v1884 = vunpack.c.l.s4 1983009808
          %v1885 = vunpack.c.0.s8 %v1884
          %v1886 = vlaneseq
          %v1887 = vshrl.u32 %v1886, 7
          %v1888 = vsub.s32 %v1885, %v1887
          %v1889 = vrot.slane %v1875, %v1888
          %v1890 = vcombine.high %v1882, %v1882
          %v1891 = vcombine.high %v1889, %v1889
          %v1892 = vcombine.high %v1831, %v1831
          %v1894 = vunpack.c.l.s4 1983009808
          %v1895 = vunpack.c.0.s8 %v1894
          %v1896 = vlaneseq
          %v1897 = vshrl.u32 %v1896, 7
          %v1898 = vsub.s32 %v1895, %v1897
          %v1899 = vrot.slane %v1831, %v1898
          %v1901 = vunpack.c.l.s4 1983009808
          %v1902 = vunpack.c.0.s8 %v1901
          %v1903 = vlaneseq
          %v1904 = vshrl.u32 %v1903, 7
          %v1905 = vsub.s32 %v1902, %v1904
          %v1906 = vrot.slane %v1892, %v1905
          %v1907 = vcombine.high %v1899, %v1899
          %v1908 = vcombine.high %v1906, %v1906
          %v1917 = vmul.f32 %v1836, %v1882
          %v1918 = vmul.f32 %v1840, %v1890
          %v1919 = vmul.f32 %v1844, %v1889
          %v1920 = vmul.f32 %v1848, %v1891
          %v1921 = vmul.f32 %v1852, %v1899
          %v1922 = vmul.f32 %v1856, %v1907
          %v1923 = vmul.f32 %v1860, %v1906
          %v1924 = vmul.f32 %v1864, %v1908
          %v1933 = vcombine.low %v1917, %v1918
          %v1934 = vcombine.low %v1919, %v1920
          %v1936 = vunpack.c.l.s4 1983009808
          %v1937 = vunpack.c.0.s8 %v1936
          %v1938 = vlaneseq
          %v1939 = vshrl.u32 %v1938, 7
          %v1940 = vsub.s32 %v1937, %v1939
          %v1941 = vrot.slane %v1933, %v1940
          %v1943 = vunpack.c.l.s4 1983009808
          %v1944 = vunpack.c.0.s8 %v1943
          %v1945 = vlaneseq
          %v1946 = vshrl.u32 %v1945, 7
          %v1947 = vsub.s32 %v1944, %v1946
          %v1948 = vrot.slane %v1934, %v1947
          %v1949 = vcombine.low %v1941, %v1948
          %v1950 = vcombine.low %v1921, %v1922
          %v1951 = vcombine.low %v1923, %v1924
          %v1953 = vunpack.c.l.s4 1983009808
          %v1954 = vunpack.c.0.s8 %v1953
          %v1955 = vlaneseq
          %v1956 = vshrl.u32 %v1955, 7
          %v1957 = vsub.s32 %v1954, %v1956
          %v1958 = vrot.slane %v1950, %v1957
          %v1960 = vunpack.c.l.s4 1983009808
          %v1961 = vunpack.c.0.s8 %v1960
          %v1962 = vlaneseq
          %v1963 = vshrl.u32 %v1962, 7
          %v1964 = vsub.s32 %v1961, %v1963
          %v1965 = vrot.slane %v1951, %v1964
          %v1966 = vcombine.low %v1958, %v1965
          %v1969 = vadd.f32 %v1825, %v1949
          %v1970 = vadd.f32 %v1826, %v1966
          %1971 = vst [vmem:[%s333] sm:$0xff] %v1969
          %1972 = vst [vmem:[%s333 + $0x8] sm:$0xff] %v1970
        $region56: #{transformer_net_forward.3} parent=35 // pred_fallthru
          _
        %s1973 = smul.u32 8, %s25
        %p1974 = scmp.lt.s32.totalorder %s1973, 31
        %s1975 = scalar_select %p1974, %s1973, 31
        %s1976 = smul.addr %s1975, 2
        %s1977 = scalar_lea.vmem %s4, %s1976
        // Predicated region
        $region57: #{transformer_net_forward.3} parent=35 // pred_check
          %p1978 = pneg %p157
        $region58: #{transformer_net_forward.3} parent=35 // pred_check_branch
          %1980 = sbr.rel (%p1978) target = $region60
        $region59: #{transformer_net_forward.3} parent=35 // pred_region
          %s1981 = smul.u32 8, %s25
        $region60: #{transformer_net_forward.3} parent=35 // pred_fallthru
          _
      $region36: #{transformer_net_forward.3} parent=5 // pred_fallthru
        _
      %p1982 = scmp.le.s32.totalorder 2, %s16
      // Predicated region
      $region61: #{transformer_net_forward.3} parent=5 // pred_check
        %p1983 = pneg %p1982
      $region62: #{transformer_net_forward.3} parent=5 // pred_check_branch
        %1985 = sbr.rel (%p1983) target = $region64
      $region63: #{transformer_net_forward.3} parent=5 // pred_region
        %s1986 = ssub.s32 %s16, 2
        // Predicated region
        $region65: #{transformer_net_forward.3} parent=63 // pred_check
          %p1987 = pneg %p163
        $region66: #{transformer_net_forward.3} parent=63 // pred_check_branch
          %1989 = sbr.rel (%p1987) target = $region68
        $region67: #{transformer_net_forward.3} parent=63 // pred_region
          %s1990 = smul.u32 8, %s27
          %p1991 = scmp.lt.s32.totalorder %s1990, 31
          %s1992 = scalar_select %p1991, %s1990, 31
          %s1993 = smul.addr %s1992, 2
          %s1994 = scalar_lea.vmem %s4, %s1993
        $region68: #{transformer_net_forward.3} parent=63 // pred_fallthru
          _
      $region64: #{transformer_net_forward.3} parent=5 // pred_fallthru
        _
    $region6: #{transformer_net_forward.3} parent=1 // loop_footer
      %s20 = sadd.s32 1, %s16
    $region7: #{transformer_net_forward.3} parent=1 // loop_footer_branch
      %15 = sbr.rel target = $region3
    $region8: #{transformer_net_forward.3} parent=1 // loop_exit
      _
    %1995 = vsyncpa [#allocation4], 1
    %s1996 = scalar_lea.sflag [#allocation4], 1
    %1997 = vsyncpa %s1996, 1
    %1998 = vsyncpa [#allocation6], 1
    %s1999 = scalar_lea.sflag [#allocation6], 1
    %2000 = vsyncpa %s1999, 1

// kernel: transformer_net_forward.5
$region0: #{transformer_net_forward.5}
  #allocation0 [shape = 'u32[]', space=smem, size = 0x4, offset = 0x4, fixed_abs, tag = 'smem constant byte address 0x4 - core index']
  #allocation1 [shape = 'u32[144,128]{1,0:T(1,128)}', space=vmem, size = 0x12000, scoped, tag = 'internal scratch']
  #allocation2 [shape = 'f32[2,256]{1,0:T(2,128)}', space=vmem, size = 0x800, scoped, tag = 'scratch operand']
  %s0 = inlined_call_operand.vmem [shape: f32[2,4096], index: 0, kind: input, shape index: {}]
  %s1 = inlined_call_operand.vmem [shape: bf16[4096,256], index: 1, kind: input, shape index: {}]
  %s2 = inlined_call_operand.vmem [shape: f32[1,256], index: 2, kind: input, shape index: {}]
  %s3 = inlined_call_operand.vmem [shape: f32[1,256], index: 3, kind: input, shape index: {}]
  %s4 = inlined_call_operand.vmem [shape: f32[2,256], index: 4, kind: output, shape index: {}]
  %s5 = sld [smem:[#allocation0]]
  $region57: #{transformer_net_forward.5} parent=0
    _
  %s7 = ssub.s32 1, %s5
  %s8 = scalar_select 0, %s7, %s5
  loop: start=0, step=1, limit=6
  $region2: #{transformer_net_forward.5} parent=0 // loop_pre_header
    _
  $region3: #{transformer_net_forward.5} parent=0 // loop_header
    %s10 = sphi 0, %s14
    %p11 = scmp.ge.s32.totalorder %s10, 6
    %s17 = sphi 0, %s29
    %s18 = sphi 0, %s25
    %s19 = sphi 0, %s17
    %s20 = sphi 0, %s18
    %s21 = sphi 0, %s19
    %s22 = sphi 0, %s20
    %s32 = sphi 0, %s34
    %s35 = sphi 0, %s32
    %s36 = sphi 0, %s35
    %s52 = sphi 0, %s36
    %s60 = sphi 0, %s62
    %s63 = sphi 0, %s60
    %s64 = sphi 0, %s63
    %s80 = sphi 0, %s64
    %s86 = sphi 0, %s88
    %s89 = sphi 0, %s86
    %s90 = sphi 0, %s89
    %s106 = sphi 0, %s90
    %s112 = sphi 0, %s114
    %s115 = sphi 0, %s112
    %s116 = sphi 0, %s115
    %s132 = sphi 0, %s116
    %s138 = sphi 0, %s140
    %s141 = sphi 0, %s138
    %s142 = sphi 0, %s141
    %s158 = sphi 0, %s142
  $region4: #{transformer_net_forward.5} parent=0 // loop_header_branch
    %13 = sbr.rel (%p11) target = $region8
  $region5: #{transformer_net_forward.5} parent=0 // loop_body
    %s15 = ssub.s32 %s10, 1
    %s16 = ssub.s32 %s10, 2
    %s23 = sadd.s32 1, %s18
    %p24 = scmp.ge.s32.totalorder %s23, 4
    %s25 = scalar_select %p24, 0, %s23
    %s26 = sadd.s32 1, %s17
    %s27 = scalar_select %p24, %s26, %s17
    %p28 = scmp.ge.s32.totalorder %s27, 1
    %s29 = scalar_select %p28, 0, %s27
    %s30 = ssub.s32 %s18, %s25
    %p31 = scmp.eq.s32.totalorder %s30, 0
    %s33 = sadd.s32 %s32, 1
    %s34 = scalar_select %p31, %s32, %s33
    %p37 = pneg %p31
    %p38 = scmp.eq.s32.totalorder %s10, 3
    %p39 = por %p37, %p38
    %p40 = scmp.ne.s32.totalorder %s32, %s35
    %p41 = scmp.eq.s32.totalorder %s10, 0
    %p42 = por %p40, %p41
    %p43 = scmp.ne.s32.totalorder %s32, %s35
    %p44 = scmp.eq.s32.totalorder %s15, 3
    %p45 = por %p43, %p44
    %p46 = scmp.ne.s32.totalorder %s35, %s36
    %p47 = scmp.eq.s32.totalorder %s15, 0
    %p48 = por %p46, %p47
    %p49 = scmp.ne.s32.totalorder %s35, %s36
    %p50 = scmp.eq.s32.totalorder %s16, 3
    %p51 = por %p49, %p50
    %p53 = scmp.ne.s32.totalorder %s36, %s52
    %p54 = scmp.eq.s32.totalorder %s16, 0
    %p55 = por %p53, %p54
    %s56 = ssub.s32 %s18, %s25
    %s57 = ssub.s32 %s17, %s29
    %s58 = sor.u32 %s56, %s57
    %p59 = scmp.eq.s32.totalorder %s58, 0
    %s61 = sadd.s32 %s60, 1
    %s62 = scalar_select %p59, %s60, %s61
    %p65 = pneg %p59
    %p66 = scmp.eq.s32.totalorder %s10, 3
    %p67 = por %p65, %p66
    %p68 = scmp.ne.s32.totalorder %s60, %s63
    %p69 = scmp.eq.s32.totalorder %s10, 0
    %p70 = por %p68, %p69
    %p71 = scmp.ne.s32.totalorder %s60, %s63
    %p72 = scmp.eq.s32.totalorder %s15, 3
    %p73 = por %p71, %p72
    %p74 = scmp.ne.s32.totalorder %s63, %s64
    %p75 = scmp.eq.s32.totalorder %s15, 0
    %p76 = por %p74, %p75
    %p77 = scmp.ne.s32.totalorder %s63, %s64
    %p78 = scmp.eq.s32.totalorder %s16, 3
    %p79 = por %p77, %p78
    %p81 = scmp.ne.s32.totalorder %s64, %s80
    %p82 = scmp.eq.s32.totalorder %s16, 0
    %p83 = por %p81, %p82
    %s84 = ssub.s32 %s17, %s29
    %p85 = scmp.eq.s32.totalorder %s84, 0
    %s87 = sadd.s32 %s86, 1
    %s88 = scalar_select %p85, %s86, %s87
    %p91 = pneg %p85
    %p92 = scmp.eq.s32.totalorder %s10, 3
    %p93 = por %p91, %p92
    %p94 = scmp.ne.s32.totalorder %s86, %s89
    %p95 = scmp.eq.s32.totalorder %s10, 0
    %p96 = por %p94, %p95
    %p97 = scmp.ne.s32.totalorder %s86, %s89
    %p98 = scmp.eq.s32.totalorder %s15, 3
    %p99 = por %p97, %p98
    %p100 = scmp.ne.s32.totalorder %s89, %s90
    %p101 = scmp.eq.s32.totalorder %s15, 0
    %p102 = por %p100, %p101
    %p103 = scmp.ne.s32.totalorder %s89, %s90
    %p104 = scmp.eq.s32.totalorder %s16, 3
    %p105 = por %p103, %p104
    %p107 = scmp.ne.s32.totalorder %s90, %s106
    %p108 = scmp.eq.s32.totalorder %s16, 0
    %p109 = por %p107, %p108
    %s110 = ssub.s32 %s17, %s29
    %p111 = scmp.eq.s32.totalorder %s110, 0
    %s113 = sadd.s32 %s112, 1
    %s114 = scalar_select %p111, %s112, %s113
    %p117 = pneg %p111
    %p118 = scmp.eq.s32.totalorder %s10, 3
    %p119 = por %p117, %p118
    %p120 = scmp.ne.s32.totalorder %s112, %s115
    %p121 = scmp.eq.s32.totalorder %s10, 0
    %p122 = por %p120, %p121
    %p123 = scmp.ne.s32.totalorder %s112, %s115
    %p124 = scmp.eq.s32.totalorder %s15, 3
    %p125 = por %p123, %p124
    %p126 = scmp.ne.s32.totalorder %s115, %s116
    %p127 = scmp.eq.s32.totalorder %s15, 0
    %p128 = por %p126, %p127
    %p129 = scmp.ne.s32.totalorder %s115, %s116
    %p130 = scmp.eq.s32.totalorder %s16, 3
    %p131 = por %p129, %p130
    %p133 = scmp.ne.s32.totalorder %s116, %s132
    %p134 = scmp.eq.s32.totalorder %s16, 0
    %p135 = por %p133, %p134
    %s136 = ssub.s32 %s17, %s29
    %p137 = scmp.eq.s32.totalorder %s136, 0
    %s139 = sadd.s32 %s138, 1
    %s140 = scalar_select %p137, %s138, %s139
    %p143 = pneg %p137
    %p144 = scmp.eq.s32.totalorder %s10, 3
    %p145 = por %p143, %p144
    %p146 = scmp.ne.s32.totalorder %s138, %s141
    %p147 = scmp.eq.s32.totalorder %s10, 0
    %p148 = por %p146, %p147
    %p149 = scmp.ne.s32.totalorder %s138, %s141
    %p150 = scmp.eq.s32.totalorder %s15, 3
    %p151 = por %p149, %p150
    %p152 = scmp.ne.s32.totalorder %s141, %s142
    %p153 = scmp.eq.s32.totalorder %s15, 0
    %p154 = por %p152, %p153
    %p155 = scmp.ne.s32.totalorder %s141, %s142
    %p156 = scmp.eq.s32.totalorder %s16, 3
    %p157 = por %p155, %p156
    %p159 = scmp.ne.s32.totalorder %s142, %s158
    %p160 = scmp.eq.s32.totalorder %s16, 0
    %p161 = por %p159, %p160
    %p162 = scmp.le.s32.totalorder 1, %s10
    %p163 = scmp.lt.s32.totalorder %s10, 5
    %p164 = pnand %p162, %p163
    %p165 = pneg %p164
    // Predicated region
    $region9: #{transformer_net_forward.5} parent=5 // pred_check
      _
    $region10: #{transformer_net_forward.5} parent=5 // pred_check_branch
      %167 = sbr.rel (%p164) target = $region12
    $region11: #{transformer_net_forward.5} parent=5 // pred_region
      %s168 = ssub.s32 %s10, 1
      // Predicated region
      $region13: #{transformer_net_forward.5} parent=11 // pred_check
        %p169 = pneg %p102
      $region14: #{transformer_net_forward.5} parent=11 // pred_check_branch
        %171 = sbr.rel (%p169) target = $region16
      $region15: #{transformer_net_forward.5} parent=11 // pred_region
        %s172 = smul.u32 2, %s19
        %p173 = scmp.lt.s32.totalorder %s172, 1
        %s174 = scalar_select %p173, %s172, 1
        %s175 = scalar_lea.vmem %s2, %s174
        %s176 = smul.u32 2, %s19
      $region16: #{transformer_net_forward.5} parent=11 // pred_fallthru
        _
      // Predicated region
      $region17: #{transformer_net_forward.5} parent=11 // pred_check
        %p177 = pneg %p128
      $region18: #{transformer_net_forward.5} parent=11 // pred_check_branch
        %179 = sbr.rel (%p177) target = $region20
      $region19: #{transformer_net_forward.5} parent=11 // pred_region
        %s180 = smul.u32 2, %s19
        %p181 = scmp.lt.s32.totalorder %s180, 1
        %s182 = scalar_select %p181, %s180, 1
        %s183 = scalar_lea.vmem %s3, %s182
        %s184 = smul.u32 2, %s19
      $region20: #{transformer_net_forward.5} parent=11 // pred_fallthru
        _
    $region12: #{transformer_net_forward.5} parent=5 // pred_fallthru
      _
    %p185 = scmp.lt.s32.totalorder %s10, 4
    // Predicated region
    $region21: #{transformer_net_forward.5} parent=5 // pred_check
      %p186 = pneg %p185
    $region22: #{transformer_net_forward.5} parent=5 // pred_check_branch
      %188 = sbr.rel (%p186) target = $region24
    $region23: #{transformer_net_forward.5} parent=5 // pred_region
      // Predicated region
      $region25: #{transformer_net_forward.5} parent=23 // pred_check
        %p189 = pneg %p42
      $region26: #{transformer_net_forward.5} parent=23 // pred_check_branch
        %191 = sbr.rel (%p189) target = $region28
      $region27: #{transformer_net_forward.5} parent=23 // pred_region
        %s192 = smul.u32 8, %s18
        %p193 = scmp.lt.s32.totalorder %s192, 31
        %s194 = scalar_select %p193, %s192, 31
        %s195 = smul.addr %s194, 2
        %s196 = scalar_lea.vmem %s0, %s195
        %s197 = smul.u32 8, %s18
      $region28: #{transformer_net_forward.5} parent=23 // pred_fallthru
        _
      // Predicated region
      $region29: #{transformer_net_forward.5} parent=23 // pred_check
        %p198 = pneg %p70
      $region30: #{transformer_net_forward.5} parent=23 // pred_check_branch
        %200 = sbr.rel (%p198) target = $region32
      $region31: #{transformer_net_forward.5} parent=23 // pred_region
        %s201 = smul.u32 128, %s18
        %s202 = smul.u32 2, %s17
        %p203 = scmp.lt.s32.totalorder %s201, 511
        %s204 = scalar_select %p203, %s201, 511
        %p205 = scmp.lt.s32.totalorder %s202, 1
        %s206 = scalar_select %p205, %s202, 1
        %s207 = smul.addr %s204, 2
        %s208 = sadd.s32 %s206, %s207
        %s209 = smul.addr %s208, 4
        %s210 = scalar_lea.vmem %s1, %s209
        %s211 = smul.u32 128, %s18
        %s212 = smul.u32 2, %s17
      $region32: #{transformer_net_forward.5} parent=23 // pred_fallthru
        _
    $region24: #{transformer_net_forward.5} parent=5 // pred_fallthru
      _
    %p213 = scmp.le.s32.totalorder 1, %s10
    %p214 = scmp.lt.s32.totalorder %s10, 5
    %p215 = pnand %p213, %p214
    %p216 = pneg %p215
    // Predicated region
    $region33: #{transformer_net_forward.5} parent=5 // pred_check
      _
    $region34: #{transformer_net_forward.5} parent=5 // pred_check_branch
      %218 = sbr.rel (%p215) target = $region36
    $region35: #{transformer_net_forward.5} parent=5 // pred_region
      %s219 = ssub.s32 %s10, 1
      %s220 = smul.u32 8, %s20
      %p221 = scmp.lt.s32.totalorder %s220, 31
      %s222 = scalar_select %p221, %s220, 31
      %s223 = smul.addr %s222, 2
      %s224 = scalar_lea.vmem %s0, %s223
      %p225 = pneg %p48
      %p226 = pneg %p45
      %s227 = smul.u32 128, %s20
      %s228 = smul.u32 2, %s19
      %p229 = scmp.lt.s32.totalorder %s227, 511
      %s230 = scalar_select %p229, %s227, 511
      %p231 = scmp.lt.s32.totalorder %s228, 1
      %s232 = scalar_select %p231, %s228, 1
      %s233 = smul.addr %s230, 2
      %s234 = sadd.s32 %s232, %s233
      %s235 = smul.addr %s234, 4
      %s236 = scalar_lea.vmem %s1, %s235
      %p237 = pneg %p76
      %p238 = pneg %p73
      %s239 = smul.u32 2, %s19
      %p240 = scmp.lt.s32.totalorder %s239, 1
      %s241 = scalar_select %p240, %s239, 1
      %s242 = scalar_lea.vmem %s2, %s241
      %p243 = pneg %p102
      %p244 = pneg %p99
      %s245 = smul.u32 2, %s19
      %p246 = scmp.lt.s32.totalorder %s245, 1
      %s247 = scalar_select %p246, %s245, 1
      %s248 = scalar_lea.vmem %s3, %s247
      %p249 = pneg %p128
      %p250 = pneg %p125
      %p251 = pneg %p154
      %p252 = pneg %p151
      %s253 = smul.u32 2, %s19
      %p254 = scmp.lt.s32.totalorder %s253, 1
      %s255 = scalar_select %p254, %s253, 1
      %s256 = smul.addr %s255, 2
      %s257 = scalar_lea.vmem %s4, %s256
      %s258 = smul.u32 8, %s20
      %p259 = scmp.lt.s32.totalorder %s258, 31
      %s260 = scalar_select %p259, %s258, 31
      %s261 = smul.addr %s260, 2
      %s262 = scalar_lea.vmem %s0, %s261
      %s263 = smul.u32 8, %s20
      %s264 = smul.u32 128, %s20
      %s265 = smul.u32 2, %s19
      %p266 = scmp.lt.s32.totalorder %s264, 511
      %s267 = scalar_select %p266, %s264, 511
      %p268 = scmp.lt.s32.totalorder %s265, 1
      %s269 = scalar_select %p268, %s265, 1
      %s270 = smul.addr %s267, 2
      %s271 = sadd.s32 %s269, %s270
      %s272 = smul.addr %s271, 4
      %s273 = scalar_lea.vmem %s1, %s272
      %s274 = smul.u32 128, %s20
      %s275 = smul.u32 2, %s19
      %s276 = smul.u32 2, %s19
      %p277 = scmp.lt.s32.totalorder %s276, 1
      %s278 = scalar_select %p277, %s276, 1
      %s279 = scalar_lea.vmem %s2, %s278
      %s280 = smul.u32 2, %s19
      %s281 = smul.u32 2, %s19
      %p282 = scmp.lt.s32.totalorder %s281, 1
      %s283 = scalar_select %p282, %s281, 1
      %s284 = scalar_lea.vmem %s3, %s283
      %s285 = smul.u32 2, %s19
      %s286 = smul.u32 2, %s19
      %p287 = scmp.lt.s32.totalorder %s286, 1
      %s288 = scalar_select %p287, %s286, 1
      %s289 = smul.addr %s288, 2
      %s290 = scalar_lea.vmem %s4, %s289
      %s291 = smul.u32 2, %s19
      %p292 = scmp.eq.s32.totalorder %s20, 0
      // Predicated region
      $region37: #{transformer_net_forward.5} parent=35 // pred_check
        %p293 = pneg %p292
      $region38: #{transformer_net_forward.5} parent=35 // pred_check_branch
        %295 = sbr.rel (%p293) target = $region40
      $region39: #{transformer_net_forward.5} parent=35 // pred_region
        %296 = vst [vmem:[#allocation2] sm:$0xf] 0.0
      $region40: #{transformer_net_forward.5} parent=35 // pred_fallthru
        _
      %v297 = vld [vmem:[#allocation2] sm:$0xf]
      %v298 = vld [vmem:[%s262] sm:$0xff]
      %v299 = vld [vmem:[%s262 + $0x8] sm:$0xff]
      %v300 = vld [vmem:[%s273] sm:$0xff]
      %v301 = vld [vmem:[%s273 + $0x8] sm:$0xff]
      %v302 = vld [vmem:[%s273 + $0x10] sm:$0xff]
      %v303 = vld [vmem:[%s273 + $0x18] sm:$0xff]
      %v304 = vld [vmem:[%s273 + $0x20] sm:$0xff]
      %v305 = vld [vmem:[%s273 + $0x28] sm:$0xff]
      %v306 = vld [vmem:[%s273 + $0x30] sm:$0xff]
      %v307 = vld [vmem:[%s273 + $0x38] sm:$0xff]
      %v308 = vld [vmem:[%s273 + $0x40] sm:$0xff]
      %v309 = vld [vmem:[%s273 + $0x48] sm:$0xff]
      %v310 = vld [vmem:[%s273 + $0x50] sm:$0xff]
      %v311 = vld [vmem:[%s273 + $0x58] sm:$0xff]
      %v312 = vld [vmem:[%s273 + $0x60] sm:$0xff]
      %v313 = vld [vmem:[%s273 + $0x68] sm:$0xff]
      %v314 = vld [vmem:[%s273 + $0x70] sm:$0xff]
      %v315 = vld [vmem:[%s273 + $0x78] sm:$0xff]
      %v316 = vld [vmem:[%s273 + $0x80] sm:$0xff]
      %v317 = vld [vmem:[%s273 + $0x88] sm:$0xff]
      %v318 = vld [vmem:[%s273 + $0x90] sm:$0xff]
      %v319 = vld [vmem:[%s273 + $0x98] sm:$0xff]
      %v320 = vld [vmem:[%s273 + $0xa0] sm:$0xff]
      %v321 = vld [vmem:[%s273 + $0xa8] sm:$0xff]
      %v322 = vld [vmem:[%s273 + $0xb0] sm:$0xff]
      %v323 = vld [vmem:[%s273 + $0xb8] sm:$0xff]
      %v324 = vld [vmem:[%s273 + $0xc0] sm:$0xff]
      %v325 = vld [vmem:[%s273 + $0xc8] sm:$0xff]
      %v326 = vld [vmem:[%s273 + $0xd0] sm:$0xff]
      %v327 = vld [vmem:[%s273 + $0xd8] sm:$0xff]
      %v328 = vld [vmem:[%s273 + $0xe0] sm:$0xff]
      %v329 = vld [vmem:[%s273 + $0xe8] sm:$0xff]
      %v330 = vld [vmem:[%s273 + $0xf0] sm:$0xff]
      %v331 = vld [vmem:[%s273 + $0xf8] sm:$0xff]
      %v332 = vld [vmem:[%s273 + $0x100] sm:$0xff]
      %v333 = vld [vmem:[%s273 + $0x108] sm:$0xff]
      %v334 = vld [vmem:[%s273 + $0x110] sm:$0xff]
      %v335 = vld [vmem:[%s273 + $0x118] sm:$0xff]
      %v336 = vld [vmem:[%s273 + $0x120] sm:$0xff]
      %v337 = vld [vmem:[%s273 + $0x128] sm:$0xff]
      %v338 = vld [vmem:[%s273 + $0x130] sm:$0xff]
      %v339 = vld [vmem:[%s273 + $0x138] sm:$0xff]
      %v340 = vld [vmem:[%s273 + $0x140] sm:$0xff]
      %v341 = vld [vmem:[%s273 + $0x148] sm:$0xff]
      %v342 = vld [vmem:[%s273 + $0x150] sm:$0xff]
      %v343 = vld [vmem:[%s273 + $0x158] sm:$0xff]
      %v344 = vld [vmem:[%s273 + $0x160] sm:$0xff]
      %v345 = vld [vmem:[%s273 + $0x168] sm:$0xff]
      %v346 = vld [vmem:[%s273 + $0x170] sm:$0xff]
      %v347 = vld [vmem:[%s273 + $0x178] sm:$0xff]
      %v348 = vld [vmem:[%s273 + $0x180] sm:$0xff]
      %v349 = vld [vmem:[%s273 + $0x188] sm:$0xff]
      %v350 = vld [vmem:[%s273 + $0x190] sm:$0xff]
      %v351 = vld [vmem:[%s273 + $0x198] sm:$0xff]
      %v352 = vld [vmem:[%s273 + $0x1a0] sm:$0xff]
      %v353 = vld [vmem:[%s273 + $0x1a8] sm:$0xff]
      %v354 = vld [vmem:[%s273 + $0x1b0] sm:$0xff]
      %v355 = vld [vmem:[%s273 + $0x1b8] sm:$0xff]
      %v356 = vld [vmem:[%s273 + $0x1c0] sm:$0xff]
      %v357 = vld [vmem:[%s273 + $0x1c8] sm:$0xff]
      %v358 = vld [vmem:[%s273 + $0x1d0] sm:$0xff]
      %v359 = vld [vmem:[%s273 + $0x1d8] sm:$0xff]
      %v360 = vld [vmem:[%s273 + $0x1e0] sm:$0xff]
      %v361 = vld [vmem:[%s273 + $0x1e8] sm:$0xff]
      %v362 = vld [vmem:[%s273 + $0x1f0] sm:$0xff]
      %v363 = vld [vmem:[%s273 + $0x1f8] sm:$0xff]
      %v364 = vld [vmem:[%s273 + $0x200] sm:$0xff]
      %v365 = vld [vmem:[%s273 + $0x208] sm:$0xff]
      %v366 = vld [vmem:[%s273 + $0x210] sm:$0xff]
      %v367 = vld [vmem:[%s273 + $0x218] sm:$0xff]
      %v368 = vld [vmem:[%s273 + $0x220] sm:$0xff]
      %v369 = vld [vmem:[%s273 + $0x228] sm:$0xff]
      %v370 = vld [vmem:[%s273 + $0x230] sm:$0xff]
      %v371 = vld [vmem:[%s273 + $0x238] sm:$0xff]
      %v372 = vld [vmem:[%s273 + $0x240] sm:$0xff]
      %v373 = vld [vmem:[%s273 + $0x248] sm:$0xff]
      %v374 = vld [vmem:[%s273 + $0x250] sm:$0xff]
      %v375 = vld [vmem:[%s273 + $0x258] sm:$0xff]
      %v376 = vld [vmem:[%s273 + $0x260] sm:$0xff]
      %v377 = vld [vmem:[%s273 + $0x268] sm:$0xff]
      %v378 = vld [vmem:[%s273 + $0x270] sm:$0xff]
      %v379 = vld [vmem:[%s273 + $0x278] sm:$0xff]
      %v380 = vld [vmem:[%s273 + $0x280] sm:$0xff]
      %v381 = vld [vmem:[%s273 + $0x288] sm:$0xff]
      %v382 = vld [vmem:[%s273 + $0x290] sm:$0xff]
      %v383 = vld [vmem:[%s273 + $0x298] sm:$0xff]
      %v384 = vld [vmem:[%s273 + $0x2a0] sm:$0xff]
      %v385 = vld [vmem:[%s273 + $0x2a8] sm:$0xff]
      %v386 = vld [vmem:[%s273 + $0x2b0] sm:$0xff]
      %v387 = vld [vmem:[%s273 + $0x2b8] sm:$0xff]
      %v388 = vld [vmem:[%s273 + $0x2c0] sm:$0xff]
      %v389 = vld [vmem:[%s273 + $0x2c8] sm:$0xff]
      %v390 = vld [vmem:[%s273 + $0x2d0] sm:$0xff]
      %v391 = vld [vmem:[%s273 + $0x2d8] sm:$0xff]
      %v392 = vld [vmem:[%s273 + $0x2e0] sm:$0xff]
      %v393 = vld [vmem:[%s273 + $0x2e8] sm:$0xff]
      %v394 = vld [vmem:[%s273 + $0x2f0] sm:$0xff]
      %v395 = vld [vmem:[%s273 + $0x2f8] sm:$0xff]
      %v396 = vld [vmem:[%s273 + $0x300] sm:$0xff]
      %v397 = vld [vmem:[%s273 + $0x308] sm:$0xff]
      %v398 = vld [vmem:[%s273 + $0x310] sm:$0xff]
      %v399 = vld [vmem:[%s273 + $0x318] sm:$0xff]
      %v400 = vld [vmem:[%s273 + $0x320] sm:$0xff]
      %v401 = vld [vmem:[%s273 + $0x328] sm:$0xff]
      %v402 = vld [vmem:[%s273 + $0x330] sm:$0xff]
      %v403 = vld [vmem:[%s273 + $0x338] sm:$0xff]
      %v404 = vld [vmem:[%s273 + $0x340] sm:$0xff]
      %v405 = vld [vmem:[%s273 + $0x348] sm:$0xff]
      %v406 = vld [vmem:[%s273 + $0x350] sm:$0xff]
      %v407 = vld [vmem:[%s273 + $0x358] sm:$0xff]
      %v408 = vld [vmem:[%s273 + $0x360] sm:$0xff]
      %v409 = vld [vmem:[%s273 + $0x368] sm:$0xff]
      %v410 = vld [vmem:[%s273 + $0x370] sm:$0xff]
      %v411 = vld [vmem:[%s273 + $0x378] sm:$0xff]
      %v412 = vld [vmem:[%s273 + $0x380] sm:$0xff]
      %v413 = vld [vmem:[%s273 + $0x388] sm:$0xff]
      %v414 = vld [vmem:[%s273 + $0x390] sm:$0xff]
      %v415 = vld [vmem:[%s273 + $0x398] sm:$0xff]
      %v416 = vld [vmem:[%s273 + $0x3a0] sm:$0xff]
      %v417 = vld [vmem:[%s273 + $0x3a8] sm:$0xff]
      %v418 = vld [vmem:[%s273 + $0x3b0] sm:$0xff]
      %v419 = vld [vmem:[%s273 + $0x3b8] sm:$0xff]
      %v420 = vld [vmem:[%s273 + $0x3c0] sm:$0xff]
      %v421 = vld [vmem:[%s273 + $0x3c8] sm:$0xff]
      %v422 = vld [vmem:[%s273 + $0x3d0] sm:$0xff]
      %v423 = vld [vmem:[%s273 + $0x3d8] sm:$0xff]
      %v424 = vld [vmem:[%s273 + $0x3e0] sm:$0xff]
      %v425 = vld [vmem:[%s273 + $0x3e8] sm:$0xff]
      %v426 = vld [vmem:[%s273 + $0x3f0] sm:$0xff]
      %v427 = vld [vmem:[%s273 + $0x3f8] sm:$0xff]
      %v428 = vunpack.c.l.bf16 %v300
      %v429 = vunpack.c.h.bf16 %v300
      %v430 = vunpack.c.l.bf16 %v301
      %v431 = vunpack.c.h.bf16 %v301
      %v432 = vunpack.c.l.bf16 %v302
      %v433 = vunpack.c.h.bf16 %v302
      %v434 = vunpack.c.l.bf16 %v303
      %v435 = vunpack.c.h.bf16 %v303
      %v436 = vunpack.c.l.bf16 %v304
      %v437 = vunpack.c.h.bf16 %v304
      %v438 = vunpack.c.l.bf16 %v305
      %v439 = vunpack.c.h.bf16 %v305
      %v440 = vunpack.c.l.bf16 %v306
      %v441 = vunpack.c.h.bf16 %v306
      %v442 = vunpack.c.l.bf16 %v307
      %v443 = vunpack.c.h.bf16 %v307
      %v444 = vunpack.c.l.bf16 %v308
      %v445 = vunpack.c.h.bf16 %v308
      %v446 = vunpack.c.l.bf16 %v309
      %v447 = vunpack.c.h.bf16 %v309
      %v448 = vunpack.c.l.bf16 %v310
      %v449 = vunpack.c.h.bf16 %v310
      %v450 = vunpack.c.l.bf16 %v311
      %v451 = vunpack.c.h.bf16 %v311
      %v452 = vunpack.c.l.bf16 %v312
      %v453 = vunpack.c.h.bf16 %v312
      %v454 = vunpack.c.l.bf16 %v313
      %v455 = vunpack.c.h.bf16 %v313
      %v456 = vunpack.c.l.bf16 %v314
      %v457 = vunpack.c.h.bf16 %v314
      %v458 = vunpack.c.l.bf16 %v315
      %v459 = vunpack.c.h.bf16 %v315
      %v460 = vunpack.c.l.bf16 %v316
      %v461 = vunpack.c.h.bf16 %v316
      %v462 = vunpack.c.l.bf16 %v317
      %v463 = vunpack.c.h.bf16 %v317
      %v464 = vunpack.c.l.bf16 %v318
      %v465 = vunpack.c.h.bf16 %v318
      %v466 = vunpack.c.l.bf16 %v319
      %v467 = vunpack.c.h.bf16 %v319
      %v468 = vunpack.c.l.bf16 %v320
      %v469 = vunpack.c.h.bf16 %v320
      %v470 = vunpack.c.l.bf16 %v321
      %v471 = vunpack.c.h.bf16 %v321
      %v472 = vunpack.c.l.bf16 %v322
      %v473 = vunpack.c.h.bf16 %v322
      %v474 = vunpack.c.l.bf16 %v323
      %v475 = vunpack.c.h.bf16 %v323
      %v476 = vunpack.c.l.bf16 %v324
      %v477 = vunpack.c.h.bf16 %v324
      %v478 = vunpack.c.l.bf16 %v325
      %v479 = vunpack.c.h.bf16 %v325
      %v480 = vunpack.c.l.bf16 %v326
      %v481 = vunpack.c.h.bf16 %v326
      %v482 = vunpack.c.l.bf16 %v327
      %v483 = vunpack.c.h.bf16 %v327
      %v484 = vunpack.c.l.bf16 %v328
      %v485 = vunpack.c.h.bf16 %v328
      %v486 = vunpack.c.l.bf16 %v329
      %v487 = vunpack.c.h.bf16 %v329
      %v488 = vunpack.c.l.bf16 %v330
      %v489 = vunpack.c.h.bf16 %v330
      %v490 = vunpack.c.l.bf16 %v331
      %v491 = vunpack.c.h.bf16 %v331
      %v492 = vunpack.c.l.bf16 %v332
      %v493 = vunpack.c.h.bf16 %v332
      %v494 = vunpack.c.l.bf16 %v333
      %v495 = vunpack.c.h.bf16 %v333
      %v496 = vunpack.c.l.bf16 %v334
      %v497 = vunpack.c.h.bf16 %v334
      %v498 = vunpack.c.l.bf16 %v335
      %v499 = vunpack.c.h.bf16 %v335
      %v500 = vunpack.c.l.bf16 %v336
      %v501 = vunpack.c.h.bf16 %v336
      %v502 = vunpack.c.l.bf16 %v337
      %v503 = vunpack.c.h.bf16 %v337
      %v504 = vunpack.c.l.bf16 %v338
      %v505 = vunpack.c.h.bf16 %v338
      %v506 = vunpack.c.l.bf16 %v339
      %v507 = vunpack.c.h.bf16 %v339
      %v508 = vunpack.c.l.bf16 %v340
      %v509 = vunpack.c.h.bf16 %v340
      %v510 = vunpack.c.l.bf16 %v341
      %v511 = vunpack.c.h.bf16 %v341
      %v512 = vunpack.c.l.bf16 %v342
      %v513 = vunpack.c.h.bf16 %v342
      %v514 = vunpack.c.l.bf16 %v343
      %v515 = vunpack.c.h.bf16 %v343
      %v516 = vunpack.c.l.bf16 %v344
      %v517 = vunpack.c.h.bf16 %v344
      %v518 = vunpack.c.l.bf16 %v345
      %v519 = vunpack.c.h.bf16 %v345
      %v520 = vunpack.c.l.bf16 %v346
      %v521 = vunpack.c.h.bf16 %v346
      %v522 = vunpack.c.l.bf16 %v347
      %v523 = vunpack.c.h.bf16 %v347
      %v524 = vunpack.c.l.bf16 %v348
      %v525 = vunpack.c.h.bf16 %v348
      %v526 = vunpack.c.l.bf16 %v349
      %v527 = vunpack.c.h.bf16 %v349
      %v528 = vunpack.c.l.bf16 %v350
      %v529 = vunpack.c.h.bf16 %v350
      %v530 = vunpack.c.l.bf16 %v351
      %v531 = vunpack.c.h.bf16 %v351
      %v532 = vunpack.c.l.bf16 %v352
      %v533 = vunpack.c.h.bf16 %v352
      %v534 = vunpack.c.l.bf16 %v353
      %v535 = vunpack.c.h.bf16 %v353
      %v536 = vunpack.c.l.bf16 %v354
      %v537 = vunpack.c.h.bf16 %v354
      %v538 = vunpack.c.l.bf16 %v355
      %v539 = vunpack.c.h.bf16 %v355
      %v540 = vunpack.c.l.bf16 %v356
      %v541 = vunpack.c.h.bf16 %v356
      %v542 = vunpack.c.l.bf16 %v357
      %v543 = vunpack.c.h.bf16 %v357
      %v544 = vunpack.c.l.bf16 %v358
      %v545 = vunpack.c.h.bf16 %v358
      %v546 = vunpack.c.l.bf16 %v359
      %v547 = vunpack.c.h.bf16 %v359
      %v548 = vunpack.c.l.bf16 %v360
      %v549 = vunpack.c.h.bf16 %v360
      %v550 = vunpack.c.l.bf16 %v361
      %v551 = vunpack.c.h.bf16 %v361
      %v552 = vunpack.c.l.bf16 %v362
      %v553 = vunpack.c.h.bf16 %v362
      %v554 = vunpack.c.l.bf16 %v363
      %v555 = vunpack.c.h.bf16 %v363
      %v556 = vunpack.c.l.bf16 %v364
      %v557 = vunpack.c.h.bf16 %v364
      %v558 = vunpack.c.l.bf16 %v365
      %v559 = vunpack.c.h.bf16 %v365
      %v560 = vunpack.c.l.bf16 %v366
      %v561 = vunpack.c.h.bf16 %v366
      %v562 = vunpack.c.l.bf16 %v367
      %v563 = vunpack.c.h.bf16 %v367
      %v564 = vunpack.c.l.bf16 %v368
      %v565 = vunpack.c.h.bf16 %v368
      %v566 = vunpack.c.l.bf16 %v369
      %v567 = vunpack.c.h.bf16 %v369
      %v568 = vunpack.c.l.bf16 %v370
      %v569 = vunpack.c.h.bf16 %v370
      %v570 = vunpack.c.l.bf16 %v371
      %v571 = vunpack.c.h.bf16 %v371
      %v572 = vunpack.c.l.bf16 %v372
      %v573 = vunpack.c.h.bf16 %v372
      %v574 = vunpack.c.l.bf16 %v373
      %v575 = vunpack.c.h.bf16 %v373
      %v576 = vunpack.c.l.bf16 %v374
      %v577 = vunpack.c.h.bf16 %v374
      %v578 = vunpack.c.l.bf16 %v375
      %v579 = vunpack.c.h.bf16 %v375
      %v580 = vunpack.c.l.bf16 %v376
      %v581 = vunpack.c.h.bf16 %v376
      %v582 = vunpack.c.l.bf16 %v377
      %v583 = vunpack.c.h.bf16 %v377
      %v584 = vunpack.c.l.bf16 %v378
      %v585 = vunpack.c.h.bf16 %v378
      %v586 = vunpack.c.l.bf16 %v379
      %v587 = vunpack.c.h.bf16 %v379
      %v588 = vunpack.c.l.bf16 %v380
      %v589 = vunpack.c.h.bf16 %v380
      %v590 = vunpack.c.l.bf16 %v381
      %v591 = vunpack.c.h.bf16 %v381
      %v592 = vunpack.c.l.bf16 %v382
      %v593 = vunpack.c.h.bf16 %v382
      %v594 = vunpack.c.l.bf16 %v383
      %v595 = vunpack.c.h.bf16 %v383
      %v596 = vunpack.c.l.bf16 %v384
      %v597 = vunpack.c.h.bf16 %v384
      %v598 = vunpack.c.l.bf16 %v385
      %v599 = vunpack.c.h.bf16 %v385
      %v600 = vunpack.c.l.bf16 %v386
      %v601 = vunpack.c.h.bf16 %v386
      %v602 = vunpack.c.l.bf16 %v387
      %v603 = vunpack.c.h.bf16 %v387
      %v604 = vunpack.c.l.bf16 %v388
      %v605 = vunpack.c.h.bf16 %v388
      %v606 = vunpack.c.l.bf16 %v389
      %v607 = vunpack.c.h.bf16 %v389
      %v608 = vunpack.c.l.bf16 %v390
      %v609 = vunpack.c.h.bf16 %v390
      %v610 = vunpack.c.l.bf16 %v391
      %v611 = vunpack.c.h.bf16 %v391
      %v612 = vunpack.c.l.bf16 %v392
      %v613 = vunpack.c.h.bf16 %v392
      %v614 = vunpack.c.l.bf16 %v393
      %v615 = vunpack.c.h.bf16 %v393
      %v616 = vunpack.c.l.bf16 %v394
      %v617 = vunpack.c.h.bf16 %v394
      %v618 = vunpack.c.l.bf16 %v395
      %v619 = vunpack.c.h.bf16 %v395
      %v620 = vunpack.c.l.bf16 %v396
      %v621 = vunpack.c.h.bf16 %v396
      %v622 = vunpack.c.l.bf16 %v397
      %v623 = vunpack.c.h.bf16 %v397
      %v624 = vunpack.c.l.bf16 %v398
      %v625 = vunpack.c.h.bf16 %v398
      %v626 = vunpack.c.l.bf16 %v399
      %v627 = vunpack.c.h.bf16 %v399
      %v628 = vunpack.c.l.bf16 %v400
      %v629 = vunpack.c.h.bf16 %v400
      %v630 = vunpack.c.l.bf16 %v401
      %v631 = vunpack.c.h.bf16 %v401
      %v632 = vunpack.c.l.bf16 %v402
      %v633 = vunpack.c.h.bf16 %v402
      %v634 = vunpack.c.l.bf16 %v403
      %v635 = vunpack.c.h.bf16 %v403
      %v636 = vunpack.c.l.bf16 %v404
      %v637 = vunpack.c.h.bf16 %v404
      %v638 = vunpack.c.l.bf16 %v405
      %v639 = vunpack.c.h.bf16 %v405
      %v640 = vunpack.c.l.bf16 %v406
      %v641 = vunpack.c.h.bf16 %v406
      %v642 = vunpack.c.l.bf16 %v407
      %v643 = vunpack.c.h.bf16 %v407
      %v644 = vunpack.c.l.bf16 %v408
      %v645 = vunpack.c.h.bf16 %v408
      %v646 = vunpack.c.l.bf16 %v409
      %v647 = vunpack.c.h.bf16 %v409
      %v648 = vunpack.c.l.bf16 %v410
      %v649 = vunpack.c.h.bf16 %v410
      %v650 = vunpack.c.l.bf16 %v411
      %v651 = vunpack.c.h.bf16 %v411
      %v652 = vunpack.c.l.bf16 %v412
      %v653 = vunpack.c.h.bf16 %v412
      %v654 = vunpack.c.l.bf16 %v413
      %v655 = vunpack.c.h.bf16 %v413
      %v656 = vunpack.c.l.bf16 %v414
      %v657 = vunpack.c.h.bf16 %v414
      %v658 = vunpack.c.l.bf16 %v415
      %v659 = vunpack.c.h.bf16 %v415
      %v660 = vunpack.c.l.bf16 %v416
      %v661 = vunpack.c.h.bf16 %v416
      %v662 = vunpack.c.l.bf16 %v417
      %v663 = vunpack.c.h.bf16 %v417
      %v664 = vunpack.c.l.bf16 %v418
      %v665 = vunpack.c.h.bf16 %v418
      %v666 = vunpack.c.l.bf16 %v419
      %v667 = vunpack.c.h.bf16 %v419
      %v668 = vunpack.c.l.bf16 %v420
      %v669 = vunpack.c.h.bf16 %v420
      %v670 = vunpack.c.l.bf16 %v421
      %v671 = vunpack.c.h.bf16 %v421
      %v672 = vunpack.c.l.bf16 %v422
      %v673 = vunpack.c.h.bf16 %v422
      %v674 = vunpack.c.l.bf16 %v423
      %v675 = vunpack.c.h.bf16 %v423
      %v676 = vunpack.c.l.bf16 %v424
      %v677 = vunpack.c.h.bf16 %v424
      %v678 = vunpack.c.l.bf16 %v425
      %v679 = vunpack.c.h.bf16 %v425
      %v680 = vunpack.c.l.bf16 %v426
      %v681 = vunpack.c.h.bf16 %v426
      %v682 = vunpack.c.l.bf16 %v427
      %v683 = vunpack.c.h.bf16 %v427
      %v686 = vcombine.high %v298, %v298
      %v688 = vunpack.c.l.s4 1983009808
      %v689 = vunpack.c.0.s8 %v688
      %v690 = vlaneseq
      %v691 = vshrl.u32 %v690, 7
      %v692 = vsub.s32 %v689, %v691
      %v693 = vrot.slane %v298, %v692
      %v695 = vunpack.c.l.s4 1983009808
      %v696 = vunpack.c.0.s8 %v695
      %v697 = vlaneseq
      %v698 = vshrl.u32 %v697, 7
      %v699 = vsub.s32 %v696, %v698
      %v700 = vrot.slane %v686, %v699
      %v701 = vcombine.high %v693, %v693
      %v702 = vcombine.high %v700, %v700
      %v703 = vcombine.high %v299, %v299
      %v705 = vunpack.c.l.s4 1983009808
      %v706 = vunpack.c.0.s8 %v705
      %v707 = vlaneseq
      %v708 = vshrl.u32 %v707, 7
      %v709 = vsub.s32 %v706, %v708
      %v710 = vrot.slane %v299, %v709
      %v712 = vunpack.c.l.s4 1983009808
      %v713 = vunpack.c.0.s8 %v712
      %v714 = vlaneseq
      %v715 = vshrl.u32 %v714, 7
      %v716 = vsub.s32 %v713, %v715
      %v717 = vrot.slane %v703, %v716
      %v718 = vcombine.high %v710, %v710
      %v719 = vcombine.high %v717, %v717
      %728 = vmatprep.subr.mxu0 %v429
      %729 = vmatpush1.msra.mxu0 %v428
      %730 = vmatprep.subr.mxu0 %v431
      %731 = vmatpush1.msra.mxu0 %v430
      %732 = vmatprep.subr.mxu0 %v433
      %733 = vmatpush1.msra.mxu0 %v432
      %734 = vmatprep.subr.mxu0 %v435
      %735 = vmatpush1.msra.mxu0 %v434
      %736 = vmatprep.subr.mxu0 %v437
      %737 = vmatpush1.msra.mxu0 %v436
      %738 = vmatprep.subr.mxu0 %v439
      %739 = vmatpush1.msra.mxu0 %v438
      %740 = vmatprep.subr.mxu0 %v441
      %741 = vmatpush1.msra.mxu0 %v440
      %742 = vmatprep.subr.mxu0 %v443
      %743 = vmatpush1.msra.mxu0 %v442
      %744 = vmatprep.subr.mxu0 %v445
      %745 = vmatpush1.msra.mxu0 %v444
      %746 = vmatprep.subr.mxu0 %v447
      %747 = vmatpush1.msra.mxu0 %v446
      %748 = vmatprep.subr.mxu0 %v449
      %749 = vmatpush1.msra.mxu0 %v448
      %750 = vmatprep.subr.mxu0 %v451
      %751 = vmatpush1.msra.mxu0 %v450
      %752 = vmatprep.subr.mxu0 %v453
      %753 = vmatpush1.msra.mxu0 %v452
      %754 = vmatprep.subr.mxu0 %v455
      %755 = vmatpush1.msra.mxu0 %v454
      %756 = vmatprep.subr.mxu0 %v457
      %757 = vmatpush1.msra.mxu0 %v456
      %758 = vmatprep.subr.mxu0 %v459
      %759 = vmatpush1.msra.mxu0 %v458
      %760 = vmatprep.subr.mxu0 %v461
      %761 = vmatpush1.msra.mxu0 %v460
      %762 = vmatprep.subr.mxu0 %v463
      %763 = vmatpush1.msra.mxu0 %v462
      %764 = vmatprep.subr.mxu0 %v465
      %765 = vmatpush1.msra.mxu0 %v464
      %766 = vmatprep.subr.mxu0 %v467
      %767 = vmatpush1.msra.mxu0 %v466
      %768 = vmatprep.subr.mxu0 %v469
      %769 = vmatpush1.msra.mxu0 %v468
      %770 = vmatprep.subr.mxu0 %v471
      %771 = vmatpush1.msra.mxu0 %v470
      %772 = vmatprep.subr.mxu0 %v473
      %773 = vmatpush1.msra.mxu0 %v472
      %774 = vmatprep.subr.mxu0 %v475
      %775 = vmatpush1.msra.mxu0 %v474
      %776 = vmatprep.subr.mxu0 %v477
      %777 = vmatpush1.msra.mxu0 %v476
      %778 = vmatprep.subr.mxu0 %v479
      %779 = vmatpush1.msra.mxu0 %v478
      %780 = vmatprep.subr.mxu0 %v481
      %781 = vmatpush1.msra.mxu0 %v480
      %782 = vmatprep.subr.mxu0 %v483
      %783 = vmatpush1.msra.mxu0 %v482
      %784 = vmatprep.subr.mxu0 %v485
      %785 = vmatpush1.msra.mxu0 %v484
      %786 = vmatprep.subr.mxu0 %v487
      %787 = vmatpush1.msra.mxu0 %v486
      %788 = vmatprep.subr.mxu0 %v489
      %789 = vmatpush1.msra.mxu0 %v488
      %790 = vmatprep.subr.mxu0 %v491
      %791 = vmatpush1.msra.mxu0 %v490
      %792 = vmatprep.mubr.f32.mxu0 %v701
      %793 = vmatmul.mubr.f32.gmra.mrb[0].mxu0 %v693
      %v794 = vpop.f32.mrb[0].mxu0
      %v795 = vadd.f32 0.0, %v794
      %v796 = vpop.f32.mrb[0].mxu0
      %v797 = vadd.f32 0.0, %v796
      %798 = vdwg.mxu0
      %799 = vmatprep.subr.mxu0 %v493
      %800 = vmatpush1.msra.mxu0 %v492
      %801 = vmatprep.subr.mxu0 %v495
      %802 = vmatpush1.msra.mxu0 %v494
      %803 = vmatprep.subr.mxu0 %v497
      %804 = vmatpush1.msra.mxu0 %v496
      %805 = vmatprep.subr.mxu0 %v499
      %806 = vmatpush1.msra.mxu0 %v498
      %807 = vmatprep.subr.mxu0 %v501
      %808 = vmatpush1.msra.mxu0 %v500
      %809 = vmatprep.subr.mxu0 %v503
      %810 = vmatpush1.msra.mxu0 %v502
      %811 = vmatprep.subr.mxu0 %v505
      %812 = vmatpush1.msra.mxu0 %v504
      %813 = vmatprep.subr.mxu0 %v507
      %814 = vmatpush1.msra.mxu0 %v506
      %815 = vmatprep.subr.mxu0 %v509
      %816 = vmatpush1.msra.mxu0 %v508
      %817 = vmatprep.subr.mxu0 %v511
      %818 = vmatpush1.msra.mxu0 %v510
      %819 = vmatprep.subr.mxu0 %v513
      %820 = vmatpush1.msra.mxu0 %v512
      %821 = vmatprep.subr.mxu0 %v515
      %822 = vmatpush1.msra.mxu0 %v514
      %823 = vmatprep.subr.mxu0 %v517
      %824 = vmatpush1.msra.mxu0 %v516
      %825 = vmatprep.subr.mxu0 %v519
      %826 = vmatpush1.msra.mxu0 %v518
      %827 = vmatprep.subr.mxu0 %v521
      %828 = vmatpush1.msra.mxu0 %v520
      %829 = vmatprep.subr.mxu0 %v523
      %830 = vmatpush1.msra.mxu0 %v522
      %831 = vmatprep.subr.mxu0 %v525
      %832 = vmatpush1.msra.mxu0 %v524
      %833 = vmatprep.subr.mxu0 %v527
      %834 = vmatpush1.msra.mxu0 %v526
      %835 = vmatprep.subr.mxu0 %v529
      %836 = vmatpush1.msra.mxu0 %v528
      %837 = vmatprep.subr.mxu0 %v531
      %838 = vmatpush1.msra.mxu0 %v530
      %839 = vmatprep.subr.mxu0 %v533
      %840 = vmatpush1.msra.mxu0 %v532
      %841 = vmatprep.subr.mxu0 %v535
      %842 = vmatpush1.msra.mxu0 %v534
      %843 = vmatprep.subr.mxu0 %v537
      %844 = vmatpush1.msra.mxu0 %v536
      %845 = vmatprep.subr.mxu0 %v539
      %846 = vmatpush1.msra.mxu0 %v538
      %847 = vmatprep.subr.mxu0 %v541
      %848 = vmatpush1.msra.mxu0 %v540
      %849 = vmatprep.subr.mxu0 %v543
      %850 = vmatpush1.msra.mxu0 %v542
      %851 = vmatprep.subr.mxu0 %v545
      %852 = vmatpush1.msra.mxu0 %v544
      %853 = vmatprep.subr.mxu0 %v547
      %854 = vmatpush1.msra.mxu0 %v546
      %855 = vmatprep.subr.mxu0 %v549
      %856 = vmatpush1.msra.mxu0 %v548
      %857 = vmatprep.subr.mxu0 %v551
      %858 = vmatpush1.msra.mxu0 %v550
      %859 = vmatprep.subr.mxu0 %v553
      %860 = vmatpush1.msra.mxu0 %v552
      %861 = vmatprep.subr.mxu0 %v555
      %862 = vmatpush1.msra.mxu0 %v554
      %863 = vmatprep.mubr.f32.mxu0 %v702
      %864 = vmatmul.mubr.f32.gmra.mrb[0].mxu0 %v700
      %v865 = vpop.f32.mrb[0].mxu0
      %v866 = vadd.f32 %v795, %v865
      %v867 = vpop.f32.mrb[0].mxu0
      %v868 = vadd.f32 %v797, %v867
      %869 = vdwg.mxu0
      %870 = vmatprep.subr.mxu0 %v557
      %871 = vmatpush1.msra.mxu0 %v556
      %872 = vmatprep.subr.mxu0 %v559
      %873 = vmatpush1.msra.mxu0 %v558
      %874 = vmatprep.subr.mxu0 %v561
      %875 = vmatpush1.msra.mxu0 %v560
      %876 = vmatprep.subr.mxu0 %v563
      %877 = vmatpush1.msra.mxu0 %v562
      %878 = vmatprep.subr.mxu0 %v565
      %879 = vmatpush1.msra.mxu0 %v564
      %880 = vmatprep.subr.mxu0 %v567
      %881 = vmatpush1.msra.mxu0 %v566
      %882 = vmatprep.subr.mxu0 %v569
      %883 = vmatpush1.msra.mxu0 %v568
      %884 = vmatprep.subr.mxu0 %v571
      %885 = vmatpush1.msra.mxu0 %v570
      %886 = vmatprep.subr.mxu0 %v573
      %887 = vmatpush1.msra.mxu0 %v572
      %888 = vmatprep.subr.mxu0 %v575
      %889 = vmatpush1.msra.mxu0 %v574
      %890 = vmatprep.subr.mxu0 %v577
      %891 = vmatpush1.msra.mxu0 %v576
      %892 = vmatprep.subr.mxu0 %v579
      %893 = vmatpush1.msra.mxu0 %v578
      %894 = vmatprep.subr.mxu0 %v581
      %895 = vmatpush1.msra.mxu0 %v580
      %896 = vmatprep.subr.mxu0 %v583
      %897 = vmatpush1.msra.mxu0 %v582
      %898 = vmatprep.subr.mxu0 %v585
      %899 = vmatpush1.msra.mxu0 %v584
      %900 = vmatprep.subr.mxu0 %v587
      %901 = vmatpush1.msra.mxu0 %v586
      %902 = vmatprep.subr.mxu0 %v589
      %903 = vmatpush1.msra.mxu0 %v588
      %904 = vmatprep.subr.mxu0 %v591
      %905 = vmatpush1.msra.mxu0 %v590
      %906 = vmatprep.subr.mxu0 %v593
      %907 = vmatpush1.msra.mxu0 %v592
      %908 = vmatprep.subr.mxu0 %v595
      %909 = vmatpush1.msra.mxu0 %v594
      %910 = vmatprep.subr.mxu0 %v597
      %911 = vmatpush1.msra.mxu0 %v596
      %912 = vmatprep.subr.mxu0 %v599
      %913 = vmatpush1.msra.mxu0 %v598
      %914 = vmatprep.subr.mxu0 %v601
      %915 = vmatpush1.msra.mxu0 %v600
      %916 = vmatprep.subr.mxu0 %v603
      %917 = vmatpush1.msra.mxu0 %v602
      %918 = vmatprep.subr.mxu0 %v605
      %919 = vmatpush1.msra.mxu0 %v604
      %920 = vmatprep.subr.mxu0 %v607
      %921 = vmatpush1.msra.mxu0 %v606
      %922 = vmatprep.subr.mxu0 %v609
      %923 = vmatpush1.msra.mxu0 %v608
      %924 = vmatprep.subr.mxu0 %v611
      %925 = vmatpush1.msra.mxu0 %v610
      %926 = vmatprep.subr.mxu0 %v613
      %927 = vmatpush1.msra.mxu0 %v612
      %928 = vmatprep.subr.mxu0 %v615
      %929 = vmatpush1.msra.mxu0 %v614
      %930 = vmatprep.subr.mxu0 %v617
      %931 = vmatpush1.msra.mxu0 %v616
      %932 = vmatprep.subr.mxu0 %v619
      %933 = vmatpush1.msra.mxu0 %v618
      %934 = vmatprep.mubr.f32.mxu0 %v718
      %935 = vmatmul.mubr.f32.gmra.mrb[0].mxu0 %v710
      %v936 = vpop.f32.mrb[0].mxu0
      %v937 = vadd.f32 %v866, %v936
      %v938 = vpop.f32.mrb[0].mxu0
      %v939 = vadd.f32 %v868, %v938
      %940 = vdwg.mxu0
      %941 = vmatprep.subr.mxu0 %v621
      %942 = vmatpush1.msra.mxu0 %v620
      %943 = vmatprep.subr.mxu0 %v623
      %944 = vmatpush1.msra.mxu0 %v622
      %945 = vmatprep.subr.mxu0 %v625
      %946 = vmatpush1.msra.mxu0 %v624
      %947 = vmatprep.subr.mxu0 %v627
      %948 = vmatpush1.msra.mxu0 %v626
      %949 = vmatprep.subr.mxu0 %v629
      %950 = vmatpush1.msra.mxu0 %v628
      %951 = vmatprep.subr.mxu0 %v631
      %952 = vmatpush1.msra.mxu0 %v630
      %953 = vmatprep.subr.mxu0 %v633
      %954 = vmatpush1.msra.mxu0 %v632
      %955 = vmatprep.subr.mxu0 %v635
      %956 = vmatpush1.msra.mxu0 %v634
      %957 = vmatprep.subr.mxu0 %v637
      %958 = vmatpush1.msra.mxu0 %v636
      %959 = vmatprep.subr.mxu0 %v639
      %960 = vmatpush1.msra.mxu0 %v638
      %961 = vmatprep.subr.mxu0 %v641
      %962 = vmatpush1.msra.mxu0 %v640
      %963 = vmatprep.subr.mxu0 %v643
      %964 = vmatpush1.msra.mxu0 %v642
      %965 = vmatprep.subr.mxu0 %v645
      %966 = vmatpush1.msra.mxu0 %v644
      %967 = vmatprep.subr.mxu0 %v647
      %968 = vmatpush1.msra.mxu0 %v646
      %969 = vmatprep.subr.mxu0 %v649
      %970 = vmatpush1.msra.mxu0 %v648
      %971 = vmatprep.subr.mxu0 %v651
      %972 = vmatpush1.msra.mxu0 %v650
      %973 = vmatprep.subr.mxu0 %v653
      %974 = vmatpush1.msra.mxu0 %v652
      %975 = vmatprep.subr.mxu0 %v655
      %976 = vmatpush1.msra.mxu0 %v654
      %977 = vmatprep.subr.mxu0 %v657
      %978 = vmatpush1.msra.mxu0 %v656
      %979 = vmatprep.subr.mxu0 %v659
      %980 = vmatpush1.msra.mxu0 %v658
      %981 = vmatprep.subr.mxu0 %v661
      %982 = vmatpush1.msra.mxu0 %v660
      %983 = vmatprep.subr.mxu0 %v663
      %984 = vmatpush1.msra.mxu0 %v662
      %985 = vmatprep.subr.mxu0 %v665
      %986 = vmatpush1.msra.mxu0 %v664
      %987 = vmatprep.subr.mxu0 %v667
      %988 = vmatpush1.msra.mxu0 %v666
      %989 = vmatprep.subr.mxu0 %v669
      %990 = vmatpush1.msra.mxu0 %v668
      %991 = vmatprep.subr.mxu0 %v671
      %992 = vmatpush1.msra.mxu0 %v670
      %993 = vmatprep.subr.mxu0 %v673
      %994 = vmatpush1.msra.mxu0 %v672
      %995 = vmatprep.subr.mxu0 %v675
      %996 = vmatpush1.msra.mxu0 %v674
      %997 = vmatprep.subr.mxu0 %v677
      %998 = vmatpush1.msra.mxu0 %v676
      %999 = vmatprep.subr.mxu0 %v679
      %1000 = vmatpush1.msra.mxu0 %v678
      %1001 = vmatprep.subr.mxu0 %v681
      %1002 = vmatpush1.msra.mxu0 %v680
      %1003 = vmatprep.subr.mxu0 %v683
      %1004 = vmatpush1.msra.mxu0 %v682
      %1005 = vmatprep.mubr.f32.mxu0 %v719
      %1006 = vmatmul.mubr.f32.gmra.mrb[0].mxu0 %v717
      %v1007 = vpop.f32.mrb[0].mxu0
      %v1008 = vadd.f32 %v937, %v1007
      %v1009 = vpop.f32.mrb[0].mxu0
      %v1010 = vadd.f32 %v939, %v1009
      %1011 = vdwg.mxu0
      %v1014 = vcombine.low %v1008, %v1010
      %v1016 = vunpack.c.l.s4 1983009808
      %v1017 = vunpack.c.0.s8 %v1016
      %v1018 = vlaneseq
      %v1019 = vshrl.u32 %v1018, 7
      %v1020 = vsub.s32 %v1017, %v1019
      %v1021 = vrot.slane %v1014, %v1020
      %v1023 = vadd.f32 %v297, %v1021
      %1024 = vst [vmem:[#allocation2] sm:$0xf] %v1023
      %p1025 = scmp.eq.s32.totalorder %s20, 3
      // Predicated region
      $region41: #{transformer_net_forward.5} parent=35 // pred_check
        %p1026 = pneg %p1025
      $region42: #{transformer_net_forward.5} parent=35 // pred_check_branch
        %1028 = sbr.rel (%p1026) target = $region44
      $region43: #{transformer_net_forward.5} parent=35 // pred_region
        %v1029 = vld [vmem:[#allocation2] sm:$0xf]
        %v1030 = vld [vmem:[%s279] sm:$0x3]
        %v1032 = vlaneseq
        %v1033 = vshrl.u32 %v1032, 7
        %v1034 = vsub.s32 0, %v1033
        %v1035 = vrot.slane %v1030, %v1034
        %v1036 = vlaneseq
        %v1037 = vshrl.u32 %v1036, 7
        %v1038 = vsub.s32 1, %v1037
        %v1039 = vrot.slane %v1030, %v1038
        %v1040 = vcombine.low %v1035, %v1039
        %v1042 = vunpack.c.l.s4 1983009808
        %v1043 = vunpack.c.0.s8 %v1042
        %v1044 = vlaneseq
        %v1045 = vshrl.u32 %v1044, 7
        %v1046 = vsub.s32 %v1043, %v1045
        %v1047 = vrot.slane %v1040, %v1046
        %v1049 = vadd.f32 %v1029, %v1047
        %v1050 = vld [vmem:[%s284] sm:$0x3]
        %v1051 = vtanh.pop %v1049
        %v1052 = vsub.f32 %v1051, %v1049
        %v1054 = vlaneseq
        %v1055 = vshrl.u32 %v1054, 7
        %v1056 = vsub.s32 0, %v1055
        %v1057 = vrot.slane %v1050, %v1056
        %v1058 = vlaneseq
        %v1059 = vshrl.u32 %v1058, 7
        %v1060 = vsub.s32 1, %v1059
        %v1061 = vrot.slane %v1050, %v1060
        %v1066 = vunpack.c.l.s4 1983009808
        %v1067 = vunpack.c.0.s8 %v1066
        %v1068 = vlaneseq
        %v1069 = vshrl.u32 %v1068, 7
        %v1070 = vsub.s32 %v1067, %v1069
        %v1071 = vrot.slane %v1052, %v1070
        %v1072 = vcombine.high %v1071, %v1071
        %v1075 = vmul.f32 %v1057, %v1071
        %v1076 = vmul.f32 %v1061, %v1072
        %v1079 = vcombine.low %v1075, %v1076
        %v1081 = vunpack.c.l.s4 1983009808
        %v1082 = vunpack.c.0.s8 %v1081
        %v1083 = vlaneseq
        %v1084 = vshrl.u32 %v1083, 7
        %v1085 = vsub.s32 %v1082, %v1084
        %v1086 = vrot.slane %v1079, %v1085
        %v1088 = vadd.f32 %v1049, %v1086
        %1089 = vst [vmem:[%s290] sm:$0xf] %v1088
      $region44: #{transformer_net_forward.5} parent=35 // pred_fallthru
        _
      %s1090 = smul.u32 2, %s19
      %p1091 = scmp.lt.s32.totalorder %s1090, 1
      %s1092 = scalar_select %p1091, %s1090, 1
      %s1093 = smul.addr %s1092, 2
      %s1094 = scalar_lea.vmem %s4, %s1093
      // Predicated region
      $region45: #{transformer_net_forward.5} parent=35 // pred_check
        %p1095 = pneg %p151
      $region46: #{transformer_net_forward.5} parent=35 // pred_check_branch
        %1097 = sbr.rel (%p1095) target = $region48
      $region47: #{transformer_net_forward.5} parent=35 // pred_region
        %s1098 = smul.u32 2, %s19
      $region48: #{transformer_net_forward.5} parent=35 // pred_fallthru
        _
      // Predicated region
      $region49: #{transformer_net_forward.5} parent=35 // pred_check
        %p1099 = pneg %p151
      $region50: #{transformer_net_forward.5} parent=35 // pred_check_branch
        %1101 = sbr.rel (%p1099) target = $region52
      $region51: #{transformer_net_forward.5} parent=35 // pred_region
        %s1102 = smul.u32 2, %s19
        %p1103 = scmp.lt.s32.totalorder %s1102, 1
        %s1104 = scalar_select %p1103, %s1102, 1
        %s1105 = smul.addr %s1104, 2
        %s1106 = scalar_lea.vmem %s4, %s1105
      $region52: #{transformer_net_forward.5} parent=35 // pred_fallthru
        _
    $region36: #{transformer_net_forward.5} parent=5 // pred_fallthru
      _
    %p1107 = scmp.le.s32.totalorder 2, %s10
    // Predicated region
    $region53: #{transformer_net_forward.5} parent=5 // pred_check
      %p1108 = pneg %p1107
    $region54: #{transformer_net_forward.5} parent=5 // pred_check_branch
      %1110 = sbr.rel (%p1108) target = $region56
    $region55: #{transformer_net_forward.5} parent=5 // pred_region
      %s1111 = ssub.s32 %s10, 2
    $region56: #{transformer_net_forward.5} parent=5 // pred_fallthru
      _
  $region6: #{transformer_net_forward.5} parent=0 // loop_footer
    %s14 = sadd.s32 1, %s10
  $region7: #{transformer_net_forward.5} parent=0 // loop_footer_branch
    %9 = sbr.rel target = $region3
  $region8: #{transformer_net_forward.5} parent=0 // loop_exit
    _

// kernel: transformer_net_forward.4
$region0: #{transformer_net_forward.4}
  #allocation0 [shape = 'u32[]', space=smem, size = 0x4, offset = 0x4, fixed_abs, tag = 'smem constant byte address 0x4 - core index']
  #allocation1 [shape = 'u32[144,128]{1,0:T(1,128)}', space=vmem, size = 0x12000, scoped, tag = 'internal scratch']
  %s0 = inlined_call_operand.vmem [shape: f32[128,64], index: 0, kind: input, shape index: {}]
  %s1 = inlined_call_operand.vmem [shape: f32[64,192], index: 1, kind: input, shape index: {}]
  %s2 = inlined_call_operand.vmem [shape: f32[1,192], index: 2, kind: input, shape index: {}]
  %s3 = inlined_call_operand.vmem [shape: f32[64,64], index: 3, kind: input, shape index: {}]
  %s4 = inlined_call_operand.vmem [shape: f32[1,64], index: 4, kind: input, shape index: {}]
  %s5 = inlined_call_operand.vmem [shape: f32[1,64], index: 5, kind: input, shape index: {}]
  %s6 = inlined_call_operand.vmem [shape: f32[1,64], index: 6, kind: input, shape index: {}]
  %s7 = inlined_call_operand.vmem [shape: bf16[64,512], index: 7, kind: input, shape index: {}]
  %s8 = inlined_call_operand.vmem [shape: f32[1,512], index: 8, kind: input, shape index: {}]
  %s9 = inlined_call_operand.vmem [shape: bf16[512,64], index: 9, kind: input, shape index: {}]
  %s10 = inlined_call_operand.vmem [shape: f32[1,64], index: 10, kind: input, shape index: {}]
  %s11 = inlined_call_operand.vmem [shape: f32[1,64], index: 11, kind: input, shape index: {}]
  %s12 = inlined_call_operand.vmem [shape: f32[1,64], index: 12, kind: input, shape index: {}]
  %s13 = inlined_call_operand.vmem [shape: f32[64,8], index: 13, kind: input, shape index: {}]
  %s14 = inlined_call_operand.vmem [shape: f32[8,64], index: 14, kind: input, shape index: {}]
  %s15 = inlined_call_operand.vmem [shape: f32[128,64], index: 15, kind: output, shape index: {}]
  %s16 = sld [smem:[#allocation0]]
  $region70: #{transformer_net_forward.4} parent=0
    _
  %s18 = ssub.s32 1, %s16
  %s19 = scalar_select 0, %s18, %s16
  // Predicated region
  $region2: #{transformer_net_forward.4} parent=0 // pred_check
    _
  $region3: #{transformer_net_forward.4} parent=0 // pred_check_branch
    %21 = sbr.rel (0) target = $region5
  $region4: #{transformer_net_forward.4} parent=0 // pred_region
    _
  $region5: #{transformer_net_forward.4} parent=0 // pred_fallthru
    _
  // Predicated region
  $region6: #{transformer_net_forward.4} parent=0 // pred_check
    _
  $region7: #{transformer_net_forward.4} parent=0 // pred_check_branch
    %23 = sbr.rel (0) target = $region9
  $region8: #{transformer_net_forward.4} parent=0 // pred_region
    _
  $region9: #{transformer_net_forward.4} parent=0 // pred_fallthru
    _
  // Predicated region
  $region10: #{transformer_net_forward.4} parent=0 // pred_check
    _
  $region11: #{transformer_net_forward.4} parent=0 // pred_check_branch
    %25 = sbr.rel (0) target = $region13
  $region12: #{transformer_net_forward.4} parent=0 // pred_region
    _
  $region13: #{transformer_net_forward.4} parent=0 // pred_fallthru
    _
  // Predicated region
  $region14: #{transformer_net_forward.4} parent=0 // pred_check
    _
  $region15: #{transformer_net_forward.4} parent=0 // pred_check_branch
    %27 = sbr.rel (0) target = $region17
  $region16: #{transformer_net_forward.4} parent=0 // pred_region
    _
  $region17: #{transformer_net_forward.4} parent=0 // pred_fallthru
    _
  // Predicated region
  $region18: #{transformer_net_forward.4} parent=0 // pred_check
    _
  $region19: #{transformer_net_forward.4} parent=0 // pred_check_branch
    %29 = sbr.rel (0) target = $region21
  $region20: #{transformer_net_forward.4} parent=0 // pred_region
    _
  $region21: #{transformer_net_forward.4} parent=0 // pred_fallthru
    _
  // Predicated region
  $region22: #{transformer_net_forward.4} parent=0 // pred_check
    _
  $region23: #{transformer_net_forward.4} parent=0 // pred_check_branch
    %31 = sbr.rel (0) target = $region25
  $region24: #{transformer_net_forward.4} parent=0 // pred_region
    _
  $region25: #{transformer_net_forward.4} parent=0 // pred_fallthru
    _
  // Predicated region
  $region26: #{transformer_net_forward.4} parent=0 // pred_check
    _
  $region27: #{transformer_net_forward.4} parent=0 // pred_check_branch
    %33 = sbr.rel (0) target = $region29
  $region28: #{transformer_net_forward.4} parent=0 // pred_region
    _
  $region29: #{transformer_net_forward.4} parent=0 // pred_fallthru
    _
  // Predicated region
  $region30: #{transformer_net_forward.4} parent=0 // pred_check
    _
  $region31: #{transformer_net_forward.4} parent=0 // pred_check_branch
    %35 = sbr.rel (0) target = $region33
  $region32: #{transformer_net_forward.4} parent=0 // pred_region
    _
  $region33: #{transformer_net_forward.4} parent=0 // pred_fallthru
    _
  // Predicated region
  $region34: #{transformer_net_forward.4} parent=0 // pred_check
    _
  $region35: #{transformer_net_forward.4} parent=0 // pred_check_branch
    %37 = sbr.rel (0) target = $region37
  $region36: #{transformer_net_forward.4} parent=0 // pred_region
    _
  $region37: #{transformer_net_forward.4} parent=0 // pred_fallthru
    _
  // Predicated region
  $region38: #{transformer_net_forward.4} parent=0 // pred_check
    _
  $region39: #{transformer_net_forward.4} parent=0 // pred_check_branch
    %39 = sbr.rel (0) target = $region41
  $region40: #{transformer_net_forward.4} parent=0 // pred_region
    _
  $region41: #{transformer_net_forward.4} parent=0 // pred_fallthru
    _
  // Predicated region
  $region42: #{transformer_net_forward.4} parent=0 // pred_check
    _
  $region43: #{transformer_net_forward.4} parent=0 // pred_check_branch
    %41 = sbr.rel (0) target = $region45
  $region44: #{transformer_net_forward.4} parent=0 // pred_region
    _
  $region45: #{transformer_net_forward.4} parent=0 // pred_fallthru
    _
  // Predicated region
  $region46: #{transformer_net_forward.4} parent=0 // pred_check
    _
  $region47: #{transformer_net_forward.4} parent=0 // pred_check_branch
    %43 = sbr.rel (0) target = $region49
  $region48: #{transformer_net_forward.4} parent=0 // pred_region
    _
  $region49: #{transformer_net_forward.4} parent=0 // pred_fallthru
    _
  // Predicated region
  $region50: #{transformer_net_forward.4} parent=0 // pred_check
    _
  $region51: #{transformer_net_forward.4} parent=0 // pred_check_branch
    %45 = sbr.rel (0) target = $region53
  $region52: #{transformer_net_forward.4} parent=0 // pred_region
    _
  $region53: #{transformer_net_forward.4} parent=0 // pred_fallthru
    _
  // Predicated region
  $region54: #{transformer_net_forward.4} parent=0 // pred_check
    _
  $region55: #{transformer_net_forward.4} parent=0 // pred_check_branch
    %47 = sbr.rel (0) target = $region57
  $region56: #{transformer_net_forward.4} parent=0 // pred_region
    _
  $region57: #{transformer_net_forward.4} parent=0 // pred_fallthru
    _
  // Predicated region
  $region58: #{transformer_net_forward.4} parent=0 // pred_check
    _
  $region59: #{transformer_net_forward.4} parent=0 // pred_check_branch
    %49 = sbr.rel (0) target = $region61
  $region60: #{transformer_net_forward.4} parent=0 // pred_region
    _
  $region61: #{transformer_net_forward.4} parent=0 // pred_fallthru
    _
  %v50 = vld [vmem:[%s0] sm:$0xff]
  %v51 = vld [vmem:[%s0 + $0x8] sm:$0xff]
  %v52 = vld [vmem:[%s0 + $0x10] sm:$0xff]
  %v53 = vld [vmem:[%s0 + $0x18] sm:$0xff]
  %v54 = vld [vmem:[%s0 + $0x20] sm:$0xff]
  %v55 = vld [vmem:[%s0 + $0x28] sm:$0xff]
  %v56 = vld [vmem:[%s0 + $0x30] sm:$0xff]
  %v57 = vld [vmem:[%s0 + $0x38] sm:$0xff]
  %v58 = vld [vmem:[%s0 + $0x40] sm:$0xff]
  %v59 = vld [vmem:[%s0 + $0x48] sm:$0xff]
  %v60 = vld [vmem:[%s0 + $0x50] sm:$0xff]
  %v61 = vld [vmem:[%s0 + $0x58] sm:$0xff]
  %v62 = vld [vmem:[%s0 + $0x60] sm:$0xff]
  %v63 = vld [vmem:[%s0 + $0x68] sm:$0xff]
  %v64 = vld [vmem:[%s0 + $0x70] sm:$0xff]
  %v65 = vld [vmem:[%s0 + $0x78] sm:$0xff]
  %v66 = vld [vmem:[%s1] sm:$0xff]
  %v67 = vld [vmem:[%s1 + $0x8] sm:$0xff]
  %v68 = vld [vmem:[%s1 + $0x10] sm:$0xff]
  %v69 = vld [vmem:[%s1 + $0x18] sm:$0xff]
  %v70 = vld [vmem:[%s1 + $0x20] sm:$0xff]
  %v71 = vld [vmem:[%s1 + $0x28] sm:$0xff]
  %v72 = vld [vmem:[%s1 + $0x30] sm:$0xff]
  %v73 = vld [vmem:[%s1 + $0x38] sm:$0xff]
  %v74 = vld [vmem:[%s1 + $0x40] sm:$0xff]
  %v75 = vld [vmem:[%s1 + $0x48] sm:$0xff]
  %v76 = vld [vmem:[%s1 + $0x50] sm:$0xff]
  %v77 = vld [vmem:[%s1 + $0x58] sm:$0xff]
  %v78 = vld [vmem:[%s1 + $0x60] sm:$0xff]
  %v79 = vld [vmem:[%s1 + $0x68] sm:$0xff]
  %v80 = vld [vmem:[%s1 + $0x70] sm:$0xff]
  %v81 = vld [vmem:[%s1 + $0x78] sm:$0xff]
  %v82 = vld [vmem:[%s2] sm:$0x3]
  %v84 = vlaneseq
  %v85 = vshrl.u32 %v84, 7
  %v86 = vsub.s32 0, %v85
  %v87 = vrot.slane %v82, %v86
  %v88 = vlaneseq
  %v89 = vshrl.u32 %v88, 7
  %v90 = vsub.s32 1, %v89
  %v91 = vrot.slane %v82, %v90
  %vm94 = vcmask 523264
  %v96 = vsel %vm94, %v50, 0
  %v99 = vsel %vm94, %v51, 0
  %v102 = vsel %vm94, %v52, 0
  %v105 = vsel %vm94, %v53, 0
  %v108 = vsel %vm94, %v54, 0
  %v111 = vsel %vm94, %v55, 0
  %v114 = vsel %vm94, %v56, 0
  %v117 = vsel %vm94, %v57, 0
  %v120 = vsel %vm94, %v58, 0
  %v123 = vsel %vm94, %v59, 0
  %v126 = vsel %vm94, %v60, 0
  %v129 = vsel %vm94, %v61, 0
  %v132 = vsel %vm94, %v62, 0
  %v135 = vsel %vm94, %v63, 0
  %v138 = vsel %vm94, %v64, 0
  %v141 = vsel %vm94, %v65, 0
  %143 = vmatprep.subr.mxu0 %v67
  %144 = vmatpush1.msra.mxu0 %v66
  %145 = vmatprep.subr.mxu0 %v69
  %146 = vmatpush1.msra.mxu0 %v68
  %147 = vmatprep.subr.mxu0 %v71
  %148 = vmatpush1.msra.mxu0 %v70
  %149 = vmatprep.subr.mxu0 %v73
  %150 = vmatpush1.msra.mxu0 %v72
  %151 = vmatprep.subr.mxu0 %v75
  %152 = vmatpush1.msra.mxu0 %v74
  %153 = vmatprep.subr.mxu0 %v77
  %154 = vmatpush1.msra.mxu0 %v76
  %155 = vmatprep.subr.mxu0 %v79
  %156 = vmatpush1.msra.mxu0 %v78
  %157 = vmatprep.subr.mxu0 %v81
  %158 = vmatpush1.msra.mxu0 %v80
  %159 = vmatprep.subr.mxu0 0.0
  %160 = vmatpush1.msra.mxu0 0.0
  %161 = vmatprep.subr.mxu0 0.0
  %162 = vmatpush1.msra.mxu0 0.0
  %163 = vmatprep.subr.mxu0 0.0
  %164 = vmatpush1.msra.mxu0 0.0
  %165 = vmatprep.subr.mxu0 0.0
  %166 = vmatpush1.msra.mxu0 0.0
  %167 = vmatprep.subr.mxu0 0.0
  %168 = vmatpush1.msra.mxu0 0.0
  %169 = vmatprep.subr.mxu0 0.0
  %170 = vmatpush1.msra.mxu0 0.0
  %171 = vmatprep.subr.mxu0 0.0
  %172 = vmatpush1.msra.mxu0 0.0
  %173 = vmatprep.subr.mxu0 0.0
  %174 = vmatpush1.msra.mxu0 0.0
  %175 = vmatprep.subr.mxu0 0.0
  %176 = vmatpush1.msra.mxu0 0.0
  %177 = vmatprep.subr.mxu0 0.0
  %178 = vmatpush1.msra.mxu0 0.0
  %179 = vmatprep.subr.mxu0 0.0
  %180 = vmatpush1.msra.mxu0 0.0
  %181 = vmatprep.subr.mxu0 0.0
  %182 = vmatpush1.msra.mxu0 0.0
  %183 = vmatprep.subr.mxu0 0.0
  %184 = vmatpush1.msra.mxu0 0.0
  %185 = vmatprep.subr.mxu0 0.0
  %186 = vmatpush1.msra.mxu0 0.0
  %187 = vmatprep.subr.mxu0 0.0
  %188 = vmatpush1.msra.mxu0 0.0
  %189 = vmatprep.subr.mxu0 0.0
  %190 = vmatpush1.msra.mxu0 0.0
  %191 = vmatprep.subr.mxu0 0.0
  %192 = vmatpush1.msra.mxu0 0.0
  %193 = vmatprep.subr.mxu0 0.0
  %194 = vmatpush1.msra.mxu0 0.0
  %195 = vmatprep.subr.mxu0 0.0
  %196 = vmatpush1.msra.mxu0 0.0
  %197 = vmatprep.subr.mxu0 0.0
  %198 = vmatpush1.msra.mxu0 0.0
  %199 = vmatprep.subr.mxu0 0.0
  %200 = vmatpush1.msra.mxu0 0.0
  %201 = vmatprep.subr.mxu0 0.0
  %202 = vmatpush1.msra.mxu0 0.0
  %203 = vmatprep.subr.mxu0 0.0
  %204 = vmatpush1.msra.mxu0 0.0
  %205 = vmatprep.subr.mxu0 0.0
  %206 = vmatpush1.msra.mxu0 0.0
  %207 = vmatprep.mubr.f32.mxu0 0.0
  %208 = vmatmul.mubr.f32.gmra.mrb[0].mxu0 %v96
  %v209 = vpop.f32.mrb[0].mxu0
  %v210 = vadd.f32 %v87, %v209
  %v211 = vpop.f32.mrb[0].mxu0
  %v212 = vadd.f32 %v91, %v211
  %213 = vmatprep.mubr.f32.mxu0 0.0
  %214 = vmatmul.mubr.f32.gmra.mrb[0].mxu0 %v99
  %v215 = vpop.f32.mrb[0].mxu0
  %v216 = vadd.f32 %v87, %v215
  %v217 = vpop.f32.mrb[0].mxu0
  %v218 = vadd.f32 %v91, %v217
  %219 = vmatprep.mubr.f32.mxu0 0.0
  %220 = vmatmul.mubr.f32.gmra.mrb[0].mxu0 %v102
  %v221 = vpop.f32.mrb[0].mxu0
  %v222 = vadd.f32 %v87, %v221
  %v223 = vpop.f32.mrb[0].mxu0
  %v224 = vadd.f32 %v91, %v223
  %225 = vmatprep.mubr.f32.mxu0 0.0
  %226 = vmatmul.mubr.f32.gmra.mrb[0].mxu0 %v105
  %v227 = vpop.f32.mrb[0].mxu0
  %v228 = vadd.f32 %v87, %v227
  %v229 = vpop.f32.mrb[0].mxu0
  %v230 = vadd.f32 %v91, %v229
  %231 = vmatprep.mubr.f32.mxu0 0.0
  %232 = vmatmul.mubr.f32.gmra.mrb[0].mxu0 %v108
  %v233 = vpop.f32.mrb[0].mxu0
  %v234 = vadd.f32 %v87, %v233
  %v235 = vpop.f32.mrb[0].mxu0
  %v236 = vadd.f32 %v91, %v235
  %237 = vmatprep.mubr.f32.mxu0 0.0
  %238 = vmatmul.mubr.f32.gmra.mrb[0].mxu0 %v111
  %v239 = vpop.f32.mrb[0].mxu0
  %v240 = vadd.f32 %v87, %v239
  %v241 = vpop.f32.mrb[0].mxu0
  %v242 = vadd.f32 %v91, %v241
  %243 = vmatprep.mubr.f32.mxu0 0.0
  %244 = vmatmul.mubr.f32.gmra.mrb[0].mxu0 %v114
  %v245 = vpop.f32.mrb[0].mxu0
  %v246 = vadd.f32 %v87, %v245
  %v247 = vpop.f32.mrb[0].mxu0
  %v248 = vadd.f32 %v91, %v247
  %249 = vmatprep.mubr.f32.mxu0 0.0
  %250 = vmatmul.mubr.f32.gmra.mrb[0].mxu0 %v117
  %v251 = vpop.f32.mrb[0].mxu0
  %v252 = vadd.f32 %v87, %v251
  %v253 = vpop.f32.mrb[0].mxu0
  %v254 = vadd.f32 %v91, %v253
  %255 = vmatprep.mubr.f32.mxu0 0.0
  %256 = vmatmul.mubr.f32.gmra.mrb[0].mxu0 %v120
  %v257 = vpop.f32.mrb[0].mxu0
  %v258 = vadd.f32 %v87, %v257
  %v259 = vpop.f32.mrb[0].mxu0
  %v260 = vadd.f32 %v91, %v259
  %261 = vmatprep.mubr.f32.mxu0 0.0
  %262 = vmatmul.mubr.f32.gmra.mrb[0].mxu0 %v123
  %v263 = vpop.f32.mrb[0].mxu0
  %v264 = vadd.f32 %v87, %v263
  %v265 = vpop.f32.mrb[0].mxu0
  %v266 = vadd.f32 %v91, %v265
  %267 = vmatprep.mubr.f32.mxu0 0.0
  %268 = vmatmul.mubr.f32.gmra.mrb[0].mxu0 %v126
  %v269 = vpop.f32.mrb[0].mxu0
  %v270 = vadd.f32 %v87, %v269
  %v271 = vpop.f32.mrb[0].mxu0
  %v272 = vadd.f32 %v91, %v271
  %273 = vmatprep.mubr.f32.mxu0 0.0
  %274 = vmatmul.mubr.f32.gmra.mrb[0].mxu0 %v129
  %v275 = vpop.f32.mrb[0].mxu0
  %v276 = vadd.f32 %v87, %v275
  %v277 = vpop.f32.mrb[0].mxu0
  %v278 = vadd.f32 %v91, %v277
  %279 = vmatprep.mubr.f32.mxu0 0.0
  %280 = vmatmul.mubr.f32.gmra.mrb[0].mxu0 %v132
  %v281 = vpop.f32.mrb[0].mxu0
  %v282 = vadd.f32 %v87, %v281
  %v283 = vpop.f32.mrb[0].mxu0
  %v284 = vadd.f32 %v91, %v283
  %285 = vmatprep.mubr.f32.mxu0 0.0
  %286 = vmatmul.mubr.f32.gmra.mrb[0].mxu0 %v135
  %v287 = vpop.f32.mrb[0].mxu0
  %v288 = vadd.f32 %v87, %v287
  %v289 = vpop.f32.mrb[0].mxu0
  %v290 = vadd.f32 %v91, %v289
  %291 = vmatprep.mubr.f32.mxu0 0.0
  %292 = vmatmul.mubr.f32.gmra.mrb[0].mxu0 %v138
  %v293 = vpop.f32.mrb[0].mxu0
  %v294 = vadd.f32 %v87, %v293
  %v295 = vpop.f32.mrb[0].mxu0
  %v296 = vadd.f32 %v91, %v295
  %297 = vmatprep.mubr.f32.mxu0 0.0
  %298 = vmatmul.mubr.f32.gmra.mrb[0].mxu0 %v141
  %v299 = vpop.f32.mrb[0].mxu0
  %v300 = vadd.f32 %v87, %v299
  %v301 = vpop.f32.mrb[0].mxu0
  %v302 = vadd.f32 %v91, %v301
  %303 = vdwg.mxu0
  %312 = vrot.lane.b32.xlu0 %v210, 64
  %v313 = vpop.permute.xlu0 %312
  %314 = vrot.lane.b32.xlu0 %v216, 64
  %v315 = vpop.permute.xlu0 %314
  %316 = vrot.lane.b32.xlu0 %v222, 64
  %v317 = vpop.permute.xlu0 %316
  %318 = vrot.lane.b32.xlu0 %v228, 64
  %v319 = vpop.permute.xlu0 %318
  %320 = vrot.lane.b32.xlu0 %v234, 64
  %v321 = vpop.permute.xlu0 %320
  %322 = vrot.lane.b32.xlu0 %v240, 64
  %v323 = vpop.permute.xlu0 %322
  %324 = vrot.lane.b32.xlu0 %v246, 64
  %v325 = vpop.permute.xlu0 %324
  %326 = vrot.lane.b32.xlu0 %v252, 64
  %v327 = vpop.permute.xlu0 %326
  %v336 = vmul.f32 %v210, %v313
  %v337 = vmul.f32 %v216, %v315
  %v338 = vmul.f32 %v222, %v317
  %v339 = vmul.f32 %v228, %v319
  %v340 = vmul.f32 %v234, %v321
  %v341 = vmul.f32 %v240, %v323
  %v342 = vmul.f32 %v246, %v325
  %v343 = vmul.f32 %v252, %v327
  %v344 = vmul.f32 %v258, %v313
  %v345 = vmul.f32 %v264, %v315
  %v346 = vmul.f32 %v270, %v317
  %v347 = vmul.f32 %v276, %v319
  %v348 = vmul.f32 %v282, %v321
  %v349 = vmul.f32 %v288, %v323
  %v350 = vmul.f32 %v294, %v325
  %v351 = vmul.f32 %v300, %v327
  %v352 = vld [vmem:[%s13] sm:$0xff]
  %v353 = vld [vmem:[%s13 + $0x8] sm:$0xff]
  %v354 = vld [vmem:[%s13 + $0x10] sm:$0xff]
  %v355 = vld [vmem:[%s13 + $0x18] sm:$0xff]
  %v356 = vld [vmem:[%s13 + $0x20] sm:$0xff]
  %v357 = vld [vmem:[%s13 + $0x28] sm:$0xff]
  %v358 = vld [vmem:[%s13 + $0x30] sm:$0xff]
  %v359 = vld [vmem:[%s13 + $0x38] sm:$0xff]
  %v361 = vsel %vm94, %v336, 0
  %v364 = vsel %vm94, %v337, 0
  %v367 = vsel %vm94, %v338, 0
  %v370 = vsel %vm94, %v339, 0
  %v373 = vsel %vm94, %v340, 0
  %v376 = vsel %vm94, %v341, 0
  %v379 = vsel %vm94, %v342, 0
  %v382 = vsel %vm94, %v343, 0
  %v385 = vsel %vm94, %v344, 0
  %v388 = vsel %vm94, %v345, 0
  %v391 = vsel %vm94, %v346, 0
  %v394 = vsel %vm94, %v347, 0
  %v397 = vsel %vm94, %v348, 0
  %v400 = vsel %vm94, %v349, 0
  %v403 = vsel %vm94, %v350, 0
  %v406 = vsel %vm94, %v351, 0
  %408 = vmatprep.subr.mxu0 0.0
  %409 = vmatpush1.msra.mxu0 %v352
  %410 = vmatprep.subr.mxu0 0.0
  %411 = vmatpush1.msra.mxu0 %v353
  %412 = vmatprep.subr.mxu0 0.0
  %413 = vmatpush1.msra.mxu0 %v354
  %414 = vmatprep.subr.mxu0 0.0
  %415 = vmatpush1.msra.mxu0 %v355
  %416 = vmatprep.subr.mxu0 0.0
  %417 = vmatpush1.msra.mxu0 %v356
  %418 = vmatprep.subr.mxu0 0.0
  %419 = vmatpush1.msra.mxu0 %v357
  %420 = vmatprep.subr.mxu0 0.0
  %421 = vmatpush1.msra.mxu0 %v358
  %422 = vmatprep.subr.mxu0 0.0
  %423 = vmatpush1.msra.mxu0 %v359
  %424 = vmatprep.subr.mxu0 0.0
  %425 = vmatpush1.msra.mxu0 0.0
  %426 = vmatprep.subr.mxu0 0.0
  %427 = vmatpush1.msra.mxu0 0.0
  %428 = vmatprep.subr.mxu0 0.0
  %429 = vmatpush1.msra.mxu0 0.0
  %430 = vmatprep.subr.mxu0 0.0
  %431 = vmatpush1.msra.mxu0 0.0
  %432 = vmatprep.subr.mxu0 0.0
  %433 = vmatpush1.msra.mxu0 0.0
  %434 = vmatprep.subr.mxu0 0.0
  %435 = vmatpush1.msra.mxu0 0.0
  %436 = vmatprep.subr.mxu0 0.0
  %437 = vmatpush1.msra.mxu0 0.0
  %438 = vmatprep.subr.mxu0 0.0
  %439 = vmatpush1.msra.mxu0 0.0
  %440 = vmatprep.subr.mxu0 0.0
  %441 = vmatpush1.msra.mxu0 0.0
  %442 = vmatprep.subr.mxu0 0.0
  %443 = vmatpush1.msra.mxu0 0.0
  %444 = vmatprep.subr.mxu0 0.0
  %445 = vmatpush1.msra.mxu0 0.0
  %446 = vmatprep.subr.mxu0 0.0
  %447 = vmatpush1.msra.mxu0 0.0
  %448 = vmatprep.subr.mxu0 0.0
  %449 = vmatpush1.msra.mxu0 0.0
  %450 = vmatprep.subr.mxu0 0.0
  %451 = vmatpush1.msra.mxu0 0.0
  %452 = vmatprep.subr.mxu0 0.0
  %453 = vmatpush1.msra.mxu0 0.0
  %454 = vmatprep.subr.mxu0 0.0
  %455 = vmatpush1.msra.mxu0 0.0
  %456 = vmatprep.subr.mxu0 0.0
  %457 = vmatpush1.msra.mxu0 0.0
  %458 = vmatprep.subr.mxu0 0.0
  %459 = vmatpush1.msra.mxu0 0.0
  %460 = vmatprep.subr.mxu0 0.0
  %461 = vmatpush1.msra.mxu0 0.0
  %462 = vmatprep.subr.mxu0 0.0
  %463 = vmatpush1.msra.mxu0 0.0
  %464 = vmatprep.subr.mxu0 0.0
  %465 = vmatpush1.msra.mxu0 0.0
  %466 = vmatprep.subr.mxu0 0.0
  %467 = vmatpush1.msra.mxu0 0.0
  %468 = vmatprep.subr.mxu0 0.0
  %469 = vmatpush1.msra.mxu0 0.0
  %470 = vmatprep.subr.mxu0 0.0
  %471 = vmatpush1.msra.mxu0 0.0
  %472 = vmatprep.mubr.f32.mxu0 0.0
  %473 = vmatmul.mubr.f32.gmra.mrb[0].mxu0 %v361
  %v474 = vpop.f32.mrb[0].mxu0
  %v475 = vadd.f32 0.0, %v474
  %v476 = vpop.f32.mrb[0].mxu0
  %477 = vmatprep.mubr.f32.mxu0 0.0
  %478 = vmatmul.mubr.f32.gmra.mrb[0].mxu0 %v364
  %v479 = vpop.f32.mrb[0].mxu0
  %v480 = vadd.f32 0.0, %v479
  %v481 = vpop.f32.mrb[0].mxu0
  %482 = vmatprep.mubr.f32.mxu0 0.0
  %483 = vmatmul.mubr.f32.gmra.mrb[0].mxu0 %v367
  %v484 = vpop.f32.mrb[0].mxu0
  %v485 = vadd.f32 0.0, %v484
  %v486 = vpop.f32.mrb[0].mxu0
  %487 = vmatprep.mubr.f32.mxu0 0.0
  %488 = vmatmul.mubr.f32.gmra.mrb[0].mxu0 %v370
  %v489 = vpop.f32.mrb[0].mxu0
  %v490 = vadd.f32 0.0, %v489
  %v491 = vpop.f32.mrb[0].mxu0
  %492 = vmatprep.mubr.f32.mxu0 0.0
  %493 = vmatmul.mubr.f32.gmra.mrb[0].mxu0 %v373
  %v494 = vpop.f32.mrb[0].mxu0
  %v495 = vadd.f32 0.0, %v494
  %v496 = vpop.f32.mrb[0].mxu0
  %497 = vmatprep.mubr.f32.mxu0 0.0
  %498 = vmatmul.mubr.f32.gmra.mrb[0].mxu0 %v376
  %v499 = vpop.f32.mrb[0].mxu0
  %v500 = vadd.f32 0.0, %v499
  %v501 = vpop.f32.mrb[0].mxu0
  %502 = vmatprep.mubr.f32.mxu0 0.0
  %503 = vmatmul.mubr.f32.gmra.mrb[0].mxu0 %v379
  %v504 = vpop.f32.mrb[0].mxu0
  %v505 = vadd.f32 0.0, %v504
  %v506 = vpop.f32.mrb[0].mxu0
  %507 = vmatprep.mubr.f32.mxu0 0.0
  %508 = vmatmul.mubr.f32.gmra.mrb[0].mxu0 %v382
  %v509 = vpop.f32.mrb[0].mxu0
  %v510 = vadd.f32 0.0, %v509
  %v511 = vpop.f32.mrb[0].mxu0
  %512 = vmatprep.mubr.f32.mxu0 0.0
  %513 = vmatmul.mubr.f32.gmra.mrb[0].mxu0 %v385
  %v514 = vpop.f32.mrb[0].mxu0
  %v515 = vadd.f32 0.0, %v514
  %v516 = vpop.f32.mrb[0].mxu0
  %517 = vmatprep.mubr.f32.mxu0 0.0
  %518 = vmatmul.mubr.f32.gmra.mrb[0].mxu0 %v388
  %v519 = vpop.f32.mrb[0].mxu0
  %v520 = vadd.f32 0.0, %v519
  %v521 = vpop.f32.mrb[0].mxu0
  %522 = vmatprep.mubr.f32.mxu0 0.0
  %523 = vmatmul.mubr.f32.gmra.mrb[0].mxu0 %v391
  %v524 = vpop.f32.mrb[0].mxu0
  %v525 = vadd.f32 0.0, %v524
  %v526 = vpop.f32.mrb[0].mxu0
  %527 = vmatprep.mubr.f32.mxu0 0.0
  %528 = vmatmul.mubr.f32.gmra.mrb[0].mxu0 %v394
  %v529 = vpop.f32.mrb[0].mxu0
  %v530 = vadd.f32 0.0, %v529
  %v531 = vpop.f32.mrb[0].mxu0
  %532 = vmatprep.mubr.f32.mxu0 0.0
  %533 = vmatmul.mubr.f32.gmra.mrb[0].mxu0 %v397
  %v534 = vpop.f32.mrb[0].mxu0
  %v535 = vadd.f32 0.0, %v534
  %v536 = vpop.f32.mrb[0].mxu0
  %537 = vmatprep.mubr.f32.mxu0 0.0
  %538 = vmatmul.mubr.f32.gmra.mrb[0].mxu0 %v400
  %v539 = vpop.f32.mrb[0].mxu0
  %v540 = vadd.f32 0.0, %v539
  %v541 = vpop.f32.mrb[0].mxu0
  %542 = vmatprep.mubr.f32.mxu0 0.0
  %543 = vmatmul.mubr.f32.gmra.mrb[0].mxu0 %v403
  %v544 = vpop.f32.mrb[0].mxu0
  %v545 = vadd.f32 0.0, %v544
  %v546 = vpop.f32.mrb[0].mxu0
  %547 = vmatprep.mubr.f32.mxu0 0.0
  %548 = vmatmul.mubr.f32.gmra.mrb[0].mxu0 %v406
  %v549 = vpop.f32.mrb[0].mxu0
  %v550 = vadd.f32 0.0, %v549
  %v551 = vpop.f32.mrb[0].mxu0
  %552 = vdwg.mxu0
  %v553 = vmul.f32 %v475, 0.35355338
  %v554 = vmul.f32 %v480, 0.35355338
  %v555 = vmul.f32 %v485, 0.35355338
  %v556 = vmul.f32 %v490, 0.35355338
  %v557 = vmul.f32 %v495, 0.35355338
  %v558 = vmul.f32 %v500, 0.35355338
  %v559 = vmul.f32 %v505, 0.35355338
  %v560 = vmul.f32 %v510, 0.35355338
  %v561 = vmul.f32 %v515, 0.35355338
  %v562 = vmul.f32 %v520, 0.35355338
  %v563 = vmul.f32 %v525, 0.35355338
  %v564 = vmul.f32 %v530, 0.35355338
  %v565 = vmul.f32 %v535, 0.35355338
  %v566 = vmul.f32 %v540, 0.35355338
  %v567 = vmul.f32 %v545, 0.35355338
  %v568 = vmul.f32 %v550, 0.35355338
  %577 = vrot.lane.b32.xlu0 %v258, 64
  %v578 = vpop.permute.xlu0 %577
  %579 = vrot.lane.b32.xlu0 %v264, 64
  %v580 = vpop.permute.xlu0 %579
  %581 = vrot.lane.b32.xlu0 %v270, 64
  %v582 = vpop.permute.xlu0 %581
  %583 = vrot.lane.b32.xlu0 %v276, 64
  %v584 = vpop.permute.xlu0 %583
  %585 = vrot.lane.b32.xlu0 %v282, 64
  %v586 = vpop.permute.xlu0 %585
  %587 = vrot.lane.b32.xlu0 %v288, 64
  %v588 = vpop.permute.xlu0 %587
  %589 = vrot.lane.b32.xlu0 %v294, 64
  %v590 = vpop.permute.xlu0 %589
  %591 = vrot.lane.b32.xlu0 %v300, 64
  %v592 = vpop.permute.xlu0 %591
  %v601 = vmul.f32 %v210, %v578
  %v602 = vmul.f32 %v216, %v580
  %v603 = vmul.f32 %v222, %v582
  %v604 = vmul.f32 %v228, %v584
  %v605 = vmul.f32 %v234, %v586
  %v606 = vmul.f32 %v240, %v588
  %v607 = vmul.f32 %v246, %v590
  %v608 = vmul.f32 %v252, %v592
  %v609 = vmul.f32 %v258, %v578
  %v610 = vmul.f32 %v264, %v580
  %v611 = vmul.f32 %v270, %v582
  %v612 = vmul.f32 %v276, %v584
  %v613 = vmul.f32 %v282, %v586
  %v614 = vmul.f32 %v288, %v588
  %v615 = vmul.f32 %v294, %v590
  %v616 = vmul.f32 %v300, %v592
  %v618 = vsel %vm94, %v601, 0
  %v621 = vsel %vm94, %v602, 0
  %v624 = vsel %vm94, %v603, 0
  %v627 = vsel %vm94, %v604, 0
  %v630 = vsel %vm94, %v605, 0
  %v633 = vsel %vm94, %v606, 0
  %v636 = vsel %vm94, %v607, 0
  %v639 = vsel %vm94, %v608, 0
  %v642 = vsel %vm94, %v609, 0
  %v645 = vsel %vm94, %v610, 0
  %v648 = vsel %vm94, %v611, 0
  %v651 = vsel %vm94, %v612, 0
  %v654 = vsel %vm94, %v613, 0
  %v657 = vsel %vm94, %v614, 0
  %v660 = vsel %vm94, %v615, 0
  %v663 = vsel %vm94, %v616, 0
  %665 = vmatprep.subr.mxu0 0.0
  %666 = vmatpush1.msra.mxu0 %v352
  %667 = vmatprep.subr.mxu0 0.0
  %668 = vmatpush1.msra.mxu0 %v353
  %669 = vmatprep.subr.mxu0 0.0
  %670 = vmatpush1.msra.mxu0 %v354
  %671 = vmatprep.subr.mxu0 0.0
  %672 = vmatpush1.msra.mxu0 %v355
  %673 = vmatprep.subr.mxu0 0.0
  %674 = vmatpush1.msra.mxu0 %v356
  %675 = vmatprep.subr.mxu0 0.0
  %676 = vmatpush1.msra.mxu0 %v357
  %677 = vmatprep.subr.mxu0 0.0
  %678 = vmatpush1.msra.mxu0 %v358
  %679 = vmatprep.subr.mxu0 0.0
  %680 = vmatpush1.msra.mxu0 %v359
  %681 = vmatprep.subr.mxu0 0.0
  %682 = vmatpush1.msra.mxu0 0.0
  %683 = vmatprep.subr.mxu0 0.0
  %684 = vmatpush1.msra.mxu0 0.0
  %685 = vmatprep.subr.mxu0 0.0
  %686 = vmatpush1.msra.mxu0 0.0
  %687 = vmatprep.subr.mxu0 0.0
  %688 = vmatpush1.msra.mxu0 0.0
  %689 = vmatprep.subr.mxu0 0.0
  %690 = vmatpush1.msra.mxu0 0.0
  %691 = vmatprep.subr.mxu0 0.0
  %692 = vmatpush1.msra.mxu0 0.0
  %693 = vmatprep.subr.mxu0 0.0
  %694 = vmatpush1.msra.mxu0 0.0
  %695 = vmatprep.subr.mxu0 0.0
  %696 = vmatpush1.msra.mxu0 0.0
  %697 = vmatprep.subr.mxu0 0.0
  %698 = vmatpush1.msra.mxu0 0.0
  %699 = vmatprep.subr.mxu0 0.0
  %700 = vmatpush1.msra.mxu0 0.0
  %701 = vmatprep.subr.mxu0 0.0
  %702 = vmatpush1.msra.mxu0 0.0
  %703 = vmatprep.subr.mxu0 0.0
  %704 = vmatpush1.msra.mxu0 0.0
  %705 = vmatprep.subr.mxu0 0.0
  %706 = vmatpush1.msra.mxu0 0.0
  %707 = vmatprep.subr.mxu0 0.0
  %708 = vmatpush1.msra.mxu0 0.0
  %709 = vmatprep.subr.mxu0 0.0
  %710 = vmatpush1.msra.mxu0 0.0
  %711 = vmatprep.subr.mxu0 0.0
  %712 = vmatpush1.msra.mxu0 0.0
  %713 = vmatprep.subr.mxu0 0.0
  %714 = vmatpush1.msra.mxu0 0.0
  %715 = vmatprep.subr.mxu0 0.0
  %716 = vmatpush1.msra.mxu0 0.0
  %717 = vmatprep.subr.mxu0 0.0
  %718 = vmatpush1.msra.mxu0 0.0
  %719 = vmatprep.subr.mxu0 0.0
  %720 = vmatpush1.msra.mxu0 0.0
  %721 = vmatprep.subr.mxu0 0.0
  %722 = vmatpush1.msra.mxu0 0.0
  %723 = vmatprep.subr.mxu0 0.0
  %724 = vmatpush1.msra.mxu0 0.0
  %725 = vmatprep.subr.mxu0 0.0
  %726 = vmatpush1.msra.mxu0 0.0
  %727 = vmatprep.subr.mxu0 0.0
  %728 = vmatpush1.msra.mxu0 0.0
  %729 = vmatprep.mubr.f32.mxu0 0.0
  %730 = vmatmul.mubr.f32.gmra.mrb[0].mxu0 %v618
  %v731 = vpop.f32.mrb[0].mxu0
  %v732 = vadd.f32 0.0, %v731
  %v733 = vpop.f32.mrb[0].mxu0
  %734 = vmatprep.mubr.f32.mxu0 0.0
  %735 = vmatmul.mubr.f32.gmra.mrb[0].mxu0 %v621
  %v736 = vpop.f32.mrb[0].mxu0
  %v737 = vadd.f32 0.0, %v736
  %v738 = vpop.f32.mrb[0].mxu0
  %739 = vmatprep.mubr.f32.mxu0 0.0
  %740 = vmatmul.mubr.f32.gmra.mrb[0].mxu0 %v624
  %v741 = vpop.f32.mrb[0].mxu0
  %v742 = vadd.f32 0.0, %v741
  %v743 = vpop.f32.mrb[0].mxu0
  %744 = vmatprep.mubr.f32.mxu0 0.0
  %745 = vmatmul.mubr.f32.gmra.mrb[0].mxu0 %v627
  %v746 = vpop.f32.mrb[0].mxu0
  %v747 = vadd.f32 0.0, %v746
  %v748 = vpop.f32.mrb[0].mxu0
  %749 = vmatprep.mubr.f32.mxu0 0.0
  %750 = vmatmul.mubr.f32.gmra.mrb[0].mxu0 %v630
  %v751 = vpop.f32.mrb[0].mxu0
  %v752 = vadd.f32 0.0, %v751
  %v753 = vpop.f32.mrb[0].mxu0
  %754 = vmatprep.mubr.f32.mxu0 0.0
  %755 = vmatmul.mubr.f32.gmra.mrb[0].mxu0 %v633
  %v756 = vpop.f32.mrb[0].mxu0
  %v757 = vadd.f32 0.0, %v756
  %v758 = vpop.f32.mrb[0].mxu0
  %759 = vmatprep.mubr.f32.mxu0 0.0
  %760 = vmatmul.mubr.f32.gmra.mrb[0].mxu0 %v636
  %v761 = vpop.f32.mrb[0].mxu0
  %v762 = vadd.f32 0.0, %v761
  %v763 = vpop.f32.mrb[0].mxu0
  %764 = vmatprep.mubr.f32.mxu0 0.0
  %765 = vmatmul.mubr.f32.gmra.mrb[0].mxu0 %v639
  %v766 = vpop.f32.mrb[0].mxu0
  %v767 = vadd.f32 0.0, %v766
  %v768 = vpop.f32.mrb[0].mxu0
  %769 = vmatprep.mubr.f32.mxu0 0.0
  %770 = vmatmul.mubr.f32.gmra.mrb[0].mxu0 %v642
  %v771 = vpop.f32.mrb[0].mxu0
  %v772 = vadd.f32 0.0, %v771
  %v773 = vpop.f32.mrb[0].mxu0
  %774 = vmatprep.mubr.f32.mxu0 0.0
  %775 = vmatmul.mubr.f32.gmra.mrb[0].mxu0 %v645
  %v776 = vpop.f32.mrb[0].mxu0
  %v777 = vadd.f32 0.0, %v776
  %v778 = vpop.f32.mrb[0].mxu0
  %779 = vmatprep.mubr.f32.mxu0 0.0
  %780 = vmatmul.mubr.f32.gmra.mrb[0].mxu0 %v648
  %v781 = vpop.f32.mrb[0].mxu0
  %v782 = vadd.f32 0.0, %v781
  %v783 = vpop.f32.mrb[0].mxu0
  %784 = vmatprep.mubr.f32.mxu0 0.0
  %785 = vmatmul.mubr.f32.gmra.mrb[0].mxu0 %v651
  %v786 = vpop.f32.mrb[0].mxu0
  %v787 = vadd.f32 0.0, %v786
  %v788 = vpop.f32.mrb[0].mxu0
  %789 = vmatprep.mubr.f32.mxu0 0.0
  %790 = vmatmul.mubr.f32.gmra.mrb[0].mxu0 %v654
  %v791 = vpop.f32.mrb[0].mxu0
  %v792 = vadd.f32 0.0, %v791
  %v793 = vpop.f32.mrb[0].mxu0
  %794 = vmatprep.mubr.f32.mxu0 0.0
  %795 = vmatmul.mubr.f32.gmra.mrb[0].mxu0 %v657
  %v796 = vpop.f32.mrb[0].mxu0
  %v797 = vadd.f32 0.0, %v796
  %v798 = vpop.f32.mrb[0].mxu0
  %799 = vmatprep.mubr.f32.mxu0 0.0
  %800 = vmatmul.mubr.f32.gmra.mrb[0].mxu0 %v660
  %v801 = vpop.f32.mrb[0].mxu0
  %v802 = vadd.f32 0.0, %v801
  %v803 = vpop.f32.mrb[0].mxu0
  %804 = vmatprep.mubr.f32.mxu0 0.0
  %805 = vmatmul.mubr.f32.gmra.mrb[0].mxu0 %v663
  %v806 = vpop.f32.mrb[0].mxu0
  %v807 = vadd.f32 0.0, %v806
  %v808 = vpop.f32.mrb[0].mxu0
  %809 = vdwg.mxu0
  %v810 = vmul.f32 %v732, 0.35355338
  %v811 = vmul.f32 %v737, 0.35355338
  %v812 = vmul.f32 %v742, 0.35355338
  %v813 = vmul.f32 %v747, 0.35355338
  %v814 = vmul.f32 %v752, 0.35355338
  %v815 = vmul.f32 %v757, 0.35355338
  %v816 = vmul.f32 %v762, 0.35355338
  %v817 = vmul.f32 %v767, 0.35355338
  %v818 = vmul.f32 %v772, 0.35355338
  %v819 = vmul.f32 %v777, 0.35355338
  %v820 = vmul.f32 %v782, 0.35355338
  %v821 = vmul.f32 %v787, 0.35355338
  %v822 = vmul.f32 %v792, 0.35355338
  %v823 = vmul.f32 %v797, 0.35355338
  %v824 = vmul.f32 %v802, 0.35355338
  %v825 = vmul.f32 %v807, 0.35355338
  %v826 = vmax.f32 %v553, %v810
  %v827 = vmax.f32 %v554, %v811
  %v828 = vmax.f32 %v555, %v812
  %v829 = vmax.f32 %v556, %v813
  %v830 = vmax.f32 %v557, %v814
  %v831 = vmax.f32 %v558, %v815
  %v832 = vmax.f32 %v559, %v816
  %v833 = vmax.f32 %v560, %v817
  %v834 = vmax.f32 %v561, %v818
  %v835 = vmax.f32 %v562, %v819
  %v836 = vmax.f32 %v563, %v820
  %v837 = vmax.f32 %v564, %v821
  %v838 = vmax.f32 %v565, %v822
  %v839 = vmax.f32 %v566, %v823
  %v840 = vmax.f32 %v567, %v824
  %v841 = vmax.f32 %v568, %v825
  %v842 = vsub.f32 %v553, %v826
  %v843 = vsub.f32 %v554, %v827
  %v844 = vsub.f32 %v555, %v828
  %v845 = vsub.f32 %v556, %v829
  %v846 = vsub.f32 %v557, %v830
  %v847 = vsub.f32 %v558, %v831
  %v848 = vsub.f32 %v559, %v832
  %v849 = vsub.f32 %v560, %v833
  %v850 = vsub.f32 %v561, %v834
  %v851 = vsub.f32 %v562, %v835
  %v852 = vsub.f32 %v563, %v836
  %v853 = vsub.f32 %v564, %v837
  %v854 = vsub.f32 %v565, %v838
  %v855 = vsub.f32 %v566, %v839
  %v856 = vsub.f32 %v567, %v840
  %v857 = vsub.f32 %v568, %v841
  %v858 = vmul.f32 %v842, 1.442695
  %v859 = vpow.pop %v858
  %v860 = vmul.f32 %v843, 1.442695
  %v861 = vpow.pop %v860
  %v862 = vmul.f32 %v844, 1.442695
  %v863 = vpow.pop %v862
  %v864 = vmul.f32 %v845, 1.442695
  %v865 = vpow.pop %v864
  %v866 = vmul.f32 %v846, 1.442695
  %v867 = vpow.pop %v866
  %v868 = vmul.f32 %v847, 1.442695
  %v869 = vpow.pop %v868
  %v870 = vmul.f32 %v848, 1.442695
  %v871 = vpow.pop %v870
  %v872 = vmul.f32 %v849, 1.442695
  %v873 = vpow.pop %v872
  %v874 = vmul.f32 %v850, 1.442695
  %v875 = vpow.pop %v874
  %v876 = vmul.f32 %v851, 1.442695
  %v877 = vpow.pop %v876
  %v878 = vmul.f32 %v852, 1.442695
  %v879 = vpow.pop %v878
  %v880 = vmul.f32 %v853, 1.442695
  %v881 = vpow.pop %v880
  %v882 = vmul.f32 %v854, 1.442695
  %v883 = vpow.pop %v882
  %v884 = vmul.f32 %v855, 1.442695
  %v885 = vpow.pop %v884
  %v886 = vmul.f32 %v856, 1.442695
  %v887 = vpow.pop %v886
  %v888 = vmul.f32 %v857, 1.442695
  %v889 = vpow.pop %v888
  %v890 = vsub.f32 %v810, %v826
  %v891 = vsub.f32 %v811, %v827
  %v892 = vsub.f32 %v812, %v828
  %v893 = vsub.f32 %v813, %v829
  %v894 = vsub.f32 %v814, %v830
  %v895 = vsub.f32 %v815, %v831
  %v896 = vsub.f32 %v816, %v832
  %v897 = vsub.f32 %v817, %v833
  %v898 = vsub.f32 %v818, %v834
  %v899 = vsub.f32 %v819, %v835
  %v900 = vsub.f32 %v820, %v836
  %v901 = vsub.f32 %v821, %v837
  %v902 = vsub.f32 %v822, %v838
  %v903 = vsub.f32 %v823, %v839
  %v904 = vsub.f32 %v824, %v840
  %v905 = vsub.f32 %v825, %v841
  %v906 = vmul.f32 %v890, 1.442695
  %v907 = vpow.pop %v906
  %v908 = vmul.f32 %v891, 1.442695
  %v909 = vpow.pop %v908
  %v910 = vmul.f32 %v892, 1.442695
  %v911 = vpow.pop %v910
  %v912 = vmul.f32 %v893, 1.442695
  %v913 = vpow.pop %v912
  %v914 = vmul.f32 %v894, 1.442695
  %v915 = vpow.pop %v914
  %v916 = vmul.f32 %v895, 1.442695
  %v917 = vpow.pop %v916
  %v918 = vmul.f32 %v896, 1.442695
  %v919 = vpow.pop %v918
  %v920 = vmul.f32 %v897, 1.442695
  %v921 = vpow.pop %v920
  %v922 = vmul.f32 %v898, 1.442695
  %v923 = vpow.pop %v922
  %v924 = vmul.f32 %v899, 1.442695
  %v925 = vpow.pop %v924
  %v926 = vmul.f32 %v900, 1.442695
  %v927 = vpow.pop %v926
  %v928 = vmul.f32 %v901, 1.442695
  %v929 = vpow.pop %v928
  %v930 = vmul.f32 %v902, 1.442695
  %v931 = vpow.pop %v930
  %v932 = vmul.f32 %v903, 1.442695
  %v933 = vpow.pop %v932
  %v934 = vmul.f32 %v904, 1.442695
  %v935 = vpow.pop %v934
  %v936 = vmul.f32 %v905, 1.442695
  %v937 = vpow.pop %v936
  %v938 = vadd.f32 %v859, %v907
  %v939 = vadd.f32 %v861, %v909
  %v940 = vadd.f32 %v863, %v911
  %v941 = vadd.f32 %v865, %v913
  %v942 = vadd.f32 %v867, %v915
  %v943 = vadd.f32 %v869, %v917
  %v944 = vadd.f32 %v871, %v919
  %v945 = vadd.f32 %v873, %v921
  %v946 = vadd.f32 %v875, %v923
  %v947 = vadd.f32 %v877, %v925
  %v948 = vadd.f32 %v879, %v927
  %v949 = vadd.f32 %v881, %v929
  %v950 = vadd.f32 %v883, %v931
  %v951 = vadd.f32 %v885, %v933
  %v952 = vadd.f32 %v887, %v935
  %v953 = vadd.f32 %v889, %v937
  %v954 = vrcp.pop %v938
  %v955 = vrcp.pop %v939
  %v956 = vrcp.pop %v940
  %v957 = vrcp.pop %v941
  %v958 = vrcp.pop %v942
  %v959 = vrcp.pop %v943
  %v960 = vrcp.pop %v944
  %v961 = vrcp.pop %v945
  %v962 = vrcp.pop %v946
  %v963 = vrcp.pop %v947
  %v964 = vrcp.pop %v948
  %v965 = vrcp.pop %v949
  %v966 = vrcp.pop %v950
  %v967 = vrcp.pop %v951
  %v968 = vrcp.pop %v952
  %v969 = vrcp.pop %v953
  %v970 = vmul.f32 %v859, %v954
  %v971 = vmul.f32 %v861, %v955
  %v972 = vmul.f32 %v863, %v956
  %v973 = vmul.f32 %v865, %v957
  %v974 = vmul.f32 %v867, %v958
  %v975 = vmul.f32 %v869, %v959
  %v976 = vmul.f32 %v871, %v960
  %v977 = vmul.f32 %v873, %v961
  %v978 = vmul.f32 %v875, %v962
  %v979 = vmul.f32 %v877, %v963
  %v980 = vmul.f32 %v879, %v964
  %v981 = vmul.f32 %v881, %v965
  %v982 = vmul.f32 %v883, %v966
  %v983 = vmul.f32 %v885, %v967
  %v984 = vmul.f32 %v887, %v968
  %v985 = vmul.f32 %v889, %v969
  %v986 = vld [vmem:[%s14] sm:$0xff]
  %vm987 = vcmask 64512
  %v989 = vsel %vm987, %v970, 0
  %v992 = vsel %vm987, %v971, 0
  %v995 = vsel %vm987, %v972, 0
  %v998 = vsel %vm987, %v973, 0
  %v1001 = vsel %vm987, %v974, 0
  %v1004 = vsel %vm987, %v975, 0
  %v1007 = vsel %vm987, %v976, 0
  %v1010 = vsel %vm987, %v977, 0
  %v1013 = vsel %vm987, %v978, 0
  %v1016 = vsel %vm987, %v979, 0
  %v1019 = vsel %vm987, %v980, 0
  %v1022 = vsel %vm987, %v981, 0
  %v1025 = vsel %vm987, %v982, 0
  %v1028 = vsel %vm987, %v983, 0
  %v1031 = vsel %vm987, %v984, 0
  %v1034 = vsel %vm987, %v985, 0
  %1036 = vmatprep.subr.mxu0 0.0
  %1037 = vmatpush1.msra.mxu0 %v986
  %1038 = vmatprep.subr.mxu0 0.0
  %1039 = vmatpush1.msra.mxu0 0.0
  %1040 = vmatprep.subr.mxu0 0.0
  %1041 = vmatpush1.msra.mxu0 0.0
  %1042 = vmatprep.subr.mxu0 0.0
  %1043 = vmatpush1.msra.mxu0 0.0
  %1044 = vmatprep.subr.mxu0 0.0
  %1045 = vmatpush1.msra.mxu0 0.0
  %1046 = vmatprep.subr.mxu0 0.0
  %1047 = vmatpush1.msra.mxu0 0.0
  %1048 = vmatprep.subr.mxu0 0.0
  %1049 = vmatpush1.msra.mxu0 0.0
  %1050 = vmatprep.subr.mxu0 0.0
  %1051 = vmatpush1.msra.mxu0 0.0
  %1052 = vmatprep.subr.mxu0 0.0
  %1053 = vmatpush1.msra.mxu0 0.0
  %1054 = vmatprep.subr.mxu0 0.0
  %1055 = vmatpush1.msra.mxu0 0.0
  %1056 = vmatprep.subr.mxu0 0.0
  %1057 = vmatpush1.msra.mxu0 0.0
  %1058 = vmatprep.subr.mxu0 0.0
  %1059 = vmatpush1.msra.mxu0 0.0
  %1060 = vmatprep.subr.mxu0 0.0
  %1061 = vmatpush1.msra.mxu0 0.0
  %1062 = vmatprep.subr.mxu0 0.0
  %1063 = vmatpush1.msra.mxu0 0.0
  %1064 = vmatprep.subr.mxu0 0.0
  %1065 = vmatpush1.msra.mxu0 0.0
  %1066 = vmatprep.subr.mxu0 0.0
  %1067 = vmatpush1.msra.mxu0 0.0
  %1068 = vmatprep.subr.mxu0 0.0
  %1069 = vmatpush1.msra.mxu0 0.0
  %1070 = vmatprep.subr.mxu0 0.0
  %1071 = vmatpush1.msra.mxu0 0.0
  %1072 = vmatprep.subr.mxu0 0.0
  %1073 = vmatpush1.msra.mxu0 0.0
  %1074 = vmatprep.subr.mxu0 0.0
  %1075 = vmatpush1.msra.mxu0 0.0
  %1076 = vmatprep.subr.mxu0 0.0
  %1077 = vmatpush1.msra.mxu0 0.0
  %1078 = vmatprep.subr.mxu0 0.0
  %1079 = vmatpush1.msra.mxu0 0.0
  %1080 = vmatprep.subr.mxu0 0.0
  %1081 = vmatpush1.msra.mxu0 0.0
  %1082 = vmatprep.subr.mxu0 0.0
  %1083 = vmatpush1.msra.mxu0 0.0
  %1084 = vmatprep.subr.mxu0 0.0
  %1085 = vmatpush1.msra.mxu0 0.0
  %1086 = vmatprep.subr.mxu0 0.0
  %1087 = vmatpush1.msra.mxu0 0.0
  %1088 = vmatprep.subr.mxu0 0.0
  %1089 = vmatpush1.msra.mxu0 0.0
  %1090 = vmatprep.subr.mxu0 0.0
  %1091 = vmatpush1.msra.mxu0 0.0
  %1092 = vmatprep.subr.mxu0 0.0
  %1093 = vmatpush1.msra.mxu0 0.0
  %1094 = vmatprep.subr.mxu0 0.0
  %1095 = vmatpush1.msra.mxu0 0.0
  %1096 = vmatprep.subr.mxu0 0.0
  %1097 = vmatpush1.msra.mxu0 0.0
  %1098 = vmatprep.subr.mxu0 0.0
  %1099 = vmatpush1.msra.mxu0 0.0
  %1100 = vmatprep.mubr.f32.mxu0 0.0
  %1101 = vmatmul.mubr.f32.gmra.mrb[0].mxu0 %v989
  %v1102 = vpop.f32.mrb[0].mxu0
  %v1103 = vadd.f32 0.0, %v1102
  %v1104 = vpop.f32.mrb[0].mxu0
  %1105 = vmatprep.mubr.f32.mxu0 0.0
  %1106 = vmatmul.mubr.f32.gmra.mrb[0].mxu0 %v992
  %v1107 = vpop.f32.mrb[0].mxu0
  %v1108 = vadd.f32 0.0, %v1107
  %v1109 = vpop.f32.mrb[0].mxu0
  %1110 = vmatprep.mubr.f32.mxu0 0.0
  %1111 = vmatmul.mubr.f32.gmra.mrb[0].mxu0 %v995
  %v1112 = vpop.f32.mrb[0].mxu0
  %v1113 = vadd.f32 0.0, %v1112
  %v1114 = vpop.f32.mrb[0].mxu0
  %1115 = vmatprep.mubr.f32.mxu0 0.0
  %1116 = vmatmul.mubr.f32.gmra.mrb[0].mxu0 %v998
  %v1117 = vpop.f32.mrb[0].mxu0
  %v1118 = vadd.f32 0.0, %v1117
  %v1119 = vpop.f32.mrb[0].mxu0
  %1120 = vmatprep.mubr.f32.mxu0 0.0
  %1121 = vmatmul.mubr.f32.gmra.mrb[0].mxu0 %v1001
  %v1122 = vpop.f32.mrb[0].mxu0
  %v1123 = vadd.f32 0.0, %v1122
  %v1124 = vpop.f32.mrb[0].mxu0
  %1125 = vmatprep.mubr.f32.mxu0 0.0
  %1126 = vmatmul.mubr.f32.gmra.mrb[0].mxu0 %v1004
  %v1127 = vpop.f32.mrb[0].mxu0
  %v1128 = vadd.f32 0.0, %v1127
  %v1129 = vpop.f32.mrb[0].mxu0
  %1130 = vmatprep.mubr.f32.mxu0 0.0
  %1131 = vmatmul.mubr.f32.gmra.mrb[0].mxu0 %v1007
  %v1132 = vpop.f32.mrb[0].mxu0
  %v1133 = vadd.f32 0.0, %v1132
  %v1134 = vpop.f32.mrb[0].mxu0
  %1135 = vmatprep.mubr.f32.mxu0 0.0
  %1136 = vmatmul.mubr.f32.gmra.mrb[0].mxu0 %v1010
  %v1137 = vpop.f32.mrb[0].mxu0
  %v1138 = vadd.f32 0.0, %v1137
  %v1139 = vpop.f32.mrb[0].mxu0
  %1140 = vmatprep.mubr.f32.mxu0 0.0
  %1141 = vmatmul.mubr.f32.gmra.mrb[0].mxu0 %v1013
  %v1142 = vpop.f32.mrb[0].mxu0
  %v1143 = vadd.f32 0.0, %v1142
  %v1144 = vpop.f32.mrb[0].mxu0
  %1145 = vmatprep.mubr.f32.mxu0 0.0
  %1146 = vmatmul.mubr.f32.gmra.mrb[0].mxu0 %v1016
  %v1147 = vpop.f32.mrb[0].mxu0
  %v1148 = vadd.f32 0.0, %v1147
  %v1149 = vpop.f32.mrb[0].mxu0
  %1150 = vmatprep.mubr.f32.mxu0 0.0
  %1151 = vmatmul.mubr.f32.gmra.mrb[0].mxu0 %v1019
  %v1152 = vpop.f32.mrb[0].mxu0
  %v1153 = vadd.f32 0.0, %v1152
  %v1154 = vpop.f32.mrb[0].mxu0
  %1155 = vmatprep.mubr.f32.mxu0 0.0
  %1156 = vmatmul.mubr.f32.gmra.mrb[0].mxu0 %v1022
  %v1157 = vpop.f32.mrb[0].mxu0
  %v1158 = vadd.f32 0.0, %v1157
  %v1159 = vpop.f32.mrb[0].mxu0
  %1160 = vmatprep.mubr.f32.mxu0 0.0
  %1161 = vmatmul.mubr.f32.gmra.mrb[0].mxu0 %v1025
  %v1162 = vpop.f32.mrb[0].mxu0
  %v1163 = vadd.f32 0.0, %v1162
  %v1164 = vpop.f32.mrb[0].mxu0
  %1165 = vmatprep.mubr.f32.mxu0 0.0
  %1166 = vmatmul.mubr.f32.gmra.mrb[0].mxu0 %v1028
  %v1167 = vpop.f32.mrb[0].mxu0
  %v1168 = vadd.f32 0.0, %v1167
  %v1169 = vpop.f32.mrb[0].mxu0
  %1170 = vmatprep.mubr.f32.mxu0 0.0
  %1171 = vmatmul.mubr.f32.gmra.mrb[0].mxu0 %v1031
  %v1172 = vpop.f32.mrb[0].mxu0
  %v1173 = vadd.f32 0.0, %v1172
  %v1174 = vpop.f32.mrb[0].mxu0
  %1175 = vmatprep.mubr.f32.mxu0 0.0
  %1176 = vmatmul.mubr.f32.gmra.mrb[0].mxu0 %v1034
  %v1177 = vpop.f32.mrb[0].mxu0
  %v1178 = vadd.f32 0.0, %v1177
  %v1179 = vpop.f32.mrb[0].mxu0
  %1180 = vdwg.mxu0
  %v1181 = vmul.f32 %v1103, %v212
  %v1182 = vmul.f32 %v1108, %v218
  %v1183 = vmul.f32 %v1113, %v224
  %v1184 = vmul.f32 %v1118, %v230
  %v1185 = vmul.f32 %v1123, %v236
  %v1186 = vmul.f32 %v1128, %v242
  %v1187 = vmul.f32 %v1133, %v248
  %v1188 = vmul.f32 %v1138, %v254
  %v1189 = vmul.f32 %v1143, %v212
  %v1190 = vmul.f32 %v1148, %v218
  %v1191 = vmul.f32 %v1153, %v224
  %v1192 = vmul.f32 %v1158, %v230
  %v1193 = vmul.f32 %v1163, %v236
  %v1194 = vmul.f32 %v1168, %v242
  %v1195 = vmul.f32 %v1173, %v248
  %v1196 = vmul.f32 %v1178, %v254
  %v1197 = vadd.f32 %v1181, 0.0
  %v1198 = vadd.f32 %v1182, 0.0
  %v1199 = vadd.f32 %v1183, 0.0
  %v1200 = vadd.f32 %v1184, 0.0
  %v1201 = vadd.f32 %v1185, 0.0
  %v1202 = vadd.f32 %v1186, 0.0
  %v1203 = vadd.f32 %v1187, 0.0
  %v1204 = vadd.f32 %v1188, 0.0
  %v1205 = vadd.f32 %v1189, 0.0
  %v1206 = vadd.f32 %v1190, 0.0
  %v1207 = vadd.f32 %v1191, 0.0
  %v1208 = vadd.f32 %v1192, 0.0
  %v1209 = vadd.f32 %v1193, 0.0
  %v1210 = vadd.f32 %v1194, 0.0
  %v1211 = vadd.f32 %v1195, 0.0
  %v1212 = vadd.f32 %v1196, 0.0
  %v1213 = vmul.f32 %v907, %v954
  %v1214 = vmul.f32 %v909, %v955
  %v1215 = vmul.f32 %v911, %v956
  %v1216 = vmul.f32 %v913, %v957
  %v1217 = vmul.f32 %v915, %v958
  %v1218 = vmul.f32 %v917, %v959
  %v1219 = vmul.f32 %v919, %v960
  %v1220 = vmul.f32 %v921, %v961
  %v1221 = vmul.f32 %v923, %v962
  %v1222 = vmul.f32 %v925, %v963
  %v1223 = vmul.f32 %v927, %v964
  %v1224 = vmul.f32 %v929, %v965
  %v1225 = vmul.f32 %v931, %v966
  %v1226 = vmul.f32 %v933, %v967
  %v1227 = vmul.f32 %v935, %v968
  %v1228 = vmul.f32 %v937, %v969
  %v1230 = vsel %vm987, %v1213, 0
  %v1233 = vsel %vm987, %v1214, 0
  %v1236 = vsel %vm987, %v1215, 0
  %v1239 = vsel %vm987, %v1216, 0
  %v1242 = vsel %vm987, %v1217, 0
  %v1245 = vsel %vm987, %v1218, 0
  %v1248 = vsel %vm987, %v1219, 0
  %v1251 = vsel %vm987, %v1220, 0
  %v1254 = vsel %vm987, %v1221, 0
  %v1257 = vsel %vm987, %v1222, 0
  %v1260 = vsel %vm987, %v1223, 0
  %v1263 = vsel %vm987, %v1224, 0
  %v1266 = vsel %vm987, %v1225, 0
  %v1269 = vsel %vm987, %v1226, 0
  %v1272 = vsel %vm987, %v1227, 0
  %v1275 = vsel %vm987, %v1228, 0
  %1277 = vmatprep.subr.mxu0 0.0
  %1278 = vmatpush1.msra.mxu0 %v986
  %1279 = vmatprep.subr.mxu0 0.0
  %1280 = vmatpush1.msra.mxu0 0.0
  %1281 = vmatprep.subr.mxu0 0.0
  %1282 = vmatpush1.msra.mxu0 0.0
  %1283 = vmatprep.subr.mxu0 0.0
  %1284 = vmatpush1.msra.mxu0 0.0
  %1285 = vmatprep.subr.mxu0 0.0
  %1286 = vmatpush1.msra.mxu0 0.0
  %1287 = vmatprep.subr.mxu0 0.0
  %1288 = vmatpush1.msra.mxu0 0.0
  %1289 = vmatprep.subr.mxu0 0.0
  %1290 = vmatpush1.msra.mxu0 0.0
  %1291 = vmatprep.subr.mxu0 0.0
  %1292 = vmatpush1.msra.mxu0 0.0
  %1293 = vmatprep.subr.mxu0 0.0
  %1294 = vmatpush1.msra.mxu0 0.0
  %1295 = vmatprep.subr.mxu0 0.0
  %1296 = vmatpush1.msra.mxu0 0.0
  %1297 = vmatprep.subr.mxu0 0.0
  %1298 = vmatpush1.msra.mxu0 0.0
  %1299 = vmatprep.subr.mxu0 0.0
  %1300 = vmatpush1.msra.mxu0 0.0
  %1301 = vmatprep.subr.mxu0 0.0
  %1302 = vmatpush1.msra.mxu0 0.0
  %1303 = vmatprep.subr.mxu0 0.0
  %1304 = vmatpush1.msra.mxu0 0.0
  %1305 = vmatprep.subr.mxu0 0.0
  %1306 = vmatpush1.msra.mxu0 0.0
  %1307 = vmatprep.subr.mxu0 0.0
  %1308 = vmatpush1.msra.mxu0 0.0
  %1309 = vmatprep.subr.mxu0 0.0
  %1310 = vmatpush1.msra.mxu0 0.0
  %1311 = vmatprep.subr.mxu0 0.0
  %1312 = vmatpush1.msra.mxu0 0.0
  %1313 = vmatprep.subr.mxu0 0.0
  %1314 = vmatpush1.msra.mxu0 0.0
  %1315 = vmatprep.subr.mxu0 0.0
  %1316 = vmatpush1.msra.mxu0 0.0
  %1317 = vmatprep.subr.mxu0 0.0
  %1318 = vmatpush1.msra.mxu0 0.0
  %1319 = vmatprep.subr.mxu0 0.0
  %1320 = vmatpush1.msra.mxu0 0.0
  %1321 = vmatprep.subr.mxu0 0.0
  %1322 = vmatpush1.msra.mxu0 0.0
  %1323 = vmatprep.subr.mxu0 0.0
  %1324 = vmatpush1.msra.mxu0 0.0
  %1325 = vmatprep.subr.mxu0 0.0
  %1326 = vmatpush1.msra.mxu0 0.0
  %1327 = vmatprep.subr.mxu0 0.0
  %1328 = vmatpush1.msra.mxu0 0.0
  %1329 = vmatprep.subr.mxu0 0.0
  %1330 = vmatpush1.msra.mxu0 0.0
  %1331 = vmatprep.subr.mxu0 0.0
  %1332 = vmatpush1.msra.mxu0 0.0
  %1333 = vmatprep.subr.mxu0 0.0
  %1334 = vmatpush1.msra.mxu0 0.0
  %1335 = vmatprep.subr.mxu0 0.0
  %1336 = vmatpush1.msra.mxu0 0.0
  %1337 = vmatprep.subr.mxu0 0.0
  %1338 = vmatpush1.msra.mxu0 0.0
  %1339 = vmatprep.subr.mxu0 0.0
  %1340 = vmatpush1.msra.mxu0 0.0
  %1341 = vmatprep.mubr.f32.mxu0 0.0
  %1342 = vmatmul.mubr.f32.gmra.mrb[0].mxu0 %v1230
  %v1343 = vpop.f32.mrb[0].mxu0
  %v1344 = vadd.f32 0.0, %v1343
  %v1345 = vpop.f32.mrb[0].mxu0
  %1346 = vmatprep.mubr.f32.mxu0 0.0
  %1347 = vmatmul.mubr.f32.gmra.mrb[0].mxu0 %v1233
  %v1348 = vpop.f32.mrb[0].mxu0
  %v1349 = vadd.f32 0.0, %v1348
  %v1350 = vpop.f32.mrb[0].mxu0
  %1351 = vmatprep.mubr.f32.mxu0 0.0
  %1352 = vmatmul.mubr.f32.gmra.mrb[0].mxu0 %v1236
  %v1353 = vpop.f32.mrb[0].mxu0
  %v1354 = vadd.f32 0.0, %v1353
  %v1355 = vpop.f32.mrb[0].mxu0
  %1356 = vmatprep.mubr.f32.mxu0 0.0
  %1357 = vmatmul.mubr.f32.gmra.mrb[0].mxu0 %v1239
  %v1358 = vpop.f32.mrb[0].mxu0
  %v1359 = vadd.f32 0.0, %v1358
  %v1360 = vpop.f32.mrb[0].mxu0
  %1361 = vmatprep.mubr.f32.mxu0 0.0
  %1362 = vmatmul.mubr.f32.gmra.mrb[0].mxu0 %v1242
  %v1363 = vpop.f32.mrb[0].mxu0
  %v1364 = vadd.f32 0.0, %v1363
  %v1365 = vpop.f32.mrb[0].mxu0
  %1366 = vmatprep.mubr.f32.mxu0 0.0
  %1367 = vmatmul.mubr.f32.gmra.mrb[0].mxu0 %v1245
  %v1368 = vpop.f32.mrb[0].mxu0
  %v1369 = vadd.f32 0.0, %v1368
  %v1370 = vpop.f32.mrb[0].mxu0
  %1371 = vmatprep.mubr.f32.mxu0 0.0
  %1372 = vmatmul.mubr.f32.gmra.mrb[0].mxu0 %v1248
  %v1373 = vpop.f32.mrb[0].mxu0
  %v1374 = vadd.f32 0.0, %v1373
  %v1375 = vpop.f32.mrb[0].mxu0
  %1376 = vmatprep.mubr.f32.mxu0 0.0
  %1377 = vmatmul.mubr.f32.gmra.mrb[0].mxu0 %v1251
  %v1378 = vpop.f32.mrb[0].mxu0
  %v1379 = vadd.f32 0.0, %v1378
  %v1380 = vpop.f32.mrb[0].mxu0
  %1381 = vmatprep.mubr.f32.mxu0 0.0
  %1382 = vmatmul.mubr.f32.gmra.mrb[0].mxu0 %v1254
  %v1383 = vpop.f32.mrb[0].mxu0
  %v1384 = vadd.f32 0.0, %v1383
  %v1385 = vpop.f32.mrb[0].mxu0
  %1386 = vmatprep.mubr.f32.mxu0 0.0
  %1387 = vmatmul.mubr.f32.gmra.mrb[0].mxu0 %v1257
  %v1388 = vpop.f32.mrb[0].mxu0
  %v1389 = vadd.f32 0.0, %v1388
  %v1390 = vpop.f32.mrb[0].mxu0
  %1391 = vmatprep.mubr.f32.mxu0 0.0
  %1392 = vmatmul.mubr.f32.gmra.mrb[0].mxu0 %v1260
  %v1393 = vpop.f32.mrb[0].mxu0
  %v1394 = vadd.f32 0.0, %v1393
  %v1395 = vpop.f32.mrb[0].mxu0
  %1396 = vmatprep.mubr.f32.mxu0 0.0
  %1397 = vmatmul.mubr.f32.gmra.mrb[0].mxu0 %v1263
  %v1398 = vpop.f32.mrb[0].mxu0
  %v1399 = vadd.f32 0.0, %v1398
  %v1400 = vpop.f32.mrb[0].mxu0
  %1401 = vmatprep.mubr.f32.mxu0 0.0
  %1402 = vmatmul.mubr.f32.gmra.mrb[0].mxu0 %v1266
  %v1403 = vpop.f32.mrb[0].mxu0
  %v1404 = vadd.f32 0.0, %v1403
  %v1405 = vpop.f32.mrb[0].mxu0
  %1406 = vmatprep.mubr.f32.mxu0 0.0
  %1407 = vmatmul.mubr.f32.gmra.mrb[0].mxu0 %v1269
  %v1408 = vpop.f32.mrb[0].mxu0
  %v1409 = vadd.f32 0.0, %v1408
  %v1410 = vpop.f32.mrb[0].mxu0
  %1411 = vmatprep.mubr.f32.mxu0 0.0
  %1412 = vmatmul.mubr.f32.gmra.mrb[0].mxu0 %v1272
  %v1413 = vpop.f32.mrb[0].mxu0
  %v1414 = vadd.f32 0.0, %v1413
  %v1415 = vpop.f32.mrb[0].mxu0
  %1416 = vmatprep.mubr.f32.mxu0 0.0
  %1417 = vmatmul.mubr.f32.gmra.mrb[0].mxu0 %v1275
  %v1418 = vpop.f32.mrb[0].mxu0
  %v1419 = vadd.f32 0.0, %v1418
  %v1420 = vpop.f32.mrb[0].mxu0
  %1421 = vdwg.mxu0
  %v1422 = vmul.f32 %v1344, %v260
  %v1423 = vmul.f32 %v1349, %v266
  %v1424 = vmul.f32 %v1354, %v272
  %v1425 = vmul.f32 %v1359, %v278
  %v1426 = vmul.f32 %v1364, %v284
  %v1427 = vmul.f32 %v1369, %v290
  %v1428 = vmul.f32 %v1374, %v296
  %v1429 = vmul.f32 %v1379, %v302
  %v1430 = vmul.f32 %v1384, %v260
  %v1431 = vmul.f32 %v1389, %v266
  %v1432 = vmul.f32 %v1394, %v272
  %v1433 = vmul.f32 %v1399, %v278
  %v1434 = vmul.f32 %v1404, %v284
  %v1435 = vmul.f32 %v1409, %v290
  %v1436 = vmul.f32 %v1414, %v296
  %v1437 = vmul.f32 %v1419, %v302
  %v1438 = vadd.f32 %v1197, %v1422
  %v1439 = vadd.f32 %v1198, %v1423
  %v1440 = vadd.f32 %v1199, %v1424
  %v1441 = vadd.f32 %v1200, %v1425
  %v1442 = vadd.f32 %v1201, %v1426
  %v1443 = vadd.f32 %v1202, %v1427
  %v1444 = vadd.f32 %v1203, %v1428
  %v1445 = vadd.f32 %v1204, %v1429
  %v1446 = vadd.f32 %v1205, %v1430
  %v1447 = vadd.f32 %v1206, %v1431
  %v1448 = vadd.f32 %v1207, %v1432
  %v1449 = vadd.f32 %v1208, %v1433
  %v1450 = vadd.f32 %v1209, %v1434
  %v1451 = vadd.f32 %v1210, %v1435
  %v1452 = vadd.f32 %v1211, %v1436
  %v1453 = vadd.f32 %v1212, %v1437
  %v1454 = vld [vmem:[%s3] sm:$0xff]
  %v1455 = vld [vmem:[%s3 + $0x8] sm:$0xff]
  %v1456 = vld [vmem:[%s3 + $0x10] sm:$0xff]
  %v1457 = vld [vmem:[%s3 + $0x18] sm:$0xff]
  %v1458 = vld [vmem:[%s3 + $0x20] sm:$0xff]
  %v1459 = vld [vmem:[%s3 + $0x28] sm:$0xff]
  %v1460 = vld [vmem:[%s3 + $0x30] sm:$0xff]
  %v1461 = vld [vmem:[%s3 + $0x38] sm:$0xff]
  %v1462 = vld [vmem:[%s4] sm:$0x1]
  %v1464 = vlaneseq
  %v1465 = vshrl.u32 %v1464, 7
  %v1466 = vsub.s32 0, %v1465
  %v1467 = vrot.slane %v1462, %v1466
  %v1470 = vsel %vm94, %v1438, 0
  %v1473 = vsel %vm94, %v1439, 0
  %v1476 = vsel %vm94, %v1440, 0
  %v1479 = vsel %vm94, %v1441, 0
  %v1482 = vsel %vm94, %v1442, 0
  %v1485 = vsel %vm94, %v1443, 0
  %v1488 = vsel %vm94, %v1444, 0
  %v1491 = vsel %vm94, %v1445, 0
  %v1494 = vsel %vm94, %v1446, 0
  %v1497 = vsel %vm94, %v1447, 0
  %v1500 = vsel %vm94, %v1448, 0
  %v1503 = vsel %vm94, %v1449, 0
  %v1506 = vsel %vm94, %v1450, 0
  %v1509 = vsel %vm94, %v1451, 0
  %v1512 = vsel %vm94, %v1452, 0
  %v1515 = vsel %vm94, %v1453, 0
  %1517 = vmatprep.subr.mxu0 0.0
  %1518 = vmatpush1.msra.mxu0 %v1454
  %1519 = vmatprep.subr.mxu0 0.0
  %1520 = vmatpush1.msra.mxu0 %v1455
  %1521 = vmatprep.subr.mxu0 0.0
  %1522 = vmatpush1.msra.mxu0 %v1456
  %1523 = vmatprep.subr.mxu0 0.0
  %1524 = vmatpush1.msra.mxu0 %v1457
  %1525 = vmatprep.subr.mxu0 0.0
  %1526 = vmatpush1.msra.mxu0 %v1458
  %1527 = vmatprep.subr.mxu0 0.0
  %1528 = vmatpush1.msra.mxu0 %v1459
  %1529 = vmatprep.subr.mxu0 0.0
  %1530 = vmatpush1.msra.mxu0 %v1460
  %1531 = vmatprep.subr.mxu0 0.0
  %1532 = vmatpush1.msra.mxu0 %v1461
  %1533 = vmatprep.subr.mxu0 0.0
  %1534 = vmatpush1.msra.mxu0 0.0
  %1535 = vmatprep.subr.mxu0 0.0
  %1536 = vmatpush1.msra.mxu0 0.0
  %1537 = vmatprep.subr.mxu0 0.0
  %1538 = vmatpush1.msra.mxu0 0.0
  %1539 = vmatprep.subr.mxu0 0.0
  %1540 = vmatpush1.msra.mxu0 0.0
  %1541 = vmatprep.subr.mxu0 0.0
  %1542 = vmatpush1.msra.mxu0 0.0
  %1543 = vmatprep.subr.mxu0 0.0
  %1544 = vmatpush1.msra.mxu0 0.0
  %1545 = vmatprep.subr.mxu0 0.0
  %1546 = vmatpush1.msra.mxu0 0.0
  %1547 = vmatprep.subr.mxu0 0.0
  %1548 = vmatpush1.msra.mxu0 0.0
  %1549 = vmatprep.subr.mxu0 0.0
  %1550 = vmatpush1.msra.mxu0 0.0
  %1551 = vmatprep.subr.mxu0 0.0
  %1552 = vmatpush1.msra.mxu0 0.0
  %1553 = vmatprep.subr.mxu0 0.0
  %1554 = vmatpush1.msra.mxu0 0.0
  %1555 = vmatprep.subr.mxu0 0.0
  %1556 = vmatpush1.msra.mxu0 0.0
  %1557 = vmatprep.subr.mxu0 0.0
  %1558 = vmatpush1.msra.mxu0 0.0
  %1559 = vmatprep.subr.mxu0 0.0
  %1560 = vmatpush1.msra.mxu0 0.0
  %1561 = vmatprep.subr.mxu0 0.0
  %1562 = vmatpush1.msra.mxu0 0.0
  %1563 = vmatprep.subr.mxu0 0.0
  %1564 = vmatpush1.msra.mxu0 0.0
  %1565 = vmatprep.subr.mxu0 0.0
  %1566 = vmatpush1.msra.mxu0 0.0
  %1567 = vmatprep.subr.mxu0 0.0
  %1568 = vmatpush1.msra.mxu0 0.0
  %1569 = vmatprep.subr.mxu0 0.0
  %1570 = vmatpush1.msra.mxu0 0.0
  %1571 = vmatprep.subr.mxu0 0.0
  %1572 = vmatpush1.msra.mxu0 0.0
  %1573 = vmatprep.subr.mxu0 0.0
  %1574 = vmatpush1.msra.mxu0 0.0
  %1575 = vmatprep.subr.mxu0 0.0
  %1576 = vmatpush1.msra.mxu0 0.0
  %1577 = vmatprep.subr.mxu0 0.0
  %1578 = vmatpush1.msra.mxu0 0.0
  %1579 = vmatprep.subr.mxu0 0.0
  %1580 = vmatpush1.msra.mxu0 0.0
  %1581 = vmatprep.mubr.f32.mxu0 0.0
  %1582 = vmatmul.mubr.f32.gmra.mrb[0].mxu0 %v1470
  %v1583 = vpop.f32.mrb[0].mxu0
  %v1584 = vadd.f32 %v1467, %v1583
  %v1585 = vpop.f32.mrb[0].mxu0
  %1586 = vmatprep.mubr.f32.mxu0 0.0
  %1587 = vmatmul.mubr.f32.gmra.mrb[0].mxu0 %v1473
  %v1588 = vpop.f32.mrb[0].mxu0
  %v1589 = vadd.f32 %v1467, %v1588
  %v1590 = vpop.f32.mrb[0].mxu0
  %1591 = vmatprep.mubr.f32.mxu0 0.0
  %1592 = vmatmul.mubr.f32.gmra.mrb[0].mxu0 %v1476
  %v1593 = vpop.f32.mrb[0].mxu0
  %v1594 = vadd.f32 %v1467, %v1593
  %v1595 = vpop.f32.mrb[0].mxu0
  %1596 = vmatprep.mubr.f32.mxu0 0.0
  %1597 = vmatmul.mubr.f32.gmra.mrb[0].mxu0 %v1479
  %v1598 = vpop.f32.mrb[0].mxu0
  %v1599 = vadd.f32 %v1467, %v1598
  %v1600 = vpop.f32.mrb[0].mxu0
  %1601 = vmatprep.mubr.f32.mxu0 0.0
  %1602 = vmatmul.mubr.f32.gmra.mrb[0].mxu0 %v1482
  %v1603 = vpop.f32.mrb[0].mxu0
  %v1604 = vadd.f32 %v1467, %v1603
  %v1605 = vpop.f32.mrb[0].mxu0
  %1606 = vmatprep.mubr.f32.mxu0 0.0
  %1607 = vmatmul.mubr.f32.gmra.mrb[0].mxu0 %v1485
  %v1608 = vpop.f32.mrb[0].mxu0
  %v1609 = vadd.f32 %v1467, %v1608
  %v1610 = vpop.f32.mrb[0].mxu0
  %1611 = vmatprep.mubr.f32.mxu0 0.0
  %1612 = vmatmul.mubr.f32.gmra.mrb[0].mxu0 %v1488
  %v1613 = vpop.f32.mrb[0].mxu0
  %v1614 = vadd.f32 %v1467, %v1613
  %v1615 = vpop.f32.mrb[0].mxu0
  %1616 = vmatprep.mubr.f32.mxu0 0.0
  %1617 = vmatmul.mubr.f32.gmra.mrb[0].mxu0 %v1491
  %v1618 = vpop.f32.mrb[0].mxu0
  %v1619 = vadd.f32 %v1467, %v1618
  %v1620 = vpop.f32.mrb[0].mxu0
  %1621 = vmatprep.mubr.f32.mxu0 0.0
  %1622 = vmatmul.mubr.f32.gmra.mrb[0].mxu0 %v1494
  %v1623 = vpop.f32.mrb[0].mxu0
  %v1624 = vadd.f32 %v1467, %v1623
  %v1625 = vpop.f32.mrb[0].mxu0
  %1626 = vmatprep.mubr.f32.mxu0 0.0
  %1627 = vmatmul.mubr.f32.gmra.mrb[0].mxu0 %v1497
  %v1628 = vpop.f32.mrb[0].mxu0
  %v1629 = vadd.f32 %v1467, %v1628
  %v1630 = vpop.f32.mrb[0].mxu0
  %1631 = vmatprep.mubr.f32.mxu0 0.0
  %1632 = vmatmul.mubr.f32.gmra.mrb[0].mxu0 %v1500
  %v1633 = vpop.f32.mrb[0].mxu0
  %v1634 = vadd.f32 %v1467, %v1633
  %v1635 = vpop.f32.mrb[0].mxu0
  %1636 = vmatprep.mubr.f32.mxu0 0.0
  %1637 = vmatmul.mubr.f32.gmra.mrb[0].mxu0 %v1503
  %v1638 = vpop.f32.mrb[0].mxu0
  %v1639 = vadd.f32 %v1467, %v1638
  %v1640 = vpop.f32.mrb[0].mxu0
  %1641 = vmatprep.mubr.f32.mxu0 0.0
  %1642 = vmatmul.mubr.f32.gmra.mrb[0].mxu0 %v1506
  %v1643 = vpop.f32.mrb[0].mxu0
  %v1644 = vadd.f32 %v1467, %v1643
  %v1645 = vpop.f32.mrb[0].mxu0
  %1646 = vmatprep.mubr.f32.mxu0 0.0
  %1647 = vmatmul.mubr.f32.gmra.mrb[0].mxu0 %v1509
  %v1648 = vpop.f32.mrb[0].mxu0
  %v1649 = vadd.f32 %v1467, %v1648
  %v1650 = vpop.f32.mrb[0].mxu0
  %1651 = vmatprep.mubr.f32.mxu0 0.0
  %1652 = vmatmul.mubr.f32.gmra.mrb[0].mxu0 %v1512
  %v1653 = vpop.f32.mrb[0].mxu0
  %v1654 = vadd.f32 %v1467, %v1653
  %v1655 = vpop.f32.mrb[0].mxu0
  %1656 = vmatprep.mubr.f32.mxu0 0.0
  %1657 = vmatmul.mubr.f32.gmra.mrb[0].mxu0 %v1515
  %v1658 = vpop.f32.mrb[0].mxu0
  %v1659 = vadd.f32 %v1467, %v1658
  %v1660 = vpop.f32.mrb[0].mxu0
  %1661 = vdwg.mxu0
  %v1662 = vadd.f32 %v50, %v1584
  %v1663 = vadd.f32 %v51, %v1589
  %v1664 = vadd.f32 %v52, %v1594
  %v1665 = vadd.f32 %v53, %v1599
  %v1666 = vadd.f32 %v54, %v1604
  %v1667 = vadd.f32 %v55, %v1609
  %v1668 = vadd.f32 %v56, %v1614
  %v1669 = vadd.f32 %v57, %v1619
  %v1670 = vadd.f32 %v58, %v1624
  %v1671 = vadd.f32 %v59, %v1629
  %v1672 = vadd.f32 %v60, %v1634
  %v1673 = vadd.f32 %v61, %v1639
  %v1674 = vadd.f32 %v62, %v1644
  %v1675 = vadd.f32 %v63, %v1649
  %v1676 = vadd.f32 %v64, %v1654
  %v1677 = vadd.f32 %v65, %v1659
  %v1678 = vld [vmem:[%s5] sm:$0x1]
  %v1679 = vld [vmem:[%s6] sm:$0x1]
  %v1680 = vsel %vm94, %v1662, 0.0
  %1681 = vadd.xlane.f32.xlu0 %v1680
  %v1682 = vpop.xlane.xlu0 %1681
  %v1683 = vsel %vm94, %v1663, 0.0
  %1684 = vadd.xlane.f32.xlu0 %v1683
  %v1685 = vpop.xlane.xlu0 %1684
  %v1686 = vsel %vm94, %v1664, 0.0
  %1687 = vadd.xlane.f32.xlu0 %v1686
  %v1688 = vpop.xlane.xlu0 %1687
  %v1689 = vsel %vm94, %v1665, 0.0
  %1690 = vadd.xlane.f32.xlu0 %v1689
  %v1691 = vpop.xlane.xlu0 %1690
  %v1692 = vsel %vm94, %v1666, 0.0
  %1693 = vadd.xlane.f32.xlu0 %v1692
  %v1694 = vpop.xlane.xlu0 %1693
  %v1695 = vsel %vm94, %v1667, 0.0
  %1696 = vadd.xlane.f32.xlu0 %v1695
  %v1697 = vpop.xlane.xlu0 %1696
  %v1698 = vsel %vm94, %v1668, 0.0
  %1699 = vadd.xlane.f32.xlu0 %v1698
  %v1700 = vpop.xlane.xlu0 %1699
  %v1701 = vsel %vm94, %v1669, 0.0
  %1702 = vadd.xlane.f32.xlu0 %v1701
  %v1703 = vpop.xlane.xlu0 %1702
  %v1704 = vsel %vm94, %v1670, 0.0
  %1705 = vadd.xlane.f32.xlu0 %v1704
  %v1706 = vpop.xlane.xlu0 %1705
  %v1707 = vsel %vm94, %v1671, 0.0
  %1708 = vadd.xlane.f32.xlu0 %v1707
  %v1709 = vpop.xlane.xlu0 %1708
  %v1710 = vsel %vm94, %v1672, 0.0
  %1711 = vadd.xlane.f32.xlu0 %v1710
  %v1712 = vpop.xlane.xlu0 %1711
  %v1713 = vsel %vm94, %v1673, 0.0
  %1714 = vadd.xlane.f32.xlu0 %v1713
  %v1715 = vpop.xlane.xlu0 %1714
  %v1716 = vsel %vm94, %v1674, 0.0
  %1717 = vadd.xlane.f32.xlu0 %v1716
  %v1718 = vpop.xlane.xlu0 %1717
  %v1719 = vsel %vm94, %v1675, 0.0
  %1720 = vadd.xlane.f32.xlu0 %v1719
  %v1721 = vpop.xlane.xlu0 %1720
  %v1722 = vsel %vm94, %v1676, 0.0
  %1723 = vadd.xlane.f32.xlu0 %v1722
  %v1724 = vpop.xlane.xlu0 %1723
  %v1725 = vsel %vm94, %v1677, 0.0
  %1726 = vadd.xlane.f32.xlu0 %v1725
  %v1727 = vpop.xlane.xlu0 %1726
  %v1728 = vrcp.pop 64.0
  %v1729 = vmul.f32 %v1682, %v1728
  %v1730 = vmul.f32 %v1685, %v1728
  %v1731 = vmul.f32 %v1688, %v1728
  %v1732 = vmul.f32 %v1691, %v1728
  %v1733 = vmul.f32 %v1694, %v1728
  %v1734 = vmul.f32 %v1697, %v1728
  %v1735 = vmul.f32 %v1700, %v1728
  %v1736 = vmul.f32 %v1703, %v1728
  %v1737 = vmul.f32 %v1706, %v1728
  %v1738 = vmul.f32 %v1709, %v1728
  %v1739 = vmul.f32 %v1712, %v1728
  %v1740 = vmul.f32 %v1715, %v1728
  %v1741 = vmul.f32 %v1718, %v1728
  %v1742 = vmul.f32 %v1721, %v1728
  %v1743 = vmul.f32 %v1724, %v1728
  %v1744 = vmul.f32 %v1727, %v1728
  %v1745 = vsub.f32 %v1662, %v1729
  %v1746 = vsub.f32 %v1663, %v1730
  %v1747 = vsub.f32 %v1664, %v1731
  %v1748 = vsub.f32 %v1665, %v1732
  %v1749 = vsub.f32 %v1666, %v1733
  %v1750 = vsub.f32 %v1667, %v1734
  %v1751 = vsub.f32 %v1668, %v1735
  %v1752 = vsub.f32 %v1669, %v1736
  %v1753 = vsub.f32 %v1670, %v1737
  %v1754 = vsub.f32 %v1671, %v1738
  %v1755 = vsub.f32 %v1672, %v1739
  %v1756 = vsub.f32 %v1673, %v1740
  %v1757 = vsub.f32 %v1674, %v1741
  %v1758 = vsub.f32 %v1675, %v1742
  %v1759 = vsub.f32 %v1676, %v1743
  %v1760 = vsub.f32 %v1677, %v1744
  %v1761 = vmul.f32 %v1745, %v1745
  %v1762 = vmul.f32 %v1746, %v1746
  %v1763 = vmul.f32 %v1747, %v1747
  %v1764 = vmul.f32 %v1748, %v1748
  %v1765 = vmul.f32 %v1749, %v1749
  %v1766 = vmul.f32 %v1750, %v1750
  %v1767 = vmul.f32 %v1751, %v1751
  %v1768 = vmul.f32 %v1752, %v1752
  %v1769 = vmul.f32 %v1753, %v1753
  %v1770 = vmul.f32 %v1754, %v1754
  %v1771 = vmul.f32 %v1755, %v1755
  %v1772 = vmul.f32 %v1756, %v1756
  %v1773 = vmul.f32 %v1757, %v1757
  %v1774 = vmul.f32 %v1758, %v1758
  %v1775 = vmul.f32 %v1759, %v1759
  %v1776 = vmul.f32 %v1760, %v1760
  %v1777 = vsel %vm94, %v1761, 0.0
  %1778 = vadd.xlane.f32.xlu0 %v1777
  %v1779 = vpop.xlane.xlu0 %1778
  %v1780 = vsel %vm94, %v1762, 0.0
  %1781 = vadd.xlane.f32.xlu0 %v1780
  %v1782 = vpop.xlane.xlu0 %1781
  %v1783 = vsel %vm94, %v1763, 0.0
  %1784 = vadd.xlane.f32.xlu0 %v1783
  %v1785 = vpop.xlane.xlu0 %1784
  %v1786 = vsel %vm94, %v1764, 0.0
  %1787 = vadd.xlane.f32.xlu0 %v1786
  %v1788 = vpop.xlane.xlu0 %1787
  %v1789 = vsel %vm94, %v1765, 0.0
  %1790 = vadd.xlane.f32.xlu0 %v1789
  %v1791 = vpop.xlane.xlu0 %1790
  %v1792 = vsel %vm94, %v1766, 0.0
  %1793 = vadd.xlane.f32.xlu0 %v1792
  %v1794 = vpop.xlane.xlu0 %1793
  %v1795 = vsel %vm94, %v1767, 0.0
  %1796 = vadd.xlane.f32.xlu0 %v1795
  %v1797 = vpop.xlane.xlu0 %1796
  %v1798 = vsel %vm94, %v1768, 0.0
  %1799 = vadd.xlane.f32.xlu0 %v1798
  %v1800 = vpop.xlane.xlu0 %1799
  %v1801 = vsel %vm94, %v1769, 0.0
  %1802 = vadd.xlane.f32.xlu0 %v1801
  %v1803 = vpop.xlane.xlu0 %1802
  %v1804 = vsel %vm94, %v1770, 0.0
  %1805 = vadd.xlane.f32.xlu0 %v1804
  %v1806 = vpop.xlane.xlu0 %1805
  %v1807 = vsel %vm94, %v1771, 0.0
  %1808 = vadd.xlane.f32.xlu0 %v1807
  %v1809 = vpop.xlane.xlu0 %1808
  %v1810 = vsel %vm94, %v1772, 0.0
  %1811 = vadd.xlane.f32.xlu0 %v1810
  %v1812 = vpop.xlane.xlu0 %1811
  %v1813 = vsel %vm94, %v1773, 0.0
  %1814 = vadd.xlane.f32.xlu0 %v1813
  %v1815 = vpop.xlane.xlu0 %1814
  %v1816 = vsel %vm94, %v1774, 0.0
  %1817 = vadd.xlane.f32.xlu0 %v1816
  %v1818 = vpop.xlane.xlu0 %1817
  %v1819 = vsel %vm94, %v1775, 0.0
  %1820 = vadd.xlane.f32.xlu0 %v1819
  %v1821 = vpop.xlane.xlu0 %1820
  %v1822 = vsel %vm94, %v1776, 0.0
  %1823 = vadd.xlane.f32.xlu0 %v1822
  %v1824 = vpop.xlane.xlu0 %1823
  %v1825 = vmul.f32 %v1779, %v1728
  %v1826 = vmul.f32 %v1782, %v1728
  %v1827 = vmul.f32 %v1785, %v1728
  %v1828 = vmul.f32 %v1788, %v1728
  %v1829 = vmul.f32 %v1791, %v1728
  %v1830 = vmul.f32 %v1794, %v1728
  %v1831 = vmul.f32 %v1797, %v1728
  %v1832 = vmul.f32 %v1800, %v1728
  %v1833 = vmul.f32 %v1803, %v1728
  %v1834 = vmul.f32 %v1806, %v1728
  %v1835 = vmul.f32 %v1809, %v1728
  %v1836 = vmul.f32 %v1812, %v1728
  %v1837 = vmul.f32 %v1815, %v1728
  %v1838 = vmul.f32 %v1818, %v1728
  %v1839 = vmul.f32 %v1821, %v1728
  %v1840 = vmul.f32 %v1824, %v1728
  %v1841 = vadd.f32 %v1825, 1e-05
  %v1842 = vadd.f32 %v1826, 1e-05
  %v1843 = vadd.f32 %v1827, 1e-05
  %v1844 = vadd.f32 %v1828, 1e-05
  %v1845 = vadd.f32 %v1829, 1e-05
  %v1846 = vadd.f32 %v1830, 1e-05
  %v1847 = vadd.f32 %v1831, 1e-05
  %v1848 = vadd.f32 %v1832, 1e-05
  %v1849 = vadd.f32 %v1833, 1e-05
  %v1850 = vadd.f32 %v1834, 1e-05
  %v1851 = vadd.f32 %v1835, 1e-05
  %v1852 = vadd.f32 %v1836, 1e-05
  %v1853 = vadd.f32 %v1837, 1e-05
  %v1854 = vadd.f32 %v1838, 1e-05
  %v1855 = vadd.f32 %v1839, 1e-05
  %v1856 = vadd.f32 %v1840, 1e-05
  %v1857 = vrsqrt.pop %v1841
  %v1858 = vrsqrt.pop %v1842
  %v1859 = vrsqrt.pop %v1843
  %v1860 = vrsqrt.pop %v1844
  %v1861 = vrsqrt.pop %v1845
  %v1862 = vrsqrt.pop %v1846
  %v1863 = vrsqrt.pop %v1847
  %v1864 = vrsqrt.pop %v1848
  %v1865 = vrsqrt.pop %v1849
  %v1866 = vrsqrt.pop %v1850
  %v1867 = vrsqrt.pop %v1851
  %v1868 = vrsqrt.pop %v1852
  %v1869 = vrsqrt.pop %v1853
  %v1870 = vrsqrt.pop %v1854
  %v1871 = vrsqrt.pop %v1855
  %v1872 = vrsqrt.pop %v1856
  %v1873 = vmul.f32 %v1745, %v1857
  %v1874 = vmul.f32 %v1746, %v1858
  %v1875 = vmul.f32 %v1747, %v1859
  %v1876 = vmul.f32 %v1748, %v1860
  %v1877 = vmul.f32 %v1749, %v1861
  %v1878 = vmul.f32 %v1750, %v1862
  %v1879 = vmul.f32 %v1751, %v1863
  %v1880 = vmul.f32 %v1752, %v1864
  %v1881 = vmul.f32 %v1753, %v1865
  %v1882 = vmul.f32 %v1754, %v1866
  %v1883 = vmul.f32 %v1755, %v1867
  %v1884 = vmul.f32 %v1756, %v1868
  %v1885 = vmul.f32 %v1757, %v1869
  %v1886 = vmul.f32 %v1758, %v1870
  %v1887 = vmul.f32 %v1759, %v1871
  %v1888 = vmul.f32 %v1760, %v1872
  %v1890 = vlaneseq
  %v1891 = vshrl.u32 %v1890, 7
  %v1892 = vsub.s32 0, %v1891
  %v1893 = vrot.slane %v1678, %v1892
  %v1895 = vmul.f32 %v1873, %v1893
  %v1896 = vmul.f32 %v1874, %v1893
  %v1897 = vmul.f32 %v1875, %v1893
  %v1898 = vmul.f32 %v1876, %v1893
  %v1899 = vmul.f32 %v1877, %v1893
  %v1900 = vmul.f32 %v1878, %v1893
  %v1901 = vmul.f32 %v1879, %v1893
  %v1902 = vmul.f32 %v1880, %v1893
  %v1903 = vmul.f32 %v1881, %v1893
  %v1904 = vmul.f32 %v1882, %v1893
  %v1905 = vmul.f32 %v1883, %v1893
  %v1906 = vmul.f32 %v1884, %v1893
  %v1907 = vmul.f32 %v1885, %v1893
  %v1908 = vmul.f32 %v1886, %v1893
  %v1909 = vmul.f32 %v1887, %v1893
  %v1910 = vmul.f32 %v1888, %v1893
  %v1912 = vlaneseq
  %v1913 = vshrl.u32 %v1912, 7
  %v1914 = vsub.s32 0, %v1913
  %v1915 = vrot.slane %v1679, %v1914
  %v1917 = vadd.f32 %v1895, %v1915
  %v1918 = vadd.f32 %v1896, %v1915
  %v1919 = vadd.f32 %v1897, %v1915
  %v1920 = vadd.f32 %v1898, %v1915
  %v1921 = vadd.f32 %v1899, %v1915
  %v1922 = vadd.f32 %v1900, %v1915
  %v1923 = vadd.f32 %v1901, %v1915
  %v1924 = vadd.f32 %v1902, %v1915
  %v1925 = vadd.f32 %v1903, %v1915
  %v1926 = vadd.f32 %v1904, %v1915
  %v1927 = vadd.f32 %v1905, %v1915
  %v1928 = vadd.f32 %v1906, %v1915
  %v1929 = vadd.f32 %v1907, %v1915
  %v1930 = vadd.f32 %v1908, %v1915
  %v1931 = vadd.f32 %v1909, %v1915
  %v1932 = vadd.f32 %v1910, %v1915
  %v1933 = vld [vmem:[%s7] sm:$0xff]
  %v1934 = vld [vmem:[%s7 + $0x8] sm:$0xff]
  %v1935 = vld [vmem:[%s7 + $0x10] sm:$0xff]
  %v1936 = vld [vmem:[%s7 + $0x18] sm:$0xff]
  %v1937 = vld [vmem:[%s7 + $0x20] sm:$0xff]
  %v1938 = vld [vmem:[%s7 + $0x28] sm:$0xff]
  %v1939 = vld [vmem:[%s7 + $0x30] sm:$0xff]
  %v1940 = vld [vmem:[%s7 + $0x38] sm:$0xff]
  %v1941 = vld [vmem:[%s7 + $0x40] sm:$0xff]
  %v1942 = vld [vmem:[%s7 + $0x48] sm:$0xff]
  %v1943 = vld [vmem:[%s7 + $0x50] sm:$0xff]
  %v1944 = vld [vmem:[%s7 + $0x58] sm:$0xff]
  %v1945 = vld [vmem:[%s7 + $0x60] sm:$0xff]
  %v1946 = vld [vmem:[%s7 + $0x68] sm:$0xff]
  %v1947 = vld [vmem:[%s7 + $0x70] sm:$0xff]
  %v1948 = vld [vmem:[%s7 + $0x78] sm:$0xff]
  %v1949 = vunpack.c.l.bf16 %v1933
  %v1950 = vunpack.c.h.bf16 %v1933
  %v1951 = vunpack.c.l.bf16 %v1934
  %v1952 = vunpack.c.h.bf16 %v1934
  %v1953 = vunpack.c.l.bf16 %v1935
  %v1954 = vunpack.c.h.bf16 %v1935
  %v1955 = vunpack.c.l.bf16 %v1936
  %v1956 = vunpack.c.h.bf16 %v1936
  %v1957 = vunpack.c.l.bf16 %v1937
  %v1958 = vunpack.c.h.bf16 %v1937
  %v1959 = vunpack.c.l.bf16 %v1938
  %v1960 = vunpack.c.h.bf16 %v1938
  %v1961 = vunpack.c.l.bf16 %v1939
  %v1962 = vunpack.c.h.bf16 %v1939
  %v1963 = vunpack.c.l.bf16 %v1940
  %v1964 = vunpack.c.h.bf16 %v1940
  %v1965 = vunpack.c.l.bf16 %v1941
  %v1966 = vunpack.c.h.bf16 %v1941
  %v1967 = vunpack.c.l.bf16 %v1942
  %v1968 = vunpack.c.h.bf16 %v1942
  %v1969 = vunpack.c.l.bf16 %v1943
  %v1970 = vunpack.c.h.bf16 %v1943
  %v1971 = vunpack.c.l.bf16 %v1944
  %v1972 = vunpack.c.h.bf16 %v1944
  %v1973 = vunpack.c.l.bf16 %v1945
  %v1974 = vunpack.c.h.bf16 %v1945
  %v1975 = vunpack.c.l.bf16 %v1946
  %v1976 = vunpack.c.h.bf16 %v1946
  %v1977 = vunpack.c.l.bf16 %v1947
  %v1978 = vunpack.c.h.bf16 %v1947
  %v1979 = vunpack.c.l.bf16 %v1948
  %v1980 = vunpack.c.h.bf16 %v1948
  %v1981 = vld [vmem:[%s8] sm:$0xf]
  %v1983 = vlaneseq
  %v1984 = vshrl.u32 %v1983, 7
  %v1985 = vsub.s32 0, %v1984
  %v1986 = vrot.slane %v1981, %v1985
  %v1987 = vlaneseq
  %v1988 = vshrl.u32 %v1987, 7
  %v1989 = vsub.s32 1, %v1988
  %v1990 = vrot.slane %v1981, %v1989
  %v1991 = vlaneseq
  %v1992 = vshrl.u32 %v1991, 7
  %v1993 = vsub.s32 2, %v1992
  %v1994 = vrot.slane %v1981, %v1993
  %v1995 = vlaneseq
  %v1996 = vshrl.u32 %v1995, 7
  %v1997 = vsub.s32 3, %v1996
  %v1998 = vrot.slane %v1981, %v1997
  %v2004 = vsel %vm94, %v1917, 0
  %v2007 = vsel %vm94, %v1918, 0
  %v2010 = vsel %vm94, %v1919, 0
  %v2013 = vsel %vm94, %v1920, 0
  %v2016 = vsel %vm94, %v1921, 0
  %v2019 = vsel %vm94, %v1922, 0
  %v2022 = vsel %vm94, %v1923, 0
  %v2025 = vsel %vm94, %v1924, 0
  %v2028 = vsel %vm94, %v1925, 0
  %v2031 = vsel %vm94, %v1926, 0
  %v2034 = vsel %vm94, %v1927, 0
  %v2037 = vsel %vm94, %v1928, 0
  %v2040 = vsel %vm94, %v1929, 0
  %v2043 = vsel %vm94, %v1930, 0
  %v2046 = vsel %vm94, %v1931, 0
  %v2049 = vsel %vm94, %v1932, 0
  %2051 = vmatprep.subr.mxu0 %v1950
  %2052 = vmatpush1.msra.mxu0 %v1949
  %2053 = vmatprep.subr.mxu0 %v1954
  %2054 = vmatpush1.msra.mxu0 %v1953
  %2055 = vmatprep.subr.mxu0 %v1958
  %2056 = vmatpush1.msra.mxu0 %v1957
  %2057 = vmatprep.subr.mxu0 %v1962
  %2058 = vmatpush1.msra.mxu0 %v1961
  %2059 = vmatprep.subr.mxu0 %v1966
  %2060 = vmatpush1.msra.mxu0 %v1965
  %2061 = vmatprep.subr.mxu0 %v1970
  %2062 = vmatpush1.msra.mxu0 %v1969
  %2063 = vmatprep.subr.mxu0 %v1974
  %2064 = vmatpush1.msra.mxu0 %v1973
  %2065 = vmatprep.subr.mxu0 %v1978
  %2066 = vmatpush1.msra.mxu0 %v1977
  %2067 = vmatprep.subr.mxu0 0.0
  %2068 = vmatpush1.msra.mxu0 0.0
  %2069 = vmatprep.subr.mxu0 0.0
  %2070 = vmatpush1.msra.mxu0 0.0
  %2071 = vmatprep.subr.mxu0 0.0
  %2072 = vmatpush1.msra.mxu0 0.0
  %2073 = vmatprep.subr.mxu0 0.0
  %2074 = vmatpush1.msra.mxu0 0.0
  %2075 = vmatprep.subr.mxu0 0.0
  %2076 = vmatpush1.msra.mxu0 0.0
  %2077 = vmatprep.subr.mxu0 0.0
  %2078 = vmatpush1.msra.mxu0 0.0
  %2079 = vmatprep.subr.mxu0 0.0
  %2080 = vmatpush1.msra.mxu0 0.0
  %2081 = vmatprep.subr.mxu0 0.0
  %2082 = vmatpush1.msra.mxu0 0.0
  %2083 = vmatprep.subr.mxu0 0.0
  %2084 = vmatpush1.msra.mxu0 0.0
  %2085 = vmatprep.subr.mxu0 0.0
  %2086 = vmatpush1.msra.mxu0 0.0
  %2087 = vmatprep.subr.mxu0 0.0
  %2088 = vmatpush1.msra.mxu0 0.0
  %2089 = vmatprep.subr.mxu0 0.0
  %2090 = vmatpush1.msra.mxu0 0.0
  %2091 = vmatprep.subr.mxu0 0.0
  %2092 = vmatpush1.msra.mxu0 0.0
  %2093 = vmatprep.subr.mxu0 0.0
  %2094 = vmatpush1.msra.mxu0 0.0
  %2095 = vmatprep.subr.mxu0 0.0
  %2096 = vmatpush1.msra.mxu0 0.0
  %2097 = vmatprep.subr.mxu0 0.0
  %2098 = vmatpush1.msra.mxu0 0.0
  %2099 = vmatprep.subr.mxu0 0.0
  %2100 = vmatpush1.msra.mxu0 0.0
  %2101 = vmatprep.subr.mxu0 0.0
  %2102 = vmatpush1.msra.mxu0 0.0
  %2103 = vmatprep.subr.mxu0 0.0
  %2104 = vmatpush1.msra.mxu0 0.0
  %2105 = vmatprep.subr.mxu0 0.0
  %2106 = vmatpush1.msra.mxu0 0.0
  %2107 = vmatprep.subr.mxu0 0.0
  %2108 = vmatpush1.msra.mxu0 0.0
  %2109 = vmatprep.subr.mxu0 0.0
  %2110 = vmatpush1.msra.mxu0 0.0
  %2111 = vmatprep.subr.mxu0 0.0
  %2112 = vmatpush1.msra.mxu0 0.0
  %2113 = vmatprep.subr.mxu0 0.0
  %2114 = vmatpush1.msra.mxu0 0.0
  %2115 = vmatprep.mubr.f32.mxu0 0.0
  %2116 = vmatmul.mubr.f32.gmra.mrb[0].mxu0 %v2004
  %v2117 = vpop.f32.mrb[0].mxu0
  %v2118 = vadd.f32 %v1986, %v2117
  %v2119 = vpop.f32.mrb[0].mxu0
  %v2120 = vadd.f32 %v1990, %v2119
  %2121 = vmatprep.mubr.f32.mxu0 0.0
  %2122 = vmatmul.mubr.f32.gmra.mrb[0].mxu0 %v2007
  %v2123 = vpop.f32.mrb[0].mxu0
  %v2124 = vadd.f32 %v1986, %v2123
  %v2125 = vpop.f32.mrb[0].mxu0
  %v2126 = vadd.f32 %v1990, %v2125
  %2127 = vmatprep.mubr.f32.mxu0 0.0
  %2128 = vmatmul.mubr.f32.gmra.mrb[0].mxu0 %v2010
  %v2129 = vpop.f32.mrb[0].mxu0
  %v2130 = vadd.f32 %v1986, %v2129
  %v2131 = vpop.f32.mrb[0].mxu0
  %v2132 = vadd.f32 %v1990, %v2131
  %2133 = vmatprep.mubr.f32.mxu0 0.0
  %2134 = vmatmul.mubr.f32.gmra.mrb[0].mxu0 %v2013
  %v2135 = vpop.f32.mrb[0].mxu0
  %v2136 = vadd.f32 %v1986, %v2135
  %v2137 = vpop.f32.mrb[0].mxu0
  %v2138 = vadd.f32 %v1990, %v2137
  %2139 = vmatprep.mubr.f32.mxu0 0.0
  %2140 = vmatmul.mubr.f32.gmra.mrb[0].mxu0 %v2016
  %v2141 = vpop.f32.mrb[0].mxu0
  %v2142 = vadd.f32 %v1986, %v2141
  %v2143 = vpop.f32.mrb[0].mxu0
  %v2144 = vadd.f32 %v1990, %v2143
  %2145 = vmatprep.mubr.f32.mxu0 0.0
  %2146 = vmatmul.mubr.f32.gmra.mrb[0].mxu0 %v2019
  %v2147 = vpop.f32.mrb[0].mxu0
  %v2148 = vadd.f32 %v1986, %v2147
  %v2149 = vpop.f32.mrb[0].mxu0
  %v2150 = vadd.f32 %v1990, %v2149
  %2151 = vmatprep.mubr.f32.mxu0 0.0
  %2152 = vmatmul.mubr.f32.gmra.mrb[0].mxu0 %v2022
  %v2153 = vpop.f32.mrb[0].mxu0
  %v2154 = vadd.f32 %v1986, %v2153
  %v2155 = vpop.f32.mrb[0].mxu0
  %v2156 = vadd.f32 %v1990, %v2155
  %2157 = vmatprep.mubr.f32.mxu0 0.0
  %2158 = vmatmul.mubr.f32.gmra.mrb[0].mxu0 %v2025
  %v2159 = vpop.f32.mrb[0].mxu0
  %v2160 = vadd.f32 %v1986, %v2159
  %v2161 = vpop.f32.mrb[0].mxu0
  %v2162 = vadd.f32 %v1990, %v2161
  %2163 = vmatprep.mubr.f32.mxu0 0.0
  %2164 = vmatmul.mubr.f32.gmra.mrb[0].mxu0 %v2028
  %v2165 = vpop.f32.mrb[0].mxu0
  %v2166 = vadd.f32 %v1986, %v2165
  %v2167 = vpop.f32.mrb[0].mxu0
  %v2168 = vadd.f32 %v1990, %v2167
  %2169 = vmatprep.mubr.f32.mxu0 0.0
  %2170 = vmatmul.mubr.f32.gmra.mrb[0].mxu0 %v2031
  %v2171 = vpop.f32.mrb[0].mxu0
  %v2172 = vadd.f32 %v1986, %v2171
  %v2173 = vpop.f32.mrb[0].mxu0
  %v2174 = vadd.f32 %v1990, %v2173
  %2175 = vmatprep.mubr.f32.mxu0 0.0
  %2176 = vmatmul.mubr.f32.gmra.mrb[0].mxu0 %v2034
  %v2177 = vpop.f32.mrb[0].mxu0
  %v2178 = vadd.f32 %v1986, %v2177
  %v2179 = vpop.f32.mrb[0].mxu0
  %v2180 = vadd.f32 %v1990, %v2179
  %2181 = vmatprep.mubr.f32.mxu0 0.0
  %2182 = vmatmul.mubr.f32.gmra.mrb[0].mxu0 %v2037
  %v2183 = vpop.f32.mrb[0].mxu0
  %v2184 = vadd.f32 %v1986, %v2183
  %v2185 = vpop.f32.mrb[0].mxu0
  %v2186 = vadd.f32 %v1990, %v2185
  %2187 = vmatprep.mubr.f32.mxu0 0.0
  %2188 = vmatmul.mubr.f32.gmra.mrb[0].mxu0 %v2040
  %v2189 = vpop.f32.mrb[0].mxu0
  %v2190 = vadd.f32 %v1986, %v2189
  %v2191 = vpop.f32.mrb[0].mxu0
  %v2192 = vadd.f32 %v1990, %v2191
  %2193 = vmatprep.mubr.f32.mxu0 0.0
  %2194 = vmatmul.mubr.f32.gmra.mrb[0].mxu0 %v2043
  %v2195 = vpop.f32.mrb[0].mxu0
  %v2196 = vadd.f32 %v1986, %v2195
  %v2197 = vpop.f32.mrb[0].mxu0
  %v2198 = vadd.f32 %v1990, %v2197
  %2199 = vmatprep.mubr.f32.mxu0 0.0
  %2200 = vmatmul.mubr.f32.gmra.mrb[0].mxu0 %v2046
  %v2201 = vpop.f32.mrb[0].mxu0
  %v2202 = vadd.f32 %v1986, %v2201
  %v2203 = vpop.f32.mrb[0].mxu0
  %v2204 = vadd.f32 %v1990, %v2203
  %2205 = vmatprep.mubr.f32.mxu0 0.0
  %2206 = vmatmul.mubr.f32.gmra.mrb[0].mxu0 %v2049
  %v2207 = vpop.f32.mrb[0].mxu0
  %v2208 = vadd.f32 %v1986, %v2207
  %v2209 = vpop.f32.mrb[0].mxu0
  %v2210 = vadd.f32 %v1990, %v2209
  %2211 = vdwg.mxu0
  %2212 = vmatprep.subr.mxu0 %v1952
  %2213 = vmatpush1.msra.mxu0 %v1951
  %2214 = vmatprep.subr.mxu0 %v1956
  %2215 = vmatpush1.msra.mxu0 %v1955
  %2216 = vmatprep.subr.mxu0 %v1960
  %2217 = vmatpush1.msra.mxu0 %v1959
  %2218 = vmatprep.subr.mxu0 %v1964
  %2219 = vmatpush1.msra.mxu0 %v1963
  %2220 = vmatprep.subr.mxu0 %v1968
  %2221 = vmatpush1.msra.mxu0 %v1967
  %2222 = vmatprep.subr.mxu0 %v1972
  %2223 = vmatpush1.msra.mxu0 %v1971
  %2224 = vmatprep.subr.mxu0 %v1976
  %2225 = vmatpush1.msra.mxu0 %v1975
  %2226 = vmatprep.subr.mxu0 %v1980
  %2227 = vmatpush1.msra.mxu0 %v1979
  %2228 = vmatprep.subr.mxu0 0.0
  %2229 = vmatpush1.msra.mxu0 0.0
  %2230 = vmatprep.subr.mxu0 0.0
  %2231 = vmatpush1.msra.mxu0 0.0
  %2232 = vmatprep.subr.mxu0 0.0
  %2233 = vmatpush1.msra.mxu0 0.0
  %2234 = vmatprep.subr.mxu0 0.0
  %2235 = vmatpush1.msra.mxu0 0.0
  %2236 = vmatprep.subr.mxu0 0.0
  %2237 = vmatpush1.msra.mxu0 0.0
  %2238 = vmatprep.subr.mxu0 0.0
  %2239 = vmatpush1.msra.mxu0 0.0
  %2240 = vmatprep.subr.mxu0 0.0
  %2241 = vmatpush1.msra.mxu0 0.0
  %2242 = vmatprep.subr.mxu0 0.0
  %2243 = vmatpush1.msra.mxu0 0.0
  %2244 = vmatprep.subr.mxu0 0.0
  %2245 = vmatpush1.msra.mxu0 0.0
  %2246 = vmatprep.subr.mxu0 0.0
  %2247 = vmatpush1.msra.mxu0 0.0
  %2248 = vmatprep.subr.mxu0 0.0
  %2249 = vmatpush1.msra.mxu0 0.0
  %2250 = vmatprep.subr.mxu0 0.0
  %2251 = vmatpush1.msra.mxu0 0.0
  %2252 = vmatprep.subr.mxu0 0.0
  %2253 = vmatpush1.msra.mxu0 0.0
  %2254 = vmatprep.subr.mxu0 0.0
  %2255 = vmatpush1.msra.mxu0 0.0
  %2256 = vmatprep.subr.mxu0 0.0
  %2257 = vmatpush1.msra.mxu0 0.0
  %2258 = vmatprep.subr.mxu0 0.0
  %2259 = vmatpush1.msra.mxu0 0.0
  %2260 = vmatprep.subr.mxu0 0.0
  %2261 = vmatpush1.msra.mxu0 0.0
  %2262 = vmatprep.subr.mxu0 0.0
  %2263 = vmatpush1.msra.mxu0 0.0
  %2264 = vmatprep.subr.mxu0 0.0
  %2265 = vmatpush1.msra.mxu0 0.0
  %2266 = vmatprep.subr.mxu0 0.0
  %2267 = vmatpush1.msra.mxu0 0.0
  %2268 = vmatprep.subr.mxu0 0.0
  %2269 = vmatpush1.msra.mxu0 0.0
  %2270 = vmatprep.subr.mxu0 0.0
  %2271 = vmatpush1.msra.mxu0 0.0
  %2272 = vmatprep.subr.mxu0 0.0
  %2273 = vmatpush1.msra.mxu0 0.0
  %2274 = vmatprep.subr.mxu0 0.0
  %2275 = vmatpush1.msra.mxu0 0.0
  %2276 = vmatprep.mubr.f32.mxu0 0.0
  %2277 = vmatmul.mubr.f32.gmra.mrb[0].mxu0 %v2004
  %v2278 = vpop.f32.mrb[0].mxu0
  %v2279 = vadd.f32 %v1994, %v2278
  %v2280 = vpop.f32.mrb[0].mxu0
  %v2281 = vadd.f32 %v1998, %v2280
  %2282 = vmatprep.mubr.f32.mxu0 0.0
  %2283 = vmatmul.mubr.f32.gmra.mrb[0].mxu0 %v2007
  %v2284 = vpop.f32.mrb[0].mxu0
  %v2285 = vadd.f32 %v1994, %v2284
  %v2286 = vpop.f32.mrb[0].mxu0
  %v2287 = vadd.f32 %v1998, %v2286
  %2288 = vmatprep.mubr.f32.mxu0 0.0
  %2289 = vmatmul.mubr.f32.gmra.mrb[0].mxu0 %v2010
  %v2290 = vpop.f32.mrb[0].mxu0
  %v2291 = vadd.f32 %v1994, %v2290
  %v2292 = vpop.f32.mrb[0].mxu0
  %v2293 = vadd.f32 %v1998, %v2292
  %2294 = vmatprep.mubr.f32.mxu0 0.0
  %2295 = vmatmul.mubr.f32.gmra.mrb[0].mxu0 %v2013
  %v2296 = vpop.f32.mrb[0].mxu0
  %v2297 = vadd.f32 %v1994, %v2296
  %v2298 = vpop.f32.mrb[0].mxu0
  %v2299 = vadd.f32 %v1998, %v2298
  %2300 = vmatprep.mubr.f32.mxu0 0.0
  %2301 = vmatmul.mubr.f32.gmra.mrb[0].mxu0 %v2016
  %v2302 = vpop.f32.mrb[0].mxu0
  %v2303 = vadd.f32 %v1994, %v2302
  %v2304 = vpop.f32.mrb[0].mxu0
  %v2305 = vadd.f32 %v1998, %v2304
  %2306 = vmatprep.mubr.f32.mxu0 0.0
  %2307 = vmatmul.mubr.f32.gmra.mrb[0].mxu0 %v2019
  %v2308 = vpop.f32.mrb[0].mxu0
  %v2309 = vadd.f32 %v1994, %v2308
  %v2310 = vpop.f32.mrb[0].mxu0
  %v2311 = vadd.f32 %v1998, %v2310
  %2312 = vmatprep.mubr.f32.mxu0 0.0
  %2313 = vmatmul.mubr.f32.gmra.mrb[0].mxu0 %v2022
  %v2314 = vpop.f32.mrb[0].mxu0
  %v2315 = vadd.f32 %v1994, %v2314
  %v2316 = vpop.f32.mrb[0].mxu0
  %v2317 = vadd.f32 %v1998, %v2316
  %2318 = vmatprep.mubr.f32.mxu0 0.0
  %2319 = vmatmul.mubr.f32.gmra.mrb[0].mxu0 %v2025
  %v2320 = vpop.f32.mrb[0].mxu0
  %v2321 = vadd.f32 %v1994, %v2320
  %v2322 = vpop.f32.mrb[0].mxu0
  %v2323 = vadd.f32 %v1998, %v2322
  %2324 = vmatprep.mubr.f32.mxu0 0.0
  %2325 = vmatmul.mubr.f32.gmra.mrb[0].mxu0 %v2028
  %v2326 = vpop.f32.mrb[0].mxu0
  %v2327 = vadd.f32 %v1994, %v2326
  %v2328 = vpop.f32.mrb[0].mxu0
  %v2329 = vadd.f32 %v1998, %v2328
  %2330 = vmatprep.mubr.f32.mxu0 0.0
  %2331 = vmatmul.mubr.f32.gmra.mrb[0].mxu0 %v2031
  %v2332 = vpop.f32.mrb[0].mxu0
  %v2333 = vadd.f32 %v1994, %v2332
  %v2334 = vpop.f32.mrb[0].mxu0
  %v2335 = vadd.f32 %v1998, %v2334
  %2336 = vmatprep.mubr.f32.mxu0 0.0
  %2337 = vmatmul.mubr.f32.gmra.mrb[0].mxu0 %v2034
  %v2338 = vpop.f32.mrb[0].mxu0
  %v2339 = vadd.f32 %v1994, %v2338
  %v2340 = vpop.f32.mrb[0].mxu0
  %v2341 = vadd.f32 %v1998, %v2340
  %2342 = vmatprep.mubr.f32.mxu0 0.0
  %2343 = vmatmul.mubr.f32.gmra.mrb[0].mxu0 %v2037
  %v2344 = vpop.f32.mrb[0].mxu0
  %v2345 = vadd.f32 %v1994, %v2344
  %v2346 = vpop.f32.mrb[0].mxu0
  %v2347 = vadd.f32 %v1998, %v2346
  %2348 = vmatprep.mubr.f32.mxu0 0.0
  %2349 = vmatmul.mubr.f32.gmra.mrb[0].mxu0 %v2040
  %v2350 = vpop.f32.mrb[0].mxu0
  %v2351 = vadd.f32 %v1994, %v2350
  %v2352 = vpop.f32.mrb[0].mxu0
  %v2353 = vadd.f32 %v1998, %v2352
  %2354 = vmatprep.mubr.f32.mxu0 0.0
  %2355 = vmatmul.mubr.f32.gmra.mrb[0].mxu0 %v2043
  %v2356 = vpop.f32.mrb[0].mxu0
  %v2357 = vadd.f32 %v1994, %v2356
  %v2358 = vpop.f32.mrb[0].mxu0
  %v2359 = vadd.f32 %v1998, %v2358
  %2360 = vmatprep.mubr.f32.mxu0 0.0
  %2361 = vmatmul.mubr.f32.gmra.mrb[0].mxu0 %v2046
  %v2362 = vpop.f32.mrb[0].mxu0
  %v2363 = vadd.f32 %v1994, %v2362
  %v2364 = vpop.f32.mrb[0].mxu0
  %v2365 = vadd.f32 %v1998, %v2364
  %2366 = vmatprep.mubr.f32.mxu0 0.0
  %2367 = vmatmul.mubr.f32.gmra.mrb[0].mxu0 %v2049
  %v2368 = vpop.f32.mrb[0].mxu0
  %v2369 = vadd.f32 %v1994, %v2368
  %v2370 = vpop.f32.mrb[0].mxu0
  %v2371 = vadd.f32 %v1998, %v2370
  %2372 = vdwg.mxu0
  %v2373 = vmax.f32 %v2118, 0.0
  %v2374 = vmax.f32 %v2120, 0.0
  %v2375 = vmax.f32 %v2279, 0.0
  %v2376 = vmax.f32 %v2281, 0.0
  %v2377 = vmax.f32 %v2124, 0.0
  %v2378 = vmax.f32 %v2126, 0.0
  %v2379 = vmax.f32 %v2285, 0.0
  %v2380 = vmax.f32 %v2287, 0.0
  %v2381 = vmax.f32 %v2130, 0.0
  %v2382 = vmax.f32 %v2132, 0.0
  %v2383 = vmax.f32 %v2291, 0.0
  %v2384 = vmax.f32 %v2293, 0.0
  %v2385 = vmax.f32 %v2136, 0.0
  %v2386 = vmax.f32 %v2138, 0.0
  %v2387 = vmax.f32 %v2297, 0.0
  %v2388 = vmax.f32 %v2299, 0.0
  %v2389 = vmax.f32 %v2142, 0.0
  %v2390 = vmax.f32 %v2144, 0.0
  %v2391 = vmax.f32 %v2303, 0.0
  %v2392 = vmax.f32 %v2305, 0.0
  %v2393 = vmax.f32 %v2148, 0.0
  %v2394 = vmax.f32 %v2150, 0.0
  %v2395 = vmax.f32 %v2309, 0.0
  %v2396 = vmax.f32 %v2311, 0.0
  %v2397 = vmax.f32 %v2154, 0.0
  %v2398 = vmax.f32 %v2156, 0.0
  %v2399 = vmax.f32 %v2315, 0.0
  %v2400 = vmax.f32 %v2317, 0.0
  %v2401 = vmax.f32 %v2160, 0.0
  %v2402 = vmax.f32 %v2162, 0.0
  %v2403 = vmax.f32 %v2321, 0.0
  %v2404 = vmax.f32 %v2323, 0.0
  %v2405 = vmax.f32 %v2166, 0.0
  %v2406 = vmax.f32 %v2168, 0.0
  %v2407 = vmax.f32 %v2327, 0.0
  %v2408 = vmax.f32 %v2329, 0.0
  %v2409 = vmax.f32 %v2172, 0.0
  %v2410 = vmax.f32 %v2174, 0.0
  %v2411 = vmax.f32 %v2333, 0.0
  %v2412 = vmax.f32 %v2335, 0.0
  %v2413 = vmax.f32 %v2178, 0.0
  %v2414 = vmax.f32 %v2180, 0.0
  %v2415 = vmax.f32 %v2339, 0.0
  %v2416 = vmax.f32 %v2341, 0.0
  %v2417 = vmax.f32 %v2184, 0.0
  %v2418 = vmax.f32 %v2186, 0.0
  %v2419 = vmax.f32 %v2345, 0.0
  %v2420 = vmax.f32 %v2347, 0.0
  %v2421 = vmax.f32 %v2190, 0.0
  %v2422 = vmax.f32 %v2192, 0.0
  %v2423 = vmax.f32 %v2351, 0.0
  %v2424 = vmax.f32 %v2353, 0.0
  %v2425 = vmax.f32 %v2196, 0.0
  %v2426 = vmax.f32 %v2198, 0.0
  %v2427 = vmax.f32 %v2357, 0.0
  %v2428 = vmax.f32 %v2359, 0.0
  %v2429 = vmax.f32 %v2202, 0.0
  %v2430 = vmax.f32 %v2204, 0.0
  %v2431 = vmax.f32 %v2363, 0.0
  %v2432 = vmax.f32 %v2365, 0.0
  %v2433 = vmax.f32 %v2208, 0.0
  %v2434 = vmax.f32 %v2210, 0.0
  %v2435 = vmax.f32 %v2369, 0.0
  %v2436 = vmax.f32 %v2371, 0.0
  %v2437 = vld [vmem:[%s9] sm:$0xf]
  %v2438 = vld [vmem:[%s9 + $0x4] sm:$0xf]
  %v2439 = vld [vmem:[%s9 + $0x8] sm:$0xf]
  %v2440 = vld [vmem:[%s9 + $0xc] sm:$0xf]
  %v2441 = vld [vmem:[%s9 + $0x10] sm:$0xf]
  %v2442 = vld [vmem:[%s9 + $0x14] sm:$0xf]
  %v2443 = vld [vmem:[%s9 + $0x18] sm:$0xf]
  %v2444 = vld [vmem:[%s9 + $0x1c] sm:$0xf]
  %v2445 = vld [vmem:[%s9 + $0x20] sm:$0xf]
  %v2446 = vld [vmem:[%s9 + $0x24] sm:$0xf]
  %v2447 = vld [vmem:[%s9 + $0x28] sm:$0xf]
  %v2448 = vld [vmem:[%s9 + $0x2c] sm:$0xf]
  %v2449 = vld [vmem:[%s9 + $0x30] sm:$0xf]
  %v2450 = vld [vmem:[%s9 + $0x34] sm:$0xf]
  %v2451 = vld [vmem:[%s9 + $0x38] sm:$0xf]
  %v2452 = vld [vmem:[%s9 + $0x3c] sm:$0xf]
  %v2453 = vld [vmem:[%s9 + $0x40] sm:$0xf]
  %v2454 = vld [vmem:[%s9 + $0x44] sm:$0xf]
  %v2455 = vld [vmem:[%s9 + $0x48] sm:$0xf]
  %v2456 = vld [vmem:[%s9 + $0x4c] sm:$0xf]
  %v2457 = vld [vmem:[%s9 + $0x50] sm:$0xf]
  %v2458 = vld [vmem:[%s9 + $0x54] sm:$0xf]
  %v2459 = vld [vmem:[%s9 + $0x58] sm:$0xf]
  %v2460 = vld [vmem:[%s9 + $0x5c] sm:$0xf]
  %v2461 = vld [vmem:[%s9 + $0x60] sm:$0xf]
  %v2462 = vld [vmem:[%s9 + $0x64] sm:$0xf]
  %v2463 = vld [vmem:[%s9 + $0x68] sm:$0xf]
  %v2464 = vld [vmem:[%s9 + $0x6c] sm:$0xf]
  %v2465 = vld [vmem:[%s9 + $0x70] sm:$0xf]
  %v2466 = vld [vmem:[%s9 + $0x74] sm:$0xf]
  %v2467 = vld [vmem:[%s9 + $0x78] sm:$0xf]
  %v2468 = vld [vmem:[%s9 + $0x7c] sm:$0xf]
  %v2469 = vld [vmem:[%s9 + $0x80] sm:$0xf]
  %v2470 = vld [vmem:[%s9 + $0x84] sm:$0xf]
  %v2471 = vld [vmem:[%s9 + $0x88] sm:$0xf]
  %v2472 = vld [vmem:[%s9 + $0x8c] sm:$0xf]
  %v2473 = vld [vmem:[%s9 + $0x90] sm:$0xf]
  %v2474 = vld [vmem:[%s9 + $0x94] sm:$0xf]
  %v2475 = vld [vmem:[%s9 + $0x98] sm:$0xf]
  %v2476 = vld [vmem:[%s9 + $0x9c] sm:$0xf]
  %v2477 = vld [vmem:[%s9 + $0xa0] sm:$0xf]
  %v2478 = vld [vmem:[%s9 + $0xa4] sm:$0xf]
  %v2479 = vld [vmem:[%s9 + $0xa8] sm:$0xf]
  %v2480 = vld [vmem:[%s9 + $0xac] sm:$0xf]
  %v2481 = vld [vmem:[%s9 + $0xb0] sm:$0xf]
  %v2482 = vld [vmem:[%s9 + $0xb4] sm:$0xf]
  %v2483 = vld [vmem:[%s9 + $0xb8] sm:$0xf]
  %v2484 = vld [vmem:[%s9 + $0xbc] sm:$0xf]
  %v2485 = vld [vmem:[%s9 + $0xc0] sm:$0xf]
  %v2486 = vld [vmem:[%s9 + $0xc4] sm:$0xf]
  %v2487 = vld [vmem:[%s9 + $0xc8] sm:$0xf]
  %v2488 = vld [vmem:[%s9 + $0xcc] sm:$0xf]
  %v2489 = vld [vmem:[%s9 + $0xd0] sm:$0xf]
  %v2490 = vld [vmem:[%s9 + $0xd4] sm:$0xf]
  %v2491 = vld [vmem:[%s9 + $0xd8] sm:$0xf]
  %v2492 = vld [vmem:[%s9 + $0xdc] sm:$0xf]
  %v2493 = vld [vmem:[%s9 + $0xe0] sm:$0xf]
  %v2494 = vld [vmem:[%s9 + $0xe4] sm:$0xf]
  %v2495 = vld [vmem:[%s9 + $0xe8] sm:$0xf]
  %v2496 = vld [vmem:[%s9 + $0xec] sm:$0xf]
  %v2497 = vld [vmem:[%s9 + $0xf0] sm:$0xf]
  %v2498 = vld [vmem:[%s9 + $0xf4] sm:$0xf]
  %v2499 = vld [vmem:[%s9 + $0xf8] sm:$0xf]
  %v2500 = vld [vmem:[%s9 + $0xfc] sm:$0xf]
  %v2501 = vunpack.c.l.bf16 %v2437
  %v2502 = vunpack.c.l.bf16 %v2438
  %v2503 = vunpack.c.l.bf16 %v2439
  %v2504 = vunpack.c.l.bf16 %v2440
  %v2505 = vunpack.c.l.bf16 %v2441
  %v2506 = vunpack.c.l.bf16 %v2442
  %v2507 = vunpack.c.l.bf16 %v2443
  %v2508 = vunpack.c.l.bf16 %v2444
  %v2509 = vunpack.c.l.bf16 %v2445
  %v2510 = vunpack.c.l.bf16 %v2446
  %v2511 = vunpack.c.l.bf16 %v2447
  %v2512 = vunpack.c.l.bf16 %v2448
  %v2513 = vunpack.c.l.bf16 %v2449
  %v2514 = vunpack.c.l.bf16 %v2450
  %v2515 = vunpack.c.l.bf16 %v2451
  %v2516 = vunpack.c.l.bf16 %v2452
  %v2517 = vunpack.c.l.bf16 %v2453
  %v2518 = vunpack.c.l.bf16 %v2454
  %v2519 = vunpack.c.l.bf16 %v2455
  %v2520 = vunpack.c.l.bf16 %v2456
  %v2521 = vunpack.c.l.bf16 %v2457
  %v2522 = vunpack.c.l.bf16 %v2458
  %v2523 = vunpack.c.l.bf16 %v2459
  %v2524 = vunpack.c.l.bf16 %v2460
  %v2525 = vunpack.c.l.bf16 %v2461
  %v2526 = vunpack.c.l.bf16 %v2462
  %v2527 = vunpack.c.l.bf16 %v2463
  %v2528 = vunpack.c.l.bf16 %v2464
  %v2529 = vunpack.c.l.bf16 %v2465
  %v2530 = vunpack.c.l.bf16 %v2466
  %v2531 = vunpack.c.l.bf16 %v2467
  %v2532 = vunpack.c.l.bf16 %v2468
  %v2533 = vunpack.c.l.bf16 %v2469
  %v2534 = vunpack.c.l.bf16 %v2470
  %v2535 = vunpack.c.l.bf16 %v2471
  %v2536 = vunpack.c.l.bf16 %v2472
  %v2537 = vunpack.c.l.bf16 %v2473
  %v2538 = vunpack.c.l.bf16 %v2474
  %v2539 = vunpack.c.l.bf16 %v2475
  %v2540 = vunpack.c.l.bf16 %v2476
  %v2541 = vunpack.c.l.bf16 %v2477
  %v2542 = vunpack.c.l.bf16 %v2478
  %v2543 = vunpack.c.l.bf16 %v2479
  %v2544 = vunpack.c.l.bf16 %v2480
  %v2545 = vunpack.c.l.bf16 %v2481
  %v2546 = vunpack.c.l.bf16 %v2482
  %v2547 = vunpack.c.l.bf16 %v2483
  %v2548 = vunpack.c.l.bf16 %v2484
  %v2549 = vunpack.c.l.bf16 %v2485
  %v2550 = vunpack.c.l.bf16 %v2486
  %v2551 = vunpack.c.l.bf16 %v2487
  %v2552 = vunpack.c.l.bf16 %v2488
  %v2553 = vunpack.c.l.bf16 %v2489
  %v2554 = vunpack.c.l.bf16 %v2490
  %v2555 = vunpack.c.l.bf16 %v2491
  %v2556 = vunpack.c.l.bf16 %v2492
  %v2557 = vunpack.c.l.bf16 %v2493
  %v2558 = vunpack.c.l.bf16 %v2494
  %v2559 = vunpack.c.l.bf16 %v2495
  %v2560 = vunpack.c.l.bf16 %v2496
  %v2561 = vunpack.c.l.bf16 %v2497
  %v2562 = vunpack.c.l.bf16 %v2498
  %v2563 = vunpack.c.l.bf16 %v2499
  %v2564 = vunpack.c.l.bf16 %v2500
  %v2565 = vld [vmem:[%s10] sm:$0x1]
  %v2567 = vlaneseq
  %v2568 = vshrl.u32 %v2567, 7
  %v2569 = vsub.s32 0, %v2568
  %v2570 = vrot.slane %v2565, %v2569
  %2572 = vmatprep.subr.mxu0 0.0
  %2573 = vmatpush1.msra.mxu0 %v2501
  %2574 = vmatprep.subr.mxu0 0.0
  %2575 = vmatpush1.msra.mxu0 %v2502
  %2576 = vmatprep.subr.mxu0 0.0
  %2577 = vmatpush1.msra.mxu0 %v2503
  %2578 = vmatprep.subr.mxu0 0.0
  %2579 = vmatpush1.msra.mxu0 %v2504
  %2580 = vmatprep.subr.mxu0 0.0
  %2581 = vmatpush1.msra.mxu0 %v2505
  %2582 = vmatprep.subr.mxu0 0.0
  %2583 = vmatpush1.msra.mxu0 %v2506
  %2584 = vmatprep.subr.mxu0 0.0
  %2585 = vmatpush1.msra.mxu0 %v2507
  %2586 = vmatprep.subr.mxu0 0.0
  %2587 = vmatpush1.msra.mxu0 %v2508
  %2588 = vmatprep.subr.mxu0 0.0
  %2589 = vmatpush1.msra.mxu0 %v2509
  %2590 = vmatprep.subr.mxu0 0.0
  %2591 = vmatpush1.msra.mxu0 %v2510
  %2592 = vmatprep.subr.mxu0 0.0
  %2593 = vmatpush1.msra.mxu0 %v2511
  %2594 = vmatprep.subr.mxu0 0.0
  %2595 = vmatpush1.msra.mxu0 %v2512
  %2596 = vmatprep.subr.mxu0 0.0
  %2597 = vmatpush1.msra.mxu0 %v2513
  %2598 = vmatprep.subr.mxu0 0.0
  %2599 = vmatpush1.msra.mxu0 %v2514
  %2600 = vmatprep.subr.mxu0 0.0
  %2601 = vmatpush1.msra.mxu0 %v2515
  %2602 = vmatprep.subr.mxu0 0.0
  %2603 = vmatpush1.msra.mxu0 %v2516
  %2604 = vmatprep.subr.mxu0 0.0
  %2605 = vmatpush1.msra.mxu0 %v2517
  %2606 = vmatprep.subr.mxu0 0.0
  %2607 = vmatpush1.msra.mxu0 %v2518
  %2608 = vmatprep.subr.mxu0 0.0
  %2609 = vmatpush1.msra.mxu0 %v2519
  %2610 = vmatprep.subr.mxu0 0.0
  %2611 = vmatpush1.msra.mxu0 %v2520
  %2612 = vmatprep.subr.mxu0 0.0
  %2613 = vmatpush1.msra.mxu0 %v2521
  %2614 = vmatprep.subr.mxu0 0.0
  %2615 = vmatpush1.msra.mxu0 %v2522
  %2616 = vmatprep.subr.mxu0 0.0
  %2617 = vmatpush1.msra.mxu0 %v2523
  %2618 = vmatprep.subr.mxu0 0.0
  %2619 = vmatpush1.msra.mxu0 %v2524
  %2620 = vmatprep.subr.mxu0 0.0
  %2621 = vmatpush1.msra.mxu0 %v2525
  %2622 = vmatprep.subr.mxu0 0.0
  %2623 = vmatpush1.msra.mxu0 %v2526
  %2624 = vmatprep.subr.mxu0 0.0
  %2625 = vmatpush1.msra.mxu0 %v2527
  %2626 = vmatprep.subr.mxu0 0.0
  %2627 = vmatpush1.msra.mxu0 %v2528
  %2628 = vmatprep.subr.mxu0 0.0
  %2629 = vmatpush1.msra.mxu0 %v2529
  %2630 = vmatprep.subr.mxu0 0.0
  %2631 = vmatpush1.msra.mxu0 %v2530
  %2632 = vmatprep.subr.mxu0 0.0
  %2633 = vmatpush1.msra.mxu0 %v2531
  %2634 = vmatprep.subr.mxu0 0.0
  %2635 = vmatpush1.msra.mxu0 %v2532
  %2636 = vmatprep.mubr.f32.mxu0 %v2374
  %2637 = vmatmul.mubr.f32.gmra.mrb[0].mxu0 %v2373
  %v2638 = vpop.f32.mrb[0].mxu0
  %v2639 = vadd.f32 %v2570, %v2638
  %v2640 = vpop.f32.mrb[0].mxu0
  %2641 = vmatprep.mubr.f32.mxu0 %v2378
  %2642 = vmatmul.mubr.f32.gmra.mrb[0].mxu0 %v2377
  %v2643 = vpop.f32.mrb[0].mxu0
  %v2644 = vadd.f32 %v2570, %v2643
  %v2645 = vpop.f32.mrb[0].mxu0
  %2646 = vmatprep.mubr.f32.mxu0 %v2382
  %2647 = vmatmul.mubr.f32.gmra.mrb[0].mxu0 %v2381
  %v2648 = vpop.f32.mrb[0].mxu0
  %v2649 = vadd.f32 %v2570, %v2648
  %v2650 = vpop.f32.mrb[0].mxu0
  %2651 = vmatprep.mubr.f32.mxu0 %v2386
  %2652 = vmatmul.mubr.f32.gmra.mrb[0].mxu0 %v2385
  %v2653 = vpop.f32.mrb[0].mxu0
  %v2654 = vadd.f32 %v2570, %v2653
  %v2655 = vpop.f32.mrb[0].mxu0
  %2656 = vmatprep.mubr.f32.mxu0 %v2390
  %2657 = vmatmul.mubr.f32.gmra.mrb[0].mxu0 %v2389
  %v2658 = vpop.f32.mrb[0].mxu0
  %v2659 = vadd.f32 %v2570, %v2658
  %v2660 = vpop.f32.mrb[0].mxu0
  %2661 = vmatprep.mubr.f32.mxu0 %v2394
  %2662 = vmatmul.mubr.f32.gmra.mrb[0].mxu0 %v2393
  %v2663 = vpop.f32.mrb[0].mxu0
  %v2664 = vadd.f32 %v2570, %v2663
  %v2665 = vpop.f32.mrb[0].mxu0
  %2666 = vmatprep.mubr.f32.mxu0 %v2398
  %2667 = vmatmul.mubr.f32.gmra.mrb[0].mxu0 %v2397
  %v2668 = vpop.f32.mrb[0].mxu0
  %v2669 = vadd.f32 %v2570, %v2668
  %v2670 = vpop.f32.mrb[0].mxu0
  %2671 = vmatprep.mubr.f32.mxu0 %v2402
  %2672 = vmatmul.mubr.f32.gmra.mrb[0].mxu0 %v2401
  %v2673 = vpop.f32.mrb[0].mxu0
  %v2674 = vadd.f32 %v2570, %v2673
  %v2675 = vpop.f32.mrb[0].mxu0
  %2676 = vmatprep.mubr.f32.mxu0 %v2406
  %2677 = vmatmul.mubr.f32.gmra.mrb[0].mxu0 %v2405
  %v2678 = vpop.f32.mrb[0].mxu0
  %v2679 = vadd.f32 %v2570, %v2678
  %v2680 = vpop.f32.mrb[0].mxu0
  %2681 = vmatprep.mubr.f32.mxu0 %v2410
  %2682 = vmatmul.mubr.f32.gmra.mrb[0].mxu0 %v2409
  %v2683 = vpop.f32.mrb[0].mxu0
  %v2684 = vadd.f32 %v2570, %v2683
  %v2685 = vpop.f32.mrb[0].mxu0
  %2686 = vmatprep.mubr.f32.mxu0 %v2414
  %2687 = vmatmul.mubr.f32.gmra.mrb[0].mxu0 %v2413
  %v2688 = vpop.f32.mrb[0].mxu0
  %v2689 = vadd.f32 %v2570, %v2688
  %v2690 = vpop.f32.mrb[0].mxu0
  %2691 = vmatprep.mubr.f32.mxu0 %v2418
  %2692 = vmatmul.mubr.f32.gmra.mrb[0].mxu0 %v2417
  %v2693 = vpop.f32.mrb[0].mxu0
  %v2694 = vadd.f32 %v2570, %v2693
  %v2695 = vpop.f32.mrb[0].mxu0
  %2696 = vmatprep.mubr.f32.mxu0 %v2422
  %2697 = vmatmul.mubr.f32.gmra.mrb[0].mxu0 %v2421
  %v2698 = vpop.f32.mrb[0].mxu0
  %v2699 = vadd.f32 %v2570, %v2698
  %v2700 = vpop.f32.mrb[0].mxu0
  %2701 = vmatprep.mubr.f32.mxu0 %v2426
  %2702 = vmatmul.mubr.f32.gmra.mrb[0].mxu0 %v2425
  %v2703 = vpop.f32.mrb[0].mxu0
  %v2704 = vadd.f32 %v2570, %v2703
  %v2705 = vpop.f32.mrb[0].mxu0
  %2706 = vmatprep.mubr.f32.mxu0 %v2430
  %2707 = vmatmul.mubr.f32.gmra.mrb[0].mxu0 %v2429
  %v2708 = vpop.f32.mrb[0].mxu0
  %v2709 = vadd.f32 %v2570, %v2708
  %v2710 = vpop.f32.mrb[0].mxu0
  %2711 = vmatprep.mubr.f32.mxu0 %v2434
  %2712 = vmatmul.mubr.f32.gmra.mrb[0].mxu0 %v2433
  %v2713 = vpop.f32.mrb[0].mxu0
  %v2714 = vadd.f32 %v2570, %v2713
  %v2715 = vpop.f32.mrb[0].mxu0
  %2716 = vdwg.mxu0
  %2717 = vmatprep.subr.mxu0 0.0
  %2718 = vmatpush1.msra.mxu0 %v2533
  %2719 = vmatprep.subr.mxu0 0.0
  %2720 = vmatpush1.msra.mxu0 %v2534
  %2721 = vmatprep.subr.mxu0 0.0
  %2722 = vmatpush1.msra.mxu0 %v2535
  %2723 = vmatprep.subr.mxu0 0.0
  %2724 = vmatpush1.msra.mxu0 %v2536
  %2725 = vmatprep.subr.mxu0 0.0
  %2726 = vmatpush1.msra.mxu0 %v2537
  %2727 = vmatprep.subr.mxu0 0.0
  %2728 = vmatpush1.msra.mxu0 %v2538
  %2729 = vmatprep.subr.mxu0 0.0
  %2730 = vmatpush1.msra.mxu0 %v2539
  %2731 = vmatprep.subr.mxu0 0.0
  %2732 = vmatpush1.msra.mxu0 %v2540
  %2733 = vmatprep.subr.mxu0 0.0
  %2734 = vmatpush1.msra.mxu0 %v2541
  %2735 = vmatprep.subr.mxu0 0.0
  %2736 = vmatpush1.msra.mxu0 %v2542
  %2737 = vmatprep.subr.mxu0 0.0
  %2738 = vmatpush1.msra.mxu0 %v2543
  %2739 = vmatprep.subr.mxu0 0.0
  %2740 = vmatpush1.msra.mxu0 %v2544
  %2741 = vmatprep.subr.mxu0 0.0
  %2742 = vmatpush1.msra.mxu0 %v2545
  %2743 = vmatprep.subr.mxu0 0.0
  %2744 = vmatpush1.msra.mxu0 %v2546
  %2745 = vmatprep.subr.mxu0 0.0
  %2746 = vmatpush1.msra.mxu0 %v2547
  %2747 = vmatprep.subr.mxu0 0.0
  %2748 = vmatpush1.msra.mxu0 %v2548
  %2749 = vmatprep.subr.mxu0 0.0
  %2750 = vmatpush1.msra.mxu0 %v2549
  %2751 = vmatprep.subr.mxu0 0.0
  %2752 = vmatpush1.msra.mxu0 %v2550
  %2753 = vmatprep.subr.mxu0 0.0
  %2754 = vmatpush1.msra.mxu0 %v2551
  %2755 = vmatprep.subr.mxu0 0.0
  %2756 = vmatpush1.msra.mxu0 %v2552
  %2757 = vmatprep.subr.mxu0 0.0
  %2758 = vmatpush1.msra.mxu0 %v2553
  %2759 = vmatprep.subr.mxu0 0.0
  %2760 = vmatpush1.msra.mxu0 %v2554
  %2761 = vmatprep.subr.mxu0 0.0
  %2762 = vmatpush1.msra.mxu0 %v2555
  %2763 = vmatprep.subr.mxu0 0.0
  %2764 = vmatpush1.msra.mxu0 %v2556
  %2765 = vmatprep.subr.mxu0 0.0
  %2766 = vmatpush1.msra.mxu0 %v2557
  %2767 = vmatprep.subr.mxu0 0.0
  %2768 = vmatpush1.msra.mxu0 %v2558
  %2769 = vmatprep.subr.mxu0 0.0
  %2770 = vmatpush1.msra.mxu0 %v2559
  %2771 = vmatprep.subr.mxu0 0.0
  %2772 = vmatpush1.msra.mxu0 %v2560
  %2773 = vmatprep.subr.mxu0 0.0
  %2774 = vmatpush1.msra.mxu0 %v2561
  %2775 = vmatprep.subr.mxu0 0.0
  %2776 = vmatpush1.msra.mxu0 %v2562
  %2777 = vmatprep.subr.mxu0 0.0
  %2778 = vmatpush1.msra.mxu0 %v2563
  %2779 = vmatprep.subr.mxu0 0.0
  %2780 = vmatpush1.msra.mxu0 %v2564
  %2781 = vmatprep.mubr.f32.mxu0 %v2376
  %2782 = vmatmul.mubr.f32.gmra.mrb[0].mxu0 %v2375
  %v2783 = vpop.f32.mrb[0].mxu0
  %v2784 = vadd.f32 %v2639, %v2783
  %v2785 = vpop.f32.mrb[0].mxu0
  %2786 = vmatprep.mubr.f32.mxu0 %v2380
  %2787 = vmatmul.mubr.f32.gmra.mrb[0].mxu0 %v2379
  %v2788 = vpop.f32.mrb[0].mxu0
  %v2789 = vadd.f32 %v2644, %v2788
  %v2790 = vpop.f32.mrb[0].mxu0
  %2791 = vmatprep.mubr.f32.mxu0 %v2384
  %2792 = vmatmul.mubr.f32.gmra.mrb[0].mxu0 %v2383
  %v2793 = vpop.f32.mrb[0].mxu0
  %v2794 = vadd.f32 %v2649, %v2793
  %v2795 = vpop.f32.mrb[0].mxu0
  %2796 = vmatprep.mubr.f32.mxu0 %v2388
  %2797 = vmatmul.mubr.f32.gmra.mrb[0].mxu0 %v2387
  %v2798 = vpop.f32.mrb[0].mxu0
  %v2799 = vadd.f32 %v2654, %v2798
  %v2800 = vpop.f32.mrb[0].mxu0
  %2801 = vmatprep.mubr.f32.mxu0 %v2392
  %2802 = vmatmul.mubr.f32.gmra.mrb[0].mxu0 %v2391
  %v2803 = vpop.f32.mrb[0].mxu0
  %v2804 = vadd.f32 %v2659, %v2803
  %v2805 = vpop.f32.mrb[0].mxu0
  %2806 = vmatprep.mubr.f32.mxu0 %v2396
  %2807 = vmatmul.mubr.f32.gmra.mrb[0].mxu0 %v2395
  %v2808 = vpop.f32.mrb[0].mxu0
  %v2809 = vadd.f32 %v2664, %v2808
  %v2810 = vpop.f32.mrb[0].mxu0
  %2811 = vmatprep.mubr.f32.mxu0 %v2400
  %2812 = vmatmul.mubr.f32.gmra.mrb[0].mxu0 %v2399
  %v2813 = vpop.f32.mrb[0].mxu0
  %v2814 = vadd.f32 %v2669, %v2813
  %v2815 = vpop.f32.mrb[0].mxu0
  %2816 = vmatprep.mubr.f32.mxu0 %v2404
  %2817 = vmatmul.mubr.f32.gmra.mrb[0].mxu0 %v2403
  %v2818 = vpop.f32.mrb[0].mxu0
  %v2819 = vadd.f32 %v2674, %v2818
  %v2820 = vpop.f32.mrb[0].mxu0
  %2821 = vmatprep.mubr.f32.mxu0 %v2408
  %2822 = vmatmul.mubr.f32.gmra.mrb[0].mxu0 %v2407
  %v2823 = vpop.f32.mrb[0].mxu0
  %v2824 = vadd.f32 %v2679, %v2823
  %v2825 = vpop.f32.mrb[0].mxu0
  %2826 = vmatprep.mubr.f32.mxu0 %v2412
  %2827 = vmatmul.mubr.f32.gmra.mrb[0].mxu0 %v2411
  %v2828 = vpop.f32.mrb[0].mxu0
  %v2829 = vadd.f32 %v2684, %v2828
  %v2830 = vpop.f32.mrb[0].mxu0
  %2831 = vmatprep.mubr.f32.mxu0 %v2416
  %2832 = vmatmul.mubr.f32.gmra.mrb[0].mxu0 %v2415
  %v2833 = vpop.f32.mrb[0].mxu0
  %v2834 = vadd.f32 %v2689, %v2833
  %v2835 = vpop.f32.mrb[0].mxu0
  %2836 = vmatprep.mubr.f32.mxu0 %v2420
  %2837 = vmatmul.mubr.f32.gmra.mrb[0].mxu0 %v2419
  %v2838 = vpop.f32.mrb[0].mxu0
  %v2839 = vadd.f32 %v2694, %v2838
  %v2840 = vpop.f32.mrb[0].mxu0
  %2841 = vmatprep.mubr.f32.mxu0 %v2424
  %2842 = vmatmul.mubr.f32.gmra.mrb[0].mxu0 %v2423
  %v2843 = vpop.f32.mrb[0].mxu0
  %v2844 = vadd.f32 %v2699, %v2843
  %v2845 = vpop.f32.mrb[0].mxu0
  %2846 = vmatprep.mubr.f32.mxu0 %v2428
  %2847 = vmatmul.mubr.f32.gmra.mrb[0].mxu0 %v2427
  %v2848 = vpop.f32.mrb[0].mxu0
  %v2849 = vadd.f32 %v2704, %v2848
  %v2850 = vpop.f32.mrb[0].mxu0
  %2851 = vmatprep.mubr.f32.mxu0 %v2432
  %2852 = vmatmul.mubr.f32.gmra.mrb[0].mxu0 %v2431
  %v2853 = vpop.f32.mrb[0].mxu0
  %v2854 = vadd.f32 %v2709, %v2853
  %v2855 = vpop.f32.mrb[0].mxu0
  %2856 = vmatprep.mubr.f32.mxu0 %v2436
  %2857 = vmatmul.mubr.f32.gmra.mrb[0].mxu0 %v2435
  %v2858 = vpop.f32.mrb[0].mxu0
  %v2859 = vadd.f32 %v2714, %v2858
  %v2860 = vpop.f32.mrb[0].mxu0
  %2861 = vdwg.mxu0
  %v2862 = vadd.f32 %v1917, %v2784
  %v2863 = vadd.f32 %v1918, %v2789
  %v2864 = vadd.f32 %v1919, %v2794
  %v2865 = vadd.f32 %v1920, %v2799
  %v2866 = vadd.f32 %v1921, %v2804
  %v2867 = vadd.f32 %v1922, %v2809
  %v2868 = vadd.f32 %v1923, %v2814
  %v2869 = vadd.f32 %v1924, %v2819
  %v2870 = vadd.f32 %v1925, %v2824
  %v2871 = vadd.f32 %v1926, %v2829
  %v2872 = vadd.f32 %v1927, %v2834
  %v2873 = vadd.f32 %v1928, %v2839
  %v2874 = vadd.f32 %v1929, %v2844
  %v2875 = vadd.f32 %v1930, %v2849
  %v2876 = vadd.f32 %v1931, %v2854
  %v2877 = vadd.f32 %v1932, %v2859
  %v2878 = vld [vmem:[%s11] sm:$0x1]
  %v2879 = vld [vmem:[%s12] sm:$0x1]
  %v2880 = vsel %vm94, %v2862, 0.0
  %2881 = vadd.xlane.f32.xlu0 %v2880
  %v2882 = vpop.xlane.xlu0 %2881
  %v2883 = vsel %vm94, %v2863, 0.0
  %2884 = vadd.xlane.f32.xlu0 %v2883
  %v2885 = vpop.xlane.xlu0 %2884
  %v2886 = vsel %vm94, %v2864, 0.0
  %2887 = vadd.xlane.f32.xlu0 %v2886
  %v2888 = vpop.xlane.xlu0 %2887
  %v2889 = vsel %vm94, %v2865, 0.0
  %2890 = vadd.xlane.f32.xlu0 %v2889
  %v2891 = vpop.xlane.xlu0 %2890
  %v2892 = vsel %vm94, %v2866, 0.0
  %2893 = vadd.xlane.f32.xlu0 %v2892
  %v2894 = vpop.xlane.xlu0 %2893
  %v2895 = vsel %vm94, %v2867, 0.0
  %2896 = vadd.xlane.f32.xlu0 %v2895
  %v2897 = vpop.xlane.xlu0 %2896
  %v2898 = vsel %vm94, %v2868, 0.0
  %2899 = vadd.xlane.f32.xlu0 %v2898
  %v2900 = vpop.xlane.xlu0 %2899
  %v2901 = vsel %vm94, %v2869, 0.0
  %2902 = vadd.xlane.f32.xlu0 %v2901
  %v2903 = vpop.xlane.xlu0 %2902
  %v2904 = vsel %vm94, %v2870, 0.0
  %2905 = vadd.xlane.f32.xlu0 %v2904
  %v2906 = vpop.xlane.xlu0 %2905
  %v2907 = vsel %vm94, %v2871, 0.0
  %2908 = vadd.xlane.f32.xlu0 %v2907
  %v2909 = vpop.xlane.xlu0 %2908
  %v2910 = vsel %vm94, %v2872, 0.0
  %2911 = vadd.xlane.f32.xlu0 %v2910
  %v2912 = vpop.xlane.xlu0 %2911
  %v2913 = vsel %vm94, %v2873, 0.0
  %2914 = vadd.xlane.f32.xlu0 %v2913
  %v2915 = vpop.xlane.xlu0 %2914
  %v2916 = vsel %vm94, %v2874, 0.0
  %2917 = vadd.xlane.f32.xlu0 %v2916
  %v2918 = vpop.xlane.xlu0 %2917
  %v2919 = vsel %vm94, %v2875, 0.0
  %2920 = vadd.xlane.f32.xlu0 %v2919
  %v2921 = vpop.xlane.xlu0 %2920
  %v2922 = vsel %vm94, %v2876, 0.0
  %2923 = vadd.xlane.f32.xlu0 %v2922
  %v2924 = vpop.xlane.xlu0 %2923
  %v2925 = vsel %vm94, %v2877, 0.0
  %2926 = vadd.xlane.f32.xlu0 %v2925
  %v2927 = vpop.xlane.xlu0 %2926
  %v2928 = vmul.f32 %v2882, %v1728
  %v2929 = vmul.f32 %v2885, %v1728
  %v2930 = vmul.f32 %v2888, %v1728
  %v2931 = vmul.f32 %v2891, %v1728
  %v2932 = vmul.f32 %v2894, %v1728
  %v2933 = vmul.f32 %v2897, %v1728
  %v2934 = vmul.f32 %v2900, %v1728
  %v2935 = vmul.f32 %v2903, %v1728
  %v2936 = vmul.f32 %v2906, %v1728
  %v2937 = vmul.f32 %v2909, %v1728
  %v2938 = vmul.f32 %v2912, %v1728
  %v2939 = vmul.f32 %v2915, %v1728
  %v2940 = vmul.f32 %v2918, %v1728
  %v2941 = vmul.f32 %v2921, %v1728
  %v2942 = vmul.f32 %v2924, %v1728
  %v2943 = vmul.f32 %v2927, %v1728
  %v2944 = vsub.f32 %v2862, %v2928
  %v2945 = vsub.f32 %v2863, %v2929
  %v2946 = vsub.f32 %v2864, %v2930
  %v2947 = vsub.f32 %v2865, %v2931
  %v2948 = vsub.f32 %v2866, %v2932
  %v2949 = vsub.f32 %v2867, %v2933
  %v2950 = vsub.f32 %v2868, %v2934
  %v2951 = vsub.f32 %v2869, %v2935
  %v2952 = vsub.f32 %v2870, %v2936
  %v2953 = vsub.f32 %v2871, %v2937
  %v2954 = vsub.f32 %v2872, %v2938
  %v2955 = vsub.f32 %v2873, %v2939
  %v2956 = vsub.f32 %v2874, %v2940
  %v2957 = vsub.f32 %v2875, %v2941
  %v2958 = vsub.f32 %v2876, %v2942
  %v2959 = vsub.f32 %v2877, %v2943
  %v2960 = vmul.f32 %v2944, %v2944
  %v2961 = vmul.f32 %v2945, %v2945
  %v2962 = vmul.f32 %v2946, %v2946
  %v2963 = vmul.f32 %v2947, %v2947
  %v2964 = vmul.f32 %v2948, %v2948
  %v2965 = vmul.f32 %v2949, %v2949
  %v2966 = vmul.f32 %v2950, %v2950
  %v2967 = vmul.f32 %v2951, %v2951
  %v2968 = vmul.f32 %v2952, %v2952
  %v2969 = vmul.f32 %v2953, %v2953
  %v2970 = vmul.f32 %v2954, %v2954
  %v2971 = vmul.f32 %v2955, %v2955
  %v2972 = vmul.f32 %v2956, %v2956
  %v2973 = vmul.f32 %v2957, %v2957
  %v2974 = vmul.f32 %v2958, %v2958
  %v2975 = vmul.f32 %v2959, %v2959
  %v2976 = vsel %vm94, %v2960, 0.0
  %2977 = vadd.xlane.f32.xlu0 %v2976
  %v2978 = vpop.xlane.xlu0 %2977
  %v2979 = vsel %vm94, %v2961, 0.0
  %2980 = vadd.xlane.f32.xlu0 %v2979
  %v2981 = vpop.xlane.xlu0 %2980
  %v2982 = vsel %vm94, %v2962, 0.0
  %2983 = vadd.xlane.f32.xlu0 %v2982
  %v2984 = vpop.xlane.xlu0 %2983
  %v2985 = vsel %vm94, %v2963, 0.0
  %2986 = vadd.xlane.f32.xlu0 %v2985
  %v2987 = vpop.xlane.xlu0 %2986
  %v2988 = vsel %vm94, %v2964, 0.0
  %2989 = vadd.xlane.f32.xlu0 %v2988
  %v2990 = vpop.xlane.xlu0 %2989
  %v2991 = vsel %vm94, %v2965, 0.0
  %2992 = vadd.xlane.f32.xlu0 %v2991
  %v2993 = vpop.xlane.xlu0 %2992
  %v2994 = vsel %vm94, %v2966, 0.0
  %2995 = vadd.xlane.f32.xlu0 %v2994
  %v2996 = vpop.xlane.xlu0 %2995
  %v2997 = vsel %vm94, %v2967, 0.0
  %2998 = vadd.xlane.f32.xlu0 %v2997
  %v2999 = vpop.xlane.xlu0 %2998
  %v3000 = vsel %vm94, %v2968, 0.0
  %3001 = vadd.xlane.f32.xlu0 %v3000
  %v3002 = vpop.xlane.xlu0 %3001
  %v3003 = vsel %vm94, %v2969, 0.0
  %3004 = vadd.xlane.f32.xlu0 %v3003
  %v3005 = vpop.xlane.xlu0 %3004
  %v3006 = vsel %vm94, %v2970, 0.0
  %3007 = vadd.xlane.f32.xlu0 %v3006
  %v3008 = vpop.xlane.xlu0 %3007
  %v3009 = vsel %vm94, %v2971, 0.0
  %3010 = vadd.xlane.f32.xlu0 %v3009
  %v3011 = vpop.xlane.xlu0 %3010
  %v3012 = vsel %vm94, %v2972, 0.0
  %3013 = vadd.xlane.f32.xlu0 %v3012
  %v3014 = vpop.xlane.xlu0 %3013
  %v3015 = vsel %vm94, %v2973, 0.0
  %3016 = vadd.xlane.f32.xlu0 %v3015
  %v3017 = vpop.xlane.xlu0 %3016
  %v3018 = vsel %vm94, %v2974, 0.0
  %3019 = vadd.xlane.f32.xlu0 %v3018
  %v3020 = vpop.xlane.xlu0 %3019
  %v3021 = vsel %vm94, %v2975, 0.0
  %3022 = vadd.xlane.f32.xlu0 %v3021
  %v3023 = vpop.xlane.xlu0 %3022
  %v3024 = vmul.f32 %v2978, %v1728
  %v3025 = vmul.f32 %v2981, %v1728
  %v3026 = vmul.f32 %v2984, %v1728
  %v3027 = vmul.f32 %v2987, %v1728
  %v3028 = vmul.f32 %v2990, %v1728
  %v3029 = vmul.f32 %v2993, %v1728
  %v3030 = vmul.f32 %v2996, %v1728
  %v3031 = vmul.f32 %v2999, %v1728
  %v3032 = vmul.f32 %v3002, %v1728
  %v3033 = vmul.f32 %v3005, %v1728
  %v3034 = vmul.f32 %v3008, %v1728
  %v3035 = vmul.f32 %v3011, %v1728
  %v3036 = vmul.f32 %v3014, %v1728
  %v3037 = vmul.f32 %v3017, %v1728
  %v3038 = vmul.f32 %v3020, %v1728
  %v3039 = vmul.f32 %v3023, %v1728
  %v3040 = vadd.f32 %v3024, 1e-05
  %v3041 = vadd.f32 %v3025, 1e-05
  %v3042 = vadd.f32 %v3026, 1e-05
  %v3043 = vadd.f32 %v3027, 1e-05
  %v3044 = vadd.f32 %v3028, 1e-05
  %v3045 = vadd.f32 %v3029, 1e-05
  %v3046 = vadd.f32 %v3030, 1e-05
  %v3047 = vadd.f32 %v3031, 1e-05
  %v3048 = vadd.f32 %v3032, 1e-05
  %v3049 = vadd.f32 %v3033, 1e-05
  %v3050 = vadd.f32 %v3034, 1e-05
  %v3051 = vadd.f32 %v3035, 1e-05
  %v3052 = vadd.f32 %v3036, 1e-05
  %v3053 = vadd.f32 %v3037, 1e-05
  %v3054 = vadd.f32 %v3038, 1e-05
  %v3055 = vadd.f32 %v3039, 1e-05
  %v3056 = vrsqrt.pop %v3040
  %v3057 = vrsqrt.pop %v3041
  %v3058 = vrsqrt.pop %v3042
  %v3059 = vrsqrt.pop %v3043
  %v3060 = vrsqrt.pop %v3044
  %v3061 = vrsqrt.pop %v3045
  %v3062 = vrsqrt.pop %v3046
  %v3063 = vrsqrt.pop %v3047
  %v3064 = vrsqrt.pop %v3048
  %v3065 = vrsqrt.pop %v3049
  %v3066 = vrsqrt.pop %v3050
  %v3067 = vrsqrt.pop %v3051
  %v3068 = vrsqrt.pop %v3052
  %v3069 = vrsqrt.pop %v3053
  %v3070 = vrsqrt.pop %v3054
  %v3071 = vrsqrt.pop %v3055
  %v3072 = vmul.f32 %v2944, %v3056
  %v3073 = vmul.f32 %v2945, %v3057
  %v3074 = vmul.f32 %v2946, %v3058
  %v3075 = vmul.f32 %v2947, %v3059
  %v3076 = vmul.f32 %v2948, %v3060
  %v3077 = vmul.f32 %v2949, %v3061
  %v3078 = vmul.f32 %v2950, %v3062
  %v3079 = vmul.f32 %v2951, %v3063
  %v3080 = vmul.f32 %v2952, %v3064
  %v3081 = vmul.f32 %v2953, %v3065
  %v3082 = vmul.f32 %v2954, %v3066
  %v3083 = vmul.f32 %v2955, %v3067
  %v3084 = vmul.f32 %v2956, %v3068
  %v3085 = vmul.f32 %v2957, %v3069
  %v3086 = vmul.f32 %v2958, %v3070
  %v3087 = vmul.f32 %v2959, %v3071
  %v3089 = vlaneseq
  %v3090 = vshrl.u32 %v3089, 7
  %v3091 = vsub.s32 0, %v3090
  %v3092 = vrot.slane %v2878, %v3091
  %v3094 = vmul.f32 %v3072, %v3092
  %v3095 = vmul.f32 %v3073, %v3092
  %v3096 = vmul.f32 %v3074, %v3092
  %v3097 = vmul.f32 %v3075, %v3092
  %v3098 = vmul.f32 %v3076, %v3092
  %v3099 = vmul.f32 %v3077, %v3092
  %v3100 = vmul.f32 %v3078, %v3092
  %v3101 = vmul.f32 %v3079, %v3092
  %v3102 = vmul.f32 %v3080, %v3092
  %v3103 = vmul.f32 %v3081, %v3092
  %v3104 = vmul.f32 %v3082, %v3092
  %v3105 = vmul.f32 %v3083, %v3092
  %v3106 = vmul.f32 %v3084, %v3092
  %v3107 = vmul.f32 %v3085, %v3092
  %v3108 = vmul.f32 %v3086, %v3092
  %v3109 = vmul.f32 %v3087, %v3092
  %v3111 = vlaneseq
  %v3112 = vshrl.u32 %v3111, 7
  %v3113 = vsub.s32 0, %v3112
  %v3114 = vrot.slane %v2879, %v3113
  %v3116 = vadd.f32 %v3094, %v3114
  %v3117 = vadd.f32 %v3095, %v3114
  %v3118 = vadd.f32 %v3096, %v3114
  %v3119 = vadd.f32 %v3097, %v3114
  %v3120 = vadd.f32 %v3098, %v3114
  %v3121 = vadd.f32 %v3099, %v3114
  %v3122 = vadd.f32 %v3100, %v3114
  %v3123 = vadd.f32 %v3101, %v3114
  %v3124 = vadd.f32 %v3102, %v3114
  %v3125 = vadd.f32 %v3103, %v3114
  %v3126 = vadd.f32 %v3104, %v3114
  %v3127 = vadd.f32 %v3105, %v3114
  %v3128 = vadd.f32 %v3106, %v3114
  %v3129 = vadd.f32 %v3107, %v3114
  %v3130 = vadd.f32 %v3108, %v3114
  %v3131 = vadd.f32 %v3109, %v3114
  %3132 = vst.msk [vmem:[%s15] sm:$0xff] %vm94, %v3116
  %3133 = vst.msk [vmem:[%s15 + $0x8] sm:$0xff] %vm94, %v3117
  %3134 = vst.msk [vmem:[%s15 + $0x10] sm:$0xff] %vm94, %v3118
  %3135 = vst.msk [vmem:[%s15 + $0x18] sm:$0xff] %vm94, %v3119
  %3136 = vst.msk [vmem:[%s15 + $0x20] sm:$0xff] %vm94, %v3120
  %3137 = vst.msk [vmem:[%s15 + $0x28] sm:$0xff] %vm94, %v3121
  %3138 = vst.msk [vmem:[%s15 + $0x30] sm:$0xff] %vm94, %v3122
  %3139 = vst.msk [vmem:[%s15 + $0x38] sm:$0xff] %vm94, %v3123
  %3140 = vst.msk [vmem:[%s15 + $0x40] sm:$0xff] %vm94, %v3124
  %3141 = vst.msk [vmem:[%s15 + $0x48] sm:$0xff] %vm94, %v3125
  %3142 = vst.msk [vmem:[%s15 + $0x50] sm:$0xff] %vm94, %v3126
  %3143 = vst.msk [vmem:[%s15 + $0x58] sm:$0xff] %vm94, %v3127
  %3144 = vst.msk [vmem:[%s15 + $0x60] sm:$0xff] %vm94, %v3128
  %3145 = vst.msk [vmem:[%s15 + $0x68] sm:$0xff] %vm94, %v3129
  %3146 = vst.msk [vmem:[%s15 + $0x70] sm:$0xff] %vm94, %v3130
  %3147 = vst.msk [vmem:[%s15 + $0x78] sm:$0xff] %vm94, %v3131
  // Predicated region
  $region62: #{transformer_net_forward.4} parent=0 // pred_check
    _
  $region63: #{transformer_net_forward.4} parent=0 // pred_check_branch
    %3149 = sbr.rel (0) target = $region65
  $region64: #{transformer_net_forward.4} parent=0 // pred_region
    _
  $region65: #{transformer_net_forward.4} parent=0 // pred_fallthru
    _
  // Predicated region
  $region66: #{transformer_net_forward.4} parent=0 // pred_check
    _
  $region67: #{transformer_net_forward.4} parent=0 // pred_check_branch
    %3151 = sbr.rel (0) target = $region69
  $region68: #{transformer_net_forward.4} parent=0 // pred_region
    _
  $region69: #{transformer_net_forward.4} parent=0 // pred_fallthru
    _

</llo_original>
